<compile_context>
chip_gen: v6e
topology: v6e:2x2x1
jax: 0.10.0
libtpu: 0.0.40
codegen_flags: <defaults>
</compile_context>

<pallas_src>
import functools

import jax
import jax.numpy as jnp
import numpy as np
from jax.experimental import pallas as pl
from jax.experimental.pallas import tpu as pltpu


def _pad8(c):
    return max(8, ((c + 7) // 8) * 8)


def _tensorcores_per_chip():
    """Best-effort #TensorCores reachable via a 'parallel' grid axis (1 is safe)."""
    try:
        kind = getattr(jax.devices()[0], "device_kind", "").lower()
    except Exception:
        return 1
    if "lite" in kind or "v5e" in kind or "v6e" in kind:
        return 1                      # single-TC chips
    for tag in ("v7", "7x", "v5p", "v4"):
        if tag in kind:
            return 2                  # megacore chips: 2 TCs share the grid
    return 1


def _choose_images_per_step(n, hw, n_cores):
    """Largest G | N with N//G >= n_cores (keep every TC busy) and G*HW <= 2048 lanes."""
    best = 1
    for g in range(1, n + 1):
        if n % g == 0 and n // g >= n_cores and g * hw <= 2048:
            best = g
    return best


def _fused_cnn_kernel(x_ref, m1_ref, m2_ref, w1_ref, b1_ref, w2_ref, b2_ref,
                      w3_ref, b3_ref, o_ref, p_ref, *, H, W, KH, KW):
    """conv1 -> conv2 -> conv3 for G lane-batched images, fully fused in VMEM.

    x_ref  : (C0p, L)            input, channels-first, L = G*H*W lanes
    mX_ref : (KH*KW*Cinp, L)     pre-broadcast 0/1 tap-validity masks
    wX_ref : (Coutp, KH*KW*Cinp) im2col weight matrices (channel-padded)
    bX_ref : (Coutp, 1)          biases (channel-padded)
    o_ref  : (Coutp, L)          padded output block
    p_ref  : (K_max, L)          VMEM scratch holding the im2col patch matrix
    """
    L = x_ref.shape[1]
    pad = KH // 2

    def conv_layer(act, w_ref, b_ref, m_ref):
        cin = act.shape[0]
        t = 0
        for kh in range(KH):
            for kw in range(KW):
                delta = (kh - pad) * W + (kw - pad)        # flat spatial shift
                shift = (-delta) % L
                shifted = act if shift == 0 else pltpu.roll(act, shift, axis=1)
                p_ref[pl.ds(t * cin, cin), :] = shifted    # unmasked tap -> scratch
                t += 1
        k = KH * KW * cin
        patches = p_ref[pl.ds(0, k), :] * m_ref[...]       # one bulk mask multiply
        y = jnp.dot(w_ref[...], patches,
                    preferred_element_type=jnp.float32)    # (Coutp, L) MXU matmul
        return y + b_ref[...]

    a = conv_layer(x_ref[...].astype(jnp.float32), w1_ref, b1_ref, m1_ref)
    a = conv_layer(a, w2_ref, b2_ref, m2_ref)
    a = conv_layer(a, w3_ref, b3_ref, m2_ref)
    o_ref[...] = a.astype(o_ref.dtype)


def _big_tap_mask(H, W, KH, KW, cin_p, n_imgs):
    """(KH*KW*cin_p, n_imgs*H*W) 0/1 mask, pre-broadcast over channels & images."""
    pad = KH // 2
    p = np.arange(H * W)
    r, c = p // W, p % W
    rows = []
    for kh in range(KH):
        for kw in range(KW):
            dh, dw = kh - pad, kw - pad
            ok = ((r + dh >= 0) & (r + dh < H) &
                  (c + dw >= 0) & (c + dw < W)).astype(np.float32)
            rows.append(np.broadcast_to(ok[None, :], (cin_p, H * W)))
    m = np.concatenate(rows, axis=0)                        # (KH*KW*cin_p, HW)
    return jnp.asarray(np.tile(m, (1, n_imgs)))             # (KH*KW*cin_p, n_imgs*HW)


def _pack_layer(w, b, cin_p, cout_p):
    """HWIO w:(KH,KW,Ci,Co), b:(Co,) -> wmat:(cout_p, KH*KW*cin_p), b:(cout_p,1)."""
    KH, KW, ci, co = w.shape
    wp = jnp.zeros((KH, KW, cin_p, cout_p), w.dtype)
    wp = wp.at[:, :, :ci, :co].set(w)
    wmat = wp.reshape(KH * KW * cin_p, cout_p).T            # (cout_p, K)
    bp = jnp.zeros((cout_p, 1), b.dtype).at[:co, 0].set(b)
    return wmat, bp


@jax.jit
def cnn_forward(x_nchw, params):
    """Equivalent of CNN.forward: conv1 -> conv2 -> conv3 (no activations)."""
    N, C0, H, W = x_nchw.shape
    KH, KW = params[0][0].shape[:2]
    HW = H * W
    chans = [C0] + [w.shape[3] for w, _ in params]          # [4, 21, 20, 3]
    cps = [_pad8(c) for c in chans]                         # [8, 24, 24, 8]
    c_out = chans[-1]

    g = _choose_images_per_step(N, HW, _tensorcores_per_chip())
    steps = N // g
    L = g * HW                                              # lanes per grid step

    (w1, b1), (w2, b2), (w3, b3) = [
        _pack_layer(w, b, cps[i], cps[i + 1]) for i, (w, b) in enumerate(params)]
    m1 = _big_tap_mask(H, W, KH, KW, cps[0], g)             # (200, L)
    m2 = _big_tap_mask(H, W, KH, KW, cps[1], g)             # (600, L) shared by L2/L3
    k_max = KH * KW * max(cps[:-1])

    # NCHW -> channels-first, lane-batched (C0p, N*HW) with zero rows for padded channels.
    x_flat = x_nchw.reshape(N, C0, HW).transpose(1, 0, 2).reshape(C0, N * HW)
    x_pad = jnp.zeros((cps[0], N * HW), x_nchw.dtype).at[:C0].set(x_flat)

    flops = 2 * N * HW * sum(KH * KW * cps[i] * cps[i + 1] for i in range(3))
    bytes_acc = 4 * (x_pad.size + cps[-1] * N * HW + m1.size + m2.size
                     + w1.size + b1.size + w2.size + b2.size + w3.size + b3.size)

    kernel = functools.partial(_fused_cnn_kernel, H=H, W=W, KH=KH, KW=KW)
    out = pl.pallas_call(
        kernel,
        out_shape=jax.ShapeDtypeStruct((cps[-1], N * HW), x_nchw.dtype),
        grid=(steps,),
        in_specs=[
            pl.BlockSpec((cps[0], L), lambda n: (0, n)),
            pl.BlockSpec(m1.shape, lambda n: (0, 0)),
            pl.BlockSpec(m2.shape, lambda n: (0, 0)),
            pl.BlockSpec(w1.shape, lambda n: (0, 0)),
            pl.BlockSpec(b1.shape, lambda n: (0, 0)),
            pl.BlockSpec(w2.shape, lambda n: (0, 0)),
            pl.BlockSpec(b2.shape, lambda n: (0, 0)),
            pl.BlockSpec(w3.shape, lambda n: (0, 0)),
            pl.BlockSpec(b3.shape, lambda n: (0, 0)),
        ],
        out_specs=pl.BlockSpec((cps[-1], L), lambda n: (0, n)),
        scratch_shapes=[pltpu.VMEM((k_max, L), jnp.float32)],
        compiler_params=pltpu.CompilerParams(
            dimension_semantics=("parallel",)),
        cost_estimate=pl.CostEstimate(
            flops=flops, transcendentals=0, bytes_accessed=bytes_acc),
    )(x_pad, m1, m2, w1, b1, w2, b2, w3, b3)

    out = out[:c_out].reshape(c_out, N, HW).transpose(1, 0, 2)   # slice pads, un-batch lanes
    return out.reshape(N, c_out, H, W)                           # -> NCHW


def init_cnn_params(key, in_channels, kernel_size=5):
    """Deterministic init matching CNN.__init__ shapes (Conv2d-style bounds), HWIO."""
    channels = [in_channels, 21, 20, 3]
    params = []
    for i in range(3):
        cin, cout = channels[i], channels[i + 1]
        key, wk, bk = jax.random.split(key, 3)
        fan_in = cin * kernel_size * kernel_size
        bound = 1.0 / float(fan_in) ** 0.5
        w = jax.random.uniform(
            wk, (kernel_size, kernel_size, cin, cout), jnp.float32, -bound, bound)
        b = jax.random.uniform(bk, (cout,), jnp.float32, -bound, bound)
        params.append((w, b))
    return params


def _reference_forward(x_nchw, params):
    """Pure-JAX reference (lax conv) for a correctness check."""
    x = x_nchw
    for w, b in params:
        x = jax.lax.conv_general_dilated(
            x, jnp.transpose(w, (3, 2, 0, 1)), (1, 1), "SAME",
            dimension_numbers=("NCHW", "OIHW", "NCHW"),
        ) + b[None, :, None, None]
    return x


if __name__ == "__main__":
    key = jax.random.PRNGKey(0)
    key, xk = jax.random.split(key)

    # Small shapes consistent with the module: batch=2, in_channels=4, H=W=16.
    x = jax.random.normal(xk, (2, 4, 16, 16), jnp.float32)
    params = init_cnn_params(key, in_channels=4, kernel_size=5)

    out = jax.block_until_ready(cnn_forward(x, params))
    assert out.shape == (2, 3, 16, 16), out.shape

    ref = jax.block_until_ready(_reference_forward(x, params))
    assert jnp.allclose(out, ref, atol=1e-3, rtol=1e-3), "mismatch vs lax reference"

    print("KERNEL_OK")
</pallas_src>

<mosaic_0001>
module attributes {stable_mosaic.version = 11 : i64} {
  func.func @_fused_cnn_kernel(%arg0: i32, %arg1: memref<8x512xf32, #tpu.memory_space<vmem>>, %arg2: memref<200x512xf32, #tpu.memory_space<vmem>>, %arg3: memref<600x512xf32, #tpu.memory_space<vmem>>, %arg4: memref<24x200xf32, #tpu.memory_space<vmem>>, %arg5: memref<24x1xf32, #tpu.memory_space<vmem>>, %arg6: memref<24x600xf32, #tpu.memory_space<vmem>>, %arg7: memref<24x1xf32, #tpu.memory_space<vmem>>, %arg8: memref<8x600xf32, #tpu.memory_space<vmem>>, %arg9: memref<8x1xf32, #tpu.memory_space<vmem>>, %arg10: memref<8x512xf32, #tpu.memory_space<vmem>>, %arg11: memref<600x512xf32, #tpu.memory_space<vmem>>) attributes {dimension_semantics = [#tpu.dimension_semantics<parallel>], iteration_bounds = array<i64: 1>, scalar_prefetch = 0 : i64, scratch_operands = 1 : i64, tpu.core_type = #tpu.core_type<tc>, window_params = [{transform_indices = @transform_0, window_bounds = array<i64: 8, 512>}, {pipeline_mode = #tpu.pipeline_mode<synchronous>, transform_indices = @transform_1, window_bounds = array<i64: 200, 512>}, {pipeline_mode = #tpu.pipeline_mode<synchronous>, transform_indices = @transform_2, window_bounds = array<i64: 600, 512>}, {pipeline_mode = #tpu.pipeline_mode<synchronous>, transform_indices = @transform_3, window_bounds = array<i64: 24, 200>}, {pipeline_mode = #tpu.pipeline_mode<synchronous>, transform_indices = @transform_4, window_bounds = array<i64: 24, 1>}, {pipeline_mode = #tpu.pipeline_mode<synchronous>, transform_indices = @transform_5, window_bounds = array<i64: 24, 600>}, {pipeline_mode = #tpu.pipeline_mode<synchronous>, transform_indices = @transform_6, window_bounds = array<i64: 24, 1>}, {pipeline_mode = #tpu.pipeline_mode<synchronous>, transform_indices = @transform_7, window_bounds = array<i64: 8, 600>}, {pipeline_mode = #tpu.pipeline_mode<synchronous>, transform_indices = @transform_8, window_bounds = array<i64: 8, 1>}, {transform_indices = @transform_9, window_bounds = array<i64: 8, 512>}]} {
    %c0 = arith.constant 0 : index
    %c0_0 = arith.constant 0 : index
    %0 = vector.load %arg1[%c0, %c0_0] : memref<8x512xf32, #tpu.memory_space<vmem>>, vector<8x512xf32>
    %c34_i32 = arith.constant 34 : i32
    %1 = tpu.dynamic_rotate %0 by %c34_i32 dim 1 : vector<8x512xf32>, i32 -> vector<8x512xf32>
    %c0_1 = arith.constant 0 : index
    %c0_2 = arith.constant 0 : index
    %2 = vector.load %arg11[%c0_1, %c0_2] : memref<600x512xf32, #tpu.memory_space<vmem>>, vector<8x512xf32>
    tpu.vector_store %arg11[%c0_1, %c0_2], %1 {strides = array<i32>} : memref<600x512xf32, #tpu.memory_space<vmem>>, vector<8x512xf32>,
    %c33_i32 = arith.constant 33 : i32
    %3 = tpu.dynamic_rotate %0 by %c33_i32 dim 1 : vector<8x512xf32>, i32 -> vector<8x512xf32>
    %c8 = arith.constant 8 : index
    %c0_3 = arith.constant 0 : index
    %4 = vector.load %arg11[%c8, %c0_3] : memref<600x512xf32, #tpu.memory_space<vmem>>, vector<8x512xf32>
    tpu.vector_store %arg11[%c8, %c0_3], %3 {strides = array<i32>} : memref<600x512xf32, #tpu.memory_space<vmem>>, vector<8x512xf32>,
    %c32_i32 = arith.constant 32 : i32
    %5 = tpu.dynamic_rotate %0 by %c32_i32 dim 1 : vector<8x512xf32>, i32 -> vector<8x512xf32>
    %c16 = arith.constant 16 : index
    %c0_4 = arith.constant 0 : index
    %6 = vector.load %arg11[%c16, %c0_4] : memref<600x512xf32, #tpu.memory_space<vmem>>, vector<8x512xf32>
    tpu.vector_store %arg11[%c16, %c0_4], %5 {strides = array<i32>} : memref<600x512xf32, #tpu.memory_space<vmem>>, vector<8x512xf32>,
    %c31_i32 = arith.constant 31 : i32
    %7 = tpu.dynamic_rotate %0 by %c31_i32 dim 1 : vector<8x512xf32>, i32 -> vector<8x512xf32>
    %c24 = arith.constant 24 : index
    %c0_5 = arith.constant 0 : index
    %8 = vector.load %arg11[%c24, %c0_5] : memref<600x512xf32, #tpu.memory_space<vmem>>, vector<8x512xf32>
    tpu.vector_store %arg11[%c24, %c0_5], %7 {strides = array<i32>} : memref<600x512xf32, #tpu.memory_space<vmem>>, vector<8x512xf32>,
    %c30_i32 = arith.constant 30 : i32
    %9 = tpu.dynamic_rotate %0 by %c30_i32 dim 1 : vector<8x512xf32>, i32 -> vector<8x512xf32>
    %c32 = arith.constant 32 : index
    %c0_6 = arith.constant 0 : index
    %10 = vector.load %arg11[%c32, %c0_6] : memref<600x512xf32, #tpu.memory_space<vmem>>, vector<8x512xf32>
    tpu.vector_store %arg11[%c32, %c0_6], %9 {strides = array<i32>} : memref<600x512xf32, #tpu.memory_space<vmem>>, vector<8x512xf32>,
    %c18_i32 = arith.constant 18 : i32
    %11 = tpu.dynamic_rotate %0 by %c18_i32 dim 1 : vector<8x512xf32>, i32 -> vector<8x512xf32>
    %c40 = arith.constant 40 : index
    %c0_7 = arith.constant 0 : index
    %12 = vector.load %arg11[%c40, %c0_7] : memref<600x512xf32, #tpu.memory_space<vmem>>, vector<8x512xf32>
    tpu.vector_store %arg11[%c40, %c0_7], %11 {strides = array<i32>} : memref<600x512xf32, #tpu.memory_space<vmem>>, vector<8x512xf32>,
    %c17_i32 = arith.constant 17 : i32
    %13 = tpu.dynamic_rotate %0 by %c17_i32 dim 1 : vector<8x512xf32>, i32 -> vector<8x512xf32>
    %c48 = arith.constant 48 : index
    %c0_8 = arith.constant 0 : index
    %14 = vector.load %arg11[%c48, %c0_8] : memref<600x512xf32, #tpu.memory_space<vmem>>, vector<8x512xf32>
    tpu.vector_store %arg11[%c48, %c0_8], %13 {strides = array<i32>} : memref<600x512xf32, #tpu.memory_space<vmem>>, vector<8x512xf32>,
    %c16_i32 = arith.constant 16 : i32
    %15 = tpu.dynamic_rotate %0 by %c16_i32 dim 1 : vector<8x512xf32>, i32 -> vector<8x512xf32>
    %c56 = arith.constant 56 : index
    %c0_9 = arith.constant 0 : index
    %16 = vector.load %arg11[%c56, %c0_9] : memref<600x512xf32, #tpu.memory_space<vmem>>, vector<8x512xf32>
    tpu.vector_store %arg11[%c56, %c0_9], %15 {strides = array<i32>} : memref<600x512xf32, #tpu.memory_space<vmem>>, vector<8x512xf32>,
    %c15_i32 = arith.constant 15 : i32
    %17 = tpu.dynamic_rotate %0 by %c15_i32 dim 1 : vector<8x512xf32>, i32 -> vector<8x512xf32>
    %c64 = arith.constant 64 : index
    %c0_10 = arith.constant 0 : index
    %18 = vector.load %arg11[%c64, %c0_10] : memref<600x512xf32, #tpu.memory_space<vmem>>, vector<8x512xf32>
    tpu.vector_store %arg11[%c64, %c0_10], %17 {strides = array<i32>} : memref<600x512xf32, #tpu.memory_space<vmem>>, vector<8x512xf32>,
    %c14_i32 = arith.constant 14 : i32
    %19 = tpu.dynamic_rotate %0 by %c14_i32 dim 1 : vector<8x512xf32>, i32 -> vector<8x512xf32>
    %c72 = arith.constant 72 : index
    %c0_11 = arith.constant 0 : index
    %20 = vector.load %arg11[%c72, %c0_11] : memref<600x512xf32, #tpu.memory_space<vmem>>, vector<8x512xf32>
    tpu.vector_store %arg11[%c72, %c0_11], %19 {strides = array<i32>} : memref<600x512xf32, #tpu.memory_space<vmem>>, vector<8x512xf32>,
    %c2_i32 = arith.constant 2 : i32
    %21 = tpu.dynamic_rotate %0 by %c2_i32 dim 1 : vector<8x512xf32>, i32 -> vector<8x512xf32>
    %c80 = arith.constant 80 : index
    %c0_12 = arith.constant 0 : index
    %22 = vector.load %arg11[%c80, %c0_12] : memref<600x512xf32, #tpu.memory_space<vmem>>, vector<8x512xf32>
    tpu.vector_store %arg11[%c80, %c0_12], %21 {strides = array<i32>} : memref<600x512xf32, #tpu.memory_space<vmem>>, vector<8x512xf32>,
    %c1_i32 = arith.constant 1 : i32
    %23 = tpu.dynamic_rotate %0 by %c1_i32 dim 1 : vector<8x512xf32>, i32 -> vector<8x512xf32>
    %c88 = arith.constant 88 : index
    %c0_13 = arith.constant 0 : index
    %24 = vector.load %arg11[%c88, %c0_13] : memref<600x512xf32, #tpu.memory_space<vmem>>, vector<8x512xf32>
    tpu.vector_store %arg11[%c88, %c0_13], %23 {strides = array<i32>} : memref<600x512xf32, #tpu.memory_space<vmem>>, vector<8x512xf32>,
    %c96 = arith.constant 96 : index
    %c0_14 = arith.constant 0 : index
    %25 = vector.load %arg11[%c96, %c0_14] : memref<600x512xf32, #tpu.memory_space<vmem>>, vector<8x512xf32>
    tpu.vector_store %arg11[%c96, %c0_14], %0 {strides = array<i32>} : memref<600x512xf32, #tpu.memory_space<vmem>>, vector<8x512xf32>,
    %c511_i32 = arith.constant 511 : i32
    %26 = tpu.dynamic_rotate %0 by %c511_i32 dim 1 : vector<8x512xf32>, i32 -> vector<8x512xf32>
    %c104 = arith.constant 104 : index
    %c0_15 = arith.constant 0 : index
    %27 = vector.load %arg11[%c104, %c0_15] : memref<600x512xf32, #tpu.memory_space<vmem>>, vector<8x512xf32>
    tpu.vector_store %arg11[%c104, %c0_15], %26 {strides = array<i32>} : memref<600x512xf32, #tpu.memory_space<vmem>>, vector<8x512xf32>,
    %c510_i32 = arith.constant 510 : i32
    %28 = tpu.dynamic_rotate %0 by %c510_i32 dim 1 : vector<8x512xf32>, i32 -> vector<8x512xf32>
    %c112 = arith.constant 112 : index
    %c0_16 = arith.constant 0 : index
    %29 = vector.load %arg11[%c112, %c0_16] : memref<600x512xf32, #tpu.memory_space<vmem>>, vector<8x512xf32>
    tpu.vector_store %arg11[%c112, %c0_16], %28 {strides = array<i32>} : memref<600x512xf32, #tpu.memory_space<vmem>>, vector<8x512xf32>,
    %c498_i32 = arith.constant 498 : i32
    %30 = tpu.dynamic_rotate %0 by %c498_i32 dim 1 : vector<8x512xf32>, i32 -> vector<8x512xf32>
    %c120 = arith.constant 120 : index
    %c0_17 = arith.constant 0 : index
    %31 = vector.load %arg11[%c120, %c0_17] : memref<600x512xf32, #tpu.memory_space<vmem>>, vector<8x512xf32>
    tpu.vector_store %arg11[%c120, %c0_17], %30 {strides = array<i32>} : memref<600x512xf32, #tpu.memory_space<vmem>>, vector<8x512xf32>,
    %c497_i32 = arith.constant 497 : i32
    %32 = tpu.dynamic_rotate %0 by %c497_i32 dim 1 : vector<8x512xf32>, i32 -> vector<8x512xf32>
    %c128 = arith.constant 128 : index
    %c0_18 = arith.constant 0 : index
    %33 = vector.load %arg11[%c128, %c0_18] : memref<600x512xf32, #tpu.memory_space<vmem>>, vector<8x512xf32>
    tpu.vector_store %arg11[%c128, %c0_18], %32 {strides = array<i32>} : memref<600x512xf32, #tpu.memory_space<vmem>>, vector<8x512xf32>,
    %c496_i32 = arith.constant 496 : i32
    %34 = tpu.dynamic_rotate %0 by %c496_i32 dim 1 : vector<8x512xf32>, i32 -> vector<8x512xf32>
    %c136 = arith.constant 136 : index
    %c0_19 = arith.constant 0 : index
    %35 = vector.load %arg11[%c136, %c0_19] : memref<600x512xf32, #tpu.memory_space<vmem>>, vector<8x512xf32>
    tpu.vector_store %arg11[%c136, %c0_19], %34 {strides = array<i32>} : memref<600x512xf32, #tpu.memory_space<vmem>>, vector<8x512xf32>,
    %c495_i32 = arith.constant 495 : i32
    %36 = tpu.dynamic_rotate %0 by %c495_i32 dim 1 : vector<8x512xf32>, i32 -> vector<8x512xf32>
    %c144 = arith.constant 144 : index
    %c0_20 = arith.constant 0 : index
    %37 = vector.load %arg11[%c144, %c0_20] : memref<600x512xf32, #tpu.memory_space<vmem>>, vector<8x512xf32>
    tpu.vector_store %arg11[%c144, %c0_20], %36 {strides = array<i32>} : memref<600x512xf32, #tpu.memory_space<vmem>>, vector<8x512xf32>,
    %c494_i32 = arith.constant 494 : i32
    %38 = tpu.dynamic_rotate %0 by %c494_i32 dim 1 : vector<8x512xf32>, i32 -> vector<8x512xf32>
    %c152 = arith.constant 152 : index
    %c0_21 = arith.constant 0 : index
    %39 = vector.load %arg11[%c152, %c0_21] : memref<600x512xf32, #tpu.memory_space<vmem>>, vector<8x512xf32>
    tpu.vector_store %arg11[%c152, %c0_21], %38 {strides = array<i32>} : memref<600x512xf32, #tpu.memory_space<vmem>>, vector<8x512xf32>,
    %c482_i32 = arith.constant 482 : i32
    %40 = tpu.dynamic_rotate %0 by %c482_i32 dim 1 : vector<8x512xf32>, i32 -> vector<8x512xf32>
    %c160 = arith.constant 160 : index
    %c0_22 = arith.constant 0 : index
    %41 = vector.load %arg11[%c160, %c0_22] : memref<600x512xf32, #tpu.memory_space<vmem>>, vector<8x512xf32>
    tpu.vector_store %arg11[%c160, %c0_22], %40 {strides = array<i32>} : memref<600x512xf32, #tpu.memory_space<vmem>>, vector<8x512xf32>,
    %c481_i32 = arith.constant 481 : i32
    %42 = tpu.dynamic_rotate %0 by %c481_i32 dim 1 : vector<8x512xf32>, i32 -> vector<8x512xf32>
    %c168 = arith.constant 168 : index
    %c0_23 = arith.constant 0 : index
    %43 = vector.load %arg11[%c168, %c0_23] : memref<600x512xf32, #tpu.memory_space<vmem>>, vector<8x512xf32>
    tpu.vector_store %arg11[%c168, %c0_23], %42 {strides = array<i32>} : memref<600x512xf32, #tpu.memory_space<vmem>>, vector<8x512xf32>,
    %c480_i32 = arith.constant 480 : i32
    %44 = tpu.dynamic_rotate %0 by %c480_i32 dim 1 : vector<8x512xf32>, i32 -> vector<8x512xf32>
    %c176 = arith.constant 176 : index
    %c0_24 = arith.constant 0 : index
    %45 = vector.load %arg11[%c176, %c0_24] : memref<600x512xf32, #tpu.memory_space<vmem>>, vector<8x512xf32>
    tpu.vector_store %arg11[%c176, %c0_24], %44 {strides = array<i32>} : memref<600x512xf32, #tpu.memory_space<vmem>>, vector<8x512xf32>,
    %c479_i32 = arith.constant 479 : i32
    %46 = tpu.dynamic_rotate %0 by %c479_i32 dim 1 : vector<8x512xf32>, i32 -> vector<8x512xf32>
    %c184 = arith.constant 184 : index
    %c0_25 = arith.constant 0 : index
    %47 = vector.load %arg11[%c184, %c0_25] : memref<600x512xf32, #tpu.memory_space<vmem>>, vector<8x512xf32>
    tpu.vector_store %arg11[%c184, %c0_25], %46 {strides = array<i32>} : memref<600x512xf32, #tpu.memory_space<vmem>>, vector<8x512xf32>,
    %c478_i32 = arith.constant 478 : i32
    %48 = tpu.dynamic_rotate %0 by %c478_i32 dim 1 : vector<8x512xf32>, i32 -> vector<8x512xf32>
    %c192 = arith.constant 192 : index
    %c0_26 = arith.constant 0 : index
    %49 = vector.load %arg11[%c192, %c0_26] : memref<600x512xf32, #tpu.memory_space<vmem>>, vector<8x512xf32>
    tpu.vector_store %arg11[%c192, %c0_26], %48 {strides = array<i32>} : memref<600x512xf32, #tpu.memory_space<vmem>>, vector<8x512xf32>,
    %c0_27 = arith.constant 0 : index
    %c0_28 = arith.constant 0 : index
    %50 = vector.load %arg11[%c0_27, %c0_28] : memref<600x512xf32, #tpu.memory_space<vmem>>, vector<200x512xf32>
    %c0_29 = arith.constant 0 : index
    %c0_30 = arith.constant 0 : index
    %51 = vector.load %arg2[%c0_29, %c0_30] : memref<200x512xf32, #tpu.memory_space<vmem>>, vector<200x512xf32>
    %52 = arith.mulf %50, %51 : vector<200x512xf32>
    %c0_31 = arith.constant 0 : index
    %c0_32 = arith.constant 0 : index
    %53 = vector.load %arg4[%c0_31, %c0_32] : memref<24x200xf32, #tpu.memory_space<vmem>>, vector<24x200xf32>
    %cst = arith.constant dense<0.000000e+00> : vector<24x512xf32>
    %54 = tpu.matmul %53, %52, %cst {dimension_numbers = #tpu.dot_dimension_numbers<[1], [0], [0], [1], [0, 0, 1, 1], [], []>} : vector<24x200xf32>, vector<200x512xf32>, vector<24x512xf32> -> vector<24x512xf32>
    %c0_33 = arith.constant 0 : index
    %c0_34 = arith.constant 0 : index
    %55 = vector.load %arg5[%c0_33, %c0_34] : memref<24x1xf32, #tpu.memory_space<vmem>>, vector<24x1xf32>
    %56 = vector.broadcast %55 : vector<24x1xf32> to vector<24x512xf32>
    %57 = arith.addf %54, %56 : vector<24x512xf32>
    %c34_i32_35 = arith.constant 34 : i32
    %58 = tpu.dynamic_rotate %57 by %c34_i32_35 dim 1 : vector<24x512xf32>, i32 -> vector<24x512xf32>
    %c0_36 = arith.constant 0 : index
    %c0_37 = arith.constant 0 : index
    %59 = vector.load %arg11[%c0_36, %c0_37] : memref<600x512xf32, #tpu.memory_space<vmem>>, vector<24x512xf32>
    tpu.vector_store %arg11[%c0_36, %c0_37], %58 {strides = array<i32>} : memref<600x512xf32, #tpu.memory_space<vmem>>, vector<24x512xf32>,
    %c33_i32_38 = arith.constant 33 : i32
    %60 = tpu.dynamic_rotate %57 by %c33_i32_38 dim 1 : vector<24x512xf32>, i32 -> vector<24x512xf32>
    %c24_39 = arith.constant 24 : index
    %c0_40 = arith.constant 0 : index
    %61 = vector.load %arg11[%c24_39, %c0_40] : memref<600x512xf32, #tpu.memory_space<vmem>>, vector<24x512xf32>
    tpu.vector_store %arg11[%c24_39, %c0_40], %60 {strides = array<i32>} : memref<600x512xf32, #tpu.memory_space<vmem>>, vector<24x512xf32>,
    %c32_i32_41 = arith.constant 32 : i32
    %62 = tpu.dynamic_rotate %57 by %c32_i32_41 dim 1 : vector<24x512xf32>, i32 -> vector<24x512xf32>
    %c48_42 = arith.constant 48 : index
    %c0_43 = arith.constant 0 : index
    %63 = vector.load %arg11[%c48_42, %c0_43] : memref<600x512xf32, #tpu.memory_space<vmem>>, vector<24x512xf32>
    tpu.vector_store %arg11[%c48_42, %c0_43], %62 {strides = array<i32>} : memref<600x512xf32, #tpu.memory_space<vmem>>, vector<24x512xf32>,
    %c31_i32_44 = arith.constant 31 : i32
    %64 = tpu.dynamic_rotate %57 by %c31_i32_44 dim 1 : vector<24x512xf32>, i32 -> vector<24x512xf32>
    %c72_45 = arith.constant 72 : index
    %c0_46 = arith.constant 0 : index
    %65 = vector.load %arg11[%c72_45, %c0_46] : memref<600x512xf32, #tpu.memory_space<vmem>>, vector<24x512xf32>
    tpu.vector_store %arg11[%c72_45, %c0_46], %64 {strides = array<i32>} : memref<600x512xf32, #tpu.memory_space<vmem>>, vector<24x512xf32>,
    %c30_i32_47 = arith.constant 30 : i32
    %66 = tpu.dynamic_rotate %57 by %c30_i32_47 dim 1 : vector<24x512xf32>, i32 -> vector<24x512xf32>
    %c96_48 = arith.constant 96 : index
    %c0_49 = arith.constant 0 : index
    %67 = vector.load %arg11[%c96_48, %c0_49] : memref<600x512xf32, #tpu.memory_space<vmem>>, vector<24x512xf32>
    tpu.vector_store %arg11[%c96_48, %c0_49], %66 {strides = array<i32>} : memref<600x512xf32, #tpu.memory_space<vmem>>, vector<24x512xf32>,
    %c18_i32_50 = arith.constant 18 : i32
    %68 = tpu.dynamic_rotate %57 by %c18_i32_50 dim 1 : vector<24x512xf32>, i32 -> vector<24x512xf32>
    %c120_51 = arith.constant 120 : index
    %c0_52 = arith.constant 0 : index
    %69 = vector.load %arg11[%c120_51, %c0_52] : memref<600x512xf32, #tpu.memory_space<vmem>>, vector<24x512xf32>
    tpu.vector_store %arg11[%c120_51, %c0_52], %68 {strides = array<i32>} : memref<600x512xf32, #tpu.memory_space<vmem>>, vector<24x512xf32>,
    %c17_i32_53 = arith.constant 17 : i32
    %70 = tpu.dynamic_rotate %57 by %c17_i32_53 dim 1 : vector<24x512xf32>, i32 -> vector<24x512xf32>
    %c144_54 = arith.constant 144 : index
    %c0_55 = arith.constant 0 : index
    %71 = vector.load %arg11[%c144_54, %c0_55] : memref<600x512xf32, #tpu.memory_space<vmem>>, vector<24x512xf32>
    tpu.vector_store %arg11[%c144_54, %c0_55], %70 {strides = array<i32>} : memref<600x512xf32, #tpu.memory_space<vmem>>, vector<24x512xf32>,
    %c16_i32_56 = arith.constant 16 : i32
    %72 = tpu.dynamic_rotate %57 by %c16_i32_56 dim 1 : vector<24x512xf32>, i32 -> vector<24x512xf32>
    %c168_57 = arith.constant 168 : index
    %c0_58 = arith.constant 0 : index
    %73 = vector.load %arg11[%c168_57, %c0_58] : memref<600x512xf32, #tpu.memory_space<vmem>>, vector<24x512xf32>
    tpu.vector_store %arg11[%c168_57, %c0_58], %72 {strides = array<i32>} : memref<600x512xf32, #tpu.memory_space<vmem>>, vector<24x512xf32>,
    %c15_i32_59 = arith.constant 15 : i32
    %74 = tpu.dynamic_rotate %57 by %c15_i32_59 dim 1 : vector<24x512xf32>, i32 -> vector<24x512xf32>
    %c192_60 = arith.constant 192 : index
    %c0_61 = arith.constant 0 : index
    %75 = vector.load %arg11[%c192_60, %c0_61] : memref<600x512xf32, #tpu.memory_space<vmem>>, vector<24x512xf32>
    tpu.vector_store %arg11[%c192_60, %c0_61], %74 {strides = array<i32>} : memref<600x512xf32, #tpu.memory_space<vmem>>, vector<24x512xf32>,
    %c14_i32_62 = arith.constant 14 : i32
    %76 = tpu.dynamic_rotate %57 by %c14_i32_62 dim 1 : vector<24x512xf32>, i32 -> vector<24x512xf32>
    %c216 = arith.constant 216 : index
    %c0_63 = arith.constant 0 : index
    %77 = vector.load %arg11[%c216, %c0_63] : memref<600x512xf32, #tpu.memory_space<vmem>>, vector<24x512xf32>
    tpu.vector_store %arg11[%c216, %c0_63], %76 {strides = array<i32>} : memref<600x512xf32, #tpu.memory_space<vmem>>, vector<24x512xf32>,
    %c2_i32_64 = arith.constant 2 : i32
    %78 = tpu.dynamic_rotate %57 by %c2_i32_64 dim 1 : vector<24x512xf32>, i32 -> vector<24x512xf32>
    %c240 = arith.constant 240 : index
    %c0_65 = arith.constant 0 : index
    %79 = vector.load %arg11[%c240, %c0_65] : memref<600x512xf32, #tpu.memory_space<vmem>>, vector<24x512xf32>
    tpu.vector_store %arg11[%c240, %c0_65], %78 {strides = array<i32>} : memref<600x512xf32, #tpu.memory_space<vmem>>, vector<24x512xf32>,
    %c1_i32_66 = arith.constant 1 : i32
    %80 = tpu.dynamic_rotate %57 by %c1_i32_66 dim 1 : vector<24x512xf32>, i32 -> vector<24x512xf32>
    %c264 = arith.constant 264 : index
    %c0_67 = arith.constant 0 : index
    %81 = vector.load %arg11[%c264, %c0_67] : memref<600x512xf32, #tpu.memory_space<vmem>>, vector<24x512xf32>
    tpu.vector_store %arg11[%c264, %c0_67], %80 {strides = array<i32>} : memref<600x512xf32, #tpu.memory_space<vmem>>, vector<24x512xf32>,
    %c288 = arith.constant 288 : index
    %c0_68 = arith.constant 0 : index
    %82 = vector.load %arg11[%c288, %c0_68] : memref<600x512xf32, #tpu.memory_space<vmem>>, vector<24x512xf32>
    tpu.vector_store %arg11[%c288, %c0_68], %57 {strides = array<i32>} : memref<600x512xf32, #tpu.memory_space<vmem>>, vector<24x512xf32>,
    %c511_i32_69 = arith.constant 511 : i32
    %83 = tpu.dynamic_rotate %57 by %c511_i32_69 dim 1 : vector<24x512xf32>, i32 -> vector<24x512xf32>
    %c312 = arith.constant 312 : index
    %c0_70 = arith.constant 0 : index
    %84 = vector.load %arg11[%c312, %c0_70] : memref<600x512xf32, #tpu.memory_space<vmem>>, vector<24x512xf32>
    tpu.vector_store %arg11[%c312, %c0_70], %83 {strides = array<i32>} : memref<600x512xf32, #tpu.memory_space<vmem>>, vector<24x512xf32>,
    %c510_i32_71 = arith.constant 510 : i32
    %85 = tpu.dynamic_rotate %57 by %c510_i32_71 dim 1 : vector<24x512xf32>, i32 -> vector<24x512xf32>
    %c336 = arith.constant 336 : index
    %c0_72 = arith.constant 0 : index
    %86 = vector.load %arg11[%c336, %c0_72] : memref<600x512xf32, #tpu.memory_space<vmem>>, vector<24x512xf32>
    tpu.vector_store %arg11[%c336, %c0_72], %85 {strides = array<i32>} : memref<600x512xf32, #tpu.memory_space<vmem>>, vector<24x512xf32>,
    %c498_i32_73 = arith.constant 498 : i32
    %87 = tpu.dynamic_rotate %57 by %c498_i32_73 dim 1 : vector<24x512xf32>, i32 -> vector<24x512xf32>
    %c360 = arith.constant 360 : index
    %c0_74 = arith.constant 0 : index
    %88 = vector.load %arg11[%c360, %c0_74] : memref<600x512xf32, #tpu.memory_space<vmem>>, vector<24x512xf32>
    tpu.vector_store %arg11[%c360, %c0_74], %87 {strides = array<i32>} : memref<600x512xf32, #tpu.memory_space<vmem>>, vector<24x512xf32>,
    %c497_i32_75 = arith.constant 497 : i32
    %89 = tpu.dynamic_rotate %57 by %c497_i32_75 dim 1 : vector<24x512xf32>, i32 -> vector<24x512xf32>
    %c384 = arith.constant 384 : index
    %c0_76 = arith.constant 0 : index
    %90 = vector.load %arg11[%c384, %c0_76] : memref<600x512xf32, #tpu.memory_space<vmem>>, vector<24x512xf32>
    tpu.vector_store %arg11[%c384, %c0_76], %89 {strides = array<i32>} : memref<600x512xf32, #tpu.memory_space<vmem>>, vector<24x512xf32>,
    %c496_i32_77 = arith.constant 496 : i32
    %91 = tpu.dynamic_rotate %57 by %c496_i32_77 dim 1 : vector<24x512xf32>, i32 -> vector<24x512xf32>
    %c408 = arith.constant 408 : index
    %c0_78 = arith.constant 0 : index
    %92 = vector.load %arg11[%c408, %c0_78] : memref<600x512xf32, #tpu.memory_space<vmem>>, vector<24x512xf32>
    tpu.vector_store %arg11[%c408, %c0_78], %91 {strides = array<i32>} : memref<600x512xf32, #tpu.memory_space<vmem>>, vector<24x512xf32>,
    %c495_i32_79 = arith.constant 495 : i32
    %93 = tpu.dynamic_rotate %57 by %c495_i32_79 dim 1 : vector<24x512xf32>, i32 -> vector<24x512xf32>
    %c432 = arith.constant 432 : index
    %c0_80 = arith.constant 0 : index
    %94 = vector.load %arg11[%c432, %c0_80] : memref<600x512xf32, #tpu.memory_space<vmem>>, vector<24x512xf32>
    tpu.vector_store %arg11[%c432, %c0_80], %93 {strides = array<i32>} : memref<600x512xf32, #tpu.memory_space<vmem>>, vector<24x512xf32>,
    %c494_i32_81 = arith.constant 494 : i32
    %95 = tpu.dynamic_rotate %57 by %c494_i32_81 dim 1 : vector<24x512xf32>, i32 -> vector<24x512xf32>
    %c456 = arith.constant 456 : index
    %c0_82 = arith.constant 0 : index
    %96 = vector.load %arg11[%c456, %c0_82] : memref<600x512xf32, #tpu.memory_space<vmem>>, vector<24x512xf32>
    tpu.vector_store %arg11[%c456, %c0_82], %95 {strides = array<i32>} : memref<600x512xf32, #tpu.memory_space<vmem>>, vector<24x512xf32>,
    %c482_i32_83 = arith.constant 482 : i32
    %97 = tpu.dynamic_rotate %57 by %c482_i32_83 dim 1 : vector<24x512xf32>, i32 -> vector<24x512xf32>
    %c480 = arith.constant 480 : index
    %c0_84 = arith.constant 0 : index
    %98 = vector.load %arg11[%c480, %c0_84] : memref<600x512xf32, #tpu.memory_space<vmem>>, vector<24x512xf32>
    tpu.vector_store %arg11[%c480, %c0_84], %97 {strides = array<i32>} : memref<600x512xf32, #tpu.memory_space<vmem>>, vector<24x512xf32>,
    %c481_i32_85 = arith.constant 481 : i32
    %99 = tpu.dynamic_rotate %57 by %c481_i32_85 dim 1 : vector<24x512xf32>, i32 -> vector<24x512xf32>
    %c504 = arith.constant 504 : index
    %c0_86 = arith.constant 0 : index
    %100 = vector.load %arg11[%c504, %c0_86] : memref<600x512xf32, #tpu.memory_space<vmem>>, vector<24x512xf32>
    tpu.vector_store %arg11[%c504, %c0_86], %99 {strides = array<i32>} : memref<600x512xf32, #tpu.memory_space<vmem>>, vector<24x512xf32>,
    %c480_i32_87 = arith.constant 480 : i32
    %101 = tpu.dynamic_rotate %57 by %c480_i32_87 dim 1 : vector<24x512xf32>, i32 -> vector<24x512xf32>
    %c528 = arith.constant 528 : index
    %c0_88 = arith.constant 0 : index
    %102 = vector.load %arg11[%c528, %c0_88] : memref<600x512xf32, #tpu.memory_space<vmem>>, vector<24x512xf32>
    tpu.vector_store %arg11[%c528, %c0_88], %101 {strides = array<i32>} : memref<600x512xf32, #tpu.memory_space<vmem>>, vector<24x512xf32>,
    %c479_i32_89 = arith.constant 479 : i32
    %103 = tpu.dynamic_rotate %57 by %c479_i32_89 dim 1 : vector<24x512xf32>, i32 -> vector<24x512xf32>
    %c552 = arith.constant 552 : index
    %c0_90 = arith.constant 0 : index
    %104 = vector.load %arg11[%c552, %c0_90] : memref<600x512xf32, #tpu.memory_space<vmem>>, vector<24x512xf32>
    tpu.vector_store %arg11[%c552, %c0_90], %103 {strides = array<i32>} : memref<600x512xf32, #tpu.memory_space<vmem>>, vector<24x512xf32>,
    %c478_i32_91 = arith.constant 478 : i32
    %105 = tpu.dynamic_rotate %57 by %c478_i32_91 dim 1 : vector<24x512xf32>, i32 -> vector<24x512xf32>
    %c576 = arith.constant 576 : index
    %c0_92 = arith.constant 0 : index
    %106 = vector.load %arg11[%c576, %c0_92] : memref<600x512xf32, #tpu.memory_space<vmem>>, vector<24x512xf32>
    tpu.vector_store %arg11[%c576, %c0_92], %105 {strides = array<i32>} : memref<600x512xf32, #tpu.memory_space<vmem>>, vector<24x512xf32>,
    %c0_93 = arith.constant 0 : index
    %c0_94 = arith.constant 0 : index
    %107 = vector.load %arg11[%c0_93, %c0_94] : memref<600x512xf32, #tpu.memory_space<vmem>>, vector<600x512xf32>
    %c0_95 = arith.constant 0 : index
    %c0_96 = arith.constant 0 : index
    %108 = vector.load %arg3[%c0_95, %c0_96] : memref<600x512xf32, #tpu.memory_space<vmem>>, vector<600x512xf32>
    %109 = arith.mulf %107, %108 : vector<600x512xf32>
    %c0_97 = arith.constant 0 : index
    %c0_98 = arith.constant 0 : index
    %110 = vector.load %arg6[%c0_97, %c0_98] : memref<24x600xf32, #tpu.memory_space<vmem>>, vector<24x600xf32>
    %cst_99 = arith.constant dense<0.000000e+00> : vector<24x512xf32>
    %111 = tpu.matmul %110, %109, %cst_99 {dimension_numbers = #tpu.dot_dimension_numbers<[1], [0], [0], [1], [0, 0, 1, 1], [], []>} : vector<24x600xf32>, vector<600x512xf32>, vector<24x512xf32> -> vector<24x512xf32>
    %c0_100 = arith.constant 0 : index
    %c0_101 = arith.constant 0 : index
    %112 = vector.load %arg7[%c0_100, %c0_101] : memref<24x1xf32, #tpu.memory_space<vmem>>, vector<24x1xf32>
    %113 = vector.broadcast %112 : vector<24x1xf32> to vector<24x512xf32>
    %114 = arith.addf %111, %113 : vector<24x512xf32>
    %c34_i32_102 = arith.constant 34 : i32
    %115 = tpu.dynamic_rotate %114 by %c34_i32_102 dim 1 : vector<24x512xf32>, i32 -> vector<24x512xf32>
    %c0_103 = arith.constant 0 : index
    %c0_104 = arith.constant 0 : index
    %116 = vector.load %arg11[%c0_103, %c0_104] : memref<600x512xf32, #tpu.memory_space<vmem>>, vector<24x512xf32>
    tpu.vector_store %arg11[%c0_103, %c0_104], %115 {strides = array<i32>} : memref<600x512xf32, #tpu.memory_space<vmem>>, vector<24x512xf32>,
    %c33_i32_105 = arith.constant 33 : i32
    %117 = tpu.dynamic_rotate %114 by %c33_i32_105 dim 1 : vector<24x512xf32>, i32 -> vector<24x512xf32>
    %c24_106 = arith.constant 24 : index
    %c0_107 = arith.constant 0 : index
    %118 = vector.load %arg11[%c24_106, %c0_107] : memref<600x512xf32, #tpu.memory_space<vmem>>, vector<24x512xf32>
    tpu.vector_store %arg11[%c24_106, %c0_107], %117 {strides = array<i32>} : memref<600x512xf32, #tpu.memory_space<vmem>>, vector<24x512xf32>,
    %c32_i32_108 = arith.constant 32 : i32
    %119 = tpu.dynamic_rotate %114 by %c32_i32_108 dim 1 : vector<24x512xf32>, i32 -> vector<24x512xf32>
    %c48_109 = arith.constant 48 : index
    %c0_110 = arith.constant 0 : index
    %120 = vector.load %arg11[%c48_109, %c0_110] : memref<600x512xf32, #tpu.memory_space<vmem>>, vector<24x512xf32>
    tpu.vector_store %arg11[%c48_109, %c0_110], %119 {strides = array<i32>} : memref<600x512xf32, #tpu.memory_space<vmem>>, vector<24x512xf32>,
    %c31_i32_111 = arith.constant 31 : i32
    %121 = tpu.dynamic_rotate %114 by %c31_i32_111 dim 1 : vector<24x512xf32>, i32 -> vector<24x512xf32>
    %c72_112 = arith.constant 72 : index
    %c0_113 = arith.constant 0 : index
    %122 = vector.load %arg11[%c72_112, %c0_113] : memref<600x512xf32, #tpu.memory_space<vmem>>, vector<24x512xf32>
    tpu.vector_store %arg11[%c72_112, %c0_113], %121 {strides = array<i32>} : memref<600x512xf32, #tpu.memory_space<vmem>>, vector<24x512xf32>,
    %c30_i32_114 = arith.constant 30 : i32
    %123 = tpu.dynamic_rotate %114 by %c30_i32_114 dim 1 : vector<24x512xf32>, i32 -> vector<24x512xf32>
    %c96_115 = arith.constant 96 : index
    %c0_116 = arith.constant 0 : index
    %124 = vector.load %arg11[%c96_115, %c0_116] : memref<600x512xf32, #tpu.memory_space<vmem>>, vector<24x512xf32>
    tpu.vector_store %arg11[%c96_115, %c0_116], %123 {strides = array<i32>} : memref<600x512xf32, #tpu.memory_space<vmem>>, vector<24x512xf32>,
    %c18_i32_117 = arith.constant 18 : i32
    %125 = tpu.dynamic_rotate %114 by %c18_i32_117 dim 1 : vector<24x512xf32>, i32 -> vector<24x512xf32>
    %c120_118 = arith.constant 120 : index
    %c0_119 = arith.constant 0 : index
    %126 = vector.load %arg11[%c120_118, %c0_119] : memref<600x512xf32, #tpu.memory_space<vmem>>, vector<24x512xf32>
    tpu.vector_store %arg11[%c120_118, %c0_119], %125 {strides = array<i32>} : memref<600x512xf32, #tpu.memory_space<vmem>>, vector<24x512xf32>,
    %c17_i32_120 = arith.constant 17 : i32
    %127 = tpu.dynamic_rotate %114 by %c17_i32_120 dim 1 : vector<24x512xf32>, i32 -> vector<24x512xf32>
    %c144_121 = arith.constant 144 : index
    %c0_122 = arith.constant 0 : index
    %128 = vector.load %arg11[%c144_121, %c0_122] : memref<600x512xf32, #tpu.memory_space<vmem>>, vector<24x512xf32>
    tpu.vector_store %arg11[%c144_121, %c0_122], %127 {strides = array<i32>} : memref<600x512xf32, #tpu.memory_space<vmem>>, vector<24x512xf32>,
    %c16_i32_123 = arith.constant 16 : i32
    %129 = tpu.dynamic_rotate %114 by %c16_i32_123 dim 1 : vector<24x512xf32>, i32 -> vector<24x512xf32>
    %c168_124 = arith.constant 168 : index
    %c0_125 = arith.constant 0 : index
    %130 = vector.load %arg11[%c168_124, %c0_125] : memref<600x512xf32, #tpu.memory_space<vmem>>, vector<24x512xf32>
    tpu.vector_store %arg11[%c168_124, %c0_125], %129 {strides = array<i32>} : memref<600x512xf32, #tpu.memory_space<vmem>>, vector<24x512xf32>,
    %c15_i32_126 = arith.constant 15 : i32
    %131 = tpu.dynamic_rotate %114 by %c15_i32_126 dim 1 : vector<24x512xf32>, i32 -> vector<24x512xf32>
    %c192_127 = arith.constant 192 : index
    %c0_128 = arith.constant 0 : index
    %132 = vector.load %arg11[%c192_127, %c0_128] : memref<600x512xf32, #tpu.memory_space<vmem>>, vector<24x512xf32>
    tpu.vector_store %arg11[%c192_127, %c0_128], %131 {strides = array<i32>} : memref<600x512xf32, #tpu.memory_space<vmem>>, vector<24x512xf32>,
    %c14_i32_129 = arith.constant 14 : i32
    %133 = tpu.dynamic_rotate %114 by %c14_i32_129 dim 1 : vector<24x512xf32>, i32 -> vector<24x512xf32>
    %c216_130 = arith.constant 216 : index
    %c0_131 = arith.constant 0 : index
    %134 = vector.load %arg11[%c216_130, %c0_131] : memref<600x512xf32, #tpu.memory_space<vmem>>, vector<24x512xf32>
    tpu.vector_store %arg11[%c216_130, %c0_131], %133 {strides = array<i32>} : memref<600x512xf32, #tpu.memory_space<vmem>>, vector<24x512xf32>,
    %c2_i32_132 = arith.constant 2 : i32
    %135 = tpu.dynamic_rotate %114 by %c2_i32_132 dim 1 : vector<24x512xf32>, i32 -> vector<24x512xf32>
    %c240_133 = arith.constant 240 : index
    %c0_134 = arith.constant 0 : index
    %136 = vector.load %arg11[%c240_133, %c0_134] : memref<600x512xf32, #tpu.memory_space<vmem>>, vector<24x512xf32>
    tpu.vector_store %arg11[%c240_133, %c0_134], %135 {strides = array<i32>} : memref<600x512xf32, #tpu.memory_space<vmem>>, vector<24x512xf32>,
    %c1_i32_135 = arith.constant 1 : i32
    %137 = tpu.dynamic_rotate %114 by %c1_i32_135 dim 1 : vector<24x512xf32>, i32 -> vector<24x512xf32>
    %c264_136 = arith.constant 264 : index
    %c0_137 = arith.constant 0 : index
    %138 = vector.load %arg11[%c264_136, %c0_137] : memref<600x512xf32, #tpu.memory_space<vmem>>, vector<24x512xf32>
    tpu.vector_store %arg11[%c264_136, %c0_137], %137 {strides = array<i32>} : memref<600x512xf32, #tpu.memory_space<vmem>>, vector<24x512xf32>,
    %c288_138 = arith.constant 288 : index
    %c0_139 = arith.constant 0 : index
    %139 = vector.load %arg11[%c288_138, %c0_139] : memref<600x512xf32, #tpu.memory_space<vmem>>, vector<24x512xf32>
    tpu.vector_store %arg11[%c288_138, %c0_139], %114 {strides = array<i32>} : memref<600x512xf32, #tpu.memory_space<vmem>>, vector<24x512xf32>,
    %c511_i32_140 = arith.constant 511 : i32
    %140 = tpu.dynamic_rotate %114 by %c511_i32_140 dim 1 : vector<24x512xf32>, i32 -> vector<24x512xf32>
    %c312_141 = arith.constant 312 : index
    %c0_142 = arith.constant 0 : index
    %141 = vector.load %arg11[%c312_141, %c0_142] : memref<600x512xf32, #tpu.memory_space<vmem>>, vector<24x512xf32>
    tpu.vector_store %arg11[%c312_141, %c0_142], %140 {strides = array<i32>} : memref<600x512xf32, #tpu.memory_space<vmem>>, vector<24x512xf32>,
    %c510_i32_143 = arith.constant 510 : i32
    %142 = tpu.dynamic_rotate %114 by %c510_i32_143 dim 1 : vector<24x512xf32>, i32 -> vector<24x512xf32>
    %c336_144 = arith.constant 336 : index
    %c0_145 = arith.constant 0 : index
    %143 = vector.load %arg11[%c336_144, %c0_145] : memref<600x512xf32, #tpu.memory_space<vmem>>, vector<24x512xf32>
    tpu.vector_store %arg11[%c336_144, %c0_145], %142 {strides = array<i32>} : memref<600x512xf32, #tpu.memory_space<vmem>>, vector<24x512xf32>,
    %c498_i32_146 = arith.constant 498 : i32
    %144 = tpu.dynamic_rotate %114 by %c498_i32_146 dim 1 : vector<24x512xf32>, i32 -> vector<24x512xf32>
    %c360_147 = arith.constant 360 : index
    %c0_148 = arith.constant 0 : index
    %145 = vector.load %arg11[%c360_147, %c0_148] : memref<600x512xf32, #tpu.memory_space<vmem>>, vector<24x512xf32>
    tpu.vector_store %arg11[%c360_147, %c0_148], %144 {strides = array<i32>} : memref<600x512xf32, #tpu.memory_space<vmem>>, vector<24x512xf32>,
    %c497_i32_149 = arith.constant 497 : i32
    %146 = tpu.dynamic_rotate %114 by %c497_i32_149 dim 1 : vector<24x512xf32>, i32 -> vector<24x512xf32>
    %c384_150 = arith.constant 384 : index
    %c0_151 = arith.constant 0 : index
    %147 = vector.load %arg11[%c384_150, %c0_151] : memref<600x512xf32, #tpu.memory_space<vmem>>, vector<24x512xf32>
    tpu.vector_store %arg11[%c384_150, %c0_151], %146 {strides = array<i32>} : memref<600x512xf32, #tpu.memory_space<vmem>>, vector<24x512xf32>,
    %c496_i32_152 = arith.constant 496 : i32
    %148 = tpu.dynamic_rotate %114 by %c496_i32_152 dim 1 : vector<24x512xf32>, i32 -> vector<24x512xf32>
    %c408_153 = arith.constant 408 : index
    %c0_154 = arith.constant 0 : index
    %149 = vector.load %arg11[%c408_153, %c0_154] : memref<600x512xf32, #tpu.memory_space<vmem>>, vector<24x512xf32>
    tpu.vector_store %arg11[%c408_153, %c0_154], %148 {strides = array<i32>} : memref<600x512xf32, #tpu.memory_space<vmem>>, vector<24x512xf32>,
    %c495_i32_155 = arith.constant 495 : i32
    %150 = tpu.dynamic_rotate %114 by %c495_i32_155 dim 1 : vector<24x512xf32>, i32 -> vector<24x512xf32>
    %c432_156 = arith.constant 432 : index
    %c0_157 = arith.constant 0 : index
    %151 = vector.load %arg11[%c432_156, %c0_157] : memref<600x512xf32, #tpu.memory_space<vmem>>, vector<24x512xf32>
    tpu.vector_store %arg11[%c432_156, %c0_157], %150 {strides = array<i32>} : memref<600x512xf32, #tpu.memory_space<vmem>>, vector<24x512xf32>,
    %c494_i32_158 = arith.constant 494 : i32
    %152 = tpu.dynamic_rotate %114 by %c494_i32_158 dim 1 : vector<24x512xf32>, i32 -> vector<24x512xf32>
    %c456_159 = arith.constant 456 : index
    %c0_160 = arith.constant 0 : index
    %153 = vector.load %arg11[%c456_159, %c0_160] : memref<600x512xf32, #tpu.memory_space<vmem>>, vector<24x512xf32>
    tpu.vector_store %arg11[%c456_159, %c0_160], %152 {strides = array<i32>} : memref<600x512xf32, #tpu.memory_space<vmem>>, vector<24x512xf32>,
    %c482_i32_161 = arith.constant 482 : i32
    %154 = tpu.dynamic_rotate %114 by %c482_i32_161 dim 1 : vector<24x512xf32>, i32 -> vector<24x512xf32>
    %c480_162 = arith.constant 480 : index
    %c0_163 = arith.constant 0 : index
    %155 = vector.load %arg11[%c480_162, %c0_163] : memref<600x512xf32, #tpu.memory_space<vmem>>, vector<24x512xf32>
    tpu.vector_store %arg11[%c480_162, %c0_163], %154 {strides = array<i32>} : memref<600x512xf32, #tpu.memory_space<vmem>>, vector<24x512xf32>,
    %c481_i32_164 = arith.constant 481 : i32
    %156 = tpu.dynamic_rotate %114 by %c481_i32_164 dim 1 : vector<24x512xf32>, i32 -> vector<24x512xf32>
    %c504_165 = arith.constant 504 : index
    %c0_166 = arith.constant 0 : index
    %157 = vector.load %arg11[%c504_165, %c0_166] : memref<600x512xf32, #tpu.memory_space<vmem>>, vector<24x512xf32>
    tpu.vector_store %arg11[%c504_165, %c0_166], %156 {strides = array<i32>} : memref<600x512xf32, #tpu.memory_space<vmem>>, vector<24x512xf32>,
    %c480_i32_167 = arith.constant 480 : i32
    %158 = tpu.dynamic_rotate %114 by %c480_i32_167 dim 1 : vector<24x512xf32>, i32 -> vector<24x512xf32>
    %c528_168 = arith.constant 528 : index
    %c0_169 = arith.constant 0 : index
    %159 = vector.load %arg11[%c528_168, %c0_169] : memref<600x512xf32, #tpu.memory_space<vmem>>, vector<24x512xf32>
    tpu.vector_store %arg11[%c528_168, %c0_169], %158 {strides = array<i32>} : memref<600x512xf32, #tpu.memory_space<vmem>>, vector<24x512xf32>,
    %c479_i32_170 = arith.constant 479 : i32
    %160 = tpu.dynamic_rotate %114 by %c479_i32_170 dim 1 : vector<24x512xf32>, i32 -> vector<24x512xf32>
    %c552_171 = arith.constant 552 : index
    %c0_172 = arith.constant 0 : index
    %161 = vector.load %arg11[%c552_171, %c0_172] : memref<600x512xf32, #tpu.memory_space<vmem>>, vector<24x512xf32>
    tpu.vector_store %arg11[%c552_171, %c0_172], %160 {strides = array<i32>} : memref<600x512xf32, #tpu.memory_space<vmem>>, vector<24x512xf32>,
    %c478_i32_173 = arith.constant 478 : i32
    %162 = tpu.dynamic_rotate %114 by %c478_i32_173 dim 1 : vector<24x512xf32>, i32 -> vector<24x512xf32>
    %c576_174 = arith.constant 576 : index
    %c0_175 = arith.constant 0 : index
    %163 = vector.load %arg11[%c576_174, %c0_175] : memref<600x512xf32, #tpu.memory_space<vmem>>, vector<24x512xf32>
    tpu.vector_store %arg11[%c576_174, %c0_175], %162 {strides = array<i32>} : memref<600x512xf32, #tpu.memory_space<vmem>>, vector<24x512xf32>,
    %c0_176 = arith.constant 0 : index
    %c0_177 = arith.constant 0 : index
    %164 = vector.load %arg11[%c0_176, %c0_177] : memref<600x512xf32, #tpu.memory_space<vmem>>, vector<600x512xf32>
    %c0_178 = arith.constant 0 : index
    %c0_179 = arith.constant 0 : index
    %165 = vector.load %arg3[%c0_178, %c0_179] : memref<600x512xf32, #tpu.memory_space<vmem>>, vector<600x512xf32>
    %166 = arith.mulf %164, %165 : vector<600x512xf32>
    %c0_180 = arith.constant 0 : index
    %c0_181 = arith.constant 0 : index
    %167 = vector.load %arg8[%c0_180, %c0_181] : memref<8x600xf32, #tpu.memory_space<vmem>>, vector<8x600xf32>
    %cst_182 = arith.constant dense<0.000000e+00> : vector<8x512xf32>
    %168 = tpu.matmul %167, %166, %cst_182 {dimension_numbers = #tpu.dot_dimension_numbers<[1], [0], [0], [1], [0, 0, 1, 1], [], []>} : vector<8x600xf32>, vector<600x512xf32>, vector<8x512xf32> -> vector<8x512xf32>
    %c0_183 = arith.constant 0 : index
    %c0_184 = arith.constant 0 : index
    %169 = vector.load %arg9[%c0_183, %c0_184] : memref<8x1xf32, #tpu.memory_space<vmem>>, vector<8x1xf32>
    %170 = vector.broadcast %169 : vector<8x1xf32> to vector<8x512xf32>
    %171 = arith.addf %168, %170 : vector<8x512xf32>
    %c0_185 = arith.constant 0 : index
    %c0_186 = arith.constant 0 : index
    %172 = vector.load %arg10[%c0_185, %c0_186] : memref<8x512xf32, #tpu.memory_space<vmem>>, vector<8x512xf32>
    tpu.vector_store %arg10[%c0_185, %c0_186], %171 {strides = array<i32>} : memref<8x512xf32, #tpu.memory_space<vmem>>, vector<8x512xf32>,
    return
  }
  func.func @transform_0(%arg0: i32) -> (i32, i32) {
    %c0_i32 = arith.constant 0 : i32
    %c0_i32_0 = arith.constant 0 : i32
    return %c0_i32, %arg0 : i32, i32
  }
  func.func @transform_1(%arg0: i32) -> (i32, i32) {
    %c0_i32 = arith.constant 0 : i32
    %c0_i32_0 = arith.constant 0 : i32
    %c0_i32_1 = arith.constant 0 : i32
    return %c0_i32, %c0_i32_0 : i32, i32
  }
  func.func @transform_2(%arg0: i32) -> (i32, i32) {
    %c0_i32 = arith.constant 0 : i32
    %c0_i32_0 = arith.constant 0 : i32
    %c0_i32_1 = arith.constant 0 : i32
    return %c0_i32, %c0_i32_0 : i32, i32
  }
  func.func @transform_3(%arg0: i32) -> (i32, i32) {
    %c0_i32 = arith.constant 0 : i32
    %c0_i32_0 = arith.constant 0 : i32
    %c0_i32_1 = arith.constant 0 : i32
    return %c0_i32, %c0_i32_0 : i32, i32
  }
  func.func @transform_4(%arg0: i32) -> (i32, i32) {
    %c0_i32 = arith.constant 0 : i32
    %c0_i32_0 = arith.constant 0 : i32
    %c0_i32_1 = arith.constant 0 : i32
    return %c0_i32, %c0_i32_0 : i32, i32
  }
  func.func @transform_5(%arg0: i32) -> (i32, i32) {
    %c0_i32 = arith.constant 0 : i32
    %c0_i32_0 = arith.constant 0 : i32
    %c0_i32_1 = arith.constant 0 : i32
    return %c0_i32, %c0_i32_0 : i32, i32
  }
  func.func @transform_6(%arg0: i32) -> (i32, i32) {
    %c0_i32 = arith.constant 0 : i32
    %c0_i32_0 = arith.constant 0 : i32
    %c0_i32_1 = arith.constant 0 : i32
    return %c0_i32, %c0_i32_0 : i32, i32
  }
  func.func @transform_7(%arg0: i32) -> (i32, i32) {
    %c0_i32 = arith.constant 0 : i32
    %c0_i32_0 = arith.constant 0 : i32
    %c0_i32_1 = arith.constant 0 : i32
    return %c0_i32, %c0_i32_0 : i32, i32
  }
  func.func @transform_8(%arg0: i32) -> (i32, i32) {
    %c0_i32 = arith.constant 0 : i32
    %c0_i32_0 = arith.constant 0 : i32
    %c0_i32_1 = arith.constant 0 : i32
    return %c0_i32, %c0_i32_0 : i32, i32
  }
  func.func @transform_9(%arg0: i32) -> (i32, i32) {
    %c0_i32 = arith.constant 0 : i32
    %c0_i32_0 = arith.constant 0 : i32
    return %c0_i32, %arg0 : i32, i32
  }
}

</mosaic_0001>

<llo_original>
// kernel: cnn_forward.1
$region0: #{cnn_forward.1}
  #allocation0 [shape = 'u32[]', space=smem, size = 0x4, offset = 0x4, fixed_abs, tag = 'smem constant byte address 0x4 - core index']
  #allocation1 [shape = 'u32[144,128]{1,0:T(1,128)}', space=vmem, size = 0x12000, scoped, tag = 'internal scratch']
  #allocation2 [shape = 'f32[600,512]{1,0:T(8,128)}', space=vmem, size = 0x12c000, scoped, tag = 'scratch operand']
  %s0 = inlined_call_operand.vmem [shape: f32[8,512], index: 0, kind: input, shape index: {}]
  %s1 = inlined_call_operand.vmem [shape: f32[200,512], index: 1, kind: input, shape index: {}]
  %s2 = inlined_call_operand.vmem [shape: f32[600,512], index: 2, kind: input, shape index: {}]
  %s3 = inlined_call_operand.vmem [shape: f32[24,200], index: 3, kind: input, shape index: {}]
  %s4 = inlined_call_operand.vmem [shape: f32[24,1], index: 4, kind: input, shape index: {}]
  %s5 = inlined_call_operand.vmem [shape: f32[24,600], index: 5, kind: input, shape index: {}]
  %s6 = inlined_call_operand.vmem [shape: f32[24,1], index: 6, kind: input, shape index: {}]
  %s7 = inlined_call_operand.vmem [shape: f32[8,600], index: 7, kind: input, shape index: {}]
  %s8 = inlined_call_operand.vmem [shape: f32[8,1], index: 8, kind: input, shape index: {}]
  %s9 = inlined_call_operand.vmem [shape: f32[8,512], index: 9, kind: output, shape index: {}]
  %s10 = sld [smem:[#allocation0]]
  $region46: #{cnn_forward.1} parent=0
    _
  %s12 = ssub.s32 1, %s10
  %s13 = scalar_select 0, %s12, %s10
  // Predicated region
  $region2: #{cnn_forward.1} parent=0 // pred_check
    _
  $region3: #{cnn_forward.1} parent=0 // pred_check_branch
    %15 = sbr.rel (0) target = $region5
  $region4: #{cnn_forward.1} parent=0 // pred_region
    _
  $region5: #{cnn_forward.1} parent=0 // pred_fallthru
    _
  // Predicated region
  $region6: #{cnn_forward.1} parent=0 // pred_check
    _
  $region7: #{cnn_forward.1} parent=0 // pred_check_branch
    %17 = sbr.rel (0) target = $region9
  $region8: #{cnn_forward.1} parent=0 // pred_region
    _
  $region9: #{cnn_forward.1} parent=0 // pred_fallthru
    _
  // Predicated region
  $region10: #{cnn_forward.1} parent=0 // pred_check
    _
  $region11: #{cnn_forward.1} parent=0 // pred_check_branch
    %19 = sbr.rel (0) target = $region13
  $region12: #{cnn_forward.1} parent=0 // pred_region
    _
  $region13: #{cnn_forward.1} parent=0 // pred_fallthru
    _
  // Predicated region
  $region14: #{cnn_forward.1} parent=0 // pred_check
    _
  $region15: #{cnn_forward.1} parent=0 // pred_check_branch
    %21 = sbr.rel (0) target = $region17
  $region16: #{cnn_forward.1} parent=0 // pred_region
    _
  $region17: #{cnn_forward.1} parent=0 // pred_fallthru
    _
  // Predicated region
  $region18: #{cnn_forward.1} parent=0 // pred_check
    _
  $region19: #{cnn_forward.1} parent=0 // pred_check_branch
    %23 = sbr.rel (0) target = $region21
  $region20: #{cnn_forward.1} parent=0 // pred_region
    _
  $region21: #{cnn_forward.1} parent=0 // pred_fallthru
    _
  // Predicated region
  $region22: #{cnn_forward.1} parent=0 // pred_check
    _
  $region23: #{cnn_forward.1} parent=0 // pred_check_branch
    %25 = sbr.rel (0) target = $region25
  $region24: #{cnn_forward.1} parent=0 // pred_region
    _
  $region25: #{cnn_forward.1} parent=0 // pred_fallthru
    _
  // Predicated region
  $region26: #{cnn_forward.1} parent=0 // pred_check
    _
  $region27: #{cnn_forward.1} parent=0 // pred_check_branch
    %27 = sbr.rel (0) target = $region29
  $region28: #{cnn_forward.1} parent=0 // pred_region
    _
  $region29: #{cnn_forward.1} parent=0 // pred_fallthru
    _
  // Predicated region
  $region30: #{cnn_forward.1} parent=0 // pred_check
    _
  $region31: #{cnn_forward.1} parent=0 // pred_check_branch
    %29 = sbr.rel (0) target = $region33
  $region32: #{cnn_forward.1} parent=0 // pred_region
    _
  $region33: #{cnn_forward.1} parent=0 // pred_fallthru
    _
  // Predicated region
  $region34: #{cnn_forward.1} parent=0 // pred_check
    _
  $region35: #{cnn_forward.1} parent=0 // pred_check_branch
    %31 = sbr.rel (0) target = $region37
  $region36: #{cnn_forward.1} parent=0 // pred_region
    _
  $region37: #{cnn_forward.1} parent=0 // pred_fallthru
    _
  %v32 = vld [vmem:[%s0] sm:$0xff]
  %v33 = vld [vmem:[%s0 + $0x8] sm:$0xff]
  %v34 = vld [vmem:[%s0 + $0x10] sm:$0xff]
  %v35 = vld [vmem:[%s0 + $0x18] sm:$0xff]
  %36 = vrot.lane.b32.xlu0 %v32, 34
  %v37 = vpop.permute.xlu0 %36
  %38 = vrot.lane.b32.xlu0 %v33, 34
  %v39 = vpop.permute.xlu0 %38
  %40 = vrot.lane.b32.xlu0 %v34, 34
  %v41 = vpop.permute.xlu0 %40
  %42 = vrot.lane.b32.xlu0 %v35, 34
  %v43 = vpop.permute.xlu0 %42
  %v44 = vlaneseq
  %v45 = vand.u32 %v44, 127
  %vm46 = vcmp.lt.s32.totalorder %v45, 34
  %v47 = vsel %vm46, %v41, %v43
  %v48 = vsel %vm46, %v39, %v41
  %v49 = vsel %vm46, %v37, %v39
  %v50 = vsel %vm46, %v43, %v37
  %51 = vst [vmem:[#allocation2] sm:$0xff] %v50
  %52 = vst [vmem:[#allocation2 + $0x8] sm:$0xff] %v49
  %53 = vst [vmem:[#allocation2 + $0x10] sm:$0xff] %v48
  %54 = vst [vmem:[#allocation2 + $0x18] sm:$0xff] %v47
  %55 = vrot.lane.b32.xlu0 %v32, 33
  %v56 = vpop.permute.xlu0 %55
  %57 = vrot.lane.b32.xlu0 %v33, 33
  %v58 = vpop.permute.xlu0 %57
  %59 = vrot.lane.b32.xlu0 %v34, 33
  %v60 = vpop.permute.xlu0 %59
  %61 = vrot.lane.b32.xlu0 %v35, 33
  %v62 = vpop.permute.xlu0 %61
  %vm63 = vcmp.lt.s32.totalorder %v45, 33
  %v64 = vsel %vm63, %v60, %v62
  %v65 = vsel %vm63, %v58, %v60
  %v66 = vsel %vm63, %v56, %v58
  %v67 = vsel %vm63, %v62, %v56
  %68 = vst [vmem:[#allocation2 + $0x20] sm:$0xff] %v67
  %69 = vst [vmem:[#allocation2 + $0x28] sm:$0xff] %v66
  %70 = vst [vmem:[#allocation2 + $0x30] sm:$0xff] %v65
  %71 = vst [vmem:[#allocation2 + $0x38] sm:$0xff] %v64
  %72 = vrot.lane.b32.xlu0 %v32, 32
  %v73 = vpop.permute.xlu0 %72
  %74 = vrot.lane.b32.xlu0 %v33, 32
  %v75 = vpop.permute.xlu0 %74
  %76 = vrot.lane.b32.xlu0 %v34, 32
  %v77 = vpop.permute.xlu0 %76
  %78 = vrot.lane.b32.xlu0 %v35, 32
  %v79 = vpop.permute.xlu0 %78
  %vm80 = vcmp.lt.s32.totalorder %v45, 32
  %v81 = vsel %vm80, %v77, %v79
  %v82 = vsel %vm80, %v75, %v77
  %v83 = vsel %vm80, %v73, %v75
  %v84 = vsel %vm80, %v79, %v73
  %85 = vst [vmem:[#allocation2 + $0x40] sm:$0xff] %v84
  %86 = vst [vmem:[#allocation2 + $0x48] sm:$0xff] %v83
  %87 = vst [vmem:[#allocation2 + $0x50] sm:$0xff] %v82
  %88 = vst [vmem:[#allocation2 + $0x58] sm:$0xff] %v81
  %89 = vrot.lane.b32.xlu0 %v32, 31
  %v90 = vpop.permute.xlu0 %89
  %91 = vrot.lane.b32.xlu0 %v33, 31
  %v92 = vpop.permute.xlu0 %91
  %93 = vrot.lane.b32.xlu0 %v34, 31
  %v94 = vpop.permute.xlu0 %93
  %95 = vrot.lane.b32.xlu0 %v35, 31
  %v96 = vpop.permute.xlu0 %95
  %vm97 = vcmp.lt.s32.totalorder %v45, 31
  %v98 = vsel %vm97, %v94, %v96
  %v99 = vsel %vm97, %v92, %v94
  %v100 = vsel %vm97, %v90, %v92
  %v101 = vsel %vm97, %v96, %v90
  %102 = vst [vmem:[#allocation2 + $0x60] sm:$0xff] %v101
  %103 = vst [vmem:[#allocation2 + $0x68] sm:$0xff] %v100
  %104 = vst [vmem:[#allocation2 + $0x70] sm:$0xff] %v99
  %105 = vst [vmem:[#allocation2 + $0x78] sm:$0xff] %v98
  %106 = vrot.lane.b32.xlu0 %v32, 30
  %v107 = vpop.permute.xlu0 %106
  %108 = vrot.lane.b32.xlu0 %v33, 30
  %v109 = vpop.permute.xlu0 %108
  %110 = vrot.lane.b32.xlu0 %v34, 30
  %v111 = vpop.permute.xlu0 %110
  %112 = vrot.lane.b32.xlu0 %v35, 30
  %v113 = vpop.permute.xlu0 %112
  %vm114 = vcmp.lt.s32.totalorder %v45, 30
  %v115 = vsel %vm114, %v111, %v113
  %v116 = vsel %vm114, %v109, %v111
  %v117 = vsel %vm114, %v107, %v109
  %v118 = vsel %vm114, %v113, %v107
  %119 = vst [vmem:[#allocation2 + $0x80] sm:$0xff] %v118
  %120 = vst [vmem:[#allocation2 + $0x88] sm:$0xff] %v117
  %121 = vst [vmem:[#allocation2 + $0x90] sm:$0xff] %v116
  %122 = vst [vmem:[#allocation2 + $0x98] sm:$0xff] %v115
  %123 = vrot.lane.b32.xlu0 %v32, 18
  %v124 = vpop.permute.xlu0 %123
  %125 = vrot.lane.b32.xlu0 %v33, 18
  %v126 = vpop.permute.xlu0 %125
  %127 = vrot.lane.b32.xlu0 %v34, 18
  %v128 = vpop.permute.xlu0 %127
  %129 = vrot.lane.b32.xlu0 %v35, 18
  %v130 = vpop.permute.xlu0 %129
  %vm131 = vcmp.lt.s32.totalorder %v45, 18
  %v132 = vsel %vm131, %v128, %v130
  %v133 = vsel %vm131, %v126, %v128
  %v134 = vsel %vm131, %v124, %v126
  %v135 = vsel %vm131, %v130, %v124
  %136 = vst [vmem:[#allocation2 + $0xa0] sm:$0xff] %v135
  %137 = vst [vmem:[#allocation2 + $0xa8] sm:$0xff] %v134
  %138 = vst [vmem:[#allocation2 + $0xb0] sm:$0xff] %v133
  %139 = vst [vmem:[#allocation2 + $0xb8] sm:$0xff] %v132
  %140 = vrot.lane.b32.xlu0 %v32, 17
  %v141 = vpop.permute.xlu0 %140
  %142 = vrot.lane.b32.xlu0 %v33, 17
  %v143 = vpop.permute.xlu0 %142
  %144 = vrot.lane.b32.xlu0 %v34, 17
  %v145 = vpop.permute.xlu0 %144
  %146 = vrot.lane.b32.xlu0 %v35, 17
  %v147 = vpop.permute.xlu0 %146
  %vm148 = vcmp.lt.s32.totalorder %v45, 17
  %v149 = vsel %vm148, %v145, %v147
  %v150 = vsel %vm148, %v143, %v145
  %v151 = vsel %vm148, %v141, %v143
  %v152 = vsel %vm148, %v147, %v141
  %153 = vst [vmem:[#allocation2 + $0xc0] sm:$0xff] %v152
  %154 = vst [vmem:[#allocation2 + $0xc8] sm:$0xff] %v151
  %155 = vst [vmem:[#allocation2 + $0xd0] sm:$0xff] %v150
  %156 = vst [vmem:[#allocation2 + $0xd8] sm:$0xff] %v149
  %157 = vrot.lane.b32.xlu0 %v32, 16
  %v158 = vpop.permute.xlu0 %157
  %159 = vrot.lane.b32.xlu0 %v33, 16
  %v160 = vpop.permute.xlu0 %159
  %161 = vrot.lane.b32.xlu0 %v34, 16
  %v162 = vpop.permute.xlu0 %161
  %163 = vrot.lane.b32.xlu0 %v35, 16
  %v164 = vpop.permute.xlu0 %163
  %vm165 = vcmp.lt.s32.totalorder %v45, 16
  %v166 = vsel %vm165, %v162, %v164
  %v167 = vsel %vm165, %v160, %v162
  %v168 = vsel %vm165, %v158, %v160
  %v169 = vsel %vm165, %v164, %v158
  %170 = vst [vmem:[#allocation2 + $0xe0] sm:$0xff] %v169
  %171 = vst [vmem:[#allocation2 + $0xe8] sm:$0xff] %v168
  %172 = vst [vmem:[#allocation2 + $0xf0] sm:$0xff] %v167
  %173 = vst [vmem:[#allocation2 + $0xf8] sm:$0xff] %v166
  %174 = vrot.lane.b32.xlu0 %v32, 15
  %v175 = vpop.permute.xlu0 %174
  %176 = vrot.lane.b32.xlu0 %v33, 15
  %v177 = vpop.permute.xlu0 %176
  %178 = vrot.lane.b32.xlu0 %v34, 15
  %v179 = vpop.permute.xlu0 %178
  %180 = vrot.lane.b32.xlu0 %v35, 15
  %v181 = vpop.permute.xlu0 %180
  %vm182 = vcmp.lt.s32.totalorder %v45, 15
  %v183 = vsel %vm182, %v179, %v181
  %v184 = vsel %vm182, %v177, %v179
  %v185 = vsel %vm182, %v175, %v177
  %v186 = vsel %vm182, %v181, %v175
  %187 = vst [vmem:[#allocation2 + $0x100] sm:$0xff] %v186
  %188 = vst [vmem:[#allocation2 + $0x108] sm:$0xff] %v185
  %189 = vst [vmem:[#allocation2 + $0x110] sm:$0xff] %v184
  %190 = vst [vmem:[#allocation2 + $0x118] sm:$0xff] %v183
  %191 = vrot.lane.b32.xlu0 %v32, 14
  %v192 = vpop.permute.xlu0 %191
  %193 = vrot.lane.b32.xlu0 %v33, 14
  %v194 = vpop.permute.xlu0 %193
  %195 = vrot.lane.b32.xlu0 %v34, 14
  %v196 = vpop.permute.xlu0 %195
  %197 = vrot.lane.b32.xlu0 %v35, 14
  %v198 = vpop.permute.xlu0 %197
  %vm199 = vcmp.lt.s32.totalorder %v45, 14
  %v200 = vsel %vm199, %v196, %v198
  %v201 = vsel %vm199, %v194, %v196
  %v202 = vsel %vm199, %v192, %v194
  %v203 = vsel %vm199, %v198, %v192
  %204 = vst [vmem:[#allocation2 + $0x120] sm:$0xff] %v203
  %205 = vst [vmem:[#allocation2 + $0x128] sm:$0xff] %v202
  %206 = vst [vmem:[#allocation2 + $0x130] sm:$0xff] %v201
  %207 = vst [vmem:[#allocation2 + $0x138] sm:$0xff] %v200
  %208 = vrot.lane.b32.xlu0 %v32, 2
  %v209 = vpop.permute.xlu0 %208
  %210 = vrot.lane.b32.xlu0 %v33, 2
  %v211 = vpop.permute.xlu0 %210
  %212 = vrot.lane.b32.xlu0 %v34, 2
  %v213 = vpop.permute.xlu0 %212
  %214 = vrot.lane.b32.xlu0 %v35, 2
  %v215 = vpop.permute.xlu0 %214
  %vm216 = vcmp.lt.s32.totalorder %v45, 2
  %v217 = vsel %vm216, %v213, %v215
  %v218 = vsel %vm216, %v211, %v213
  %v219 = vsel %vm216, %v209, %v211
  %v220 = vsel %vm216, %v215, %v209
  %221 = vst [vmem:[#allocation2 + $0x140] sm:$0xff] %v220
  %222 = vst [vmem:[#allocation2 + $0x148] sm:$0xff] %v219
  %223 = vst [vmem:[#allocation2 + $0x150] sm:$0xff] %v218
  %224 = vst [vmem:[#allocation2 + $0x158] sm:$0xff] %v217
  %225 = vrot.lane.b32.xlu0 %v32, 1
  %v226 = vpop.permute.xlu0 %225
  %227 = vrot.lane.b32.xlu0 %v33, 1
  %v228 = vpop.permute.xlu0 %227
  %229 = vrot.lane.b32.xlu0 %v34, 1
  %v230 = vpop.permute.xlu0 %229
  %231 = vrot.lane.b32.xlu0 %v35, 1
  %v232 = vpop.permute.xlu0 %231
  %vm233 = vcmp.lt.s32.totalorder %v45, 1
  %v234 = vsel %vm233, %v230, %v232
  %v235 = vsel %vm233, %v228, %v230
  %v236 = vsel %vm233, %v226, %v228
  %v237 = vsel %vm233, %v232, %v226
  %238 = vst [vmem:[#allocation2 + $0x160] sm:$0xff] %v237
  %239 = vst [vmem:[#allocation2 + $0x168] sm:$0xff] %v236
  %240 = vst [vmem:[#allocation2 + $0x170] sm:$0xff] %v235
  %241 = vst [vmem:[#allocation2 + $0x178] sm:$0xff] %v234
  %242 = vst [vmem:[#allocation2 + $0x180] sm:$0xff] %v32
  %243 = vst [vmem:[#allocation2 + $0x188] sm:$0xff] %v33
  %244 = vst [vmem:[#allocation2 + $0x190] sm:$0xff] %v34
  %245 = vst [vmem:[#allocation2 + $0x198] sm:$0xff] %v35
  %246 = vrot.lane.b32.xlu0 %v32, 127
  %v247 = vpop.permute.xlu0 %246
  %248 = vrot.lane.b32.xlu0 %v33, 127
  %v249 = vpop.permute.xlu0 %248
  %250 = vrot.lane.b32.xlu0 %v34, 127
  %v251 = vpop.permute.xlu0 %250
  %252 = vrot.lane.b32.xlu0 %v35, 127
  %v253 = vpop.permute.xlu0 %252
  %vm254 = vcmp.lt.s32.totalorder %v45, 127
  %v255 = vsel %vm254, %v251, %v253
  %v256 = vsel %vm254, %v249, %v251
  %v257 = vsel %vm254, %v247, %v249
  %v258 = vsel %vm254, %v253, %v247
  %259 = vst [vmem:[#allocation2 + $0x1a0] sm:$0xff] %v257
  %260 = vst [vmem:[#allocation2 + $0x1a8] sm:$0xff] %v256
  %261 = vst [vmem:[#allocation2 + $0x1b0] sm:$0xff] %v255
  %262 = vst [vmem:[#allocation2 + $0x1b8] sm:$0xff] %v258
  %263 = vrot.lane.b32.xlu0 %v32, 126
  %v264 = vpop.permute.xlu0 %263
  %265 = vrot.lane.b32.xlu0 %v33, 126
  %v266 = vpop.permute.xlu0 %265
  %267 = vrot.lane.b32.xlu0 %v34, 126
  %v268 = vpop.permute.xlu0 %267
  %269 = vrot.lane.b32.xlu0 %v35, 126
  %v270 = vpop.permute.xlu0 %269
  %vm271 = vcmp.lt.s32.totalorder %v45, 126
  %v272 = vsel %vm271, %v268, %v270
  %v273 = vsel %vm271, %v266, %v268
  %v274 = vsel %vm271, %v264, %v266
  %v275 = vsel %vm271, %v270, %v264
  %276 = vst [vmem:[#allocation2 + $0x1c0] sm:$0xff] %v274
  %277 = vst [vmem:[#allocation2 + $0x1c8] sm:$0xff] %v273
  %278 = vst [vmem:[#allocation2 + $0x1d0] sm:$0xff] %v272
  %279 = vst [vmem:[#allocation2 + $0x1d8] sm:$0xff] %v275
  %280 = vrot.lane.b32.xlu0 %v32, 114
  %v281 = vpop.permute.xlu0 %280
  %282 = vrot.lane.b32.xlu0 %v33, 114
  %v283 = vpop.permute.xlu0 %282
  %284 = vrot.lane.b32.xlu0 %v34, 114
  %v285 = vpop.permute.xlu0 %284
  %286 = vrot.lane.b32.xlu0 %v35, 114
  %v287 = vpop.permute.xlu0 %286
  %vm288 = vcmp.lt.s32.totalorder %v45, 114
  %v289 = vsel %vm288, %v285, %v287
  %v290 = vsel %vm288, %v283, %v285
  %v291 = vsel %vm288, %v281, %v283
  %v292 = vsel %vm288, %v287, %v281
  %293 = vst [vmem:[#allocation2 + $0x1e0] sm:$0xff] %v291
  %294 = vst [vmem:[#allocation2 + $0x1e8] sm:$0xff] %v290
  %295 = vst [vmem:[#allocation2 + $0x1f0] sm:$0xff] %v289
  %296 = vst [vmem:[#allocation2 + $0x1f8] sm:$0xff] %v292
  %297 = vrot.lane.b32.xlu0 %v32, 113
  %v298 = vpop.permute.xlu0 %297
  %299 = vrot.lane.b32.xlu0 %v33, 113
  %v300 = vpop.permute.xlu0 %299
  %301 = vrot.lane.b32.xlu0 %v34, 113
  %v302 = vpop.permute.xlu0 %301
  %303 = vrot.lane.b32.xlu0 %v35, 113
  %v304 = vpop.permute.xlu0 %303
  %vm305 = vcmp.lt.s32.totalorder %v45, 113
  %v306 = vsel %vm305, %v302, %v304
  %v307 = vsel %vm305, %v300, %v302
  %v308 = vsel %vm305, %v298, %v300
  %v309 = vsel %vm305, %v304, %v298
  %310 = vst [vmem:[#allocation2 + $0x200] sm:$0xff] %v308
  %311 = vst [vmem:[#allocation2 + $0x208] sm:$0xff] %v307
  %312 = vst [vmem:[#allocation2 + $0x210] sm:$0xff] %v306
  %313 = vst [vmem:[#allocation2 + $0x218] sm:$0xff] %v309
  %314 = vrot.lane.b32.xlu0 %v32, 112
  %v315 = vpop.permute.xlu0 %314
  %316 = vrot.lane.b32.xlu0 %v33, 112
  %v317 = vpop.permute.xlu0 %316
  %318 = vrot.lane.b32.xlu0 %v34, 112
  %v319 = vpop.permute.xlu0 %318
  %320 = vrot.lane.b32.xlu0 %v35, 112
  %v321 = vpop.permute.xlu0 %320
  %vm322 = vcmp.lt.s32.totalorder %v45, 112
  %v323 = vsel %vm322, %v319, %v321
  %v324 = vsel %vm322, %v317, %v319
  %v325 = vsel %vm322, %v315, %v317
  %v326 = vsel %vm322, %v321, %v315
  %327 = vst [vmem:[#allocation2 + $0x220] sm:$0xff] %v325
  %328 = vst [vmem:[#allocation2 + $0x228] sm:$0xff] %v324
  %329 = vst [vmem:[#allocation2 + $0x230] sm:$0xff] %v323
  %330 = vst [vmem:[#allocation2 + $0x238] sm:$0xff] %v326
  %331 = vrot.lane.b32.xlu0 %v32, 111
  %v332 = vpop.permute.xlu0 %331
  %333 = vrot.lane.b32.xlu0 %v33, 111
  %v334 = vpop.permute.xlu0 %333
  %335 = vrot.lane.b32.xlu0 %v34, 111
  %v336 = vpop.permute.xlu0 %335
  %337 = vrot.lane.b32.xlu0 %v35, 111
  %v338 = vpop.permute.xlu0 %337
  %vm339 = vcmp.lt.s32.totalorder %v45, 111
  %v340 = vsel %vm339, %v336, %v338
  %v341 = vsel %vm339, %v334, %v336
  %v342 = vsel %vm339, %v332, %v334
  %v343 = vsel %vm339, %v338, %v332
  %344 = vst [vmem:[#allocation2 + $0x240] sm:$0xff] %v342
  %345 = vst [vmem:[#allocation2 + $0x248] sm:$0xff] %v341
  %346 = vst [vmem:[#allocation2 + $0x250] sm:$0xff] %v340
  %347 = vst [vmem:[#allocation2 + $0x258] sm:$0xff] %v343
  %348 = vrot.lane.b32.xlu0 %v32, 110
  %v349 = vpop.permute.xlu0 %348
  %350 = vrot.lane.b32.xlu0 %v33, 110
  %v351 = vpop.permute.xlu0 %350
  %352 = vrot.lane.b32.xlu0 %v34, 110
  %v353 = vpop.permute.xlu0 %352
  %354 = vrot.lane.b32.xlu0 %v35, 110
  %v355 = vpop.permute.xlu0 %354
  %vm356 = vcmp.lt.s32.totalorder %v45, 110
  %v357 = vsel %vm356, %v353, %v355
  %v358 = vsel %vm356, %v351, %v353
  %v359 = vsel %vm356, %v349, %v351
  %v360 = vsel %vm356, %v355, %v349
  %361 = vst [vmem:[#allocation2 + $0x260] sm:$0xff] %v359
  %362 = vst [vmem:[#allocation2 + $0x268] sm:$0xff] %v358
  %363 = vst [vmem:[#allocation2 + $0x270] sm:$0xff] %v357
  %364 = vst [vmem:[#allocation2 + $0x278] sm:$0xff] %v360
  %365 = vrot.lane.b32.xlu0 %v32, 98
  %v366 = vpop.permute.xlu0 %365
  %367 = vrot.lane.b32.xlu0 %v33, 98
  %v368 = vpop.permute.xlu0 %367
  %369 = vrot.lane.b32.xlu0 %v34, 98
  %v370 = vpop.permute.xlu0 %369
  %371 = vrot.lane.b32.xlu0 %v35, 98
  %v372 = vpop.permute.xlu0 %371
  %vm373 = vcmp.lt.s32.totalorder %v45, 98
  %v374 = vsel %vm373, %v370, %v372
  %v375 = vsel %vm373, %v368, %v370
  %v376 = vsel %vm373, %v366, %v368
  %v377 = vsel %vm373, %v372, %v366
  %378 = vst [vmem:[#allocation2 + $0x280] sm:$0xff] %v376
  %379 = vst [vmem:[#allocation2 + $0x288] sm:$0xff] %v375
  %380 = vst [vmem:[#allocation2 + $0x290] sm:$0xff] %v374
  %381 = vst [vmem:[#allocation2 + $0x298] sm:$0xff] %v377
  %382 = vrot.lane.b32.xlu0 %v32, 97
  %v383 = vpop.permute.xlu0 %382
  %384 = vrot.lane.b32.xlu0 %v33, 97
  %v385 = vpop.permute.xlu0 %384
  %386 = vrot.lane.b32.xlu0 %v34, 97
  %v387 = vpop.permute.xlu0 %386
  %388 = vrot.lane.b32.xlu0 %v35, 97
  %v389 = vpop.permute.xlu0 %388
  %vm390 = vcmp.lt.s32.totalorder %v45, 97
  %v391 = vsel %vm390, %v387, %v389
  %v392 = vsel %vm390, %v385, %v387
  %v393 = vsel %vm390, %v383, %v385
  %v394 = vsel %vm390, %v389, %v383
  %395 = vst [vmem:[#allocation2 + $0x2a0] sm:$0xff] %v393
  %396 = vst [vmem:[#allocation2 + $0x2a8] sm:$0xff] %v392
  %397 = vst [vmem:[#allocation2 + $0x2b0] sm:$0xff] %v391
  %398 = vst [vmem:[#allocation2 + $0x2b8] sm:$0xff] %v394
  %399 = vrot.lane.b32.xlu0 %v32, 96
  %v400 = vpop.permute.xlu0 %399
  %401 = vrot.lane.b32.xlu0 %v33, 96
  %v402 = vpop.permute.xlu0 %401
  %403 = vrot.lane.b32.xlu0 %v34, 96
  %v404 = vpop.permute.xlu0 %403
  %405 = vrot.lane.b32.xlu0 %v35, 96
  %v406 = vpop.permute.xlu0 %405
  %vm407 = vcmp.lt.s32.totalorder %v45, 96
  %v408 = vsel %vm407, %v404, %v406
  %v409 = vsel %vm407, %v402, %v404
  %v410 = vsel %vm407, %v400, %v402
  %v411 = vsel %vm407, %v406, %v400
  %412 = vst [vmem:[#allocation2 + $0x2c0] sm:$0xff] %v410
  %413 = vst [vmem:[#allocation2 + $0x2c8] sm:$0xff] %v409
  %414 = vst [vmem:[#allocation2 + $0x2d0] sm:$0xff] %v408
  %415 = vst [vmem:[#allocation2 + $0x2d8] sm:$0xff] %v411
  %416 = vrot.lane.b32.xlu0 %v32, 95
  %v417 = vpop.permute.xlu0 %416
  %418 = vrot.lane.b32.xlu0 %v33, 95
  %v419 = vpop.permute.xlu0 %418
  %420 = vrot.lane.b32.xlu0 %v34, 95
  %v421 = vpop.permute.xlu0 %420
  %422 = vrot.lane.b32.xlu0 %v35, 95
  %v423 = vpop.permute.xlu0 %422
  %vm424 = vcmp.lt.s32.totalorder %v45, 95
  %v425 = vsel %vm424, %v421, %v423
  %v426 = vsel %vm424, %v419, %v421
  %v427 = vsel %vm424, %v417, %v419
  %v428 = vsel %vm424, %v423, %v417
  %429 = vst [vmem:[#allocation2 + $0x2e0] sm:$0xff] %v427
  %430 = vst [vmem:[#allocation2 + $0x2e8] sm:$0xff] %v426
  %431 = vst [vmem:[#allocation2 + $0x2f0] sm:$0xff] %v425
  %432 = vst [vmem:[#allocation2 + $0x2f8] sm:$0xff] %v428
  %433 = vrot.lane.b32.xlu0 %v32, 94
  %v434 = vpop.permute.xlu0 %433
  %435 = vrot.lane.b32.xlu0 %v33, 94
  %v436 = vpop.permute.xlu0 %435
  %437 = vrot.lane.b32.xlu0 %v34, 94
  %v438 = vpop.permute.xlu0 %437
  %439 = vrot.lane.b32.xlu0 %v35, 94
  %v440 = vpop.permute.xlu0 %439
  %vm441 = vcmp.lt.s32.totalorder %v45, 94
  %v442 = vsel %vm441, %v438, %v440
  %v443 = vsel %vm441, %v436, %v438
  %v444 = vsel %vm441, %v434, %v436
  %v445 = vsel %vm441, %v440, %v434
  %446 = vst [vmem:[#allocation2 + $0x300] sm:$0xff] %v444
  %447 = vst [vmem:[#allocation2 + $0x308] sm:$0xff] %v443
  %448 = vst [vmem:[#allocation2 + $0x310] sm:$0xff] %v442
  %449 = vst [vmem:[#allocation2 + $0x318] sm:$0xff] %v445
  %v450 = vld [vmem:[#allocation2] sm:$0xff]
  %v451 = vld [vmem:[#allocation2 + $0x8] sm:$0xff]
  %v452 = vld [vmem:[#allocation2 + $0x10] sm:$0xff]
  %v453 = vld [vmem:[#allocation2 + $0x18] sm:$0xff]
  %v454 = vld [vmem:[#allocation2 + $0x20] sm:$0xff]
  %v455 = vld [vmem:[#allocation2 + $0x28] sm:$0xff]
  %v456 = vld [vmem:[#allocation2 + $0x30] sm:$0xff]
  %v457 = vld [vmem:[#allocation2 + $0x38] sm:$0xff]
  %v458 = vld [vmem:[#allocation2 + $0x40] sm:$0xff]
  %v459 = vld [vmem:[#allocation2 + $0x48] sm:$0xff]
  %v460 = vld [vmem:[#allocation2 + $0x50] sm:$0xff]
  %v461 = vld [vmem:[#allocation2 + $0x58] sm:$0xff]
  %v462 = vld [vmem:[#allocation2 + $0x60] sm:$0xff]
  %v463 = vld [vmem:[#allocation2 + $0x68] sm:$0xff]
  %v464 = vld [vmem:[#allocation2 + $0x70] sm:$0xff]
  %v465 = vld [vmem:[#allocation2 + $0x78] sm:$0xff]
  %v466 = vld [vmem:[#allocation2 + $0x80] sm:$0xff]
  %v467 = vld [vmem:[#allocation2 + $0x88] sm:$0xff]
  %v468 = vld [vmem:[#allocation2 + $0x90] sm:$0xff]
  %v469 = vld [vmem:[#allocation2 + $0x98] sm:$0xff]
  %v470 = vld [vmem:[#allocation2 + $0xa0] sm:$0xff]
  %v471 = vld [vmem:[#allocation2 + $0xa8] sm:$0xff]
  %v472 = vld [vmem:[#allocation2 + $0xb0] sm:$0xff]
  %v473 = vld [vmem:[#allocation2 + $0xb8] sm:$0xff]
  %v474 = vld [vmem:[#allocation2 + $0xc0] sm:$0xff]
  %v475 = vld [vmem:[#allocation2 + $0xc8] sm:$0xff]
  %v476 = vld [vmem:[#allocation2 + $0xd0] sm:$0xff]
  %v477 = vld [vmem:[#allocation2 + $0xd8] sm:$0xff]
  %v478 = vld [vmem:[#allocation2 + $0xe0] sm:$0xff]
  %v479 = vld [vmem:[#allocation2 + $0xe8] sm:$0xff]
  %v480 = vld [vmem:[#allocation2 + $0xf0] sm:$0xff]
  %v481 = vld [vmem:[#allocation2 + $0xf8] sm:$0xff]
  %v482 = vld [vmem:[#allocation2 + $0x100] sm:$0xff]
  %v483 = vld [vmem:[#allocation2 + $0x108] sm:$0xff]
  %v484 = vld [vmem:[#allocation2 + $0x110] sm:$0xff]
  %v485 = vld [vmem:[#allocation2 + $0x118] sm:$0xff]
  %v486 = vld [vmem:[#allocation2 + $0x120] sm:$0xff]
  %v487 = vld [vmem:[#allocation2 + $0x128] sm:$0xff]
  %v488 = vld [vmem:[#allocation2 + $0x130] sm:$0xff]
  %v489 = vld [vmem:[#allocation2 + $0x138] sm:$0xff]
  %v490 = vld [vmem:[#allocation2 + $0x140] sm:$0xff]
  %v491 = vld [vmem:[#allocation2 + $0x148] sm:$0xff]
  %v492 = vld [vmem:[#allocation2 + $0x150] sm:$0xff]
  %v493 = vld [vmem:[#allocation2 + $0x158] sm:$0xff]
  %v494 = vld [vmem:[#allocation2 + $0x160] sm:$0xff]
  %v495 = vld [vmem:[#allocation2 + $0x168] sm:$0xff]
  %v496 = vld [vmem:[#allocation2 + $0x170] sm:$0xff]
  %v497 = vld [vmem:[#allocation2 + $0x178] sm:$0xff]
  %v498 = vld [vmem:[#allocation2 + $0x180] sm:$0xff]
  %v499 = vld [vmem:[#allocation2 + $0x188] sm:$0xff]
  %v500 = vld [vmem:[#allocation2 + $0x190] sm:$0xff]
  %v501 = vld [vmem:[#allocation2 + $0x198] sm:$0xff]
  %v502 = vld [vmem:[#allocation2 + $0x1a0] sm:$0xff]
  %v503 = vld [vmem:[#allocation2 + $0x1a8] sm:$0xff]
  %v504 = vld [vmem:[#allocation2 + $0x1b0] sm:$0xff]
  %v505 = vld [vmem:[#allocation2 + $0x1b8] sm:$0xff]
  %v506 = vld [vmem:[#allocation2 + $0x1c0] sm:$0xff]
  %v507 = vld [vmem:[#allocation2 + $0x1c8] sm:$0xff]
  %v508 = vld [vmem:[#allocation2 + $0x1d0] sm:$0xff]
  %v509 = vld [vmem:[#allocation2 + $0x1d8] sm:$0xff]
  %v510 = vld [vmem:[#allocation2 + $0x1e0] sm:$0xff]
  %v511 = vld [vmem:[#allocation2 + $0x1e8] sm:$0xff]
  %v512 = vld [vmem:[#allocation2 + $0x1f0] sm:$0xff]
  %v513 = vld [vmem:[#allocation2 + $0x1f8] sm:$0xff]
  %v514 = vld [vmem:[#allocation2 + $0x200] sm:$0xff]
  %v515 = vld [vmem:[#allocation2 + $0x208] sm:$0xff]
  %v516 = vld [vmem:[#allocation2 + $0x210] sm:$0xff]
  %v517 = vld [vmem:[#allocation2 + $0x218] sm:$0xff]
  %v518 = vld [vmem:[#allocation2 + $0x220] sm:$0xff]
  %v519 = vld [vmem:[#allocation2 + $0x228] sm:$0xff]
  %v520 = vld [vmem:[#allocation2 + $0x230] sm:$0xff]
  %v521 = vld [vmem:[#allocation2 + $0x238] sm:$0xff]
  %v522 = vld [vmem:[#allocation2 + $0x240] sm:$0xff]
  %v523 = vld [vmem:[#allocation2 + $0x248] sm:$0xff]
  %v524 = vld [vmem:[#allocation2 + $0x250] sm:$0xff]
  %v525 = vld [vmem:[#allocation2 + $0x258] sm:$0xff]
  %v526 = vld [vmem:[#allocation2 + $0x260] sm:$0xff]
  %v527 = vld [vmem:[#allocation2 + $0x268] sm:$0xff]
  %v528 = vld [vmem:[#allocation2 + $0x270] sm:$0xff]
  %v529 = vld [vmem:[#allocation2 + $0x278] sm:$0xff]
  %v530 = vld [vmem:[#allocation2 + $0x280] sm:$0xff]
  %v531 = vld [vmem:[#allocation2 + $0x288] sm:$0xff]
  %v532 = vld [vmem:[#allocation2 + $0x290] sm:$0xff]
  %v533 = vld [vmem:[#allocation2 + $0x298] sm:$0xff]
  %v534 = vld [vmem:[#allocation2 + $0x2a0] sm:$0xff]
  %v535 = vld [vmem:[#allocation2 + $0x2a8] sm:$0xff]
  %v536 = vld [vmem:[#allocation2 + $0x2b0] sm:$0xff]
  %v537 = vld [vmem:[#allocation2 + $0x2b8] sm:$0xff]
  %v538 = vld [vmem:[#allocation2 + $0x2c0] sm:$0xff]
  %v539 = vld [vmem:[#allocation2 + $0x2c8] sm:$0xff]
  %v540 = vld [vmem:[#allocation2 + $0x2d0] sm:$0xff]
  %v541 = vld [vmem:[#allocation2 + $0x2d8] sm:$0xff]
  %v542 = vld [vmem:[#allocation2 + $0x2e0] sm:$0xff]
  %v543 = vld [vmem:[#allocation2 + $0x2e8] sm:$0xff]
  %v544 = vld [vmem:[#allocation2 + $0x2f0] sm:$0xff]
  %v545 = vld [vmem:[#allocation2 + $0x2f8] sm:$0xff]
  %v546 = vld [vmem:[#allocation2 + $0x300] sm:$0xff]
  %v547 = vld [vmem:[#allocation2 + $0x308] sm:$0xff]
  %v548 = vld [vmem:[#allocation2 + $0x310] sm:$0xff]
  %v549 = vld [vmem:[#allocation2 + $0x318] sm:$0xff]
  %v550 = vld [vmem:[%s1] sm:$0xff]
  %v551 = vld [vmem:[%s1 + $0x8] sm:$0xff]
  %v552 = vld [vmem:[%s1 + $0x10] sm:$0xff]
  %v553 = vld [vmem:[%s1 + $0x18] sm:$0xff]
  %v554 = vld [vmem:[%s1 + $0x20] sm:$0xff]
  %v555 = vld [vmem:[%s1 + $0x28] sm:$0xff]
  %v556 = vld [vmem:[%s1 + $0x30] sm:$0xff]
  %v557 = vld [vmem:[%s1 + $0x38] sm:$0xff]
  %v558 = vld [vmem:[%s1 + $0x40] sm:$0xff]
  %v559 = vld [vmem:[%s1 + $0x48] sm:$0xff]
  %v560 = vld [vmem:[%s1 + $0x50] sm:$0xff]
  %v561 = vld [vmem:[%s1 + $0x58] sm:$0xff]
  %v562 = vld [vmem:[%s1 + $0x60] sm:$0xff]
  %v563 = vld [vmem:[%s1 + $0x68] sm:$0xff]
  %v564 = vld [vmem:[%s1 + $0x70] sm:$0xff]
  %v565 = vld [vmem:[%s1 + $0x78] sm:$0xff]
  %v566 = vld [vmem:[%s1 + $0x80] sm:$0xff]
  %v567 = vld [vmem:[%s1 + $0x88] sm:$0xff]
  %v568 = vld [vmem:[%s1 + $0x90] sm:$0xff]
  %v569 = vld [vmem:[%s1 + $0x98] sm:$0xff]
  %v570 = vld [vmem:[%s1 + $0xa0] sm:$0xff]
  %v571 = vld [vmem:[%s1 + $0xa8] sm:$0xff]
  %v572 = vld [vmem:[%s1 + $0xb0] sm:$0xff]
  %v573 = vld [vmem:[%s1 + $0xb8] sm:$0xff]
  %v574 = vld [vmem:[%s1 + $0xc0] sm:$0xff]
  %v575 = vld [vmem:[%s1 + $0xc8] sm:$0xff]
  %v576 = vld [vmem:[%s1 + $0xd0] sm:$0xff]
  %v577 = vld [vmem:[%s1 + $0xd8] sm:$0xff]
  %v578 = vld [vmem:[%s1 + $0xe0] sm:$0xff]
  %v579 = vld [vmem:[%s1 + $0xe8] sm:$0xff]
  %v580 = vld [vmem:[%s1 + $0xf0] sm:$0xff]
  %v581 = vld [vmem:[%s1 + $0xf8] sm:$0xff]
  %v582 = vld [vmem:[%s1 + $0x100] sm:$0xff]
  %v583 = vld [vmem:[%s1 + $0x108] sm:$0xff]
  %v584 = vld [vmem:[%s1 + $0x110] sm:$0xff]
  %v585 = vld [vmem:[%s1 + $0x118] sm:$0xff]
  %v586 = vld [vmem:[%s1 + $0x120] sm:$0xff]
  %v587 = vld [vmem:[%s1 + $0x128] sm:$0xff]
  %v588 = vld [vmem:[%s1 + $0x130] sm:$0xff]
  %v589 = vld [vmem:[%s1 + $0x138] sm:$0xff]
  %v590 = vld [vmem:[%s1 + $0x140] sm:$0xff]
  %v591 = vld [vmem:[%s1 + $0x148] sm:$0xff]
  %v592 = vld [vmem:[%s1 + $0x150] sm:$0xff]
  %v593 = vld [vmem:[%s1 + $0x158] sm:$0xff]
  %v594 = vld [vmem:[%s1 + $0x160] sm:$0xff]
  %v595 = vld [vmem:[%s1 + $0x168] sm:$0xff]
  %v596 = vld [vmem:[%s1 + $0x170] sm:$0xff]
  %v597 = vld [vmem:[%s1 + $0x178] sm:$0xff]
  %v598 = vld [vmem:[%s1 + $0x180] sm:$0xff]
  %v599 = vld [vmem:[%s1 + $0x188] sm:$0xff]
  %v600 = vld [vmem:[%s1 + $0x190] sm:$0xff]
  %v601 = vld [vmem:[%s1 + $0x198] sm:$0xff]
  %v602 = vld [vmem:[%s1 + $0x1a0] sm:$0xff]
  %v603 = vld [vmem:[%s1 + $0x1a8] sm:$0xff]
  %v604 = vld [vmem:[%s1 + $0x1b0] sm:$0xff]
  %v605 = vld [vmem:[%s1 + $0x1b8] sm:$0xff]
  %v606 = vld [vmem:[%s1 + $0x1c0] sm:$0xff]
  %v607 = vld [vmem:[%s1 + $0x1c8] sm:$0xff]
  %v608 = vld [vmem:[%s1 + $0x1d0] sm:$0xff]
  %v609 = vld [vmem:[%s1 + $0x1d8] sm:$0xff]
  %v610 = vld [vmem:[%s1 + $0x1e0] sm:$0xff]
  %v611 = vld [vmem:[%s1 + $0x1e8] sm:$0xff]
  %v612 = vld [vmem:[%s1 + $0x1f0] sm:$0xff]
  %v613 = vld [vmem:[%s1 + $0x1f8] sm:$0xff]
  %v614 = vld [vmem:[%s1 + $0x200] sm:$0xff]
  %v615 = vld [vmem:[%s1 + $0x208] sm:$0xff]
  %v616 = vld [vmem:[%s1 + $0x210] sm:$0xff]
  %v617 = vld [vmem:[%s1 + $0x218] sm:$0xff]
  %v618 = vld [vmem:[%s1 + $0x220] sm:$0xff]
  %v619 = vld [vmem:[%s1 + $0x228] sm:$0xff]
  %v620 = vld [vmem:[%s1 + $0x230] sm:$0xff]
  %v621 = vld [vmem:[%s1 + $0x238] sm:$0xff]
  %v622 = vld [vmem:[%s1 + $0x240] sm:$0xff]
  %v623 = vld [vmem:[%s1 + $0x248] sm:$0xff]
  %v624 = vld [vmem:[%s1 + $0x250] sm:$0xff]
  %v625 = vld [vmem:[%s1 + $0x258] sm:$0xff]
  %v626 = vld [vmem:[%s1 + $0x260] sm:$0xff]
  %v627 = vld [vmem:[%s1 + $0x268] sm:$0xff]
  %v628 = vld [vmem:[%s1 + $0x270] sm:$0xff]
  %v629 = vld [vmem:[%s1 + $0x278] sm:$0xff]
  %v630 = vld [vmem:[%s1 + $0x280] sm:$0xff]
  %v631 = vld [vmem:[%s1 + $0x288] sm:$0xff]
  %v632 = vld [vmem:[%s1 + $0x290] sm:$0xff]
  %v633 = vld [vmem:[%s1 + $0x298] sm:$0xff]
  %v634 = vld [vmem:[%s1 + $0x2a0] sm:$0xff]
  %v635 = vld [vmem:[%s1 + $0x2a8] sm:$0xff]
  %v636 = vld [vmem:[%s1 + $0x2b0] sm:$0xff]
  %v637 = vld [vmem:[%s1 + $0x2b8] sm:$0xff]
  %v638 = vld [vmem:[%s1 + $0x2c0] sm:$0xff]
  %v639 = vld [vmem:[%s1 + $0x2c8] sm:$0xff]
  %v640 = vld [vmem:[%s1 + $0x2d0] sm:$0xff]
  %v641 = vld [vmem:[%s1 + $0x2d8] sm:$0xff]
  %v642 = vld [vmem:[%s1 + $0x2e0] sm:$0xff]
  %v643 = vld [vmem:[%s1 + $0x2e8] sm:$0xff]
  %v644 = vld [vmem:[%s1 + $0x2f0] sm:$0xff]
  %v645 = vld [vmem:[%s1 + $0x2f8] sm:$0xff]
  %v646 = vld [vmem:[%s1 + $0x300] sm:$0xff]
  %v647 = vld [vmem:[%s1 + $0x308] sm:$0xff]
  %v648 = vld [vmem:[%s1 + $0x310] sm:$0xff]
  %v649 = vld [vmem:[%s1 + $0x318] sm:$0xff]
  %v650 = vmul.f32 %v450, %v550
  %v651 = vmul.f32 %v451, %v551
  %v652 = vmul.f32 %v452, %v552
  %v653 = vmul.f32 %v453, %v553
  %v654 = vmul.f32 %v454, %v554
  %v655 = vmul.f32 %v455, %v555
  %v656 = vmul.f32 %v456, %v556
  %v657 = vmul.f32 %v457, %v557
  %v658 = vmul.f32 %v458, %v558
  %v659 = vmul.f32 %v459, %v559
  %v660 = vmul.f32 %v460, %v560
  %v661 = vmul.f32 %v461, %v561
  %v662 = vmul.f32 %v462, %v562
  %v663 = vmul.f32 %v463, %v563
  %v664 = vmul.f32 %v464, %v564
  %v665 = vmul.f32 %v465, %v565
  %v666 = vmul.f32 %v466, %v566
  %v667 = vmul.f32 %v467, %v567
  %v668 = vmul.f32 %v468, %v568
  %v669 = vmul.f32 %v469, %v569
  %v670 = vmul.f32 %v470, %v570
  %v671 = vmul.f32 %v471, %v571
  %v672 = vmul.f32 %v472, %v572
  %v673 = vmul.f32 %v473, %v573
  %v674 = vmul.f32 %v474, %v574
  %v675 = vmul.f32 %v475, %v575
  %v676 = vmul.f32 %v476, %v576
  %v677 = vmul.f32 %v477, %v577
  %v678 = vmul.f32 %v478, %v578
  %v679 = vmul.f32 %v479, %v579
  %v680 = vmul.f32 %v480, %v580
  %v681 = vmul.f32 %v481, %v581
  %v682 = vmul.f32 %v482, %v582
  %v683 = vmul.f32 %v483, %v583
  %v684 = vmul.f32 %v484, %v584
  %v685 = vmul.f32 %v485, %v585
  %v686 = vmul.f32 %v486, %v586
  %v687 = vmul.f32 %v487, %v587
  %v688 = vmul.f32 %v488, %v588
  %v689 = vmul.f32 %v489, %v589
  %v690 = vmul.f32 %v490, %v590
  %v691 = vmul.f32 %v491, %v591
  %v692 = vmul.f32 %v492, %v592
  %v693 = vmul.f32 %v493, %v593
  %v694 = vmul.f32 %v494, %v594
  %v695 = vmul.f32 %v495, %v595
  %v696 = vmul.f32 %v496, %v596
  %v697 = vmul.f32 %v497, %v597
  %v698 = vmul.f32 %v498, %v598
  %v699 = vmul.f32 %v499, %v599
  %v700 = vmul.f32 %v500, %v600
  %v701 = vmul.f32 %v501, %v601
  %v702 = vmul.f32 %v502, %v602
  %v703 = vmul.f32 %v503, %v603
  %v704 = vmul.f32 %v504, %v604
  %v705 = vmul.f32 %v505, %v605
  %v706 = vmul.f32 %v506, %v606
  %v707 = vmul.f32 %v507, %v607
  %v708 = vmul.f32 %v508, %v608
  %v709 = vmul.f32 %v509, %v609
  %v710 = vmul.f32 %v510, %v610
  %v711 = vmul.f32 %v511, %v611
  %v712 = vmul.f32 %v512, %v612
  %v713 = vmul.f32 %v513, %v613
  %v714 = vmul.f32 %v514, %v614
  %v715 = vmul.f32 %v515, %v615
  %v716 = vmul.f32 %v516, %v616
  %v717 = vmul.f32 %v517, %v617
  %v718 = vmul.f32 %v518, %v618
  %v719 = vmul.f32 %v519, %v619
  %v720 = vmul.f32 %v520, %v620
  %v721 = vmul.f32 %v521, %v621
  %v722 = vmul.f32 %v522, %v622
  %v723 = vmul.f32 %v523, %v623
  %v724 = vmul.f32 %v524, %v624
  %v725 = vmul.f32 %v525, %v625
  %v726 = vmul.f32 %v526, %v626
  %v727 = vmul.f32 %v527, %v627
  %v728 = vmul.f32 %v528, %v628
  %v729 = vmul.f32 %v529, %v629
  %v730 = vmul.f32 %v530, %v630
  %v731 = vmul.f32 %v531, %v631
  %v732 = vmul.f32 %v532, %v632
  %v733 = vmul.f32 %v533, %v633
  %v734 = vmul.f32 %v534, %v634
  %v735 = vmul.f32 %v535, %v635
  %v736 = vmul.f32 %v536, %v636
  %v737 = vmul.f32 %v537, %v637
  %v738 = vmul.f32 %v538, %v638
  %v739 = vmul.f32 %v539, %v639
  %v740 = vmul.f32 %v540, %v640
  %v741 = vmul.f32 %v541, %v641
  %v742 = vmul.f32 %v542, %v642
  %v743 = vmul.f32 %v543, %v643
  %v744 = vmul.f32 %v544, %v644
  %v745 = vmul.f32 %v545, %v645
  %v746 = vmul.f32 %v546, %v646
  %v747 = vmul.f32 %v547, %v647
  %v748 = vmul.f32 %v548, %v648
  %v749 = vmul.f32 %v549, %v649
  %v750 = vld [vmem:[%s3] sm:$0xff]
  %v751 = vld [vmem:[%s3 + $0x8] sm:$0xff]
  %v752 = vld [vmem:[%s3 + $0x10] sm:$0xff]
  %v753 = vld [vmem:[%s3 + $0x18] sm:$0xff]
  %v754 = vld [vmem:[%s3 + $0x20] sm:$0xff]
  %v755 = vld [vmem:[%s3 + $0x28] sm:$0xff]
  %v756 = vld [vmem:[%s4] sm:$0xff]
  %v757 = vld [vmem:[%s4 + $0x8] sm:$0xff]
  %v758 = vld [vmem:[%s4 + $0x10] sm:$0xff]
  %760 = vset.pattern.permute.xlu0 0
  %761 = vperm.xlu0 %760, %v756
  %v762 = vpop.permute.xlu0 %761
  %765 = vset.pattern.permute.xlu0 0
  %766 = vperm.xlu0 %765, %v757
  %v767 = vpop.permute.xlu0 %766
  %770 = vset.pattern.permute.xlu0 0
  %771 = vperm.xlu0 %770, %v758
  %v772 = vpop.permute.xlu0 %771
  %vm774 = vcmask 588800
  %v776 = vsel %vm774, %v751, 0
  %v779 = vsel %vm774, %v753, 0
  %v782 = vsel %vm774, %v755, 0
  %784 = vmatprep.subr.mxu0 %v711
  %785 = vmatpush1.msra.mxu0 %v710
  %786 = vmatprep.subr.mxu0 %v707
  %787 = vmatpush1.msra.mxu0 %v706
  %788 = vmatprep.subr.mxu0 %v703
  %789 = vmatpush1.msra.mxu0 %v702
  %790 = vmatprep.subr.mxu0 %v699
  %791 = vmatpush1.msra.mxu0 %v698
  %792 = vmatprep.subr.mxu0 %v695
  %793 = vmatpush1.msra.mxu0 %v694
  %794 = vmatprep.subr.mxu0 %v691
  %795 = vmatpush1.msra.mxu0 %v690
  %796 = vmatprep.subr.mxu0 %v687
  %797 = vmatpush1.msra.mxu0 %v686
  %798 = vmatprep.subr.mxu0 %v683
  %799 = vmatpush1.msra.mxu0 %v682
  %800 = vmatprep.subr.mxu0 %v679
  %801 = vmatpush1.msra.mxu0 %v678
  %802 = vmatprep.subr.mxu0 %v675
  %803 = vmatpush1.msra.mxu0 %v674
  %804 = vmatprep.subr.mxu0 %v671
  %805 = vmatpush1.msra.mxu0 %v670
  %806 = vmatprep.subr.mxu0 %v667
  %807 = vmatpush1.msra.mxu0 %v666
  %808 = vmatprep.subr.mxu0 %v663
  %809 = vmatpush1.msra.mxu0 %v662
  %810 = vmatprep.subr.mxu0 %v659
  %811 = vmatpush1.msra.mxu0 %v658
  %812 = vmatprep.subr.mxu0 %v655
  %813 = vmatpush1.msra.mxu0 %v654
  %814 = vmatprep.subr.mxu0 %v651
  %815 = vmatpush1.msra.mxu0 %v650
  %816 = vmatprep.subr.mxu0 0.0
  %817 = vmatpush2.msra.mxu0 0.0
  %818 = vmatprep.subr.mxu0 0.0
  %819 = vmatpush2.msra.mxu0 0.0
  %820 = vmatprep.subr.mxu0 0.0
  %821 = vmatpush2.msra.mxu0 0.0
  %822 = vmatprep.subr.mxu0 0.0
  %823 = vmatpush2.msra.mxu0 0.0
  %824 = vmatprep.subr.mxu0 0.0
  %825 = vmatpush2.msra.mxu0 0.0
  %826 = vmatprep.subr.mxu0 0.0
  %827 = vmatpush2.msra.mxu0 0.0
  %828 = vmatprep.subr.mxu0 0.0
  %829 = vmatpush2.msra.mxu0 0.0
  %830 = vmatprep.subr.mxu0 %v747
  %831 = vmatpush2.msra.mxu0 %v746
  %832 = vmatprep.subr.mxu0 %v743
  %833 = vmatpush2.msra.mxu0 %v742
  %834 = vmatprep.subr.mxu0 %v739
  %835 = vmatpush2.msra.mxu0 %v738
  %836 = vmatprep.subr.mxu0 %v735
  %837 = vmatpush2.msra.mxu0 %v734
  %838 = vmatprep.subr.mxu0 %v731
  %839 = vmatpush2.msra.mxu0 %v730
  %840 = vmatprep.subr.mxu0 %v727
  %841 = vmatpush2.msra.mxu0 %v726
  %842 = vmatprep.subr.mxu0 %v723
  %843 = vmatpush2.msra.mxu0 %v722
  %844 = vmatprep.subr.mxu0 %v719
  %845 = vmatpush2.msra.mxu0 %v718
  %846 = vmatprep.subr.mxu0 %v715
  %847 = vmatpush2.msra.mxu0 %v714
  %848 = vmatprep.mubr.f32.mxu0 %v776
  %849 = vmatmul.mubr.f32.gmra.mxu0 %v750
  %v850 = vpop.f32.mrf.mxu0
  %v851 = vadd.f32 %v762, %v850
  %v852 = vpop.f32.mrf.mxu0
  %v853 = vadd.f32 %v762, %v852
  %854 = vmatprep.mubr.f32.mxu0 %v779
  %855 = vmatmul.mubr.f32.gmra.mxu0 %v752
  %v856 = vpop.f32.mrf.mxu0
  %v857 = vadd.f32 %v767, %v856
  %v858 = vpop.f32.mrf.mxu0
  %v859 = vadd.f32 %v767, %v858
  %860 = vmatprep.mubr.f32.mxu0 %v782
  %861 = vmatmul.mubr.f32.gmra.mxu0 %v754
  %v862 = vpop.f32.mrf.mxu0
  %v863 = vadd.f32 %v772, %v862
  %v864 = vpop.f32.mrf.mxu0
  %v865 = vadd.f32 %v772, %v864
  %866 = vdwg.mxu0
  %867 = vmatprep.subr.mxu0 %v713
  %868 = vmatpush1.msra.mxu0 %v712
  %869 = vmatprep.subr.mxu0 %v709
  %870 = vmatpush1.msra.mxu0 %v708
  %871 = vmatprep.subr.mxu0 %v705
  %872 = vmatpush1.msra.mxu0 %v704
  %873 = vmatprep.subr.mxu0 %v701
  %874 = vmatpush1.msra.mxu0 %v700
  %875 = vmatprep.subr.mxu0 %v697
  %876 = vmatpush1.msra.mxu0 %v696
  %877 = vmatprep.subr.mxu0 %v693
  %878 = vmatpush1.msra.mxu0 %v692
  %879 = vmatprep.subr.mxu0 %v689
  %880 = vmatpush1.msra.mxu0 %v688
  %881 = vmatprep.subr.mxu0 %v685
  %882 = vmatpush1.msra.mxu0 %v684
  %883 = vmatprep.subr.mxu0 %v681
  %884 = vmatpush1.msra.mxu0 %v680
  %885 = vmatprep.subr.mxu0 %v677
  %886 = vmatpush1.msra.mxu0 %v676
  %887 = vmatprep.subr.mxu0 %v673
  %888 = vmatpush1.msra.mxu0 %v672
  %889 = vmatprep.subr.mxu0 %v669
  %890 = vmatpush1.msra.mxu0 %v668
  %891 = vmatprep.subr.mxu0 %v665
  %892 = vmatpush1.msra.mxu0 %v664
  %893 = vmatprep.subr.mxu0 %v661
  %894 = vmatpush1.msra.mxu0 %v660
  %895 = vmatprep.subr.mxu0 %v657
  %896 = vmatpush1.msra.mxu0 %v656
  %897 = vmatprep.subr.mxu0 %v653
  %898 = vmatpush1.msra.mxu0 %v652
  %899 = vmatprep.subr.mxu0 0.0
  %900 = vmatpush2.msra.mxu0 0.0
  %901 = vmatprep.subr.mxu0 0.0
  %902 = vmatpush2.msra.mxu0 0.0
  %903 = vmatprep.subr.mxu0 0.0
  %904 = vmatpush2.msra.mxu0 0.0
  %905 = vmatprep.subr.mxu0 0.0
  %906 = vmatpush2.msra.mxu0 0.0
  %907 = vmatprep.subr.mxu0 0.0
  %908 = vmatpush2.msra.mxu0 0.0
  %909 = vmatprep.subr.mxu0 0.0
  %910 = vmatpush2.msra.mxu0 0.0
  %911 = vmatprep.subr.mxu0 0.0
  %912 = vmatpush2.msra.mxu0 0.0
  %913 = vmatprep.subr.mxu0 %v749
  %914 = vmatpush2.msra.mxu0 %v748
  %915 = vmatprep.subr.mxu0 %v745
  %916 = vmatpush2.msra.mxu0 %v744
  %917 = vmatprep.subr.mxu0 %v741
  %918 = vmatpush2.msra.mxu0 %v740
  %919 = vmatprep.subr.mxu0 %v737
  %920 = vmatpush2.msra.mxu0 %v736
  %921 = vmatprep.subr.mxu0 %v733
  %922 = vmatpush2.msra.mxu0 %v732
  %923 = vmatprep.subr.mxu0 %v729
  %924 = vmatpush2.msra.mxu0 %v728
  %925 = vmatprep.subr.mxu0 %v725
  %926 = vmatpush2.msra.mxu0 %v724
  %927 = vmatprep.subr.mxu0 %v721
  %928 = vmatpush2.msra.mxu0 %v720
  %929 = vmatprep.subr.mxu0 %v717
  %930 = vmatpush2.msra.mxu0 %v716
  %931 = vmatprep.mubr.f32.mxu0 %v776
  %932 = vmatmul.mubr.f32.gmra.mxu0 %v750
  %v933 = vpop.f32.mrf.mxu0
  %v934 = vadd.f32 %v762, %v933
  %v935 = vpop.f32.mrf.mxu0
  %v936 = vadd.f32 %v762, %v935
  %937 = vmatprep.mubr.f32.mxu0 %v779
  %938 = vmatmul.mubr.f32.gmra.mxu0 %v752
  %v939 = vpop.f32.mrf.mxu0
  %v940 = vadd.f32 %v767, %v939
  %v941 = vpop.f32.mrf.mxu0
  %v942 = vadd.f32 %v767, %v941
  %943 = vmatprep.mubr.f32.mxu0 %v782
  %944 = vmatmul.mubr.f32.gmra.mxu0 %v754
  %v945 = vpop.f32.mrf.mxu0
  %v946 = vadd.f32 %v772, %v945
  %v947 = vpop.f32.mrf.mxu0
  %v948 = vadd.f32 %v772, %v947
  %949 = vdwg.mxu0
  %950 = vrot.lane.b32.xlu0 %v851, 34
  %v951 = vpop.permute.xlu0 %950
  %952 = vrot.lane.b32.xlu0 %v857, 34
  %v953 = vpop.permute.xlu0 %952
  %954 = vrot.lane.b32.xlu0 %v863, 34
  %v955 = vpop.permute.xlu0 %954
  %956 = vrot.lane.b32.xlu0 %v853, 34
  %v957 = vpop.permute.xlu0 %956
  %958 = vrot.lane.b32.xlu0 %v859, 34
  %v959 = vpop.permute.xlu0 %958
  %960 = vrot.lane.b32.xlu0 %v865, 34
  %v961 = vpop.permute.xlu0 %960
  %962 = vrot.lane.b32.xlu0 %v934, 34
  %v963 = vpop.permute.xlu0 %962
  %964 = vrot.lane.b32.xlu0 %v940, 34
  %v965 = vpop.permute.xlu0 %964
  %966 = vrot.lane.b32.xlu0 %v946, 34
  %v967 = vpop.permute.xlu0 %966
  %968 = vrot.lane.b32.xlu0 %v936, 34
  %v969 = vpop.permute.xlu0 %968
  %970 = vrot.lane.b32.xlu0 %v942, 34
  %v971 = vpop.permute.xlu0 %970
  %972 = vrot.lane.b32.xlu0 %v948, 34
  %v973 = vpop.permute.xlu0 %972
  %v974 = vsel %vm46, %v963, %v969
  %v975 = vsel %vm46, %v965, %v971
  %v976 = vsel %vm46, %v967, %v973
  %v977 = vsel %vm46, %v957, %v963
  %v978 = vsel %vm46, %v959, %v965
  %v979 = vsel %vm46, %v961, %v967
  %v980 = vsel %vm46, %v951, %v957
  %v981 = vsel %vm46, %v953, %v959
  %v982 = vsel %vm46, %v955, %v961
  %v983 = vsel %vm46, %v969, %v951
  %v984 = vsel %vm46, %v971, %v953
  %v985 = vsel %vm46, %v973, %v955
  %986 = vst [vmem:[#allocation2] sm:$0xff] %v983
  %987 = vst [vmem:[#allocation2 + $0x8] sm:$0xff] %v980
  %988 = vst [vmem:[#allocation2 + $0x10] sm:$0xff] %v977
  %989 = vst [vmem:[#allocation2 + $0x18] sm:$0xff] %v974
  %990 = vst [vmem:[#allocation2 + $0x20] sm:$0xff] %v984
  %991 = vst [vmem:[#allocation2 + $0x28] sm:$0xff] %v981
  %992 = vst [vmem:[#allocation2 + $0x30] sm:$0xff] %v978
  %993 = vst [vmem:[#allocation2 + $0x38] sm:$0xff] %v975
  %994 = vst [vmem:[#allocation2 + $0x40] sm:$0xff] %v985
  %995 = vst [vmem:[#allocation2 + $0x48] sm:$0xff] %v982
  %996 = vst [vmem:[#allocation2 + $0x50] sm:$0xff] %v979
  %997 = vst [vmem:[#allocation2 + $0x58] sm:$0xff] %v976
  %998 = vrot.lane.b32.xlu0 %v851, 33
  %v999 = vpop.permute.xlu0 %998
  %1000 = vrot.lane.b32.xlu0 %v857, 33
  %v1001 = vpop.permute.xlu0 %1000
  %1002 = vrot.lane.b32.xlu0 %v863, 33
  %v1003 = vpop.permute.xlu0 %1002
  %1004 = vrot.lane.b32.xlu0 %v853, 33
  %v1005 = vpop.permute.xlu0 %1004
  %1006 = vrot.lane.b32.xlu0 %v859, 33
  %v1007 = vpop.permute.xlu0 %1006
  %1008 = vrot.lane.b32.xlu0 %v865, 33
  %v1009 = vpop.permute.xlu0 %1008
  %1010 = vrot.lane.b32.xlu0 %v934, 33
  %v1011 = vpop.permute.xlu0 %1010
  %1012 = vrot.lane.b32.xlu0 %v940, 33
  %v1013 = vpop.permute.xlu0 %1012
  %1014 = vrot.lane.b32.xlu0 %v946, 33
  %v1015 = vpop.permute.xlu0 %1014
  %1016 = vrot.lane.b32.xlu0 %v936, 33
  %v1017 = vpop.permute.xlu0 %1016
  %1018 = vrot.lane.b32.xlu0 %v942, 33
  %v1019 = vpop.permute.xlu0 %1018
  %1020 = vrot.lane.b32.xlu0 %v948, 33
  %v1021 = vpop.permute.xlu0 %1020
  %v1022 = vsel %vm63, %v1011, %v1017
  %v1023 = vsel %vm63, %v1013, %v1019
  %v1024 = vsel %vm63, %v1015, %v1021
  %v1025 = vsel %vm63, %v1005, %v1011
  %v1026 = vsel %vm63, %v1007, %v1013
  %v1027 = vsel %vm63, %v1009, %v1015
  %v1028 = vsel %vm63, %v999, %v1005
  %v1029 = vsel %vm63, %v1001, %v1007
  %v1030 = vsel %vm63, %v1003, %v1009
  %v1031 = vsel %vm63, %v1017, %v999
  %v1032 = vsel %vm63, %v1019, %v1001
  %v1033 = vsel %vm63, %v1021, %v1003
  %1034 = vst [vmem:[#allocation2 + $0x60] sm:$0xff] %v1031
  %1035 = vst [vmem:[#allocation2 + $0x68] sm:$0xff] %v1028
  %1036 = vst [vmem:[#allocation2 + $0x70] sm:$0xff] %v1025
  %1037 = vst [vmem:[#allocation2 + $0x78] sm:$0xff] %v1022
  %1038 = vst [vmem:[#allocation2 + $0x80] sm:$0xff] %v1032
  %1039 = vst [vmem:[#allocation2 + $0x88] sm:$0xff] %v1029
  %1040 = vst [vmem:[#allocation2 + $0x90] sm:$0xff] %v1026
  %1041 = vst [vmem:[#allocation2 + $0x98] sm:$0xff] %v1023
  %1042 = vst [vmem:[#allocation2 + $0xa0] sm:$0xff] %v1033
  %1043 = vst [vmem:[#allocation2 + $0xa8] sm:$0xff] %v1030
  %1044 = vst [vmem:[#allocation2 + $0xb0] sm:$0xff] %v1027
  %1045 = vst [vmem:[#allocation2 + $0xb8] sm:$0xff] %v1024
  %1046 = vrot.lane.b32.xlu0 %v851, 32
  %v1047 = vpop.permute.xlu0 %1046
  %1048 = vrot.lane.b32.xlu0 %v857, 32
  %v1049 = vpop.permute.xlu0 %1048
  %1050 = vrot.lane.b32.xlu0 %v863, 32
  %v1051 = vpop.permute.xlu0 %1050
  %1052 = vrot.lane.b32.xlu0 %v853, 32
  %v1053 = vpop.permute.xlu0 %1052
  %1054 = vrot.lane.b32.xlu0 %v859, 32
  %v1055 = vpop.permute.xlu0 %1054
  %1056 = vrot.lane.b32.xlu0 %v865, 32
  %v1057 = vpop.permute.xlu0 %1056
  %1058 = vrot.lane.b32.xlu0 %v934, 32
  %v1059 = vpop.permute.xlu0 %1058
  %1060 = vrot.lane.b32.xlu0 %v940, 32
  %v1061 = vpop.permute.xlu0 %1060
  %1062 = vrot.lane.b32.xlu0 %v946, 32
  %v1063 = vpop.permute.xlu0 %1062
  %1064 = vrot.lane.b32.xlu0 %v936, 32
  %v1065 = vpop.permute.xlu0 %1064
  %1066 = vrot.lane.b32.xlu0 %v942, 32
  %v1067 = vpop.permute.xlu0 %1066
  %1068 = vrot.lane.b32.xlu0 %v948, 32
  %v1069 = vpop.permute.xlu0 %1068
  %v1070 = vsel %vm80, %v1059, %v1065
  %v1071 = vsel %vm80, %v1061, %v1067
  %v1072 = vsel %vm80, %v1063, %v1069
  %v1073 = vsel %vm80, %v1053, %v1059
  %v1074 = vsel %vm80, %v1055, %v1061
  %v1075 = vsel %vm80, %v1057, %v1063
  %v1076 = vsel %vm80, %v1047, %v1053
  %v1077 = vsel %vm80, %v1049, %v1055
  %v1078 = vsel %vm80, %v1051, %v1057
  %v1079 = vsel %vm80, %v1065, %v1047
  %v1080 = vsel %vm80, %v1067, %v1049
  %v1081 = vsel %vm80, %v1069, %v1051
  %1082 = vst [vmem:[#allocation2 + $0xc0] sm:$0xff] %v1079
  %1083 = vst [vmem:[#allocation2 + $0xc8] sm:$0xff] %v1076
  %1084 = vst [vmem:[#allocation2 + $0xd0] sm:$0xff] %v1073
  %1085 = vst [vmem:[#allocation2 + $0xd8] sm:$0xff] %v1070
  %1086 = vst [vmem:[#allocation2 + $0xe0] sm:$0xff] %v1080
  %1087 = vst [vmem:[#allocation2 + $0xe8] sm:$0xff] %v1077
  %1088 = vst [vmem:[#allocation2 + $0xf0] sm:$0xff] %v1074
  %1089 = vst [vmem:[#allocation2 + $0xf8] sm:$0xff] %v1071
  %1090 = vst [vmem:[#allocation2 + $0x100] sm:$0xff] %v1081
  %1091 = vst [vmem:[#allocation2 + $0x108] sm:$0xff] %v1078
  %1092 = vst [vmem:[#allocation2 + $0x110] sm:$0xff] %v1075
  %1093 = vst [vmem:[#allocation2 + $0x118] sm:$0xff] %v1072
  %1094 = vrot.lane.b32.xlu0 %v851, 31
  %v1095 = vpop.permute.xlu0 %1094
  %1096 = vrot.lane.b32.xlu0 %v857, 31
  %v1097 = vpop.permute.xlu0 %1096
  %1098 = vrot.lane.b32.xlu0 %v863, 31
  %v1099 = vpop.permute.xlu0 %1098
  %1100 = vrot.lane.b32.xlu0 %v853, 31
  %v1101 = vpop.permute.xlu0 %1100
  %1102 = vrot.lane.b32.xlu0 %v859, 31
  %v1103 = vpop.permute.xlu0 %1102
  %1104 = vrot.lane.b32.xlu0 %v865, 31
  %v1105 = vpop.permute.xlu0 %1104
  %1106 = vrot.lane.b32.xlu0 %v934, 31
  %v1107 = vpop.permute.xlu0 %1106
  %1108 = vrot.lane.b32.xlu0 %v940, 31
  %v1109 = vpop.permute.xlu0 %1108
  %1110 = vrot.lane.b32.xlu0 %v946, 31
  %v1111 = vpop.permute.xlu0 %1110
  %1112 = vrot.lane.b32.xlu0 %v936, 31
  %v1113 = vpop.permute.xlu0 %1112
  %1114 = vrot.lane.b32.xlu0 %v942, 31
  %v1115 = vpop.permute.xlu0 %1114
  %1116 = vrot.lane.b32.xlu0 %v948, 31
  %v1117 = vpop.permute.xlu0 %1116
  %v1118 = vsel %vm97, %v1107, %v1113
  %v1119 = vsel %vm97, %v1109, %v1115
  %v1120 = vsel %vm97, %v1111, %v1117
  %v1121 = vsel %vm97, %v1101, %v1107
  %v1122 = vsel %vm97, %v1103, %v1109
  %v1123 = vsel %vm97, %v1105, %v1111
  %v1124 = vsel %vm97, %v1095, %v1101
  %v1125 = vsel %vm97, %v1097, %v1103
  %v1126 = vsel %vm97, %v1099, %v1105
  %v1127 = vsel %vm97, %v1113, %v1095
  %v1128 = vsel %vm97, %v1115, %v1097
  %v1129 = vsel %vm97, %v1117, %v1099
  %1130 = vst [vmem:[#allocation2 + $0x120] sm:$0xff] %v1127
  %1131 = vst [vmem:[#allocation2 + $0x128] sm:$0xff] %v1124
  %1132 = vst [vmem:[#allocation2 + $0x130] sm:$0xff] %v1121
  %1133 = vst [vmem:[#allocation2 + $0x138] sm:$0xff] %v1118
  %1134 = vst [vmem:[#allocation2 + $0x140] sm:$0xff] %v1128
  %1135 = vst [vmem:[#allocation2 + $0x148] sm:$0xff] %v1125
  %1136 = vst [vmem:[#allocation2 + $0x150] sm:$0xff] %v1122
  %1137 = vst [vmem:[#allocation2 + $0x158] sm:$0xff] %v1119
  %1138 = vst [vmem:[#allocation2 + $0x160] sm:$0xff] %v1129
  %1139 = vst [vmem:[#allocation2 + $0x168] sm:$0xff] %v1126
  %1140 = vst [vmem:[#allocation2 + $0x170] sm:$0xff] %v1123
  %1141 = vst [vmem:[#allocation2 + $0x178] sm:$0xff] %v1120
  %1142 = vrot.lane.b32.xlu0 %v851, 30
  %v1143 = vpop.permute.xlu0 %1142
  %1144 = vrot.lane.b32.xlu0 %v857, 30
  %v1145 = vpop.permute.xlu0 %1144
  %1146 = vrot.lane.b32.xlu0 %v863, 30
  %v1147 = vpop.permute.xlu0 %1146
  %1148 = vrot.lane.b32.xlu0 %v853, 30
  %v1149 = vpop.permute.xlu0 %1148
  %1150 = vrot.lane.b32.xlu0 %v859, 30
  %v1151 = vpop.permute.xlu0 %1150
  %1152 = vrot.lane.b32.xlu0 %v865, 30
  %v1153 = vpop.permute.xlu0 %1152
  %1154 = vrot.lane.b32.xlu0 %v934, 30
  %v1155 = vpop.permute.xlu0 %1154
  %1156 = vrot.lane.b32.xlu0 %v940, 30
  %v1157 = vpop.permute.xlu0 %1156
  %1158 = vrot.lane.b32.xlu0 %v946, 30
  %v1159 = vpop.permute.xlu0 %1158
  %1160 = vrot.lane.b32.xlu0 %v936, 30
  %v1161 = vpop.permute.xlu0 %1160
  %1162 = vrot.lane.b32.xlu0 %v942, 30
  %v1163 = vpop.permute.xlu0 %1162
  %1164 = vrot.lane.b32.xlu0 %v948, 30
  %v1165 = vpop.permute.xlu0 %1164
  %v1166 = vsel %vm114, %v1155, %v1161
  %v1167 = vsel %vm114, %v1157, %v1163
  %v1168 = vsel %vm114, %v1159, %v1165
  %v1169 = vsel %vm114, %v1149, %v1155
  %v1170 = vsel %vm114, %v1151, %v1157
  %v1171 = vsel %vm114, %v1153, %v1159
  %v1172 = vsel %vm114, %v1143, %v1149
  %v1173 = vsel %vm114, %v1145, %v1151
  %v1174 = vsel %vm114, %v1147, %v1153
  %v1175 = vsel %vm114, %v1161, %v1143
  %v1176 = vsel %vm114, %v1163, %v1145
  %v1177 = vsel %vm114, %v1165, %v1147
  %1178 = vst [vmem:[#allocation2 + $0x180] sm:$0xff] %v1175
  %1179 = vst [vmem:[#allocation2 + $0x188] sm:$0xff] %v1172
  %1180 = vst [vmem:[#allocation2 + $0x190] sm:$0xff] %v1169
  %1181 = vst [vmem:[#allocation2 + $0x198] sm:$0xff] %v1166
  %1182 = vst [vmem:[#allocation2 + $0x1a0] sm:$0xff] %v1176
  %1183 = vst [vmem:[#allocation2 + $0x1a8] sm:$0xff] %v1173
  %1184 = vst [vmem:[#allocation2 + $0x1b0] sm:$0xff] %v1170
  %1185 = vst [vmem:[#allocation2 + $0x1b8] sm:$0xff] %v1167
  %1186 = vst [vmem:[#allocation2 + $0x1c0] sm:$0xff] %v1177
  %1187 = vst [vmem:[#allocation2 + $0x1c8] sm:$0xff] %v1174
  %1188 = vst [vmem:[#allocation2 + $0x1d0] sm:$0xff] %v1171
  %1189 = vst [vmem:[#allocation2 + $0x1d8] sm:$0xff] %v1168
  %1190 = vrot.lane.b32.xlu0 %v851, 18
  %v1191 = vpop.permute.xlu0 %1190
  %1192 = vrot.lane.b32.xlu0 %v857, 18
  %v1193 = vpop.permute.xlu0 %1192
  %1194 = vrot.lane.b32.xlu0 %v863, 18
  %v1195 = vpop.permute.xlu0 %1194
  %1196 = vrot.lane.b32.xlu0 %v853, 18
  %v1197 = vpop.permute.xlu0 %1196
  %1198 = vrot.lane.b32.xlu0 %v859, 18
  %v1199 = vpop.permute.xlu0 %1198
  %1200 = vrot.lane.b32.xlu0 %v865, 18
  %v1201 = vpop.permute.xlu0 %1200
  %1202 = vrot.lane.b32.xlu0 %v934, 18
  %v1203 = vpop.permute.xlu0 %1202
  %1204 = vrot.lane.b32.xlu0 %v940, 18
  %v1205 = vpop.permute.xlu0 %1204
  %1206 = vrot.lane.b32.xlu0 %v946, 18
  %v1207 = vpop.permute.xlu0 %1206
  %1208 = vrot.lane.b32.xlu0 %v936, 18
  %v1209 = vpop.permute.xlu0 %1208
  %1210 = vrot.lane.b32.xlu0 %v942, 18
  %v1211 = vpop.permute.xlu0 %1210
  %1212 = vrot.lane.b32.xlu0 %v948, 18
  %v1213 = vpop.permute.xlu0 %1212
  %v1214 = vsel %vm131, %v1203, %v1209
  %v1215 = vsel %vm131, %v1205, %v1211
  %v1216 = vsel %vm131, %v1207, %v1213
  %v1217 = vsel %vm131, %v1197, %v1203
  %v1218 = vsel %vm131, %v1199, %v1205
  %v1219 = vsel %vm131, %v1201, %v1207
  %v1220 = vsel %vm131, %v1191, %v1197
  %v1221 = vsel %vm131, %v1193, %v1199
  %v1222 = vsel %vm131, %v1195, %v1201
  %v1223 = vsel %vm131, %v1209, %v1191
  %v1224 = vsel %vm131, %v1211, %v1193
  %v1225 = vsel %vm131, %v1213, %v1195
  %1226 = vst [vmem:[#allocation2 + $0x1e0] sm:$0xff] %v1223
  %1227 = vst [vmem:[#allocation2 + $0x1e8] sm:$0xff] %v1220
  %1228 = vst [vmem:[#allocation2 + $0x1f0] sm:$0xff] %v1217
  %1229 = vst [vmem:[#allocation2 + $0x1f8] sm:$0xff] %v1214
  %1230 = vst [vmem:[#allocation2 + $0x200] sm:$0xff] %v1224
  %1231 = vst [vmem:[#allocation2 + $0x208] sm:$0xff] %v1221
  %1232 = vst [vmem:[#allocation2 + $0x210] sm:$0xff] %v1218
  %1233 = vst [vmem:[#allocation2 + $0x218] sm:$0xff] %v1215
  %1234 = vst [vmem:[#allocation2 + $0x220] sm:$0xff] %v1225
  %1235 = vst [vmem:[#allocation2 + $0x228] sm:$0xff] %v1222
  %1236 = vst [vmem:[#allocation2 + $0x230] sm:$0xff] %v1219
  %1237 = vst [vmem:[#allocation2 + $0x238] sm:$0xff] %v1216
  %1238 = vrot.lane.b32.xlu0 %v851, 17
  %v1239 = vpop.permute.xlu0 %1238
  %1240 = vrot.lane.b32.xlu0 %v857, 17
  %v1241 = vpop.permute.xlu0 %1240
  %1242 = vrot.lane.b32.xlu0 %v863, 17
  %v1243 = vpop.permute.xlu0 %1242
  %1244 = vrot.lane.b32.xlu0 %v853, 17
  %v1245 = vpop.permute.xlu0 %1244
  %1246 = vrot.lane.b32.xlu0 %v859, 17
  %v1247 = vpop.permute.xlu0 %1246
  %1248 = vrot.lane.b32.xlu0 %v865, 17
  %v1249 = vpop.permute.xlu0 %1248
  %1250 = vrot.lane.b32.xlu0 %v934, 17
  %v1251 = vpop.permute.xlu0 %1250
  %1252 = vrot.lane.b32.xlu0 %v940, 17
  %v1253 = vpop.permute.xlu0 %1252
  %1254 = vrot.lane.b32.xlu0 %v946, 17
  %v1255 = vpop.permute.xlu0 %1254
  %1256 = vrot.lane.b32.xlu0 %v936, 17
  %v1257 = vpop.permute.xlu0 %1256
  %1258 = vrot.lane.b32.xlu0 %v942, 17
  %v1259 = vpop.permute.xlu0 %1258
  %1260 = vrot.lane.b32.xlu0 %v948, 17
  %v1261 = vpop.permute.xlu0 %1260
  %v1262 = vsel %vm148, %v1251, %v1257
  %v1263 = vsel %vm148, %v1253, %v1259
  %v1264 = vsel %vm148, %v1255, %v1261
  %v1265 = vsel %vm148, %v1245, %v1251
  %v1266 = vsel %vm148, %v1247, %v1253
  %v1267 = vsel %vm148, %v1249, %v1255
  %v1268 = vsel %vm148, %v1239, %v1245
  %v1269 = vsel %vm148, %v1241, %v1247
  %v1270 = vsel %vm148, %v1243, %v1249
  %v1271 = vsel %vm148, %v1257, %v1239
  %v1272 = vsel %vm148, %v1259, %v1241
  %v1273 = vsel %vm148, %v1261, %v1243
  %1274 = vst [vmem:[#allocation2 + $0x240] sm:$0xff] %v1271
  %1275 = vst [vmem:[#allocation2 + $0x248] sm:$0xff] %v1268
  %1276 = vst [vmem:[#allocation2 + $0x250] sm:$0xff] %v1265
  %1277 = vst [vmem:[#allocation2 + $0x258] sm:$0xff] %v1262
  %1278 = vst [vmem:[#allocation2 + $0x260] sm:$0xff] %v1272
  %1279 = vst [vmem:[#allocation2 + $0x268] sm:$0xff] %v1269
  %1280 = vst [vmem:[#allocation2 + $0x270] sm:$0xff] %v1266
  %1281 = vst [vmem:[#allocation2 + $0x278] sm:$0xff] %v1263
  %1282 = vst [vmem:[#allocation2 + $0x280] sm:$0xff] %v1273
  %1283 = vst [vmem:[#allocation2 + $0x288] sm:$0xff] %v1270
  %1284 = vst [vmem:[#allocation2 + $0x290] sm:$0xff] %v1267
  %1285 = vst [vmem:[#allocation2 + $0x298] sm:$0xff] %v1264
  %1286 = vrot.lane.b32.xlu0 %v851, 16
  %v1287 = vpop.permute.xlu0 %1286
  %1288 = vrot.lane.b32.xlu0 %v857, 16
  %v1289 = vpop.permute.xlu0 %1288
  %1290 = vrot.lane.b32.xlu0 %v863, 16
  %v1291 = vpop.permute.xlu0 %1290
  %1292 = vrot.lane.b32.xlu0 %v853, 16
  %v1293 = vpop.permute.xlu0 %1292
  %1294 = vrot.lane.b32.xlu0 %v859, 16
  %v1295 = vpop.permute.xlu0 %1294
  %1296 = vrot.lane.b32.xlu0 %v865, 16
  %v1297 = vpop.permute.xlu0 %1296
  %1298 = vrot.lane.b32.xlu0 %v934, 16
  %v1299 = vpop.permute.xlu0 %1298
  %1300 = vrot.lane.b32.xlu0 %v940, 16
  %v1301 = vpop.permute.xlu0 %1300
  %1302 = vrot.lane.b32.xlu0 %v946, 16
  %v1303 = vpop.permute.xlu0 %1302
  %1304 = vrot.lane.b32.xlu0 %v936, 16
  %v1305 = vpop.permute.xlu0 %1304
  %1306 = vrot.lane.b32.xlu0 %v942, 16
  %v1307 = vpop.permute.xlu0 %1306
  %1308 = vrot.lane.b32.xlu0 %v948, 16
  %v1309 = vpop.permute.xlu0 %1308
  %v1310 = vsel %vm165, %v1299, %v1305
  %v1311 = vsel %vm165, %v1301, %v1307
  %v1312 = vsel %vm165, %v1303, %v1309
  %v1313 = vsel %vm165, %v1293, %v1299
  %v1314 = vsel %vm165, %v1295, %v1301
  %v1315 = vsel %vm165, %v1297, %v1303
  %v1316 = vsel %vm165, %v1287, %v1293
  %v1317 = vsel %vm165, %v1289, %v1295
  %v1318 = vsel %vm165, %v1291, %v1297
  %v1319 = vsel %vm165, %v1305, %v1287
  %v1320 = vsel %vm165, %v1307, %v1289
  %v1321 = vsel %vm165, %v1309, %v1291
  %1322 = vst [vmem:[#allocation2 + $0x2a0] sm:$0xff] %v1319
  %1323 = vst [vmem:[#allocation2 + $0x2a8] sm:$0xff] %v1316
  %1324 = vst [vmem:[#allocation2 + $0x2b0] sm:$0xff] %v1313
  %1325 = vst [vmem:[#allocation2 + $0x2b8] sm:$0xff] %v1310
  %1326 = vst [vmem:[#allocation2 + $0x2c0] sm:$0xff] %v1320
  %1327 = vst [vmem:[#allocation2 + $0x2c8] sm:$0xff] %v1317
  %1328 = vst [vmem:[#allocation2 + $0x2d0] sm:$0xff] %v1314
  %1329 = vst [vmem:[#allocation2 + $0x2d8] sm:$0xff] %v1311
  %1330 = vst [vmem:[#allocation2 + $0x2e0] sm:$0xff] %v1321
  %1331 = vst [vmem:[#allocation2 + $0x2e8] sm:$0xff] %v1318
  %1332 = vst [vmem:[#allocation2 + $0x2f0] sm:$0xff] %v1315
  %1333 = vst [vmem:[#allocation2 + $0x2f8] sm:$0xff] %v1312
  %1334 = vrot.lane.b32.xlu0 %v851, 15
  %v1335 = vpop.permute.xlu0 %1334
  %1336 = vrot.lane.b32.xlu0 %v857, 15
  %v1337 = vpop.permute.xlu0 %1336
  %1338 = vrot.lane.b32.xlu0 %v863, 15
  %v1339 = vpop.permute.xlu0 %1338
  %1340 = vrot.lane.b32.xlu0 %v853, 15
  %v1341 = vpop.permute.xlu0 %1340
  %1342 = vrot.lane.b32.xlu0 %v859, 15
  %v1343 = vpop.permute.xlu0 %1342
  %1344 = vrot.lane.b32.xlu0 %v865, 15
  %v1345 = vpop.permute.xlu0 %1344
  %1346 = vrot.lane.b32.xlu0 %v934, 15
  %v1347 = vpop.permute.xlu0 %1346
  %1348 = vrot.lane.b32.xlu0 %v940, 15
  %v1349 = vpop.permute.xlu0 %1348
  %1350 = vrot.lane.b32.xlu0 %v946, 15
  %v1351 = vpop.permute.xlu0 %1350
  %1352 = vrot.lane.b32.xlu0 %v936, 15
  %v1353 = vpop.permute.xlu0 %1352
  %1354 = vrot.lane.b32.xlu0 %v942, 15
  %v1355 = vpop.permute.xlu0 %1354
  %1356 = vrot.lane.b32.xlu0 %v948, 15
  %v1357 = vpop.permute.xlu0 %1356
  %v1358 = vsel %vm182, %v1347, %v1353
  %v1359 = vsel %vm182, %v1349, %v1355
  %v1360 = vsel %vm182, %v1351, %v1357
  %v1361 = vsel %vm182, %v1341, %v1347
  %v1362 = vsel %vm182, %v1343, %v1349
  %v1363 = vsel %vm182, %v1345, %v1351
  %v1364 = vsel %vm182, %v1335, %v1341
  %v1365 = vsel %vm182, %v1337, %v1343
  %v1366 = vsel %vm182, %v1339, %v1345
  %v1367 = vsel %vm182, %v1353, %v1335
  %v1368 = vsel %vm182, %v1355, %v1337
  %v1369 = vsel %vm182, %v1357, %v1339
  %1370 = vst [vmem:[#allocation2 + $0x300] sm:$0xff] %v1367
  %1371 = vst [vmem:[#allocation2 + $0x308] sm:$0xff] %v1364
  %1372 = vst [vmem:[#allocation2 + $0x310] sm:$0xff] %v1361
  %1373 = vst [vmem:[#allocation2 + $0x318] sm:$0xff] %v1358
  %1374 = vst [vmem:[#allocation2 + $0x320] sm:$0xff] %v1368
  %1375 = vst [vmem:[#allocation2 + $0x328] sm:$0xff] %v1365
  %1376 = vst [vmem:[#allocation2 + $0x330] sm:$0xff] %v1362
  %1377 = vst [vmem:[#allocation2 + $0x338] sm:$0xff] %v1359
  %1378 = vst [vmem:[#allocation2 + $0x340] sm:$0xff] %v1369
  %1379 = vst [vmem:[#allocation2 + $0x348] sm:$0xff] %v1366
  %1380 = vst [vmem:[#allocation2 + $0x350] sm:$0xff] %v1363
  %1381 = vst [vmem:[#allocation2 + $0x358] sm:$0xff] %v1360
  %1382 = vrot.lane.b32.xlu0 %v851, 14
  %v1383 = vpop.permute.xlu0 %1382
  %1384 = vrot.lane.b32.xlu0 %v857, 14
  %v1385 = vpop.permute.xlu0 %1384
  %1386 = vrot.lane.b32.xlu0 %v863, 14
  %v1387 = vpop.permute.xlu0 %1386
  %1388 = vrot.lane.b32.xlu0 %v853, 14
  %v1389 = vpop.permute.xlu0 %1388
  %1390 = vrot.lane.b32.xlu0 %v859, 14
  %v1391 = vpop.permute.xlu0 %1390
  %1392 = vrot.lane.b32.xlu0 %v865, 14
  %v1393 = vpop.permute.xlu0 %1392
  %1394 = vrot.lane.b32.xlu0 %v934, 14
  %v1395 = vpop.permute.xlu0 %1394
  %1396 = vrot.lane.b32.xlu0 %v940, 14
  %v1397 = vpop.permute.xlu0 %1396
  %1398 = vrot.lane.b32.xlu0 %v946, 14
  %v1399 = vpop.permute.xlu0 %1398
  %1400 = vrot.lane.b32.xlu0 %v936, 14
  %v1401 = vpop.permute.xlu0 %1400
  %1402 = vrot.lane.b32.xlu0 %v942, 14
  %v1403 = vpop.permute.xlu0 %1402
  %1404 = vrot.lane.b32.xlu0 %v948, 14
  %v1405 = vpop.permute.xlu0 %1404
  %v1406 = vsel %vm199, %v1395, %v1401
  %v1407 = vsel %vm199, %v1397, %v1403
  %v1408 = vsel %vm199, %v1399, %v1405
  %v1409 = vsel %vm199, %v1389, %v1395
  %v1410 = vsel %vm199, %v1391, %v1397
  %v1411 = vsel %vm199, %v1393, %v1399
  %v1412 = vsel %vm199, %v1383, %v1389
  %v1413 = vsel %vm199, %v1385, %v1391
  %v1414 = vsel %vm199, %v1387, %v1393
  %v1415 = vsel %vm199, %v1401, %v1383
  %v1416 = vsel %vm199, %v1403, %v1385
  %v1417 = vsel %vm199, %v1405, %v1387
  %1418 = vst [vmem:[#allocation2 + $0x360] sm:$0xff] %v1415
  %1419 = vst [vmem:[#allocation2 + $0x368] sm:$0xff] %v1412
  %1420 = vst [vmem:[#allocation2 + $0x370] sm:$0xff] %v1409
  %1421 = vst [vmem:[#allocation2 + $0x378] sm:$0xff] %v1406
  %1422 = vst [vmem:[#allocation2 + $0x380] sm:$0xff] %v1416
  %1423 = vst [vmem:[#allocation2 + $0x388] sm:$0xff] %v1413
  %1424 = vst [vmem:[#allocation2 + $0x390] sm:$0xff] %v1410
  %1425 = vst [vmem:[#allocation2 + $0x398] sm:$0xff] %v1407
  %1426 = vst [vmem:[#allocation2 + $0x3a0] sm:$0xff] %v1417
  %1427 = vst [vmem:[#allocation2 + $0x3a8] sm:$0xff] %v1414
  %1428 = vst [vmem:[#allocation2 + $0x3b0] sm:$0xff] %v1411
  %1429 = vst [vmem:[#allocation2 + $0x3b8] sm:$0xff] %v1408
  %1430 = vrot.lane.b32.xlu0 %v851, 2
  %v1431 = vpop.permute.xlu0 %1430
  %1432 = vrot.lane.b32.xlu0 %v857, 2
  %v1433 = vpop.permute.xlu0 %1432
  %1434 = vrot.lane.b32.xlu0 %v863, 2
  %v1435 = vpop.permute.xlu0 %1434
  %1436 = vrot.lane.b32.xlu0 %v853, 2
  %v1437 = vpop.permute.xlu0 %1436
  %1438 = vrot.lane.b32.xlu0 %v859, 2
  %v1439 = vpop.permute.xlu0 %1438
  %1440 = vrot.lane.b32.xlu0 %v865, 2
  %v1441 = vpop.permute.xlu0 %1440
  %1442 = vrot.lane.b32.xlu0 %v934, 2
  %v1443 = vpop.permute.xlu0 %1442
  %1444 = vrot.lane.b32.xlu0 %v940, 2
  %v1445 = vpop.permute.xlu0 %1444
  %1446 = vrot.lane.b32.xlu0 %v946, 2
  %v1447 = vpop.permute.xlu0 %1446
  %1448 = vrot.lane.b32.xlu0 %v936, 2
  %v1449 = vpop.permute.xlu0 %1448
  %1450 = vrot.lane.b32.xlu0 %v942, 2
  %v1451 = vpop.permute.xlu0 %1450
  %1452 = vrot.lane.b32.xlu0 %v948, 2
  %v1453 = vpop.permute.xlu0 %1452
  %v1454 = vsel %vm216, %v1443, %v1449
  %v1455 = vsel %vm216, %v1445, %v1451
  %v1456 = vsel %vm216, %v1447, %v1453
  %v1457 = vsel %vm216, %v1437, %v1443
  %v1458 = vsel %vm216, %v1439, %v1445
  %v1459 = vsel %vm216, %v1441, %v1447
  %v1460 = vsel %vm216, %v1431, %v1437
  %v1461 = vsel %vm216, %v1433, %v1439
  %v1462 = vsel %vm216, %v1435, %v1441
  %v1463 = vsel %vm216, %v1449, %v1431
  %v1464 = vsel %vm216, %v1451, %v1433
  %v1465 = vsel %vm216, %v1453, %v1435
  %1466 = vst [vmem:[#allocation2 + $0x3c0] sm:$0xff] %v1463
  %1467 = vst [vmem:[#allocation2 + $0x3c8] sm:$0xff] %v1460
  %1468 = vst [vmem:[#allocation2 + $0x3d0] sm:$0xff] %v1457
  %1469 = vst [vmem:[#allocation2 + $0x3d8] sm:$0xff] %v1454
  %1470 = vst [vmem:[#allocation2 + $0x3e0] sm:$0xff] %v1464
  %1471 = vst [vmem:[#allocation2 + $0x3e8] sm:$0xff] %v1461
  %1472 = vst [vmem:[#allocation2 + $0x3f0] sm:$0xff] %v1458
  %1473 = vst [vmem:[#allocation2 + $0x3f8] sm:$0xff] %v1455
  %1474 = vst [vmem:[#allocation2 + $0x400] sm:$0xff] %v1465
  %1475 = vst [vmem:[#allocation2 + $0x408] sm:$0xff] %v1462
  %1476 = vst [vmem:[#allocation2 + $0x410] sm:$0xff] %v1459
  %1477 = vst [vmem:[#allocation2 + $0x418] sm:$0xff] %v1456
  %1478 = vrot.lane.b32.xlu0 %v851, 1
  %v1479 = vpop.permute.xlu0 %1478
  %1480 = vrot.lane.b32.xlu0 %v857, 1
  %v1481 = vpop.permute.xlu0 %1480
  %1482 = vrot.lane.b32.xlu0 %v863, 1
  %v1483 = vpop.permute.xlu0 %1482
  %1484 = vrot.lane.b32.xlu0 %v853, 1
  %v1485 = vpop.permute.xlu0 %1484
  %1486 = vrot.lane.b32.xlu0 %v859, 1
  %v1487 = vpop.permute.xlu0 %1486
  %1488 = vrot.lane.b32.xlu0 %v865, 1
  %v1489 = vpop.permute.xlu0 %1488
  %1490 = vrot.lane.b32.xlu0 %v934, 1
  %v1491 = vpop.permute.xlu0 %1490
  %1492 = vrot.lane.b32.xlu0 %v940, 1
  %v1493 = vpop.permute.xlu0 %1492
  %1494 = vrot.lane.b32.xlu0 %v946, 1
  %v1495 = vpop.permute.xlu0 %1494
  %1496 = vrot.lane.b32.xlu0 %v936, 1
  %v1497 = vpop.permute.xlu0 %1496
  %1498 = vrot.lane.b32.xlu0 %v942, 1
  %v1499 = vpop.permute.xlu0 %1498
  %1500 = vrot.lane.b32.xlu0 %v948, 1
  %v1501 = vpop.permute.xlu0 %1500
  %v1502 = vsel %vm233, %v1491, %v1497
  %v1503 = vsel %vm233, %v1493, %v1499
  %v1504 = vsel %vm233, %v1495, %v1501
  %v1505 = vsel %vm233, %v1485, %v1491
  %v1506 = vsel %vm233, %v1487, %v1493
  %v1507 = vsel %vm233, %v1489, %v1495
  %v1508 = vsel %vm233, %v1479, %v1485
  %v1509 = vsel %vm233, %v1481, %v1487
  %v1510 = vsel %vm233, %v1483, %v1489
  %v1511 = vsel %vm233, %v1497, %v1479
  %v1512 = vsel %vm233, %v1499, %v1481
  %v1513 = vsel %vm233, %v1501, %v1483
  %1514 = vst [vmem:[#allocation2 + $0x420] sm:$0xff] %v1511
  %1515 = vst [vmem:[#allocation2 + $0x428] sm:$0xff] %v1508
  %1516 = vst [vmem:[#allocation2 + $0x430] sm:$0xff] %v1505
  %1517 = vst [vmem:[#allocation2 + $0x438] sm:$0xff] %v1502
  %1518 = vst [vmem:[#allocation2 + $0x440] sm:$0xff] %v1512
  %1519 = vst [vmem:[#allocation2 + $0x448] sm:$0xff] %v1509
  %1520 = vst [vmem:[#allocation2 + $0x450] sm:$0xff] %v1506
  %1521 = vst [vmem:[#allocation2 + $0x458] sm:$0xff] %v1503
  %1522 = vst [vmem:[#allocation2 + $0x460] sm:$0xff] %v1513
  %1523 = vst [vmem:[#allocation2 + $0x468] sm:$0xff] %v1510
  %1524 = vst [vmem:[#allocation2 + $0x470] sm:$0xff] %v1507
  %1525 = vst [vmem:[#allocation2 + $0x478] sm:$0xff] %v1504
  %1526 = vst [vmem:[#allocation2 + $0x480] sm:$0xff] %v851
  %1527 = vst [vmem:[#allocation2 + $0x488] sm:$0xff] %v853
  %1528 = vst [vmem:[#allocation2 + $0x490] sm:$0xff] %v934
  %1529 = vst [vmem:[#allocation2 + $0x498] sm:$0xff] %v936
  %1530 = vst [vmem:[#allocation2 + $0x4a0] sm:$0xff] %v857
  %1531 = vst [vmem:[#allocation2 + $0x4a8] sm:$0xff] %v859
  %1532 = vst [vmem:[#allocation2 + $0x4b0] sm:$0xff] %v940
  %1533 = vst [vmem:[#allocation2 + $0x4b8] sm:$0xff] %v942
  %1534 = vst [vmem:[#allocation2 + $0x4c0] sm:$0xff] %v863
  %1535 = vst [vmem:[#allocation2 + $0x4c8] sm:$0xff] %v865
  %1536 = vst [vmem:[#allocation2 + $0x4d0] sm:$0xff] %v946
  %1537 = vst [vmem:[#allocation2 + $0x4d8] sm:$0xff] %v948
  %1538 = vrot.lane.b32.xlu0 %v851, 127
  %v1539 = vpop.permute.xlu0 %1538
  %1540 = vrot.lane.b32.xlu0 %v857, 127
  %v1541 = vpop.permute.xlu0 %1540
  %1542 = vrot.lane.b32.xlu0 %v863, 127
  %v1543 = vpop.permute.xlu0 %1542
  %1544 = vrot.lane.b32.xlu0 %v853, 127
  %v1545 = vpop.permute.xlu0 %1544
  %1546 = vrot.lane.b32.xlu0 %v859, 127
  %v1547 = vpop.permute.xlu0 %1546
  %1548 = vrot.lane.b32.xlu0 %v865, 127
  %v1549 = vpop.permute.xlu0 %1548
  %1550 = vrot.lane.b32.xlu0 %v934, 127
  %v1551 = vpop.permute.xlu0 %1550
  %1552 = vrot.lane.b32.xlu0 %v940, 127
  %v1553 = vpop.permute.xlu0 %1552
  %1554 = vrot.lane.b32.xlu0 %v946, 127
  %v1555 = vpop.permute.xlu0 %1554
  %1556 = vrot.lane.b32.xlu0 %v936, 127
  %v1557 = vpop.permute.xlu0 %1556
  %1558 = vrot.lane.b32.xlu0 %v942, 127
  %v1559 = vpop.permute.xlu0 %1558
  %1560 = vrot.lane.b32.xlu0 %v948, 127
  %v1561 = vpop.permute.xlu0 %1560
  %v1562 = vsel %vm254, %v1551, %v1557
  %v1563 = vsel %vm254, %v1553, %v1559
  %v1564 = vsel %vm254, %v1555, %v1561
  %v1565 = vsel %vm254, %v1545, %v1551
  %v1566 = vsel %vm254, %v1547, %v1553
  %v1567 = vsel %vm254, %v1549, %v1555
  %v1568 = vsel %vm254, %v1539, %v1545
  %v1569 = vsel %vm254, %v1541, %v1547
  %v1570 = vsel %vm254, %v1543, %v1549
  %v1571 = vsel %vm254, %v1557, %v1539
  %v1572 = vsel %vm254, %v1559, %v1541
  %v1573 = vsel %vm254, %v1561, %v1543
  %1574 = vst [vmem:[#allocation2 + $0x4e0] sm:$0xff] %v1568
  %1575 = vst [vmem:[#allocation2 + $0x4e8] sm:$0xff] %v1565
  %1576 = vst [vmem:[#allocation2 + $0x4f0] sm:$0xff] %v1562
  %1577 = vst [vmem:[#allocation2 + $0x4f8] sm:$0xff] %v1571
  %1578 = vst [vmem:[#allocation2 + $0x500] sm:$0xff] %v1569
  %1579 = vst [vmem:[#allocation2 + $0x508] sm:$0xff] %v1566
  %1580 = vst [vmem:[#allocation2 + $0x510] sm:$0xff] %v1563
  %1581 = vst [vmem:[#allocation2 + $0x518] sm:$0xff] %v1572
  %1582 = vst [vmem:[#allocation2 + $0x520] sm:$0xff] %v1570
  %1583 = vst [vmem:[#allocation2 + $0x528] sm:$0xff] %v1567
  %1584 = vst [vmem:[#allocation2 + $0x530] sm:$0xff] %v1564
  %1585 = vst [vmem:[#allocation2 + $0x538] sm:$0xff] %v1573
  %1586 = vrot.lane.b32.xlu0 %v851, 126
  %v1587 = vpop.permute.xlu0 %1586
  %1588 = vrot.lane.b32.xlu0 %v857, 126
  %v1589 = vpop.permute.xlu0 %1588
  %1590 = vrot.lane.b32.xlu0 %v863, 126
  %v1591 = vpop.permute.xlu0 %1590
  %1592 = vrot.lane.b32.xlu0 %v853, 126
  %v1593 = vpop.permute.xlu0 %1592
  %1594 = vrot.lane.b32.xlu0 %v859, 126
  %v1595 = vpop.permute.xlu0 %1594
  %1596 = vrot.lane.b32.xlu0 %v865, 126
  %v1597 = vpop.permute.xlu0 %1596
  %1598 = vrot.lane.b32.xlu0 %v934, 126
  %v1599 = vpop.permute.xlu0 %1598
  %1600 = vrot.lane.b32.xlu0 %v940, 126
  %v1601 = vpop.permute.xlu0 %1600
  %1602 = vrot.lane.b32.xlu0 %v946, 126
  %v1603 = vpop.permute.xlu0 %1602
  %1604 = vrot.lane.b32.xlu0 %v936, 126
  %v1605 = vpop.permute.xlu0 %1604
  %1606 = vrot.lane.b32.xlu0 %v942, 126
  %v1607 = vpop.permute.xlu0 %1606
  %1608 = vrot.lane.b32.xlu0 %v948, 126
  %v1609 = vpop.permute.xlu0 %1608
  %v1610 = vsel %vm271, %v1599, %v1605
  %v1611 = vsel %vm271, %v1601, %v1607
  %v1612 = vsel %vm271, %v1603, %v1609
  %v1613 = vsel %vm271, %v1593, %v1599
  %v1614 = vsel %vm271, %v1595, %v1601
  %v1615 = vsel %vm271, %v1597, %v1603
  %v1616 = vsel %vm271, %v1587, %v1593
  %v1617 = vsel %vm271, %v1589, %v1595
  %v1618 = vsel %vm271, %v1591, %v1597
  %v1619 = vsel %vm271, %v1605, %v1587
  %v1620 = vsel %vm271, %v1607, %v1589
  %v1621 = vsel %vm271, %v1609, %v1591
  %1622 = vst [vmem:[#allocation2 + $0x540] sm:$0xff] %v1616
  %1623 = vst [vmem:[#allocation2 + $0x548] sm:$0xff] %v1613
  %1624 = vst [vmem:[#allocation2 + $0x550] sm:$0xff] %v1610
  %1625 = vst [vmem:[#allocation2 + $0x558] sm:$0xff] %v1619
  %1626 = vst [vmem:[#allocation2 + $0x560] sm:$0xff] %v1617
  %1627 = vst [vmem:[#allocation2 + $0x568] sm:$0xff] %v1614
  %1628 = vst [vmem:[#allocation2 + $0x570] sm:$0xff] %v1611
  %1629 = vst [vmem:[#allocation2 + $0x578] sm:$0xff] %v1620
  %1630 = vst [vmem:[#allocation2 + $0x580] sm:$0xff] %v1618
  %1631 = vst [vmem:[#allocation2 + $0x588] sm:$0xff] %v1615
  %1632 = vst [vmem:[#allocation2 + $0x590] sm:$0xff] %v1612
  %1633 = vst [vmem:[#allocation2 + $0x598] sm:$0xff] %v1621
  %1634 = vrot.lane.b32.xlu0 %v851, 114
  %v1635 = vpop.permute.xlu0 %1634
  %1636 = vrot.lane.b32.xlu0 %v857, 114
  %v1637 = vpop.permute.xlu0 %1636
  %1638 = vrot.lane.b32.xlu0 %v863, 114
  %v1639 = vpop.permute.xlu0 %1638
  %1640 = vrot.lane.b32.xlu0 %v853, 114
  %v1641 = vpop.permute.xlu0 %1640
  %1642 = vrot.lane.b32.xlu0 %v859, 114
  %v1643 = vpop.permute.xlu0 %1642
  %1644 = vrot.lane.b32.xlu0 %v865, 114
  %v1645 = vpop.permute.xlu0 %1644
  %1646 = vrot.lane.b32.xlu0 %v934, 114
  %v1647 = vpop.permute.xlu0 %1646
  %1648 = vrot.lane.b32.xlu0 %v940, 114
  %v1649 = vpop.permute.xlu0 %1648
  %1650 = vrot.lane.b32.xlu0 %v946, 114
  %v1651 = vpop.permute.xlu0 %1650
  %1652 = vrot.lane.b32.xlu0 %v936, 114
  %v1653 = vpop.permute.xlu0 %1652
  %1654 = vrot.lane.b32.xlu0 %v942, 114
  %v1655 = vpop.permute.xlu0 %1654
  %1656 = vrot.lane.b32.xlu0 %v948, 114
  %v1657 = vpop.permute.xlu0 %1656
  %v1658 = vsel %vm288, %v1647, %v1653
  %v1659 = vsel %vm288, %v1649, %v1655
  %v1660 = vsel %vm288, %v1651, %v1657
  %v1661 = vsel %vm288, %v1641, %v1647
  %v1662 = vsel %vm288, %v1643, %v1649
  %v1663 = vsel %vm288, %v1645, %v1651
  %v1664 = vsel %vm288, %v1635, %v1641
  %v1665 = vsel %vm288, %v1637, %v1643
  %v1666 = vsel %vm288, %v1639, %v1645
  %v1667 = vsel %vm288, %v1653, %v1635
  %v1668 = vsel %vm288, %v1655, %v1637
  %v1669 = vsel %vm288, %v1657, %v1639
  %1670 = vst [vmem:[#allocation2 + $0x5a0] sm:$0xff] %v1664
  %1671 = vst [vmem:[#allocation2 + $0x5a8] sm:$0xff] %v1661
  %1672 = vst [vmem:[#allocation2 + $0x5b0] sm:$0xff] %v1658
  %1673 = vst [vmem:[#allocation2 + $0x5b8] sm:$0xff] %v1667
  %1674 = vst [vmem:[#allocation2 + $0x5c0] sm:$0xff] %v1665
  %1675 = vst [vmem:[#allocation2 + $0x5c8] sm:$0xff] %v1662
  %1676 = vst [vmem:[#allocation2 + $0x5d0] sm:$0xff] %v1659
  %1677 = vst [vmem:[#allocation2 + $0x5d8] sm:$0xff] %v1668
  %1678 = vst [vmem:[#allocation2 + $0x5e0] sm:$0xff] %v1666
  %1679 = vst [vmem:[#allocation2 + $0x5e8] sm:$0xff] %v1663
  %1680 = vst [vmem:[#allocation2 + $0x5f0] sm:$0xff] %v1660
  %1681 = vst [vmem:[#allocation2 + $0x5f8] sm:$0xff] %v1669
  %1682 = vrot.lane.b32.xlu0 %v851, 113
  %v1683 = vpop.permute.xlu0 %1682
  %1684 = vrot.lane.b32.xlu0 %v857, 113
  %v1685 = vpop.permute.xlu0 %1684
  %1686 = vrot.lane.b32.xlu0 %v863, 113
  %v1687 = vpop.permute.xlu0 %1686
  %1688 = vrot.lane.b32.xlu0 %v853, 113
  %v1689 = vpop.permute.xlu0 %1688
  %1690 = vrot.lane.b32.xlu0 %v859, 113
  %v1691 = vpop.permute.xlu0 %1690
  %1692 = vrot.lane.b32.xlu0 %v865, 113
  %v1693 = vpop.permute.xlu0 %1692
  %1694 = vrot.lane.b32.xlu0 %v934, 113
  %v1695 = vpop.permute.xlu0 %1694
  %1696 = vrot.lane.b32.xlu0 %v940, 113
  %v1697 = vpop.permute.xlu0 %1696
  %1698 = vrot.lane.b32.xlu0 %v946, 113
  %v1699 = vpop.permute.xlu0 %1698
  %1700 = vrot.lane.b32.xlu0 %v936, 113
  %v1701 = vpop.permute.xlu0 %1700
  %1702 = vrot.lane.b32.xlu0 %v942, 113
  %v1703 = vpop.permute.xlu0 %1702
  %1704 = vrot.lane.b32.xlu0 %v948, 113
  %v1705 = vpop.permute.xlu0 %1704
  %v1706 = vsel %vm305, %v1695, %v1701
  %v1707 = vsel %vm305, %v1697, %v1703
  %v1708 = vsel %vm305, %v1699, %v1705
  %v1709 = vsel %vm305, %v1689, %v1695
  %v1710 = vsel %vm305, %v1691, %v1697
  %v1711 = vsel %vm305, %v1693, %v1699
  %v1712 = vsel %vm305, %v1683, %v1689
  %v1713 = vsel %vm305, %v1685, %v1691
  %v1714 = vsel %vm305, %v1687, %v1693
  %v1715 = vsel %vm305, %v1701, %v1683
  %v1716 = vsel %vm305, %v1703, %v1685
  %v1717 = vsel %vm305, %v1705, %v1687
  %1718 = vst [vmem:[#allocation2 + $0x600] sm:$0xff] %v1712
  %1719 = vst [vmem:[#allocation2 + $0x608] sm:$0xff] %v1709
  %1720 = vst [vmem:[#allocation2 + $0x610] sm:$0xff] %v1706
  %1721 = vst [vmem:[#allocation2 + $0x618] sm:$0xff] %v1715
  %1722 = vst [vmem:[#allocation2 + $0x620] sm:$0xff] %v1713
  %1723 = vst [vmem:[#allocation2 + $0x628] sm:$0xff] %v1710
  %1724 = vst [vmem:[#allocation2 + $0x630] sm:$0xff] %v1707
  %1725 = vst [vmem:[#allocation2 + $0x638] sm:$0xff] %v1716
  %1726 = vst [vmem:[#allocation2 + $0x640] sm:$0xff] %v1714
  %1727 = vst [vmem:[#allocation2 + $0x648] sm:$0xff] %v1711
  %1728 = vst [vmem:[#allocation2 + $0x650] sm:$0xff] %v1708
  %1729 = vst [vmem:[#allocation2 + $0x658] sm:$0xff] %v1717
  %1730 = vrot.lane.b32.xlu0 %v851, 112
  %v1731 = vpop.permute.xlu0 %1730
  %1732 = vrot.lane.b32.xlu0 %v857, 112
  %v1733 = vpop.permute.xlu0 %1732
  %1734 = vrot.lane.b32.xlu0 %v863, 112
  %v1735 = vpop.permute.xlu0 %1734
  %1736 = vrot.lane.b32.xlu0 %v853, 112
  %v1737 = vpop.permute.xlu0 %1736
  %1738 = vrot.lane.b32.xlu0 %v859, 112
  %v1739 = vpop.permute.xlu0 %1738
  %1740 = vrot.lane.b32.xlu0 %v865, 112
  %v1741 = vpop.permute.xlu0 %1740
  %1742 = vrot.lane.b32.xlu0 %v934, 112
  %v1743 = vpop.permute.xlu0 %1742
  %1744 = vrot.lane.b32.xlu0 %v940, 112
  %v1745 = vpop.permute.xlu0 %1744
  %1746 = vrot.lane.b32.xlu0 %v946, 112
  %v1747 = vpop.permute.xlu0 %1746
  %1748 = vrot.lane.b32.xlu0 %v936, 112
  %v1749 = vpop.permute.xlu0 %1748
  %1750 = vrot.lane.b32.xlu0 %v942, 112
  %v1751 = vpop.permute.xlu0 %1750
  %1752 = vrot.lane.b32.xlu0 %v948, 112
  %v1753 = vpop.permute.xlu0 %1752
  %v1754 = vsel %vm322, %v1743, %v1749
  %v1755 = vsel %vm322, %v1745, %v1751
  %v1756 = vsel %vm322, %v1747, %v1753
  %v1757 = vsel %vm322, %v1737, %v1743
  %v1758 = vsel %vm322, %v1739, %v1745
  %v1759 = vsel %vm322, %v1741, %v1747
  %v1760 = vsel %vm322, %v1731, %v1737
  %v1761 = vsel %vm322, %v1733, %v1739
  %v1762 = vsel %vm322, %v1735, %v1741
  %v1763 = vsel %vm322, %v1749, %v1731
  %v1764 = vsel %vm322, %v1751, %v1733
  %v1765 = vsel %vm322, %v1753, %v1735
  %1766 = vst [vmem:[#allocation2 + $0x660] sm:$0xff] %v1760
  %1767 = vst [vmem:[#allocation2 + $0x668] sm:$0xff] %v1757
  %1768 = vst [vmem:[#allocation2 + $0x670] sm:$0xff] %v1754
  %1769 = vst [vmem:[#allocation2 + $0x678] sm:$0xff] %v1763
  %1770 = vst [vmem:[#allocation2 + $0x680] sm:$0xff] %v1761
  %1771 = vst [vmem:[#allocation2 + $0x688] sm:$0xff] %v1758
  %1772 = vst [vmem:[#allocation2 + $0x690] sm:$0xff] %v1755
  %1773 = vst [vmem:[#allocation2 + $0x698] sm:$0xff] %v1764
  %1774 = vst [vmem:[#allocation2 + $0x6a0] sm:$0xff] %v1762
  %1775 = vst [vmem:[#allocation2 + $0x6a8] sm:$0xff] %v1759
  %1776 = vst [vmem:[#allocation2 + $0x6b0] sm:$0xff] %v1756
  %1777 = vst [vmem:[#allocation2 + $0x6b8] sm:$0xff] %v1765
  %1778 = vrot.lane.b32.xlu0 %v851, 111
  %v1779 = vpop.permute.xlu0 %1778
  %1780 = vrot.lane.b32.xlu0 %v857, 111
  %v1781 = vpop.permute.xlu0 %1780
  %1782 = vrot.lane.b32.xlu0 %v863, 111
  %v1783 = vpop.permute.xlu0 %1782
  %1784 = vrot.lane.b32.xlu0 %v853, 111
  %v1785 = vpop.permute.xlu0 %1784
  %1786 = vrot.lane.b32.xlu0 %v859, 111
  %v1787 = vpop.permute.xlu0 %1786
  %1788 = vrot.lane.b32.xlu0 %v865, 111
  %v1789 = vpop.permute.xlu0 %1788
  %1790 = vrot.lane.b32.xlu0 %v934, 111
  %v1791 = vpop.permute.xlu0 %1790
  %1792 = vrot.lane.b32.xlu0 %v940, 111
  %v1793 = vpop.permute.xlu0 %1792
  %1794 = vrot.lane.b32.xlu0 %v946, 111
  %v1795 = vpop.permute.xlu0 %1794
  %1796 = vrot.lane.b32.xlu0 %v936, 111
  %v1797 = vpop.permute.xlu0 %1796
  %1798 = vrot.lane.b32.xlu0 %v942, 111
  %v1799 = vpop.permute.xlu0 %1798
  %1800 = vrot.lane.b32.xlu0 %v948, 111
  %v1801 = vpop.permute.xlu0 %1800
  %v1802 = vsel %vm339, %v1791, %v1797
  %v1803 = vsel %vm339, %v1793, %v1799
  %v1804 = vsel %vm339, %v1795, %v1801
  %v1805 = vsel %vm339, %v1785, %v1791
  %v1806 = vsel %vm339, %v1787, %v1793
  %v1807 = vsel %vm339, %v1789, %v1795
  %v1808 = vsel %vm339, %v1779, %v1785
  %v1809 = vsel %vm339, %v1781, %v1787
  %v1810 = vsel %vm339, %v1783, %v1789
  %v1811 = vsel %vm339, %v1797, %v1779
  %v1812 = vsel %vm339, %v1799, %v1781
  %v1813 = vsel %vm339, %v1801, %v1783
  %1814 = vst [vmem:[#allocation2 + $0x6c0] sm:$0xff] %v1808
  %1815 = vst [vmem:[#allocation2 + $0x6c8] sm:$0xff] %v1805
  %1816 = vst [vmem:[#allocation2 + $0x6d0] sm:$0xff] %v1802
  %1817 = vst [vmem:[#allocation2 + $0x6d8] sm:$0xff] %v1811
  %1818 = vst [vmem:[#allocation2 + $0x6e0] sm:$0xff] %v1809
  %1819 = vst [vmem:[#allocation2 + $0x6e8] sm:$0xff] %v1806
  %1820 = vst [vmem:[#allocation2 + $0x6f0] sm:$0xff] %v1803
  %1821 = vst [vmem:[#allocation2 + $0x6f8] sm:$0xff] %v1812
  %1822 = vst [vmem:[#allocation2 + $0x700] sm:$0xff] %v1810
  %1823 = vst [vmem:[#allocation2 + $0x708] sm:$0xff] %v1807
  %1824 = vst [vmem:[#allocation2 + $0x710] sm:$0xff] %v1804
  %1825 = vst [vmem:[#allocation2 + $0x718] sm:$0xff] %v1813
  %1826 = vrot.lane.b32.xlu0 %v851, 110
  %v1827 = vpop.permute.xlu0 %1826
  %1828 = vrot.lane.b32.xlu0 %v857, 110
  %v1829 = vpop.permute.xlu0 %1828
  %1830 = vrot.lane.b32.xlu0 %v863, 110
  %v1831 = vpop.permute.xlu0 %1830
  %1832 = vrot.lane.b32.xlu0 %v853, 110
  %v1833 = vpop.permute.xlu0 %1832
  %1834 = vrot.lane.b32.xlu0 %v859, 110
  %v1835 = vpop.permute.xlu0 %1834
  %1836 = vrot.lane.b32.xlu0 %v865, 110
  %v1837 = vpop.permute.xlu0 %1836
  %1838 = vrot.lane.b32.xlu0 %v934, 110
  %v1839 = vpop.permute.xlu0 %1838
  %1840 = vrot.lane.b32.xlu0 %v940, 110
  %v1841 = vpop.permute.xlu0 %1840
  %1842 = vrot.lane.b32.xlu0 %v946, 110
  %v1843 = vpop.permute.xlu0 %1842
  %1844 = vrot.lane.b32.xlu0 %v936, 110
  %v1845 = vpop.permute.xlu0 %1844
  %1846 = vrot.lane.b32.xlu0 %v942, 110
  %v1847 = vpop.permute.xlu0 %1846
  %1848 = vrot.lane.b32.xlu0 %v948, 110
  %v1849 = vpop.permute.xlu0 %1848
  %v1850 = vsel %vm356, %v1839, %v1845
  %v1851 = vsel %vm356, %v1841, %v1847
  %v1852 = vsel %vm356, %v1843, %v1849
  %v1853 = vsel %vm356, %v1833, %v1839
  %v1854 = vsel %vm356, %v1835, %v1841
  %v1855 = vsel %vm356, %v1837, %v1843
  %v1856 = vsel %vm356, %v1827, %v1833
  %v1857 = vsel %vm356, %v1829, %v1835
  %v1858 = vsel %vm356, %v1831, %v1837
  %v1859 = vsel %vm356, %v1845, %v1827
  %v1860 = vsel %vm356, %v1847, %v1829
  %v1861 = vsel %vm356, %v1849, %v1831
  %1862 = vst [vmem:[#allocation2 + $0x720] sm:$0xff] %v1856
  %1863 = vst [vmem:[#allocation2 + $0x728] sm:$0xff] %v1853
  %1864 = vst [vmem:[#allocation2 + $0x730] sm:$0xff] %v1850
  %1865 = vst [vmem:[#allocation2 + $0x738] sm:$0xff] %v1859
  %1866 = vst [vmem:[#allocation2 + $0x740] sm:$0xff] %v1857
  %1867 = vst [vmem:[#allocation2 + $0x748] sm:$0xff] %v1854
  %1868 = vst [vmem:[#allocation2 + $0x750] sm:$0xff] %v1851
  %1869 = vst [vmem:[#allocation2 + $0x758] sm:$0xff] %v1860
  %1870 = vst [vmem:[#allocation2 + $0x760] sm:$0xff] %v1858
  %1871 = vst [vmem:[#allocation2 + $0x768] sm:$0xff] %v1855
  %1872 = vst [vmem:[#allocation2 + $0x770] sm:$0xff] %v1852
  %1873 = vst [vmem:[#allocation2 + $0x778] sm:$0xff] %v1861
  %1874 = vrot.lane.b32.xlu0 %v851, 98
  %v1875 = vpop.permute.xlu0 %1874
  %1876 = vrot.lane.b32.xlu0 %v857, 98
  %v1877 = vpop.permute.xlu0 %1876
  %1878 = vrot.lane.b32.xlu0 %v863, 98
  %v1879 = vpop.permute.xlu0 %1878
  %1880 = vrot.lane.b32.xlu0 %v853, 98
  %v1881 = vpop.permute.xlu0 %1880
  %1882 = vrot.lane.b32.xlu0 %v859, 98
  %v1883 = vpop.permute.xlu0 %1882
  %1884 = vrot.lane.b32.xlu0 %v865, 98
  %v1885 = vpop.permute.xlu0 %1884
  %1886 = vrot.lane.b32.xlu0 %v934, 98
  %v1887 = vpop.permute.xlu0 %1886
  %1888 = vrot.lane.b32.xlu0 %v940, 98
  %v1889 = vpop.permute.xlu0 %1888
  %1890 = vrot.lane.b32.xlu0 %v946, 98
  %v1891 = vpop.permute.xlu0 %1890
  %1892 = vrot.lane.b32.xlu0 %v936, 98
  %v1893 = vpop.permute.xlu0 %1892
  %1894 = vrot.lane.b32.xlu0 %v942, 98
  %v1895 = vpop.permute.xlu0 %1894
  %1896 = vrot.lane.b32.xlu0 %v948, 98
  %v1897 = vpop.permute.xlu0 %1896
  %v1898 = vsel %vm373, %v1887, %v1893
  %v1899 = vsel %vm373, %v1889, %v1895
  %v1900 = vsel %vm373, %v1891, %v1897
  %v1901 = vsel %vm373, %v1881, %v1887
  %v1902 = vsel %vm373, %v1883, %v1889
  %v1903 = vsel %vm373, %v1885, %v1891
  %v1904 = vsel %vm373, %v1875, %v1881
  %v1905 = vsel %vm373, %v1877, %v1883
  %v1906 = vsel %vm373, %v1879, %v1885
  %v1907 = vsel %vm373, %v1893, %v1875
  %v1908 = vsel %vm373, %v1895, %v1877
  %v1909 = vsel %vm373, %v1897, %v1879
  %1910 = vst [vmem:[#allocation2 + $0x780] sm:$0xff] %v1904
  %1911 = vst [vmem:[#allocation2 + $0x788] sm:$0xff] %v1901
  %1912 = vst [vmem:[#allocation2 + $0x790] sm:$0xff] %v1898
  %1913 = vst [vmem:[#allocation2 + $0x798] sm:$0xff] %v1907
  %1914 = vst [vmem:[#allocation2 + $0x7a0] sm:$0xff] %v1905
  %1915 = vst [vmem:[#allocation2 + $0x7a8] sm:$0xff] %v1902
  %1916 = vst [vmem:[#allocation2 + $0x7b0] sm:$0xff] %v1899
  %1917 = vst [vmem:[#allocation2 + $0x7b8] sm:$0xff] %v1908
  %1918 = vst [vmem:[#allocation2 + $0x7c0] sm:$0xff] %v1906
  %1919 = vst [vmem:[#allocation2 + $0x7c8] sm:$0xff] %v1903
  %1920 = vst [vmem:[#allocation2 + $0x7d0] sm:$0xff] %v1900
  %1921 = vst [vmem:[#allocation2 + $0x7d8] sm:$0xff] %v1909
  %1922 = vrot.lane.b32.xlu0 %v851, 97
  %v1923 = vpop.permute.xlu0 %1922
  %1924 = vrot.lane.b32.xlu0 %v857, 97
  %v1925 = vpop.permute.xlu0 %1924
  %1926 = vrot.lane.b32.xlu0 %v863, 97
  %v1927 = vpop.permute.xlu0 %1926
  %1928 = vrot.lane.b32.xlu0 %v853, 97
  %v1929 = vpop.permute.xlu0 %1928
  %1930 = vrot.lane.b32.xlu0 %v859, 97
  %v1931 = vpop.permute.xlu0 %1930
  %1932 = vrot.lane.b32.xlu0 %v865, 97
  %v1933 = vpop.permute.xlu0 %1932
  %1934 = vrot.lane.b32.xlu0 %v934, 97
  %v1935 = vpop.permute.xlu0 %1934
  %1936 = vrot.lane.b32.xlu0 %v940, 97
  %v1937 = vpop.permute.xlu0 %1936
  %1938 = vrot.lane.b32.xlu0 %v946, 97
  %v1939 = vpop.permute.xlu0 %1938
  %1940 = vrot.lane.b32.xlu0 %v936, 97
  %v1941 = vpop.permute.xlu0 %1940
  %1942 = vrot.lane.b32.xlu0 %v942, 97
  %v1943 = vpop.permute.xlu0 %1942
  %1944 = vrot.lane.b32.xlu0 %v948, 97
  %v1945 = vpop.permute.xlu0 %1944
  %v1946 = vsel %vm390, %v1935, %v1941
  %v1947 = vsel %vm390, %v1937, %v1943
  %v1948 = vsel %vm390, %v1939, %v1945
  %v1949 = vsel %vm390, %v1929, %v1935
  %v1950 = vsel %vm390, %v1931, %v1937
  %v1951 = vsel %vm390, %v1933, %v1939
  %v1952 = vsel %vm390, %v1923, %v1929
  %v1953 = vsel %vm390, %v1925, %v1931
  %v1954 = vsel %vm390, %v1927, %v1933
  %v1955 = vsel %vm390, %v1941, %v1923
  %v1956 = vsel %vm390, %v1943, %v1925
  %v1957 = vsel %vm390, %v1945, %v1927
  %1958 = vst [vmem:[#allocation2 + $0x7e0] sm:$0xff] %v1952
  %1959 = vst [vmem:[#allocation2 + $0x7e8] sm:$0xff] %v1949
  %1960 = vst [vmem:[#allocation2 + $0x7f0] sm:$0xff] %v1946
  %1961 = vst [vmem:[#allocation2 + $0x7f8] sm:$0xff] %v1955
  %1962 = vst [vmem:[#allocation2 + $0x800] sm:$0xff] %v1953
  %1963 = vst [vmem:[#allocation2 + $0x808] sm:$0xff] %v1950
  %1964 = vst [vmem:[#allocation2 + $0x810] sm:$0xff] %v1947
  %1965 = vst [vmem:[#allocation2 + $0x818] sm:$0xff] %v1956
  %1966 = vst [vmem:[#allocation2 + $0x820] sm:$0xff] %v1954
  %1967 = vst [vmem:[#allocation2 + $0x828] sm:$0xff] %v1951
  %1968 = vst [vmem:[#allocation2 + $0x830] sm:$0xff] %v1948
  %1969 = vst [vmem:[#allocation2 + $0x838] sm:$0xff] %v1957
  %1970 = vrot.lane.b32.xlu0 %v851, 96
  %v1971 = vpop.permute.xlu0 %1970
  %1972 = vrot.lane.b32.xlu0 %v857, 96
  %v1973 = vpop.permute.xlu0 %1972
  %1974 = vrot.lane.b32.xlu0 %v863, 96
  %v1975 = vpop.permute.xlu0 %1974
  %1976 = vrot.lane.b32.xlu0 %v853, 96
  %v1977 = vpop.permute.xlu0 %1976
  %1978 = vrot.lane.b32.xlu0 %v859, 96
  %v1979 = vpop.permute.xlu0 %1978
  %1980 = vrot.lane.b32.xlu0 %v865, 96
  %v1981 = vpop.permute.xlu0 %1980
  %1982 = vrot.lane.b32.xlu0 %v934, 96
  %v1983 = vpop.permute.xlu0 %1982
  %1984 = vrot.lane.b32.xlu0 %v940, 96
  %v1985 = vpop.permute.xlu0 %1984
  %1986 = vrot.lane.b32.xlu0 %v946, 96
  %v1987 = vpop.permute.xlu0 %1986
  %1988 = vrot.lane.b32.xlu0 %v936, 96
  %v1989 = vpop.permute.xlu0 %1988
  %1990 = vrot.lane.b32.xlu0 %v942, 96
  %v1991 = vpop.permute.xlu0 %1990
  %1992 = vrot.lane.b32.xlu0 %v948, 96
  %v1993 = vpop.permute.xlu0 %1992
  %v1994 = vsel %vm407, %v1983, %v1989
  %v1995 = vsel %vm407, %v1985, %v1991
  %v1996 = vsel %vm407, %v1987, %v1993
  %v1997 = vsel %vm407, %v1977, %v1983
  %v1998 = vsel %vm407, %v1979, %v1985
  %v1999 = vsel %vm407, %v1981, %v1987
  %v2000 = vsel %vm407, %v1971, %v1977
  %v2001 = vsel %vm407, %v1973, %v1979
  %v2002 = vsel %vm407, %v1975, %v1981
  %v2003 = vsel %vm407, %v1989, %v1971
  %v2004 = vsel %vm407, %v1991, %v1973
  %v2005 = vsel %vm407, %v1993, %v1975
  %2006 = vst [vmem:[#allocation2 + $0x840] sm:$0xff] %v2000
  %2007 = vst [vmem:[#allocation2 + $0x848] sm:$0xff] %v1997
  %2008 = vst [vmem:[#allocation2 + $0x850] sm:$0xff] %v1994
  %2009 = vst [vmem:[#allocation2 + $0x858] sm:$0xff] %v2003
  %2010 = vst [vmem:[#allocation2 + $0x860] sm:$0xff] %v2001
  %2011 = vst [vmem:[#allocation2 + $0x868] sm:$0xff] %v1998
  %2012 = vst [vmem:[#allocation2 + $0x870] sm:$0xff] %v1995
  %2013 = vst [vmem:[#allocation2 + $0x878] sm:$0xff] %v2004
  %2014 = vst [vmem:[#allocation2 + $0x880] sm:$0xff] %v2002
  %2015 = vst [vmem:[#allocation2 + $0x888] sm:$0xff] %v1999
  %2016 = vst [vmem:[#allocation2 + $0x890] sm:$0xff] %v1996
  %2017 = vst [vmem:[#allocation2 + $0x898] sm:$0xff] %v2005
  %2018 = vrot.lane.b32.xlu0 %v851, 95
  %v2019 = vpop.permute.xlu0 %2018
  %2020 = vrot.lane.b32.xlu0 %v857, 95
  %v2021 = vpop.permute.xlu0 %2020
  %2022 = vrot.lane.b32.xlu0 %v863, 95
  %v2023 = vpop.permute.xlu0 %2022
  %2024 = vrot.lane.b32.xlu0 %v853, 95
  %v2025 = vpop.permute.xlu0 %2024
  %2026 = vrot.lane.b32.xlu0 %v859, 95
  %v2027 = vpop.permute.xlu0 %2026
  %2028 = vrot.lane.b32.xlu0 %v865, 95
  %v2029 = vpop.permute.xlu0 %2028
  %2030 = vrot.lane.b32.xlu0 %v934, 95
  %v2031 = vpop.permute.xlu0 %2030
  %2032 = vrot.lane.b32.xlu0 %v940, 95
  %v2033 = vpop.permute.xlu0 %2032
  %2034 = vrot.lane.b32.xlu0 %v946, 95
  %v2035 = vpop.permute.xlu0 %2034
  %2036 = vrot.lane.b32.xlu0 %v936, 95
  %v2037 = vpop.permute.xlu0 %2036
  %2038 = vrot.lane.b32.xlu0 %v942, 95
  %v2039 = vpop.permute.xlu0 %2038
  %2040 = vrot.lane.b32.xlu0 %v948, 95
  %v2041 = vpop.permute.xlu0 %2040
  %v2042 = vsel %vm424, %v2031, %v2037
  %v2043 = vsel %vm424, %v2033, %v2039
  %v2044 = vsel %vm424, %v2035, %v2041
  %v2045 = vsel %vm424, %v2025, %v2031
  %v2046 = vsel %vm424, %v2027, %v2033
  %v2047 = vsel %vm424, %v2029, %v2035
  %v2048 = vsel %vm424, %v2019, %v2025
  %v2049 = vsel %vm424, %v2021, %v2027
  %v2050 = vsel %vm424, %v2023, %v2029
  %v2051 = vsel %vm424, %v2037, %v2019
  %v2052 = vsel %vm424, %v2039, %v2021
  %v2053 = vsel %vm424, %v2041, %v2023
  %2054 = vst [vmem:[#allocation2 + $0x8a0] sm:$0xff] %v2048
  %2055 = vst [vmem:[#allocation2 + $0x8a8] sm:$0xff] %v2045
  %2056 = vst [vmem:[#allocation2 + $0x8b0] sm:$0xff] %v2042
  %2057 = vst [vmem:[#allocation2 + $0x8b8] sm:$0xff] %v2051
  %2058 = vst [vmem:[#allocation2 + $0x8c0] sm:$0xff] %v2049
  %2059 = vst [vmem:[#allocation2 + $0x8c8] sm:$0xff] %v2046
  %2060 = vst [vmem:[#allocation2 + $0x8d0] sm:$0xff] %v2043
  %2061 = vst [vmem:[#allocation2 + $0x8d8] sm:$0xff] %v2052
  %2062 = vst [vmem:[#allocation2 + $0x8e0] sm:$0xff] %v2050
  %2063 = vst [vmem:[#allocation2 + $0x8e8] sm:$0xff] %v2047
  %2064 = vst [vmem:[#allocation2 + $0x8f0] sm:$0xff] %v2044
  %2065 = vst [vmem:[#allocation2 + $0x8f8] sm:$0xff] %v2053
  %2066 = vrot.lane.b32.xlu0 %v851, 94
  %v2067 = vpop.permute.xlu0 %2066
  %2068 = vrot.lane.b32.xlu0 %v857, 94
  %v2069 = vpop.permute.xlu0 %2068
  %2070 = vrot.lane.b32.xlu0 %v863, 94
  %v2071 = vpop.permute.xlu0 %2070
  %2072 = vrot.lane.b32.xlu0 %v853, 94
  %v2073 = vpop.permute.xlu0 %2072
  %2074 = vrot.lane.b32.xlu0 %v859, 94
  %v2075 = vpop.permute.xlu0 %2074
  %2076 = vrot.lane.b32.xlu0 %v865, 94
  %v2077 = vpop.permute.xlu0 %2076
  %2078 = vrot.lane.b32.xlu0 %v934, 94
  %v2079 = vpop.permute.xlu0 %2078
  %2080 = vrot.lane.b32.xlu0 %v940, 94
  %v2081 = vpop.permute.xlu0 %2080
  %2082 = vrot.lane.b32.xlu0 %v946, 94
  %v2083 = vpop.permute.xlu0 %2082
  %2084 = vrot.lane.b32.xlu0 %v936, 94
  %v2085 = vpop.permute.xlu0 %2084
  %2086 = vrot.lane.b32.xlu0 %v942, 94
  %v2087 = vpop.permute.xlu0 %2086
  %2088 = vrot.lane.b32.xlu0 %v948, 94
  %v2089 = vpop.permute.xlu0 %2088
  %v2090 = vsel %vm441, %v2079, %v2085
  %v2091 = vsel %vm441, %v2081, %v2087
  %v2092 = vsel %vm441, %v2083, %v2089
  %v2093 = vsel %vm441, %v2073, %v2079
  %v2094 = vsel %vm441, %v2075, %v2081
  %v2095 = vsel %vm441, %v2077, %v2083
  %v2096 = vsel %vm441, %v2067, %v2073
  %v2097 = vsel %vm441, %v2069, %v2075
  %v2098 = vsel %vm441, %v2071, %v2077
  %v2099 = vsel %vm441, %v2085, %v2067
  %v2100 = vsel %vm441, %v2087, %v2069
  %v2101 = vsel %vm441, %v2089, %v2071
  %2102 = vst [vmem:[#allocation2 + $0x900] sm:$0xff] %v2096
  %2103 = vst [vmem:[#allocation2 + $0x908] sm:$0xff] %v2093
  %2104 = vst [vmem:[#allocation2 + $0x910] sm:$0xff] %v2090
  %2105 = vst [vmem:[#allocation2 + $0x918] sm:$0xff] %v2099
  %2106 = vst [vmem:[#allocation2 + $0x920] sm:$0xff] %v2097
  %2107 = vst [vmem:[#allocation2 + $0x928] sm:$0xff] %v2094
  %2108 = vst [vmem:[#allocation2 + $0x930] sm:$0xff] %v2091
  %2109 = vst [vmem:[#allocation2 + $0x938] sm:$0xff] %v2100
  %2110 = vst [vmem:[#allocation2 + $0x940] sm:$0xff] %v2098
  %2111 = vst [vmem:[#allocation2 + $0x948] sm:$0xff] %v2095
  %2112 = vst [vmem:[#allocation2 + $0x950] sm:$0xff] %v2092
  %2113 = vst [vmem:[#allocation2 + $0x958] sm:$0xff] %v2101
  %v2114 = vld [vmem:[#allocation2] sm:$0xff]
  %v2115 = vld [vmem:[#allocation2 + $0x8] sm:$0xff]
  %v2116 = vld [vmem:[#allocation2 + $0x10] sm:$0xff]
  %v2117 = vld [vmem:[#allocation2 + $0x18] sm:$0xff]
  %v2118 = vld [vmem:[#allocation2 + $0x20] sm:$0xff]
  %v2119 = vld [vmem:[#allocation2 + $0x28] sm:$0xff]
  %v2120 = vld [vmem:[#allocation2 + $0x30] sm:$0xff]
  %v2121 = vld [vmem:[#allocation2 + $0x38] sm:$0xff]
  %v2122 = vld [vmem:[#allocation2 + $0x40] sm:$0xff]
  %v2123 = vld [vmem:[#allocation2 + $0x48] sm:$0xff]
  %v2124 = vld [vmem:[#allocation2 + $0x50] sm:$0xff]
  %v2125 = vld [vmem:[#allocation2 + $0x58] sm:$0xff]
  %v2126 = vld [vmem:[#allocation2 + $0x60] sm:$0xff]
  %v2127 = vld [vmem:[#allocation2 + $0x68] sm:$0xff]
  %v2128 = vld [vmem:[#allocation2 + $0x70] sm:$0xff]
  %v2129 = vld [vmem:[#allocation2 + $0x78] sm:$0xff]
  %v2130 = vld [vmem:[#allocation2 + $0x80] sm:$0xff]
  %v2131 = vld [vmem:[#allocation2 + $0x88] sm:$0xff]
  %v2132 = vld [vmem:[#allocation2 + $0x90] sm:$0xff]
  %v2133 = vld [vmem:[#allocation2 + $0x98] sm:$0xff]
  %v2134 = vld [vmem:[#allocation2 + $0xa0] sm:$0xff]
  %v2135 = vld [vmem:[#allocation2 + $0xa8] sm:$0xff]
  %v2136 = vld [vmem:[#allocation2 + $0xb0] sm:$0xff]
  %v2137 = vld [vmem:[#allocation2 + $0xb8] sm:$0xff]
  %v2138 = vld [vmem:[#allocation2 + $0xc0] sm:$0xff]
  %v2139 = vld [vmem:[#allocation2 + $0xc8] sm:$0xff]
  %v2140 = vld [vmem:[#allocation2 + $0xd0] sm:$0xff]
  %v2141 = vld [vmem:[#allocation2 + $0xd8] sm:$0xff]
  %v2142 = vld [vmem:[#allocation2 + $0xe0] sm:$0xff]
  %v2143 = vld [vmem:[#allocation2 + $0xe8] sm:$0xff]
  %v2144 = vld [vmem:[#allocation2 + $0xf0] sm:$0xff]
  %v2145 = vld [vmem:[#allocation2 + $0xf8] sm:$0xff]
  %v2146 = vld [vmem:[#allocation2 + $0x100] sm:$0xff]
  %v2147 = vld [vmem:[#allocation2 + $0x108] sm:$0xff]
  %v2148 = vld [vmem:[#allocation2 + $0x110] sm:$0xff]
  %v2149 = vld [vmem:[#allocation2 + $0x118] sm:$0xff]
  %v2150 = vld [vmem:[#allocation2 + $0x120] sm:$0xff]
  %v2151 = vld [vmem:[#allocation2 + $0x128] sm:$0xff]
  %v2152 = vld [vmem:[#allocation2 + $0x130] sm:$0xff]
  %v2153 = vld [vmem:[#allocation2 + $0x138] sm:$0xff]
  %v2154 = vld [vmem:[#allocation2 + $0x140] sm:$0xff]
  %v2155 = vld [vmem:[#allocation2 + $0x148] sm:$0xff]
  %v2156 = vld [vmem:[#allocation2 + $0x150] sm:$0xff]
  %v2157 = vld [vmem:[#allocation2 + $0x158] sm:$0xff]
  %v2158 = vld [vmem:[#allocation2 + $0x160] sm:$0xff]
  %v2159 = vld [vmem:[#allocation2 + $0x168] sm:$0xff]
  %v2160 = vld [vmem:[#allocation2 + $0x170] sm:$0xff]
  %v2161 = vld [vmem:[#allocation2 + $0x178] sm:$0xff]
  %v2162 = vld [vmem:[#allocation2 + $0x180] sm:$0xff]
  %v2163 = vld [vmem:[#allocation2 + $0x188] sm:$0xff]
  %v2164 = vld [vmem:[#allocation2 + $0x190] sm:$0xff]
  %v2165 = vld [vmem:[#allocation2 + $0x198] sm:$0xff]
  %v2166 = vld [vmem:[#allocation2 + $0x1a0] sm:$0xff]
  %v2167 = vld [vmem:[#allocation2 + $0x1a8] sm:$0xff]
  %v2168 = vld [vmem:[#allocation2 + $0x1b0] sm:$0xff]
  %v2169 = vld [vmem:[#allocation2 + $0x1b8] sm:$0xff]
  %v2170 = vld [vmem:[#allocation2 + $0x1c0] sm:$0xff]
  %v2171 = vld [vmem:[#allocation2 + $0x1c8] sm:$0xff]
  %v2172 = vld [vmem:[#allocation2 + $0x1d0] sm:$0xff]
  %v2173 = vld [vmem:[#allocation2 + $0x1d8] sm:$0xff]
  %v2174 = vld [vmem:[#allocation2 + $0x1e0] sm:$0xff]
  %v2175 = vld [vmem:[#allocation2 + $0x1e8] sm:$0xff]
  %v2176 = vld [vmem:[#allocation2 + $0x1f0] sm:$0xff]
  %v2177 = vld [vmem:[#allocation2 + $0x1f8] sm:$0xff]
  %v2178 = vld [vmem:[#allocation2 + $0x200] sm:$0xff]
  %v2179 = vld [vmem:[#allocation2 + $0x208] sm:$0xff]
  %v2180 = vld [vmem:[#allocation2 + $0x210] sm:$0xff]
  %v2181 = vld [vmem:[#allocation2 + $0x218] sm:$0xff]
  %v2182 = vld [vmem:[#allocation2 + $0x220] sm:$0xff]
  %v2183 = vld [vmem:[#allocation2 + $0x228] sm:$0xff]
  %v2184 = vld [vmem:[#allocation2 + $0x230] sm:$0xff]
  %v2185 = vld [vmem:[#allocation2 + $0x238] sm:$0xff]
  %v2186 = vld [vmem:[#allocation2 + $0x240] sm:$0xff]
  %v2187 = vld [vmem:[#allocation2 + $0x248] sm:$0xff]
  %v2188 = vld [vmem:[#allocation2 + $0x250] sm:$0xff]
  %v2189 = vld [vmem:[#allocation2 + $0x258] sm:$0xff]
  %v2190 = vld [vmem:[#allocation2 + $0x260] sm:$0xff]
  %v2191 = vld [vmem:[#allocation2 + $0x268] sm:$0xff]
  %v2192 = vld [vmem:[#allocation2 + $0x270] sm:$0xff]
  %v2193 = vld [vmem:[#allocation2 + $0x278] sm:$0xff]
  %v2194 = vld [vmem:[#allocation2 + $0x280] sm:$0xff]
  %v2195 = vld [vmem:[#allocation2 + $0x288] sm:$0xff]
  %v2196 = vld [vmem:[#allocation2 + $0x290] sm:$0xff]
  %v2197 = vld [vmem:[#allocation2 + $0x298] sm:$0xff]
  %v2198 = vld [vmem:[#allocation2 + $0x2a0] sm:$0xff]
  %v2199 = vld [vmem:[#allocation2 + $0x2a8] sm:$0xff]
  %v2200 = vld [vmem:[#allocation2 + $0x2b0] sm:$0xff]
  %v2201 = vld [vmem:[#allocation2 + $0x2b8] sm:$0xff]
  %v2202 = vld [vmem:[#allocation2 + $0x2c0] sm:$0xff]
  %v2203 = vld [vmem:[#allocation2 + $0x2c8] sm:$0xff]
  %v2204 = vld [vmem:[#allocation2 + $0x2d0] sm:$0xff]
  %v2205 = vld [vmem:[#allocation2 + $0x2d8] sm:$0xff]
  %v2206 = vld [vmem:[#allocation2 + $0x2e0] sm:$0xff]
  %v2207 = vld [vmem:[#allocation2 + $0x2e8] sm:$0xff]
  %v2208 = vld [vmem:[#allocation2 + $0x2f0] sm:$0xff]
  %v2209 = vld [vmem:[#allocation2 + $0x2f8] sm:$0xff]
  %v2210 = vld [vmem:[#allocation2 + $0x300] sm:$0xff]
  %v2211 = vld [vmem:[#allocation2 + $0x308] sm:$0xff]
  %v2212 = vld [vmem:[#allocation2 + $0x310] sm:$0xff]
  %v2213 = vld [vmem:[#allocation2 + $0x318] sm:$0xff]
  %v2214 = vld [vmem:[#allocation2 + $0x320] sm:$0xff]
  %v2215 = vld [vmem:[#allocation2 + $0x328] sm:$0xff]
  %v2216 = vld [vmem:[#allocation2 + $0x330] sm:$0xff]
  %v2217 = vld [vmem:[#allocation2 + $0x338] sm:$0xff]
  %v2218 = vld [vmem:[#allocation2 + $0x340] sm:$0xff]
  %v2219 = vld [vmem:[#allocation2 + $0x348] sm:$0xff]
  %v2220 = vld [vmem:[#allocation2 + $0x350] sm:$0xff]
  %v2221 = vld [vmem:[#allocation2 + $0x358] sm:$0xff]
  %v2222 = vld [vmem:[#allocation2 + $0x360] sm:$0xff]
  %v2223 = vld [vmem:[#allocation2 + $0x368] sm:$0xff]
  %v2224 = vld [vmem:[#allocation2 + $0x370] sm:$0xff]
  %v2225 = vld [vmem:[#allocation2 + $0x378] sm:$0xff]
  %v2226 = vld [vmem:[#allocation2 + $0x380] sm:$0xff]
  %v2227 = vld [vmem:[#allocation2 + $0x388] sm:$0xff]
  %v2228 = vld [vmem:[#allocation2 + $0x390] sm:$0xff]
  %v2229 = vld [vmem:[#allocation2 + $0x398] sm:$0xff]
  %v2230 = vld [vmem:[#allocation2 + $0x3a0] sm:$0xff]
  %v2231 = vld [vmem:[#allocation2 + $0x3a8] sm:$0xff]
  %v2232 = vld [vmem:[#allocation2 + $0x3b0] sm:$0xff]
  %v2233 = vld [vmem:[#allocation2 + $0x3b8] sm:$0xff]
  %v2234 = vld [vmem:[#allocation2 + $0x3c0] sm:$0xff]
  %v2235 = vld [vmem:[#allocation2 + $0x3c8] sm:$0xff]
  %v2236 = vld [vmem:[#allocation2 + $0x3d0] sm:$0xff]
  %v2237 = vld [vmem:[#allocation2 + $0x3d8] sm:$0xff]
  %v2238 = vld [vmem:[#allocation2 + $0x3e0] sm:$0xff]
  %v2239 = vld [vmem:[#allocation2 + $0x3e8] sm:$0xff]
  %v2240 = vld [vmem:[#allocation2 + $0x3f0] sm:$0xff]
  %v2241 = vld [vmem:[#allocation2 + $0x3f8] sm:$0xff]
  %v2242 = vld [vmem:[#allocation2 + $0x400] sm:$0xff]
  %v2243 = vld [vmem:[#allocation2 + $0x408] sm:$0xff]
  %v2244 = vld [vmem:[#allocation2 + $0x410] sm:$0xff]
  %v2245 = vld [vmem:[#allocation2 + $0x418] sm:$0xff]
  %v2246 = vld [vmem:[#allocation2 + $0x420] sm:$0xff]
  %v2247 = vld [vmem:[#allocation2 + $0x428] sm:$0xff]
  %v2248 = vld [vmem:[#allocation2 + $0x430] sm:$0xff]
  %v2249 = vld [vmem:[#allocation2 + $0x438] sm:$0xff]
  %v2250 = vld [vmem:[#allocation2 + $0x440] sm:$0xff]
  %v2251 = vld [vmem:[#allocation2 + $0x448] sm:$0xff]
  %v2252 = vld [vmem:[#allocation2 + $0x450] sm:$0xff]
  %v2253 = vld [vmem:[#allocation2 + $0x458] sm:$0xff]
  %v2254 = vld [vmem:[#allocation2 + $0x460] sm:$0xff]
  %v2255 = vld [vmem:[#allocation2 + $0x468] sm:$0xff]
  %v2256 = vld [vmem:[#allocation2 + $0x470] sm:$0xff]
  %v2257 = vld [vmem:[#allocation2 + $0x478] sm:$0xff]
  %v2258 = vld [vmem:[#allocation2 + $0x480] sm:$0xff]
  %v2259 = vld [vmem:[#allocation2 + $0x488] sm:$0xff]
  %v2260 = vld [vmem:[#allocation2 + $0x490] sm:$0xff]
  %v2261 = vld [vmem:[#allocation2 + $0x498] sm:$0xff]
  %v2262 = vld [vmem:[#allocation2 + $0x4a0] sm:$0xff]
  %v2263 = vld [vmem:[#allocation2 + $0x4a8] sm:$0xff]
  %v2264 = vld [vmem:[#allocation2 + $0x4b0] sm:$0xff]
  %v2265 = vld [vmem:[#allocation2 + $0x4b8] sm:$0xff]
  %v2266 = vld [vmem:[#allocation2 + $0x4c0] sm:$0xff]
  %v2267 = vld [vmem:[#allocation2 + $0x4c8] sm:$0xff]
  %v2268 = vld [vmem:[#allocation2 + $0x4d0] sm:$0xff]
  %v2269 = vld [vmem:[#allocation2 + $0x4d8] sm:$0xff]
  %v2270 = vld [vmem:[#allocation2 + $0x4e0] sm:$0xff]
  %v2271 = vld [vmem:[#allocation2 + $0x4e8] sm:$0xff]
  %v2272 = vld [vmem:[#allocation2 + $0x4f0] sm:$0xff]
  %v2273 = vld [vmem:[#allocation2 + $0x4f8] sm:$0xff]
  %v2274 = vld [vmem:[#allocation2 + $0x500] sm:$0xff]
  %v2275 = vld [vmem:[#allocation2 + $0x508] sm:$0xff]
  %v2276 = vld [vmem:[#allocation2 + $0x510] sm:$0xff]
  %v2277 = vld [vmem:[#allocation2 + $0x518] sm:$0xff]
  %v2278 = vld [vmem:[#allocation2 + $0x520] sm:$0xff]
  %v2279 = vld [vmem:[#allocation2 + $0x528] sm:$0xff]
  %v2280 = vld [vmem:[#allocation2 + $0x530] sm:$0xff]
  %v2281 = vld [vmem:[#allocation2 + $0x538] sm:$0xff]
  %v2282 = vld [vmem:[#allocation2 + $0x540] sm:$0xff]
  %v2283 = vld [vmem:[#allocation2 + $0x548] sm:$0xff]
  %v2284 = vld [vmem:[#allocation2 + $0x550] sm:$0xff]
  %v2285 = vld [vmem:[#allocation2 + $0x558] sm:$0xff]
  %v2286 = vld [vmem:[#allocation2 + $0x560] sm:$0xff]
  %v2287 = vld [vmem:[#allocation2 + $0x568] sm:$0xff]
  %v2288 = vld [vmem:[#allocation2 + $0x570] sm:$0xff]
  %v2289 = vld [vmem:[#allocation2 + $0x578] sm:$0xff]
  %v2290 = vld [vmem:[#allocation2 + $0x580] sm:$0xff]
  %v2291 = vld [vmem:[#allocation2 + $0x588] sm:$0xff]
  %v2292 = vld [vmem:[#allocation2 + $0x590] sm:$0xff]
  %v2293 = vld [vmem:[#allocation2 + $0x598] sm:$0xff]
  %v2294 = vld [vmem:[#allocation2 + $0x5a0] sm:$0xff]
  %v2295 = vld [vmem:[#allocation2 + $0x5a8] sm:$0xff]
  %v2296 = vld [vmem:[#allocation2 + $0x5b0] sm:$0xff]
  %v2297 = vld [vmem:[#allocation2 + $0x5b8] sm:$0xff]
  %v2298 = vld [vmem:[#allocation2 + $0x5c0] sm:$0xff]
  %v2299 = vld [vmem:[#allocation2 + $0x5c8] sm:$0xff]
  %v2300 = vld [vmem:[#allocation2 + $0x5d0] sm:$0xff]
  %v2301 = vld [vmem:[#allocation2 + $0x5d8] sm:$0xff]
  %v2302 = vld [vmem:[#allocation2 + $0x5e0] sm:$0xff]
  %v2303 = vld [vmem:[#allocation2 + $0x5e8] sm:$0xff]
  %v2304 = vld [vmem:[#allocation2 + $0x5f0] sm:$0xff]
  %v2305 = vld [vmem:[#allocation2 + $0x5f8] sm:$0xff]
  %v2306 = vld [vmem:[#allocation2 + $0x600] sm:$0xff]
  %v2307 = vld [vmem:[#allocation2 + $0x608] sm:$0xff]
  %v2308 = vld [vmem:[#allocation2 + $0x610] sm:$0xff]
  %v2309 = vld [vmem:[#allocation2 + $0x618] sm:$0xff]
  %v2310 = vld [vmem:[#allocation2 + $0x620] sm:$0xff]
  %v2311 = vld [vmem:[#allocation2 + $0x628] sm:$0xff]
  %v2312 = vld [vmem:[#allocation2 + $0x630] sm:$0xff]
  %v2313 = vld [vmem:[#allocation2 + $0x638] sm:$0xff]
  %v2314 = vld [vmem:[#allocation2 + $0x640] sm:$0xff]
  %v2315 = vld [vmem:[#allocation2 + $0x648] sm:$0xff]
  %v2316 = vld [vmem:[#allocation2 + $0x650] sm:$0xff]
  %v2317 = vld [vmem:[#allocation2 + $0x658] sm:$0xff]
  %v2318 = vld [vmem:[#allocation2 + $0x660] sm:$0xff]
  %v2319 = vld [vmem:[#allocation2 + $0x668] sm:$0xff]
  %v2320 = vld [vmem:[#allocation2 + $0x670] sm:$0xff]
  %v2321 = vld [vmem:[#allocation2 + $0x678] sm:$0xff]
  %v2322 = vld [vmem:[#allocation2 + $0x680] sm:$0xff]
  %v2323 = vld [vmem:[#allocation2 + $0x688] sm:$0xff]
  %v2324 = vld [vmem:[#allocation2 + $0x690] sm:$0xff]
  %v2325 = vld [vmem:[#allocation2 + $0x698] sm:$0xff]
  %v2326 = vld [vmem:[#allocation2 + $0x6a0] sm:$0xff]
  %v2327 = vld [vmem:[#allocation2 + $0x6a8] sm:$0xff]
  %v2328 = vld [vmem:[#allocation2 + $0x6b0] sm:$0xff]
  %v2329 = vld [vmem:[#allocation2 + $0x6b8] sm:$0xff]
  %v2330 = vld [vmem:[#allocation2 + $0x6c0] sm:$0xff]
  %v2331 = vld [vmem:[#allocation2 + $0x6c8] sm:$0xff]
  %v2332 = vld [vmem:[#allocation2 + $0x6d0] sm:$0xff]
  %v2333 = vld [vmem:[#allocation2 + $0x6d8] sm:$0xff]
  %v2334 = vld [vmem:[#allocation2 + $0x6e0] sm:$0xff]
  %v2335 = vld [vmem:[#allocation2 + $0x6e8] sm:$0xff]
  %v2336 = vld [vmem:[#allocation2 + $0x6f0] sm:$0xff]
  %v2337 = vld [vmem:[#allocation2 + $0x6f8] sm:$0xff]
  %v2338 = vld [vmem:[#allocation2 + $0x700] sm:$0xff]
  %v2339 = vld [vmem:[#allocation2 + $0x708] sm:$0xff]
  %v2340 = vld [vmem:[#allocation2 + $0x710] sm:$0xff]
  %v2341 = vld [vmem:[#allocation2 + $0x718] sm:$0xff]
  %v2342 = vld [vmem:[#allocation2 + $0x720] sm:$0xff]
  %v2343 = vld [vmem:[#allocation2 + $0x728] sm:$0xff]
  %v2344 = vld [vmem:[#allocation2 + $0x730] sm:$0xff]
  %v2345 = vld [vmem:[#allocation2 + $0x738] sm:$0xff]
  %v2346 = vld [vmem:[#allocation2 + $0x740] sm:$0xff]
  %v2347 = vld [vmem:[#allocation2 + $0x748] sm:$0xff]
  %v2348 = vld [vmem:[#allocation2 + $0x750] sm:$0xff]
  %v2349 = vld [vmem:[#allocation2 + $0x758] sm:$0xff]
  %v2350 = vld [vmem:[#allocation2 + $0x760] sm:$0xff]
  %v2351 = vld [vmem:[#allocation2 + $0x768] sm:$0xff]
  %v2352 = vld [vmem:[#allocation2 + $0x770] sm:$0xff]
  %v2353 = vld [vmem:[#allocation2 + $0x778] sm:$0xff]
  %v2354 = vld [vmem:[#allocation2 + $0x780] sm:$0xff]
  %v2355 = vld [vmem:[#allocation2 + $0x788] sm:$0xff]
  %v2356 = vld [vmem:[#allocation2 + $0x790] sm:$0xff]
  %v2357 = vld [vmem:[#allocation2 + $0x798] sm:$0xff]
  %v2358 = vld [vmem:[#allocation2 + $0x7a0] sm:$0xff]
  %v2359 = vld [vmem:[#allocation2 + $0x7a8] sm:$0xff]
  %v2360 = vld [vmem:[#allocation2 + $0x7b0] sm:$0xff]
  %v2361 = vld [vmem:[#allocation2 + $0x7b8] sm:$0xff]
  %v2362 = vld [vmem:[#allocation2 + $0x7c0] sm:$0xff]
  %v2363 = vld [vmem:[#allocation2 + $0x7c8] sm:$0xff]
  %v2364 = vld [vmem:[#allocation2 + $0x7d0] sm:$0xff]
  %v2365 = vld [vmem:[#allocation2 + $0x7d8] sm:$0xff]
  %v2366 = vld [vmem:[#allocation2 + $0x7e0] sm:$0xff]
  %v2367 = vld [vmem:[#allocation2 + $0x7e8] sm:$0xff]
  %v2368 = vld [vmem:[#allocation2 + $0x7f0] sm:$0xff]
  %v2369 = vld [vmem:[#allocation2 + $0x7f8] sm:$0xff]
  %v2370 = vld [vmem:[#allocation2 + $0x800] sm:$0xff]
  %v2371 = vld [vmem:[#allocation2 + $0x808] sm:$0xff]
  %v2372 = vld [vmem:[#allocation2 + $0x810] sm:$0xff]
  %v2373 = vld [vmem:[#allocation2 + $0x818] sm:$0xff]
  %v2374 = vld [vmem:[#allocation2 + $0x820] sm:$0xff]
  %v2375 = vld [vmem:[#allocation2 + $0x828] sm:$0xff]
  %v2376 = vld [vmem:[#allocation2 + $0x830] sm:$0xff]
  %v2377 = vld [vmem:[#allocation2 + $0x838] sm:$0xff]
  %v2378 = vld [vmem:[#allocation2 + $0x840] sm:$0xff]
  %v2379 = vld [vmem:[#allocation2 + $0x848] sm:$0xff]
  %v2380 = vld [vmem:[#allocation2 + $0x850] sm:$0xff]
  %v2381 = vld [vmem:[#allocation2 + $0x858] sm:$0xff]
  %v2382 = vld [vmem:[#allocation2 + $0x860] sm:$0xff]
  %v2383 = vld [vmem:[#allocation2 + $0x868] sm:$0xff]
  %v2384 = vld [vmem:[#allocation2 + $0x870] sm:$0xff]
  %v2385 = vld [vmem:[#allocation2 + $0x878] sm:$0xff]
  %v2386 = vld [vmem:[#allocation2 + $0x880] sm:$0xff]
  %v2387 = vld [vmem:[#allocation2 + $0x888] sm:$0xff]
  %v2388 = vld [vmem:[#allocation2 + $0x890] sm:$0xff]
  %v2389 = vld [vmem:[#allocation2 + $0x898] sm:$0xff]
  %v2390 = vld [vmem:[#allocation2 + $0x8a0] sm:$0xff]
  %v2391 = vld [vmem:[#allocation2 + $0x8a8] sm:$0xff]
  %v2392 = vld [vmem:[#allocation2 + $0x8b0] sm:$0xff]
  %v2393 = vld [vmem:[#allocation2 + $0x8b8] sm:$0xff]
  %v2394 = vld [vmem:[#allocation2 + $0x8c0] sm:$0xff]
  %v2395 = vld [vmem:[#allocation2 + $0x8c8] sm:$0xff]
  %v2396 = vld [vmem:[#allocation2 + $0x8d0] sm:$0xff]
  %v2397 = vld [vmem:[#allocation2 + $0x8d8] sm:$0xff]
  %v2398 = vld [vmem:[#allocation2 + $0x8e0] sm:$0xff]
  %v2399 = vld [vmem:[#allocation2 + $0x8e8] sm:$0xff]
  %v2400 = vld [vmem:[#allocation2 + $0x8f0] sm:$0xff]
  %v2401 = vld [vmem:[#allocation2 + $0x8f8] sm:$0xff]
  %v2402 = vld [vmem:[#allocation2 + $0x900] sm:$0xff]
  %v2403 = vld [vmem:[#allocation2 + $0x908] sm:$0xff]
  %v2404 = vld [vmem:[#allocation2 + $0x910] sm:$0xff]
  %v2405 = vld [vmem:[#allocation2 + $0x918] sm:$0xff]
  %v2406 = vld [vmem:[#allocation2 + $0x920] sm:$0xff]
  %v2407 = vld [vmem:[#allocation2 + $0x928] sm:$0xff]
  %v2408 = vld [vmem:[#allocation2 + $0x930] sm:$0xff]
  %v2409 = vld [vmem:[#allocation2 + $0x938] sm:$0xff]
  %v2410 = vld [vmem:[#allocation2 + $0x940] sm:$0xff]
  %v2411 = vld [vmem:[#allocation2 + $0x948] sm:$0xff]
  %v2412 = vld [vmem:[#allocation2 + $0x950] sm:$0xff]
  %v2413 = vld [vmem:[#allocation2 + $0x958] sm:$0xff]
  %v2414 = vld [vmem:[%s2] sm:$0xff]
  %v2415 = vld [vmem:[%s2 + $0x8] sm:$0xff]
  %v2416 = vld [vmem:[%s2 + $0x10] sm:$0xff]
  %v2417 = vld [vmem:[%s2 + $0x18] sm:$0xff]
  %v2418 = vld [vmem:[%s2 + $0x20] sm:$0xff]
  %v2419 = vld [vmem:[%s2 + $0x28] sm:$0xff]
  %v2420 = vld [vmem:[%s2 + $0x30] sm:$0xff]
  %v2421 = vld [vmem:[%s2 + $0x38] sm:$0xff]
  %v2422 = vld [vmem:[%s2 + $0x40] sm:$0xff]
  %v2423 = vld [vmem:[%s2 + $0x48] sm:$0xff]
  %v2424 = vld [vmem:[%s2 + $0x50] sm:$0xff]
  %v2425 = vld [vmem:[%s2 + $0x58] sm:$0xff]
  %v2426 = vld [vmem:[%s2 + $0x60] sm:$0xff]
  %v2427 = vld [vmem:[%s2 + $0x68] sm:$0xff]
  %v2428 = vld [vmem:[%s2 + $0x70] sm:$0xff]
  %v2429 = vld [vmem:[%s2 + $0x78] sm:$0xff]
  %v2430 = vld [vmem:[%s2 + $0x80] sm:$0xff]
  %v2431 = vld [vmem:[%s2 + $0x88] sm:$0xff]
  %v2432 = vld [vmem:[%s2 + $0x90] sm:$0xff]
  %v2433 = vld [vmem:[%s2 + $0x98] sm:$0xff]
  %v2434 = vld [vmem:[%s2 + $0xa0] sm:$0xff]
  %v2435 = vld [vmem:[%s2 + $0xa8] sm:$0xff]
  %v2436 = vld [vmem:[%s2 + $0xb0] sm:$0xff]
  %v2437 = vld [vmem:[%s2 + $0xb8] sm:$0xff]
  %v2438 = vld [vmem:[%s2 + $0xc0] sm:$0xff]
  %v2439 = vld [vmem:[%s2 + $0xc8] sm:$0xff]
  %v2440 = vld [vmem:[%s2 + $0xd0] sm:$0xff]
  %v2441 = vld [vmem:[%s2 + $0xd8] sm:$0xff]
  %v2442 = vld [vmem:[%s2 + $0xe0] sm:$0xff]
  %v2443 = vld [vmem:[%s2 + $0xe8] sm:$0xff]
  %v2444 = vld [vmem:[%s2 + $0xf0] sm:$0xff]
  %v2445 = vld [vmem:[%s2 + $0xf8] sm:$0xff]
  %v2446 = vld [vmem:[%s2 + $0x100] sm:$0xff]
  %v2447 = vld [vmem:[%s2 + $0x108] sm:$0xff]
  %v2448 = vld [vmem:[%s2 + $0x110] sm:$0xff]
  %v2449 = vld [vmem:[%s2 + $0x118] sm:$0xff]
  %v2450 = vld [vmem:[%s2 + $0x120] sm:$0xff]
  %v2451 = vld [vmem:[%s2 + $0x128] sm:$0xff]
  %v2452 = vld [vmem:[%s2 + $0x130] sm:$0xff]
  %v2453 = vld [vmem:[%s2 + $0x138] sm:$0xff]
  %v2454 = vld [vmem:[%s2 + $0x140] sm:$0xff]
  %v2455 = vld [vmem:[%s2 + $0x148] sm:$0xff]
  %v2456 = vld [vmem:[%s2 + $0x150] sm:$0xff]
  %v2457 = vld [vmem:[%s2 + $0x158] sm:$0xff]
  %v2458 = vld [vmem:[%s2 + $0x160] sm:$0xff]
  %v2459 = vld [vmem:[%s2 + $0x168] sm:$0xff]
  %v2460 = vld [vmem:[%s2 + $0x170] sm:$0xff]
  %v2461 = vld [vmem:[%s2 + $0x178] sm:$0xff]
  %v2462 = vld [vmem:[%s2 + $0x180] sm:$0xff]
  %v2463 = vld [vmem:[%s2 + $0x188] sm:$0xff]
  %v2464 = vld [vmem:[%s2 + $0x190] sm:$0xff]
  %v2465 = vld [vmem:[%s2 + $0x198] sm:$0xff]
  %v2466 = vld [vmem:[%s2 + $0x1a0] sm:$0xff]
  %v2467 = vld [vmem:[%s2 + $0x1a8] sm:$0xff]
  %v2468 = vld [vmem:[%s2 + $0x1b0] sm:$0xff]
  %v2469 = vld [vmem:[%s2 + $0x1b8] sm:$0xff]
  %v2470 = vld [vmem:[%s2 + $0x1c0] sm:$0xff]
  %v2471 = vld [vmem:[%s2 + $0x1c8] sm:$0xff]
  %v2472 = vld [vmem:[%s2 + $0x1d0] sm:$0xff]
  %v2473 = vld [vmem:[%s2 + $0x1d8] sm:$0xff]
  %v2474 = vld [vmem:[%s2 + $0x1e0] sm:$0xff]
  %v2475 = vld [vmem:[%s2 + $0x1e8] sm:$0xff]
  %v2476 = vld [vmem:[%s2 + $0x1f0] sm:$0xff]
  %v2477 = vld [vmem:[%s2 + $0x1f8] sm:$0xff]
  %v2478 = vld [vmem:[%s2 + $0x200] sm:$0xff]
  %v2479 = vld [vmem:[%s2 + $0x208] sm:$0xff]
  %v2480 = vld [vmem:[%s2 + $0x210] sm:$0xff]
  %v2481 = vld [vmem:[%s2 + $0x218] sm:$0xff]
  %v2482 = vld [vmem:[%s2 + $0x220] sm:$0xff]
  %v2483 = vld [vmem:[%s2 + $0x228] sm:$0xff]
  %v2484 = vld [vmem:[%s2 + $0x230] sm:$0xff]
  %v2485 = vld [vmem:[%s2 + $0x238] sm:$0xff]
  %v2486 = vld [vmem:[%s2 + $0x240] sm:$0xff]
  %v2487 = vld [vmem:[%s2 + $0x248] sm:$0xff]
  %v2488 = vld [vmem:[%s2 + $0x250] sm:$0xff]
  %v2489 = vld [vmem:[%s2 + $0x258] sm:$0xff]
  %v2490 = vld [vmem:[%s2 + $0x260] sm:$0xff]
  %v2491 = vld [vmem:[%s2 + $0x268] sm:$0xff]
  %v2492 = vld [vmem:[%s2 + $0x270] sm:$0xff]
  %v2493 = vld [vmem:[%s2 + $0x278] sm:$0xff]
  %v2494 = vld [vmem:[%s2 + $0x280] sm:$0xff]
  %v2495 = vld [vmem:[%s2 + $0x288] sm:$0xff]
  %v2496 = vld [vmem:[%s2 + $0x290] sm:$0xff]
  %v2497 = vld [vmem:[%s2 + $0x298] sm:$0xff]
  %v2498 = vld [vmem:[%s2 + $0x2a0] sm:$0xff]
  %v2499 = vld [vmem:[%s2 + $0x2a8] sm:$0xff]
  %v2500 = vld [vmem:[%s2 + $0x2b0] sm:$0xff]
  %v2501 = vld [vmem:[%s2 + $0x2b8] sm:$0xff]
  %v2502 = vld [vmem:[%s2 + $0x2c0] sm:$0xff]
  %v2503 = vld [vmem:[%s2 + $0x2c8] sm:$0xff]
  %v2504 = vld [vmem:[%s2 + $0x2d0] sm:$0xff]
  %v2505 = vld [vmem:[%s2 + $0x2d8] sm:$0xff]
  %v2506 = vld [vmem:[%s2 + $0x2e0] sm:$0xff]
  %v2507 = vld [vmem:[%s2 + $0x2e8] sm:$0xff]
  %v2508 = vld [vmem:[%s2 + $0x2f0] sm:$0xff]
  %v2509 = vld [vmem:[%s2 + $0x2f8] sm:$0xff]
  %v2510 = vld [vmem:[%s2 + $0x300] sm:$0xff]
  %v2511 = vld [vmem:[%s2 + $0x308] sm:$0xff]
  %v2512 = vld [vmem:[%s2 + $0x310] sm:$0xff]
  %v2513 = vld [vmem:[%s2 + $0x318] sm:$0xff]
  %v2514 = vld [vmem:[%s2 + $0x320] sm:$0xff]
  %v2515 = vld [vmem:[%s2 + $0x328] sm:$0xff]
  %v2516 = vld [vmem:[%s2 + $0x330] sm:$0xff]
  %v2517 = vld [vmem:[%s2 + $0x338] sm:$0xff]
  %v2518 = vld [vmem:[%s2 + $0x340] sm:$0xff]
  %v2519 = vld [vmem:[%s2 + $0x348] sm:$0xff]
  %v2520 = vld [vmem:[%s2 + $0x350] sm:$0xff]
  %v2521 = vld [vmem:[%s2 + $0x358] sm:$0xff]
  %v2522 = vld [vmem:[%s2 + $0x360] sm:$0xff]
  %v2523 = vld [vmem:[%s2 + $0x368] sm:$0xff]
  %v2524 = vld [vmem:[%s2 + $0x370] sm:$0xff]
  %v2525 = vld [vmem:[%s2 + $0x378] sm:$0xff]
  %v2526 = vld [vmem:[%s2 + $0x380] sm:$0xff]
  %v2527 = vld [vmem:[%s2 + $0x388] sm:$0xff]
  %v2528 = vld [vmem:[%s2 + $0x390] sm:$0xff]
  %v2529 = vld [vmem:[%s2 + $0x398] sm:$0xff]
  %v2530 = vld [vmem:[%s2 + $0x3a0] sm:$0xff]
  %v2531 = vld [vmem:[%s2 + $0x3a8] sm:$0xff]
  %v2532 = vld [vmem:[%s2 + $0x3b0] sm:$0xff]
  %v2533 = vld [vmem:[%s2 + $0x3b8] sm:$0xff]
  %v2534 = vld [vmem:[%s2 + $0x3c0] sm:$0xff]
  %v2535 = vld [vmem:[%s2 + $0x3c8] sm:$0xff]
  %v2536 = vld [vmem:[%s2 + $0x3d0] sm:$0xff]
  %v2537 = vld [vmem:[%s2 + $0x3d8] sm:$0xff]
  %v2538 = vld [vmem:[%s2 + $0x3e0] sm:$0xff]
  %v2539 = vld [vmem:[%s2 + $0x3e8] sm:$0xff]
  %v2540 = vld [vmem:[%s2 + $0x3f0] sm:$0xff]
  %v2541 = vld [vmem:[%s2 + $0x3f8] sm:$0xff]
  %v2542 = vld [vmem:[%s2 + $0x400] sm:$0xff]
  %v2543 = vld [vmem:[%s2 + $0x408] sm:$0xff]
  %v2544 = vld [vmem:[%s2 + $0x410] sm:$0xff]
  %v2545 = vld [vmem:[%s2 + $0x418] sm:$0xff]
  %v2546 = vld [vmem:[%s2 + $0x420] sm:$0xff]
  %v2547 = vld [vmem:[%s2 + $0x428] sm:$0xff]
  %v2548 = vld [vmem:[%s2 + $0x430] sm:$0xff]
  %v2549 = vld [vmem:[%s2 + $0x438] sm:$0xff]
  %v2550 = vld [vmem:[%s2 + $0x440] sm:$0xff]
  %v2551 = vld [vmem:[%s2 + $0x448] sm:$0xff]
  %v2552 = vld [vmem:[%s2 + $0x450] sm:$0xff]
  %v2553 = vld [vmem:[%s2 + $0x458] sm:$0xff]
  %v2554 = vld [vmem:[%s2 + $0x460] sm:$0xff]
  %v2555 = vld [vmem:[%s2 + $0x468] sm:$0xff]
  %v2556 = vld [vmem:[%s2 + $0x470] sm:$0xff]
  %v2557 = vld [vmem:[%s2 + $0x478] sm:$0xff]
  %v2558 = vld [vmem:[%s2 + $0x480] sm:$0xff]
  %v2559 = vld [vmem:[%s2 + $0x488] sm:$0xff]
  %v2560 = vld [vmem:[%s2 + $0x490] sm:$0xff]
  %v2561 = vld [vmem:[%s2 + $0x498] sm:$0xff]
  %v2562 = vld [vmem:[%s2 + $0x4a0] sm:$0xff]
  %v2563 = vld [vmem:[%s2 + $0x4a8] sm:$0xff]
  %v2564 = vld [vmem:[%s2 + $0x4b0] sm:$0xff]
  %v2565 = vld [vmem:[%s2 + $0x4b8] sm:$0xff]
  %v2566 = vld [vmem:[%s2 + $0x4c0] sm:$0xff]
  %v2567 = vld [vmem:[%s2 + $0x4c8] sm:$0xff]
  %v2568 = vld [vmem:[%s2 + $0x4d0] sm:$0xff]
  %v2569 = vld [vmem:[%s2 + $0x4d8] sm:$0xff]
  %v2570 = vld [vmem:[%s2 + $0x4e0] sm:$0xff]
  %v2571 = vld [vmem:[%s2 + $0x4e8] sm:$0xff]
  %v2572 = vld [vmem:[%s2 + $0x4f0] sm:$0xff]
  %v2573 = vld [vmem:[%s2 + $0x4f8] sm:$0xff]
  %v2574 = vld [vmem:[%s2 + $0x500] sm:$0xff]
  %v2575 = vld [vmem:[%s2 + $0x508] sm:$0xff]
  %v2576 = vld [vmem:[%s2 + $0x510] sm:$0xff]
  %v2577 = vld [vmem:[%s2 + $0x518] sm:$0xff]
  %v2578 = vld [vmem:[%s2 + $0x520] sm:$0xff]
  %v2579 = vld [vmem:[%s2 + $0x528] sm:$0xff]
  %v2580 = vld [vmem:[%s2 + $0x530] sm:$0xff]
  %v2581 = vld [vmem:[%s2 + $0x538] sm:$0xff]
  %v2582 = vld [vmem:[%s2 + $0x540] sm:$0xff]
  %v2583 = vld [vmem:[%s2 + $0x548] sm:$0xff]
  %v2584 = vld [vmem:[%s2 + $0x550] sm:$0xff]
  %v2585 = vld [vmem:[%s2 + $0x558] sm:$0xff]
  %v2586 = vld [vmem:[%s2 + $0x560] sm:$0xff]
  %v2587 = vld [vmem:[%s2 + $0x568] sm:$0xff]
  %v2588 = vld [vmem:[%s2 + $0x570] sm:$0xff]
  %v2589 = vld [vmem:[%s2 + $0x578] sm:$0xff]
  %v2590 = vld [vmem:[%s2 + $0x580] sm:$0xff]
  %v2591 = vld [vmem:[%s2 + $0x588] sm:$0xff]
  %v2592 = vld [vmem:[%s2 + $0x590] sm:$0xff]
  %v2593 = vld [vmem:[%s2 + $0x598] sm:$0xff]
  %v2594 = vld [vmem:[%s2 + $0x5a0] sm:$0xff]
  %v2595 = vld [vmem:[%s2 + $0x5a8] sm:$0xff]
  %v2596 = vld [vmem:[%s2 + $0x5b0] sm:$0xff]
  %v2597 = vld [vmem:[%s2 + $0x5b8] sm:$0xff]
  %v2598 = vld [vmem:[%s2 + $0x5c0] sm:$0xff]
  %v2599 = vld [vmem:[%s2 + $0x5c8] sm:$0xff]
  %v2600 = vld [vmem:[%s2 + $0x5d0] sm:$0xff]
  %v2601 = vld [vmem:[%s2 + $0x5d8] sm:$0xff]
  %v2602 = vld [vmem:[%s2 + $0x5e0] sm:$0xff]
  %v2603 = vld [vmem:[%s2 + $0x5e8] sm:$0xff]
  %v2604 = vld [vmem:[%s2 + $0x5f0] sm:$0xff]
  %v2605 = vld [vmem:[%s2 + $0x5f8] sm:$0xff]
  %v2606 = vld [vmem:[%s2 + $0x600] sm:$0xff]
  %v2607 = vld [vmem:[%s2 + $0x608] sm:$0xff]
  %v2608 = vld [vmem:[%s2 + $0x610] sm:$0xff]
  %v2609 = vld [vmem:[%s2 + $0x618] sm:$0xff]
  %v2610 = vld [vmem:[%s2 + $0x620] sm:$0xff]
  %v2611 = vld [vmem:[%s2 + $0x628] sm:$0xff]
  %v2612 = vld [vmem:[%s2 + $0x630] sm:$0xff]
  %v2613 = vld [vmem:[%s2 + $0x638] sm:$0xff]
  %v2614 = vld [vmem:[%s2 + $0x640] sm:$0xff]
  %v2615 = vld [vmem:[%s2 + $0x648] sm:$0xff]
  %v2616 = vld [vmem:[%s2 + $0x650] sm:$0xff]
  %v2617 = vld [vmem:[%s2 + $0x658] sm:$0xff]
  %v2618 = vld [vmem:[%s2 + $0x660] sm:$0xff]
  %v2619 = vld [vmem:[%s2 + $0x668] sm:$0xff]
  %v2620 = vld [vmem:[%s2 + $0x670] sm:$0xff]
  %v2621 = vld [vmem:[%s2 + $0x678] sm:$0xff]
  %v2622 = vld [vmem:[%s2 + $0x680] sm:$0xff]
  %v2623 = vld [vmem:[%s2 + $0x688] sm:$0xff]
  %v2624 = vld [vmem:[%s2 + $0x690] sm:$0xff]
  %v2625 = vld [vmem:[%s2 + $0x698] sm:$0xff]
  %v2626 = vld [vmem:[%s2 + $0x6a0] sm:$0xff]
  %v2627 = vld [vmem:[%s2 + $0x6a8] sm:$0xff]
  %v2628 = vld [vmem:[%s2 + $0x6b0] sm:$0xff]
  %v2629 = vld [vmem:[%s2 + $0x6b8] sm:$0xff]
  %v2630 = vld [vmem:[%s2 + $0x6c0] sm:$0xff]
  %v2631 = vld [vmem:[%s2 + $0x6c8] sm:$0xff]
  %v2632 = vld [vmem:[%s2 + $0x6d0] sm:$0xff]
  %v2633 = vld [vmem:[%s2 + $0x6d8] sm:$0xff]
  %v2634 = vld [vmem:[%s2 + $0x6e0] sm:$0xff]
  %v2635 = vld [vmem:[%s2 + $0x6e8] sm:$0xff]
  %v2636 = vld [vmem:[%s2 + $0x6f0] sm:$0xff]
  %v2637 = vld [vmem:[%s2 + $0x6f8] sm:$0xff]
  %v2638 = vld [vmem:[%s2 + $0x700] sm:$0xff]
  %v2639 = vld [vmem:[%s2 + $0x708] sm:$0xff]
  %v2640 = vld [vmem:[%s2 + $0x710] sm:$0xff]
  %v2641 = vld [vmem:[%s2 + $0x718] sm:$0xff]
  %v2642 = vld [vmem:[%s2 + $0x720] sm:$0xff]
  %v2643 = vld [vmem:[%s2 + $0x728] sm:$0xff]
  %v2644 = vld [vmem:[%s2 + $0x730] sm:$0xff]
  %v2645 = vld [vmem:[%s2 + $0x738] sm:$0xff]
  %v2646 = vld [vmem:[%s2 + $0x740] sm:$0xff]
  %v2647 = vld [vmem:[%s2 + $0x748] sm:$0xff]
  %v2648 = vld [vmem:[%s2 + $0x750] sm:$0xff]
  %v2649 = vld [vmem:[%s2 + $0x758] sm:$0xff]
  %v2650 = vld [vmem:[%s2 + $0x760] sm:$0xff]
  %v2651 = vld [vmem:[%s2 + $0x768] sm:$0xff]
  %v2652 = vld [vmem:[%s2 + $0x770] sm:$0xff]
  %v2653 = vld [vmem:[%s2 + $0x778] sm:$0xff]
  %v2654 = vld [vmem:[%s2 + $0x780] sm:$0xff]
  %v2655 = vld [vmem:[%s2 + $0x788] sm:$0xff]
  %v2656 = vld [vmem:[%s2 + $0x790] sm:$0xff]
  %v2657 = vld [vmem:[%s2 + $0x798] sm:$0xff]
  %v2658 = vld [vmem:[%s2 + $0x7a0] sm:$0xff]
  %v2659 = vld [vmem:[%s2 + $0x7a8] sm:$0xff]
  %v2660 = vld [vmem:[%s2 + $0x7b0] sm:$0xff]
  %v2661 = vld [vmem:[%s2 + $0x7b8] sm:$0xff]
  %v2662 = vld [vmem:[%s2 + $0x7c0] sm:$0xff]
  %v2663 = vld [vmem:[%s2 + $0x7c8] sm:$0xff]
  %v2664 = vld [vmem:[%s2 + $0x7d0] sm:$0xff]
  %v2665 = vld [vmem:[%s2 + $0x7d8] sm:$0xff]
  %v2666 = vld [vmem:[%s2 + $0x7e0] sm:$0xff]
  %v2667 = vld [vmem:[%s2 + $0x7e8] sm:$0xff]
  %v2668 = vld [vmem:[%s2 + $0x7f0] sm:$0xff]
  %v2669 = vld [vmem:[%s2 + $0x7f8] sm:$0xff]
  %v2670 = vld [vmem:[%s2 + $0x800] sm:$0xff]
  %v2671 = vld [vmem:[%s2 + $0x808] sm:$0xff]
  %v2672 = vld [vmem:[%s2 + $0x810] sm:$0xff]
  %v2673 = vld [vmem:[%s2 + $0x818] sm:$0xff]
  %v2674 = vld [vmem:[%s2 + $0x820] sm:$0xff]
  %v2675 = vld [vmem:[%s2 + $0x828] sm:$0xff]
  %v2676 = vld [vmem:[%s2 + $0x830] sm:$0xff]
  %v2677 = vld [vmem:[%s2 + $0x838] sm:$0xff]
  %v2678 = vld [vmem:[%s2 + $0x840] sm:$0xff]
  %v2679 = vld [vmem:[%s2 + $0x848] sm:$0xff]
  %v2680 = vld [vmem:[%s2 + $0x850] sm:$0xff]
  %v2681 = vld [vmem:[%s2 + $0x858] sm:$0xff]
  %v2682 = vld [vmem:[%s2 + $0x860] sm:$0xff]
  %v2683 = vld [vmem:[%s2 + $0x868] sm:$0xff]
  %v2684 = vld [vmem:[%s2 + $0x870] sm:$0xff]
  %v2685 = vld [vmem:[%s2 + $0x878] sm:$0xff]
  %v2686 = vld [vmem:[%s2 + $0x880] sm:$0xff]
  %v2687 = vld [vmem:[%s2 + $0x888] sm:$0xff]
  %v2688 = vld [vmem:[%s2 + $0x890] sm:$0xff]
  %v2689 = vld [vmem:[%s2 + $0x898] sm:$0xff]
  %v2690 = vld [vmem:[%s2 + $0x8a0] sm:$0xff]
  %v2691 = vld [vmem:[%s2 + $0x8a8] sm:$0xff]
  %v2692 = vld [vmem:[%s2 + $0x8b0] sm:$0xff]
  %v2693 = vld [vmem:[%s2 + $0x8b8] sm:$0xff]
  %v2694 = vld [vmem:[%s2 + $0x8c0] sm:$0xff]
  %v2695 = vld [vmem:[%s2 + $0x8c8] sm:$0xff]
  %v2696 = vld [vmem:[%s2 + $0x8d0] sm:$0xff]
  %v2697 = vld [vmem:[%s2 + $0x8d8] sm:$0xff]
  %v2698 = vld [vmem:[%s2 + $0x8e0] sm:$0xff]
  %v2699 = vld [vmem:[%s2 + $0x8e8] sm:$0xff]
  %v2700 = vld [vmem:[%s2 + $0x8f0] sm:$0xff]
  %v2701 = vld [vmem:[%s2 + $0x8f8] sm:$0xff]
  %v2702 = vld [vmem:[%s2 + $0x900] sm:$0xff]
  %v2703 = vld [vmem:[%s2 + $0x908] sm:$0xff]
  %v2704 = vld [vmem:[%s2 + $0x910] sm:$0xff]
  %v2705 = vld [vmem:[%s2 + $0x918] sm:$0xff]
  %v2706 = vld [vmem:[%s2 + $0x920] sm:$0xff]
  %v2707 = vld [vmem:[%s2 + $0x928] sm:$0xff]
  %v2708 = vld [vmem:[%s2 + $0x930] sm:$0xff]
  %v2709 = vld [vmem:[%s2 + $0x938] sm:$0xff]
  %v2710 = vld [vmem:[%s2 + $0x940] sm:$0xff]
  %v2711 = vld [vmem:[%s2 + $0x948] sm:$0xff]
  %v2712 = vld [vmem:[%s2 + $0x950] sm:$0xff]
  %v2713 = vld [vmem:[%s2 + $0x958] sm:$0xff]
  %v2714 = vmul.f32 %v2114, %v2414
  %v2715 = vmul.f32 %v2115, %v2415
  %v2716 = vmul.f32 %v2116, %v2416
  %v2717 = vmul.f32 %v2117, %v2417
  %v2718 = vmul.f32 %v2118, %v2418
  %v2719 = vmul.f32 %v2119, %v2419
  %v2720 = vmul.f32 %v2120, %v2420
  %v2721 = vmul.f32 %v2121, %v2421
  %v2722 = vmul.f32 %v2122, %v2422
  %v2723 = vmul.f32 %v2123, %v2423
  %v2724 = vmul.f32 %v2124, %v2424
  %v2725 = vmul.f32 %v2125, %v2425
  %v2726 = vmul.f32 %v2126, %v2426
  %v2727 = vmul.f32 %v2127, %v2427
  %v2728 = vmul.f32 %v2128, %v2428
  %v2729 = vmul.f32 %v2129, %v2429
  %v2730 = vmul.f32 %v2130, %v2430
  %v2731 = vmul.f32 %v2131, %v2431
  %v2732 = vmul.f32 %v2132, %v2432
  %v2733 = vmul.f32 %v2133, %v2433
  %v2734 = vmul.f32 %v2134, %v2434
  %v2735 = vmul.f32 %v2135, %v2435
  %v2736 = vmul.f32 %v2136, %v2436
  %v2737 = vmul.f32 %v2137, %v2437
  %v2738 = vmul.f32 %v2138, %v2438
  %v2739 = vmul.f32 %v2139, %v2439
  %v2740 = vmul.f32 %v2140, %v2440
  %v2741 = vmul.f32 %v2141, %v2441
  %v2742 = vmul.f32 %v2142, %v2442
  %v2743 = vmul.f32 %v2143, %v2443
  %v2744 = vmul.f32 %v2144, %v2444
  %v2745 = vmul.f32 %v2145, %v2445
  %v2746 = vmul.f32 %v2146, %v2446
  %v2747 = vmul.f32 %v2147, %v2447
  %v2748 = vmul.f32 %v2148, %v2448
  %v2749 = vmul.f32 %v2149, %v2449
  %v2750 = vmul.f32 %v2150, %v2450
  %v2751 = vmul.f32 %v2151, %v2451
  %v2752 = vmul.f32 %v2152, %v2452
  %v2753 = vmul.f32 %v2153, %v2453
  %v2754 = vmul.f32 %v2154, %v2454
  %v2755 = vmul.f32 %v2155, %v2455
  %v2756 = vmul.f32 %v2156, %v2456
  %v2757 = vmul.f32 %v2157, %v2457
  %v2758 = vmul.f32 %v2158, %v2458
  %v2759 = vmul.f32 %v2159, %v2459
  %v2760 = vmul.f32 %v2160, %v2460
  %v2761 = vmul.f32 %v2161, %v2461
  %v2762 = vmul.f32 %v2162, %v2462
  %v2763 = vmul.f32 %v2163, %v2463
  %v2764 = vmul.f32 %v2164, %v2464
  %v2765 = vmul.f32 %v2165, %v2465
  %v2766 = vmul.f32 %v2166, %v2466
  %v2767 = vmul.f32 %v2167, %v2467
  %v2768 = vmul.f32 %v2168, %v2468
  %v2769 = vmul.f32 %v2169, %v2469
  %v2770 = vmul.f32 %v2170, %v2470
  %v2771 = vmul.f32 %v2171, %v2471
  %v2772 = vmul.f32 %v2172, %v2472
  %v2773 = vmul.f32 %v2173, %v2473
  %v2774 = vmul.f32 %v2174, %v2474
  %v2775 = vmul.f32 %v2175, %v2475
  %v2776 = vmul.f32 %v2176, %v2476
  %v2777 = vmul.f32 %v2177, %v2477
  %v2778 = vmul.f32 %v2178, %v2478
  %v2779 = vmul.f32 %v2179, %v2479
  %v2780 = vmul.f32 %v2180, %v2480
  %v2781 = vmul.f32 %v2181, %v2481
  %v2782 = vmul.f32 %v2182, %v2482
  %v2783 = vmul.f32 %v2183, %v2483
  %v2784 = vmul.f32 %v2184, %v2484
  %v2785 = vmul.f32 %v2185, %v2485
  %v2786 = vmul.f32 %v2186, %v2486
  %v2787 = vmul.f32 %v2187, %v2487
  %v2788 = vmul.f32 %v2188, %v2488
  %v2789 = vmul.f32 %v2189, %v2489
  %v2790 = vmul.f32 %v2190, %v2490
  %v2791 = vmul.f32 %v2191, %v2491
  %v2792 = vmul.f32 %v2192, %v2492
  %v2793 = vmul.f32 %v2193, %v2493
  %v2794 = vmul.f32 %v2194, %v2494
  %v2795 = vmul.f32 %v2195, %v2495
  %v2796 = vmul.f32 %v2196, %v2496
  %v2797 = vmul.f32 %v2197, %v2497
  %v2798 = vmul.f32 %v2198, %v2498
  %v2799 = vmul.f32 %v2199, %v2499
  %v2800 = vmul.f32 %v2200, %v2500
  %v2801 = vmul.f32 %v2201, %v2501
  %v2802 = vmul.f32 %v2202, %v2502
  %v2803 = vmul.f32 %v2203, %v2503
  %v2804 = vmul.f32 %v2204, %v2504
  %v2805 = vmul.f32 %v2205, %v2505
  %v2806 = vmul.f32 %v2206, %v2506
  %v2807 = vmul.f32 %v2207, %v2507
  %v2808 = vmul.f32 %v2208, %v2508
  %v2809 = vmul.f32 %v2209, %v2509
  %v2810 = vmul.f32 %v2210, %v2510
  %v2811 = vmul.f32 %v2211, %v2511
  %v2812 = vmul.f32 %v2212, %v2512
  %v2813 = vmul.f32 %v2213, %v2513
  %v2814 = vmul.f32 %v2214, %v2514
  %v2815 = vmul.f32 %v2215, %v2515
  %v2816 = vmul.f32 %v2216, %v2516
  %v2817 = vmul.f32 %v2217, %v2517
  %v2818 = vmul.f32 %v2218, %v2518
  %v2819 = vmul.f32 %v2219, %v2519
  %v2820 = vmul.f32 %v2220, %v2520
  %v2821 = vmul.f32 %v2221, %v2521
  %v2822 = vmul.f32 %v2222, %v2522
  %v2823 = vmul.f32 %v2223, %v2523
  %v2824 = vmul.f32 %v2224, %v2524
  %v2825 = vmul.f32 %v2225, %v2525
  %v2826 = vmul.f32 %v2226, %v2526
  %v2827 = vmul.f32 %v2227, %v2527
  %v2828 = vmul.f32 %v2228, %v2528
  %v2829 = vmul.f32 %v2229, %v2529
  %v2830 = vmul.f32 %v2230, %v2530
  %v2831 = vmul.f32 %v2231, %v2531
  %v2832 = vmul.f32 %v2232, %v2532
  %v2833 = vmul.f32 %v2233, %v2533
  %v2834 = vmul.f32 %v2234, %v2534
  %v2835 = vmul.f32 %v2235, %v2535
  %v2836 = vmul.f32 %v2236, %v2536
  %v2837 = vmul.f32 %v2237, %v2537
  %v2838 = vmul.f32 %v2238, %v2538
  %v2839 = vmul.f32 %v2239, %v2539
  %v2840 = vmul.f32 %v2240, %v2540
  %v2841 = vmul.f32 %v2241, %v2541
  %v2842 = vmul.f32 %v2242, %v2542
  %v2843 = vmul.f32 %v2243, %v2543
  %v2844 = vmul.f32 %v2244, %v2544
  %v2845 = vmul.f32 %v2245, %v2545
  %v2846 = vmul.f32 %v2246, %v2546
  %v2847 = vmul.f32 %v2247, %v2547
  %v2848 = vmul.f32 %v2248, %v2548
  %v2849 = vmul.f32 %v2249, %v2549
  %v2850 = vmul.f32 %v2250, %v2550
  %v2851 = vmul.f32 %v2251, %v2551
  %v2852 = vmul.f32 %v2252, %v2552
  %v2853 = vmul.f32 %v2253, %v2553
  %v2854 = vmul.f32 %v2254, %v2554
  %v2855 = vmul.f32 %v2255, %v2555
  %v2856 = vmul.f32 %v2256, %v2556
  %v2857 = vmul.f32 %v2257, %v2557
  %v2858 = vmul.f32 %v2258, %v2558
  %v2859 = vmul.f32 %v2259, %v2559
  %v2860 = vmul.f32 %v2260, %v2560
  %v2861 = vmul.f32 %v2261, %v2561
  %v2862 = vmul.f32 %v2262, %v2562
  %v2863 = vmul.f32 %v2263, %v2563
  %v2864 = vmul.f32 %v2264, %v2564
  %v2865 = vmul.f32 %v2265, %v2565
  %v2866 = vmul.f32 %v2266, %v2566
  %v2867 = vmul.f32 %v2267, %v2567
  %v2868 = vmul.f32 %v2268, %v2568
  %v2869 = vmul.f32 %v2269, %v2569
  %v2870 = vmul.f32 %v2270, %v2570
  %v2871 = vmul.f32 %v2271, %v2571
  %v2872 = vmul.f32 %v2272, %v2572
  %v2873 = vmul.f32 %v2273, %v2573
  %v2874 = vmul.f32 %v2274, %v2574
  %v2875 = vmul.f32 %v2275, %v2575
  %v2876 = vmul.f32 %v2276, %v2576
  %v2877 = vmul.f32 %v2277, %v2577
  %v2878 = vmul.f32 %v2278, %v2578
  %v2879 = vmul.f32 %v2279, %v2579
  %v2880 = vmul.f32 %v2280, %v2580
  %v2881 = vmul.f32 %v2281, %v2581
  %v2882 = vmul.f32 %v2282, %v2582
  %v2883 = vmul.f32 %v2283, %v2583
  %v2884 = vmul.f32 %v2284, %v2584
  %v2885 = vmul.f32 %v2285, %v2585
  %v2886 = vmul.f32 %v2286, %v2586
  %v2887 = vmul.f32 %v2287, %v2587
  %v2888 = vmul.f32 %v2288, %v2588
  %v2889 = vmul.f32 %v2289, %v2589
  %v2890 = vmul.f32 %v2290, %v2590
  %v2891 = vmul.f32 %v2291, %v2591
  %v2892 = vmul.f32 %v2292, %v2592
  %v2893 = vmul.f32 %v2293, %v2593
  %v2894 = vmul.f32 %v2294, %v2594
  %v2895 = vmul.f32 %v2295, %v2595
  %v2896 = vmul.f32 %v2296, %v2596
  %v2897 = vmul.f32 %v2297, %v2597
  %v2898 = vmul.f32 %v2298, %v2598
  %v2899 = vmul.f32 %v2299, %v2599
  %v2900 = vmul.f32 %v2300, %v2600
  %v2901 = vmul.f32 %v2301, %v2601
  %v2902 = vmul.f32 %v2302, %v2602
  %v2903 = vmul.f32 %v2303, %v2603
  %v2904 = vmul.f32 %v2304, %v2604
  %v2905 = vmul.f32 %v2305, %v2605
  %v2906 = vmul.f32 %v2306, %v2606
  %v2907 = vmul.f32 %v2307, %v2607
  %v2908 = vmul.f32 %v2308, %v2608
  %v2909 = vmul.f32 %v2309, %v2609
  %v2910 = vmul.f32 %v2310, %v2610
  %v2911 = vmul.f32 %v2311, %v2611
  %v2912 = vmul.f32 %v2312, %v2612
  %v2913 = vmul.f32 %v2313, %v2613
  %v2914 = vmul.f32 %v2314, %v2614
  %v2915 = vmul.f32 %v2315, %v2615
  %v2916 = vmul.f32 %v2316, %v2616
  %v2917 = vmul.f32 %v2317, %v2617
  %v2918 = vmul.f32 %v2318, %v2618
  %v2919 = vmul.f32 %v2319, %v2619
  %v2920 = vmul.f32 %v2320, %v2620
  %v2921 = vmul.f32 %v2321, %v2621
  %v2922 = vmul.f32 %v2322, %v2622
  %v2923 = vmul.f32 %v2323, %v2623
  %v2924 = vmul.f32 %v2324, %v2624
  %v2925 = vmul.f32 %v2325, %v2625
  %v2926 = vmul.f32 %v2326, %v2626
  %v2927 = vmul.f32 %v2327, %v2627
  %v2928 = vmul.f32 %v2328, %v2628
  %v2929 = vmul.f32 %v2329, %v2629
  %v2930 = vmul.f32 %v2330, %v2630
  %v2931 = vmul.f32 %v2331, %v2631
  %v2932 = vmul.f32 %v2332, %v2632
  %v2933 = vmul.f32 %v2333, %v2633
  %v2934 = vmul.f32 %v2334, %v2634
  %v2935 = vmul.f32 %v2335, %v2635
  %v2936 = vmul.f32 %v2336, %v2636
  %v2937 = vmul.f32 %v2337, %v2637
  %v2938 = vmul.f32 %v2338, %v2638
  %v2939 = vmul.f32 %v2339, %v2639
  %v2940 = vmul.f32 %v2340, %v2640
  %v2941 = vmul.f32 %v2341, %v2641
  %v2942 = vmul.f32 %v2342, %v2642
  %v2943 = vmul.f32 %v2343, %v2643
  %v2944 = vmul.f32 %v2344, %v2644
  %v2945 = vmul.f32 %v2345, %v2645
  %v2946 = vmul.f32 %v2346, %v2646
  %v2947 = vmul.f32 %v2347, %v2647
  %v2948 = vmul.f32 %v2348, %v2648
  %v2949 = vmul.f32 %v2349, %v2649
  %v2950 = vmul.f32 %v2350, %v2650
  %v2951 = vmul.f32 %v2351, %v2651
  %v2952 = vmul.f32 %v2352, %v2652
  %v2953 = vmul.f32 %v2353, %v2653
  %v2954 = vmul.f32 %v2354, %v2654
  %v2955 = vmul.f32 %v2355, %v2655
  %v2956 = vmul.f32 %v2356, %v2656
  %v2957 = vmul.f32 %v2357, %v2657
  %v2958 = vmul.f32 %v2358, %v2658
  %v2959 = vmul.f32 %v2359, %v2659
  %v2960 = vmul.f32 %v2360, %v2660
  %v2961 = vmul.f32 %v2361, %v2661
  %v2962 = vmul.f32 %v2362, %v2662
  %v2963 = vmul.f32 %v2363, %v2663
  %v2964 = vmul.f32 %v2364, %v2664
  %v2965 = vmul.f32 %v2365, %v2665
  %v2966 = vmul.f32 %v2366, %v2666
  %v2967 = vmul.f32 %v2367, %v2667
  %v2968 = vmul.f32 %v2368, %v2668
  %v2969 = vmul.f32 %v2369, %v2669
  %v2970 = vmul.f32 %v2370, %v2670
  %v2971 = vmul.f32 %v2371, %v2671
  %v2972 = vmul.f32 %v2372, %v2672
  %v2973 = vmul.f32 %v2373, %v2673
  %v2974 = vmul.f32 %v2374, %v2674
  %v2975 = vmul.f32 %v2375, %v2675
  %v2976 = vmul.f32 %v2376, %v2676
  %v2977 = vmul.f32 %v2377, %v2677
  %v2978 = vmul.f32 %v2378, %v2678
  %v2979 = vmul.f32 %v2379, %v2679
  %v2980 = vmul.f32 %v2380, %v2680
  %v2981 = vmul.f32 %v2381, %v2681
  %v2982 = vmul.f32 %v2382, %v2682
  %v2983 = vmul.f32 %v2383, %v2683
  %v2984 = vmul.f32 %v2384, %v2684
  %v2985 = vmul.f32 %v2385, %v2685
  %v2986 = vmul.f32 %v2386, %v2686
  %v2987 = vmul.f32 %v2387, %v2687
  %v2988 = vmul.f32 %v2388, %v2688
  %v2989 = vmul.f32 %v2389, %v2689
  %v2990 = vmul.f32 %v2390, %v2690
  %v2991 = vmul.f32 %v2391, %v2691
  %v2992 = vmul.f32 %v2392, %v2692
  %v2993 = vmul.f32 %v2393, %v2693
  %v2994 = vmul.f32 %v2394, %v2694
  %v2995 = vmul.f32 %v2395, %v2695
  %v2996 = vmul.f32 %v2396, %v2696
  %v2997 = vmul.f32 %v2397, %v2697
  %v2998 = vmul.f32 %v2398, %v2698
  %v2999 = vmul.f32 %v2399, %v2699
  %v3000 = vmul.f32 %v2400, %v2700
  %v3001 = vmul.f32 %v2401, %v2701
  %v3002 = vmul.f32 %v2402, %v2702
  %v3003 = vmul.f32 %v2403, %v2703
  %v3004 = vmul.f32 %v2404, %v2704
  %v3005 = vmul.f32 %v2405, %v2705
  %v3006 = vmul.f32 %v2406, %v2706
  %v3007 = vmul.f32 %v2407, %v2707
  %v3008 = vmul.f32 %v2408, %v2708
  %v3009 = vmul.f32 %v2409, %v2709
  %v3010 = vmul.f32 %v2410, %v2710
  %v3011 = vmul.f32 %v2411, %v2711
  %v3012 = vmul.f32 %v2412, %v2712
  %v3013 = vmul.f32 %v2413, %v2713
  %v3014 = vld [vmem:[%s5] sm:$0xff]
  %v3015 = vld [vmem:[%s5 + $0x8] sm:$0xff]
  %v3016 = vld [vmem:[%s5 + $0x10] sm:$0xff]
  %v3017 = vld [vmem:[%s5 + $0x18] sm:$0xff]
  %v3018 = vld [vmem:[%s5 + $0x20] sm:$0xff]
  %v3019 = vld [vmem:[%s5 + $0x28] sm:$0xff]
  %v3020 = vld [vmem:[%s5 + $0x30] sm:$0xff]
  %v3021 = vld [vmem:[%s5 + $0x38] sm:$0xff]
  %v3022 = vld [vmem:[%s5 + $0x40] sm:$0xff]
  %v3023 = vld [vmem:[%s5 + $0x48] sm:$0xff]
  %v3024 = vld [vmem:[%s5 + $0x50] sm:$0xff]
  %v3025 = vld [vmem:[%s5 + $0x58] sm:$0xff]
  %v3026 = vld [vmem:[%s5 + $0x60] sm:$0xff]
  %v3027 = vld [vmem:[%s5 + $0x68] sm:$0xff]
  %v3028 = vld [vmem:[%s5 + $0x70] sm:$0xff]
  %v3029 = vld [vmem:[%s6] sm:$0xff]
  %v3030 = vld [vmem:[%s6 + $0x8] sm:$0xff]
  %v3031 = vld [vmem:[%s6 + $0x10] sm:$0xff]
  %3033 = vset.pattern.permute.xlu0 0
  %3034 = vperm.xlu0 %3033, %v3029
  %v3035 = vpop.permute.xlu0 %3034
  %3038 = vset.pattern.permute.xlu0 0
  %3039 = vperm.xlu0 %3038, %v3030
  %v3040 = vpop.permute.xlu0 %3039
  %3043 = vset.pattern.permute.xlu0 0
  %3044 = vperm.xlu0 %3043, %v3031
  %v3045 = vpop.permute.xlu0 %3044
  %vm3047 = vcmask 719872
  %v3049 = vsel %vm3047, %v3018, 0
  %v3052 = vsel %vm3047, %v3023, 0
  %v3055 = vsel %vm3047, %v3028, 0
  %3057 = vmatprep.subr.mxu0 %v2775
  %3058 = vmatpush1.msra.mxu0 %v2774
  %3059 = vmatprep.subr.mxu0 %v2771
  %3060 = vmatpush1.msra.mxu0 %v2770
  %3061 = vmatprep.subr.mxu0 %v2767
  %3062 = vmatpush1.msra.mxu0 %v2766
  %3063 = vmatprep.subr.mxu0 %v2763
  %3064 = vmatpush1.msra.mxu0 %v2762
  %3065 = vmatprep.subr.mxu0 %v2759
  %3066 = vmatpush1.msra.mxu0 %v2758
  %3067 = vmatprep.subr.mxu0 %v2755
  %3068 = vmatpush1.msra.mxu0 %v2754
  %3069 = vmatprep.subr.mxu0 %v2751
  %3070 = vmatpush1.msra.mxu0 %v2750
  %3071 = vmatprep.subr.mxu0 %v2747
  %3072 = vmatpush1.msra.mxu0 %v2746
  %3073 = vmatprep.subr.mxu0 %v2743
  %3074 = vmatpush1.msra.mxu0 %v2742
  %3075 = vmatprep.subr.mxu0 %v2739
  %3076 = vmatpush1.msra.mxu0 %v2738
  %3077 = vmatprep.subr.mxu0 %v2735
  %3078 = vmatpush1.msra.mxu0 %v2734
  %3079 = vmatprep.subr.mxu0 %v2731
  %3080 = vmatpush1.msra.mxu0 %v2730
  %3081 = vmatprep.subr.mxu0 %v2727
  %3082 = vmatpush1.msra.mxu0 %v2726
  %3083 = vmatprep.subr.mxu0 %v2723
  %3084 = vmatpush1.msra.mxu0 %v2722
  %3085 = vmatprep.subr.mxu0 %v2719
  %3086 = vmatpush1.msra.mxu0 %v2718
  %3087 = vmatprep.subr.mxu0 %v2715
  %3088 = vmatpush1.msra.mxu0 %v2714
  %3089 = vmatprep.subr.mxu0 %v2839
  %3090 = vmatpush2.msra.mxu0 %v2838
  %3091 = vmatprep.subr.mxu0 %v2835
  %3092 = vmatpush2.msra.mxu0 %v2834
  %3093 = vmatprep.subr.mxu0 %v2831
  %3094 = vmatpush2.msra.mxu0 %v2830
  %3095 = vmatprep.subr.mxu0 %v2827
  %3096 = vmatpush2.msra.mxu0 %v2826
  %3097 = vmatprep.subr.mxu0 %v2823
  %3098 = vmatpush2.msra.mxu0 %v2822
  %3099 = vmatprep.subr.mxu0 %v2819
  %3100 = vmatpush2.msra.mxu0 %v2818
  %3101 = vmatprep.subr.mxu0 %v2815
  %3102 = vmatpush2.msra.mxu0 %v2814
  %3103 = vmatprep.subr.mxu0 %v2811
  %3104 = vmatpush2.msra.mxu0 %v2810
  %3105 = vmatprep.subr.mxu0 %v2807
  %3106 = vmatpush2.msra.mxu0 %v2806
  %3107 = vmatprep.subr.mxu0 %v2803
  %3108 = vmatpush2.msra.mxu0 %v2802
  %3109 = vmatprep.subr.mxu0 %v2799
  %3110 = vmatpush2.msra.mxu0 %v2798
  %3111 = vmatprep.subr.mxu0 %v2795
  %3112 = vmatpush2.msra.mxu0 %v2794
  %3113 = vmatprep.subr.mxu0 %v2791
  %3114 = vmatpush2.msra.mxu0 %v2790
  %3115 = vmatprep.subr.mxu0 %v2787
  %3116 = vmatpush2.msra.mxu0 %v2786
  %3117 = vmatprep.subr.mxu0 %v2783
  %3118 = vmatpush2.msra.mxu0 %v2782
  %3119 = vmatprep.subr.mxu0 %v2779
  %3120 = vmatpush2.msra.mxu0 %v2778
  %3121 = vmatprep.mubr.f32.mxu0 %v3015
  %3122 = vmatmul.mubr.f32.gmra.mxu0 %v3014
  %v3123 = vpop.f32.mrf.mxu0
  %v3124 = vadd.f32 %v3035, %v3123
  %v3125 = vpop.f32.mrf.mxu0
  %v3126 = vadd.f32 %v3035, %v3125
  %3127 = vmatprep.mubr.f32.mxu0 %v3020
  %3128 = vmatmul.mubr.f32.gmra.mxu0 %v3019
  %v3129 = vpop.f32.mrf.mxu0
  %v3130 = vadd.f32 %v3040, %v3129
  %v3131 = vpop.f32.mrf.mxu0
  %v3132 = vadd.f32 %v3040, %v3131
  %3133 = vmatprep.mubr.f32.mxu0 %v3025
  %3134 = vmatmul.mubr.f32.gmra.mxu0 %v3024
  %v3135 = vpop.f32.mrf.mxu0
  %v3136 = vadd.f32 %v3045, %v3135
  %v3137 = vpop.f32.mrf.mxu0
  %v3138 = vadd.f32 %v3045, %v3137
  %3139 = vdwg.mxu0
  %3140 = vmatprep.subr.mxu0 %v2903
  %3141 = vmatpush1.msra.mxu0 %v2902
  %3142 = vmatprep.subr.mxu0 %v2899
  %3143 = vmatpush1.msra.mxu0 %v2898
  %3144 = vmatprep.subr.mxu0 %v2895
  %3145 = vmatpush1.msra.mxu0 %v2894
  %3146 = vmatprep.subr.mxu0 %v2891
  %3147 = vmatpush1.msra.mxu0 %v2890
  %3148 = vmatprep.subr.mxu0 %v2887
  %3149 = vmatpush1.msra.mxu0 %v2886
  %3150 = vmatprep.subr.mxu0 %v2883
  %3151 = vmatpush1.msra.mxu0 %v2882
  %3152 = vmatprep.subr.mxu0 %v2879
  %3153 = vmatpush1.msra.mxu0 %v2878
  %3154 = vmatprep.subr.mxu0 %v2875
  %3155 = vmatpush1.msra.mxu0 %v2874
  %3156 = vmatprep.subr.mxu0 %v2871
  %3157 = vmatpush1.msra.mxu0 %v2870
  %3158 = vmatprep.subr.mxu0 %v2867
  %3159 = vmatpush1.msra.mxu0 %v2866
  %3160 = vmatprep.subr.mxu0 %v2863
  %3161 = vmatpush1.msra.mxu0 %v2862
  %3162 = vmatprep.subr.mxu0 %v2859
  %3163 = vmatpush1.msra.mxu0 %v2858
  %3164 = vmatprep.subr.mxu0 %v2855
  %3165 = vmatpush1.msra.mxu0 %v2854
  %3166 = vmatprep.subr.mxu0 %v2851
  %3167 = vmatpush1.msra.mxu0 %v2850
  %3168 = vmatprep.subr.mxu0 %v2847
  %3169 = vmatpush1.msra.mxu0 %v2846
  %3170 = vmatprep.subr.mxu0 %v2843
  %3171 = vmatpush1.msra.mxu0 %v2842
  %3172 = vmatprep.subr.mxu0 %v2967
  %3173 = vmatpush2.msra.mxu0 %v2966
  %3174 = vmatprep.subr.mxu0 %v2963
  %3175 = vmatpush2.msra.mxu0 %v2962
  %3176 = vmatprep.subr.mxu0 %v2959
  %3177 = vmatpush2.msra.mxu0 %v2958
  %3178 = vmatprep.subr.mxu0 %v2955
  %3179 = vmatpush2.msra.mxu0 %v2954
  %3180 = vmatprep.subr.mxu0 %v2951
  %3181 = vmatpush2.msra.mxu0 %v2950
  %3182 = vmatprep.subr.mxu0 %v2947
  %3183 = vmatpush2.msra.mxu0 %v2946
  %3184 = vmatprep.subr.mxu0 %v2943
  %3185 = vmatpush2.msra.mxu0 %v2942
  %3186 = vmatprep.subr.mxu0 %v2939
  %3187 = vmatpush2.msra.mxu0 %v2938
  %3188 = vmatprep.subr.mxu0 %v2935
  %3189 = vmatpush2.msra.mxu0 %v2934
  %3190 = vmatprep.subr.mxu0 %v2931
  %3191 = vmatpush2.msra.mxu0 %v2930
  %3192 = vmatprep.subr.mxu0 %v2927
  %3193 = vmatpush2.msra.mxu0 %v2926
  %3194 = vmatprep.subr.mxu0 %v2923
  %3195 = vmatpush2.msra.mxu0 %v2922
  %3196 = vmatprep.subr.mxu0 %v2919
  %3197 = vmatpush2.msra.mxu0 %v2918
  %3198 = vmatprep.subr.mxu0 %v2915
  %3199 = vmatpush2.msra.mxu0 %v2914
  %3200 = vmatprep.subr.mxu0 %v2911
  %3201 = vmatpush2.msra.mxu0 %v2910
  %3202 = vmatprep.subr.mxu0 %v2907
  %3203 = vmatpush2.msra.mxu0 %v2906
  %3204 = vmatprep.mubr.f32.mxu0 %v3017
  %3205 = vmatmul.mubr.f32.gmra.mxu0 %v3016
  %v3206 = vpop.f32.mrf.mxu0
  %v3207 = vadd.f32 %v3124, %v3206
  %v3208 = vpop.f32.mrf.mxu0
  %v3209 = vadd.f32 %v3126, %v3208
  %3210 = vmatprep.mubr.f32.mxu0 %v3022
  %3211 = vmatmul.mubr.f32.gmra.mxu0 %v3021
  %v3212 = vpop.f32.mrf.mxu0
  %v3213 = vadd.f32 %v3130, %v3212
  %v3214 = vpop.f32.mrf.mxu0
  %v3215 = vadd.f32 %v3132, %v3214
  %3216 = vmatprep.mubr.f32.mxu0 %v3027
  %3217 = vmatmul.mubr.f32.gmra.mxu0 %v3026
  %v3218 = vpop.f32.mrf.mxu0
  %v3219 = vadd.f32 %v3136, %v3218
  %v3220 = vpop.f32.mrf.mxu0
  %v3221 = vadd.f32 %v3138, %v3220
  %3222 = vdwg.mxu0
  %3223 = vmatprep.subr.mxu0 0.0
  %3224 = vmatpush1.msra.mxu0 0.0
  %3225 = vmatprep.subr.mxu0 0.0
  %3226 = vmatpush1.msra.mxu0 0.0
  %3227 = vmatprep.subr.mxu0 0.0
  %3228 = vmatpush1.msra.mxu0 0.0
  %3229 = vmatprep.subr.mxu0 0.0
  %3230 = vmatpush1.msra.mxu0 0.0
  %3231 = vmatprep.subr.mxu0 0.0
  %3232 = vmatpush1.msra.mxu0 0.0
  %3233 = vmatprep.subr.mxu0 %v3011
  %3234 = vmatpush1.msra.mxu0 %v3010
  %3235 = vmatprep.subr.mxu0 %v3007
  %3236 = vmatpush1.msra.mxu0 %v3006
  %3237 = vmatprep.subr.mxu0 %v3003
  %3238 = vmatpush1.msra.mxu0 %v3002
  %3239 = vmatprep.subr.mxu0 %v2999
  %3240 = vmatpush1.msra.mxu0 %v2998
  %3241 = vmatprep.subr.mxu0 %v2995
  %3242 = vmatpush1.msra.mxu0 %v2994
  %3243 = vmatprep.subr.mxu0 %v2991
  %3244 = vmatpush1.msra.mxu0 %v2990
  %3245 = vmatprep.subr.mxu0 %v2987
  %3246 = vmatpush1.msra.mxu0 %v2986
  %3247 = vmatprep.subr.mxu0 %v2983
  %3248 = vmatpush1.msra.mxu0 %v2982
  %3249 = vmatprep.subr.mxu0 %v2979
  %3250 = vmatpush1.msra.mxu0 %v2978
  %3251 = vmatprep.subr.mxu0 %v2975
  %3252 = vmatpush1.msra.mxu0 %v2974
  %3253 = vmatprep.subr.mxu0 %v2971
  %3254 = vmatpush1.msra.mxu0 %v2970
  %3255 = vmatprep.subr.mxu0 0.0
  %3256 = vmatpush2.msra.mxu0 0.0
  %3257 = vmatprep.subr.mxu0 0.0
  %3258 = vmatpush2.msra.mxu0 0.0
  %3259 = vmatprep.subr.mxu0 0.0
  %3260 = vmatpush2.msra.mxu0 0.0
  %3261 = vmatprep.subr.mxu0 0.0
  %3262 = vmatpush2.msra.mxu0 0.0
  %3263 = vmatprep.subr.mxu0 0.0
  %3264 = vmatpush2.msra.mxu0 0.0
  %3265 = vmatprep.subr.mxu0 0.0
  %3266 = vmatpush2.msra.mxu0 0.0
  %3267 = vmatprep.subr.mxu0 0.0
  %3268 = vmatpush2.msra.mxu0 0.0
  %3269 = vmatprep.subr.mxu0 0.0
  %3270 = vmatpush2.msra.mxu0 0.0
  %3271 = vmatprep.subr.mxu0 0.0
  %3272 = vmatpush2.msra.mxu0 0.0
  %3273 = vmatprep.subr.mxu0 0.0
  %3274 = vmatpush2.msra.mxu0 0.0
  %3275 = vmatprep.subr.mxu0 0.0
  %3276 = vmatpush2.msra.mxu0 0.0
  %3277 = vmatprep.subr.mxu0 0.0
  %3278 = vmatpush2.msra.mxu0 0.0
  %3279 = vmatprep.subr.mxu0 0.0
  %3280 = vmatpush2.msra.mxu0 0.0
  %3281 = vmatprep.subr.mxu0 0.0
  %3282 = vmatpush2.msra.mxu0 0.0
  %3283 = vmatprep.subr.mxu0 0.0
  %3284 = vmatpush2.msra.mxu0 0.0
  %3285 = vmatprep.subr.mxu0 0.0
  %3286 = vmatpush2.msra.mxu0 0.0
  %3287 = vmatprep.mubr.f32.mxu0 0.0
  %3288 = vmatmul.mubr.f32.gmra.mxu0 %v3049
  %v3289 = vpop.f32.mrf.mxu0
  %v3290 = vadd.f32 %v3207, %v3289
  %v3291 = vpop.f32.mrf.mxu0
  %v3292 = vadd.f32 %v3209, %v3291
  %3293 = vmatprep.mubr.f32.mxu0 0.0
  %3294 = vmatmul.mubr.f32.gmra.mxu0 %v3052
  %v3295 = vpop.f32.mrf.mxu0
  %v3296 = vadd.f32 %v3213, %v3295
  %v3297 = vpop.f32.mrf.mxu0
  %v3298 = vadd.f32 %v3215, %v3297
  %3299 = vmatprep.mubr.f32.mxu0 0.0
  %3300 = vmatmul.mubr.f32.gmra.mxu0 %v3055
  %v3301 = vpop.f32.mrf.mxu0
  %v3302 = vadd.f32 %v3219, %v3301
  %v3303 = vpop.f32.mrf.mxu0
  %v3304 = vadd.f32 %v3221, %v3303
  %3305 = vdwg.mxu0
  %3306 = vmatprep.subr.mxu0 %v2777
  %3307 = vmatpush1.msra.mxu0 %v2776
  %3308 = vmatprep.subr.mxu0 %v2773
  %3309 = vmatpush1.msra.mxu0 %v2772
  %3310 = vmatprep.subr.mxu0 %v2769
  %3311 = vmatpush1.msra.mxu0 %v2768
  %3312 = vmatprep.subr.mxu0 %v2765
  %3313 = vmatpush1.msra.mxu0 %v2764
  %3314 = vmatprep.subr.mxu0 %v2761
  %3315 = vmatpush1.msra.mxu0 %v2760
  %3316 = vmatprep.subr.mxu0 %v2757
  %3317 = vmatpush1.msra.mxu0 %v2756
  %3318 = vmatprep.subr.mxu0 %v2753
  %3319 = vmatpush1.msra.mxu0 %v2752
  %3320 = vmatprep.subr.mxu0 %v2749
  %3321 = vmatpush1.msra.mxu0 %v2748
  %3322 = vmatprep.subr.mxu0 %v2745
  %3323 = vmatpush1.msra.mxu0 %v2744
  %3324 = vmatprep.subr.mxu0 %v2741
  %3325 = vmatpush1.msra.mxu0 %v2740
  %3326 = vmatprep.subr.mxu0 %v2737
  %3327 = vmatpush1.msra.mxu0 %v2736
  %3328 = vmatprep.subr.mxu0 %v2733
  %3329 = vmatpush1.msra.mxu0 %v2732
  %3330 = vmatprep.subr.mxu0 %v2729
  %3331 = vmatpush1.msra.mxu0 %v2728
  %3332 = vmatprep.subr.mxu0 %v2725
  %3333 = vmatpush1.msra.mxu0 %v2724
  %3334 = vmatprep.subr.mxu0 %v2721
  %3335 = vmatpush1.msra.mxu0 %v2720
  %3336 = vmatprep.subr.mxu0 %v2717
  %3337 = vmatpush1.msra.mxu0 %v2716
  %3338 = vmatprep.subr.mxu0 %v2841
  %3339 = vmatpush2.msra.mxu0 %v2840
  %3340 = vmatprep.subr.mxu0 %v2837
  %3341 = vmatpush2.msra.mxu0 %v2836
  %3342 = vmatprep.subr.mxu0 %v2833
  %3343 = vmatpush2.msra.mxu0 %v2832
  %3344 = vmatprep.subr.mxu0 %v2829
  %3345 = vmatpush2.msra.mxu0 %v2828
  %3346 = vmatprep.subr.mxu0 %v2825
  %3347 = vmatpush2.msra.mxu0 %v2824
  %3348 = vmatprep.subr.mxu0 %v2821
  %3349 = vmatpush2.msra.mxu0 %v2820
  %3350 = vmatprep.subr.mxu0 %v2817
  %3351 = vmatpush2.msra.mxu0 %v2816
  %3352 = vmatprep.subr.mxu0 %v2813
  %3353 = vmatpush2.msra.mxu0 %v2812
  %3354 = vmatprep.subr.mxu0 %v2809
  %3355 = vmatpush2.msra.mxu0 %v2808
  %3356 = vmatprep.subr.mxu0 %v2805
  %3357 = vmatpush2.msra.mxu0 %v2804
  %3358 = vmatprep.subr.mxu0 %v2801
  %3359 = vmatpush2.msra.mxu0 %v2800
  %3360 = vmatprep.subr.mxu0 %v2797
  %3361 = vmatpush2.msra.mxu0 %v2796
  %3362 = vmatprep.subr.mxu0 %v2793
  %3363 = vmatpush2.msra.mxu0 %v2792
  %3364 = vmatprep.subr.mxu0 %v2789
  %3365 = vmatpush2.msra.mxu0 %v2788
  %3366 = vmatprep.subr.mxu0 %v2785
  %3367 = vmatpush2.msra.mxu0 %v2784
  %3368 = vmatprep.subr.mxu0 %v2781
  %3369 = vmatpush2.msra.mxu0 %v2780
  %3370 = vmatprep.mubr.f32.mxu0 %v3015
  %3371 = vmatmul.mubr.f32.gmra.mxu0 %v3014
  %v3372 = vpop.f32.mrf.mxu0
  %v3373 = vadd.f32 %v3035, %v3372
  %v3374 = vpop.f32.mrf.mxu0
  %v3375 = vadd.f32 %v3035, %v3374
  %3376 = vmatprep.mubr.f32.mxu0 %v3020
  %3377 = vmatmul.mubr.f32.gmra.mxu0 %v3019
  %v3378 = vpop.f32.mrf.mxu0
  %v3379 = vadd.f32 %v3040, %v3378
  %v3380 = vpop.f32.mrf.mxu0
  %v3381 = vadd.f32 %v3040, %v3380
  %3382 = vmatprep.mubr.f32.mxu0 %v3025
  %3383 = vmatmul.mubr.f32.gmra.mxu0 %v3024
  %v3384 = vpop.f32.mrf.mxu0
  %v3385 = vadd.f32 %v3045, %v3384
  %v3386 = vpop.f32.mrf.mxu0
  %v3387 = vadd.f32 %v3045, %v3386
  %3388 = vdwg.mxu0
  %3389 = vmatprep.subr.mxu0 %v2905
  %3390 = vmatpush1.msra.mxu0 %v2904
  %3391 = vmatprep.subr.mxu0 %v2901
  %3392 = vmatpush1.msra.mxu0 %v2900
  %3393 = vmatprep.subr.mxu0 %v2897
  %3394 = vmatpush1.msra.mxu0 %v2896
  %3395 = vmatprep.subr.mxu0 %v2893
  %3396 = vmatpush1.msra.mxu0 %v2892
  %3397 = vmatprep.subr.mxu0 %v2889
  %3398 = vmatpush1.msra.mxu0 %v2888
  %3399 = vmatprep.subr.mxu0 %v2885
  %3400 = vmatpush1.msra.mxu0 %v2884
  %3401 = vmatprep.subr.mxu0 %v2881
  %3402 = vmatpush1.msra.mxu0 %v2880
  %3403 = vmatprep.subr.mxu0 %v2877
  %3404 = vmatpush1.msra.mxu0 %v2876
  %3405 = vmatprep.subr.mxu0 %v2873
  %3406 = vmatpush1.msra.mxu0 %v2872
  %3407 = vmatprep.subr.mxu0 %v2869
  %3408 = vmatpush1.msra.mxu0 %v2868
  %3409 = vmatprep.subr.mxu0 %v2865
  %3410 = vmatpush1.msra.mxu0 %v2864
  %3411 = vmatprep.subr.mxu0 %v2861
  %3412 = vmatpush1.msra.mxu0 %v2860
  %3413 = vmatprep.subr.mxu0 %v2857
  %3414 = vmatpush1.msra.mxu0 %v2856
  %3415 = vmatprep.subr.mxu0 %v2853
  %3416 = vmatpush1.msra.mxu0 %v2852
  %3417 = vmatprep.subr.mxu0 %v2849
  %3418 = vmatpush1.msra.mxu0 %v2848
  %3419 = vmatprep.subr.mxu0 %v2845
  %3420 = vmatpush1.msra.mxu0 %v2844
  %3421 = vmatprep.subr.mxu0 %v2969
  %3422 = vmatpush2.msra.mxu0 %v2968
  %3423 = vmatprep.subr.mxu0 %v2965
  %3424 = vmatpush2.msra.mxu0 %v2964
  %3425 = vmatprep.subr.mxu0 %v2961
  %3426 = vmatpush2.msra.mxu0 %v2960
  %3427 = vmatprep.subr.mxu0 %v2957
  %3428 = vmatpush2.msra.mxu0 %v2956
  %3429 = vmatprep.subr.mxu0 %v2953
  %3430 = vmatpush2.msra.mxu0 %v2952
  %3431 = vmatprep.subr.mxu0 %v2949
  %3432 = vmatpush2.msra.mxu0 %v2948
  %3433 = vmatprep.subr.mxu0 %v2945
  %3434 = vmatpush2.msra.mxu0 %v2944
  %3435 = vmatprep.subr.mxu0 %v2941
  %3436 = vmatpush2.msra.mxu0 %v2940
  %3437 = vmatprep.subr.mxu0 %v2937
  %3438 = vmatpush2.msra.mxu0 %v2936
  %3439 = vmatprep.subr.mxu0 %v2933
  %3440 = vmatpush2.msra.mxu0 %v2932
  %3441 = vmatprep.subr.mxu0 %v2929
  %3442 = vmatpush2.msra.mxu0 %v2928
  %3443 = vmatprep.subr.mxu0 %v2925
  %3444 = vmatpush2.msra.mxu0 %v2924
  %3445 = vmatprep.subr.mxu0 %v2921
  %3446 = vmatpush2.msra.mxu0 %v2920
  %3447 = vmatprep.subr.mxu0 %v2917
  %3448 = vmatpush2.msra.mxu0 %v2916
  %3449 = vmatprep.subr.mxu0 %v2913
  %3450 = vmatpush2.msra.mxu0 %v2912
  %3451 = vmatprep.subr.mxu0 %v2909
  %3452 = vmatpush2.msra.mxu0 %v2908
  %3453 = vmatprep.mubr.f32.mxu0 %v3017
  %3454 = vmatmul.mubr.f32.gmra.mxu0 %v3016
  %v3455 = vpop.f32.mrf.mxu0
  %v3456 = vadd.f32 %v3373, %v3455
  %v3457 = vpop.f32.mrf.mxu0
  %v3458 = vadd.f32 %v3375, %v3457
  %3459 = vmatprep.mubr.f32.mxu0 %v3022
  %3460 = vmatmul.mubr.f32.gmra.mxu0 %v3021
  %v3461 = vpop.f32.mrf.mxu0
  %v3462 = vadd.f32 %v3379, %v3461
  %v3463 = vpop.f32.mrf.mxu0
  %v3464 = vadd.f32 %v3381, %v3463
  %3465 = vmatprep.mubr.f32.mxu0 %v3027
  %3466 = vmatmul.mubr.f32.gmra.mxu0 %v3026
  %v3467 = vpop.f32.mrf.mxu0
  %v3468 = vadd.f32 %v3385, %v3467
  %v3469 = vpop.f32.mrf.mxu0
  %v3470 = vadd.f32 %v3387, %v3469
  %3471 = vdwg.mxu0
  %3472 = vmatprep.subr.mxu0 0.0
  %3473 = vmatpush1.msra.mxu0 0.0
  %3474 = vmatprep.subr.mxu0 0.0
  %3475 = vmatpush1.msra.mxu0 0.0
  %3476 = vmatprep.subr.mxu0 0.0
  %3477 = vmatpush1.msra.mxu0 0.0
  %3478 = vmatprep.subr.mxu0 0.0
  %3479 = vmatpush1.msra.mxu0 0.0
  %3480 = vmatprep.subr.mxu0 0.0
  %3481 = vmatpush1.msra.mxu0 0.0
  %3482 = vmatprep.subr.mxu0 %v3013
  %3483 = vmatpush1.msra.mxu0 %v3012
  %3484 = vmatprep.subr.mxu0 %v3009
  %3485 = vmatpush1.msra.mxu0 %v3008
  %3486 = vmatprep.subr.mxu0 %v3005
  %3487 = vmatpush1.msra.mxu0 %v3004
  %3488 = vmatprep.subr.mxu0 %v3001
  %3489 = vmatpush1.msra.mxu0 %v3000
  %3490 = vmatprep.subr.mxu0 %v2997
  %3491 = vmatpush1.msra.mxu0 %v2996
  %3492 = vmatprep.subr.mxu0 %v2993
  %3493 = vmatpush1.msra.mxu0 %v2992
  %3494 = vmatprep.subr.mxu0 %v2989
  %3495 = vmatpush1.msra.mxu0 %v2988
  %3496 = vmatprep.subr.mxu0 %v2985
  %3497 = vmatpush1.msra.mxu0 %v2984
  %3498 = vmatprep.subr.mxu0 %v2981
  %3499 = vmatpush1.msra.mxu0 %v2980
  %3500 = vmatprep.subr.mxu0 %v2977
  %3501 = vmatpush1.msra.mxu0 %v2976
  %3502 = vmatprep.subr.mxu0 %v2973
  %3503 = vmatpush1.msra.mxu0 %v2972
  %3504 = vmatprep.subr.mxu0 0.0
  %3505 = vmatpush2.msra.mxu0 0.0
  %3506 = vmatprep.subr.mxu0 0.0
  %3507 = vmatpush2.msra.mxu0 0.0
  %3508 = vmatprep.subr.mxu0 0.0
  %3509 = vmatpush2.msra.mxu0 0.0
  %3510 = vmatprep.subr.mxu0 0.0
  %3511 = vmatpush2.msra.mxu0 0.0
  %3512 = vmatprep.subr.mxu0 0.0
  %3513 = vmatpush2.msra.mxu0 0.0
  %3514 = vmatprep.subr.mxu0 0.0
  %3515 = vmatpush2.msra.mxu0 0.0
  %3516 = vmatprep.subr.mxu0 0.0
  %3517 = vmatpush2.msra.mxu0 0.0
  %3518 = vmatprep.subr.mxu0 0.0
  %3519 = vmatpush2.msra.mxu0 0.0
  %3520 = vmatprep.subr.mxu0 0.0
  %3521 = vmatpush2.msra.mxu0 0.0
  %3522 = vmatprep.subr.mxu0 0.0
  %3523 = vmatpush2.msra.mxu0 0.0
  %3524 = vmatprep.subr.mxu0 0.0
  %3525 = vmatpush2.msra.mxu0 0.0
  %3526 = vmatprep.subr.mxu0 0.0
  %3527 = vmatpush2.msra.mxu0 0.0
  %3528 = vmatprep.subr.mxu0 0.0
  %3529 = vmatpush2.msra.mxu0 0.0
  %3530 = vmatprep.subr.mxu0 0.0
  %3531 = vmatpush2.msra.mxu0 0.0
  %3532 = vmatprep.subr.mxu0 0.0
  %3533 = vmatpush2.msra.mxu0 0.0
  %3534 = vmatprep.subr.mxu0 0.0
  %3535 = vmatpush2.msra.mxu0 0.0
  %3536 = vmatprep.mubr.f32.mxu0 0.0
  %3537 = vmatmul.mubr.f32.gmra.mxu0 %v3049
  %v3538 = vpop.f32.mrf.mxu0
  %v3539 = vadd.f32 %v3456, %v3538
  %v3540 = vpop.f32.mrf.mxu0
  %v3541 = vadd.f32 %v3458, %v3540
  %3542 = vmatprep.mubr.f32.mxu0 0.0
  %3543 = vmatmul.mubr.f32.gmra.mxu0 %v3052
  %v3544 = vpop.f32.mrf.mxu0
  %v3545 = vadd.f32 %v3462, %v3544
  %v3546 = vpop.f32.mrf.mxu0
  %v3547 = vadd.f32 %v3464, %v3546
  %3548 = vmatprep.mubr.f32.mxu0 0.0
  %3549 = vmatmul.mubr.f32.gmra.mxu0 %v3055
  %v3550 = vpop.f32.mrf.mxu0
  %v3551 = vadd.f32 %v3468, %v3550
  %v3552 = vpop.f32.mrf.mxu0
  %v3553 = vadd.f32 %v3470, %v3552
  %3554 = vdwg.mxu0
  %3555 = vrot.lane.b32.xlu0 %v3290, 34
  %v3556 = vpop.permute.xlu0 %3555
  %3557 = vrot.lane.b32.xlu0 %v3296, 34
  %v3558 = vpop.permute.xlu0 %3557
  %3559 = vrot.lane.b32.xlu0 %v3302, 34
  %v3560 = vpop.permute.xlu0 %3559
  %3561 = vrot.lane.b32.xlu0 %v3292, 34
  %v3562 = vpop.permute.xlu0 %3561
  %3563 = vrot.lane.b32.xlu0 %v3298, 34
  %v3564 = vpop.permute.xlu0 %3563
  %3565 = vrot.lane.b32.xlu0 %v3304, 34
  %v3566 = vpop.permute.xlu0 %3565
  %3567 = vrot.lane.b32.xlu0 %v3539, 34
  %v3568 = vpop.permute.xlu0 %3567
  %3569 = vrot.lane.b32.xlu0 %v3545, 34
  %v3570 = vpop.permute.xlu0 %3569
  %3571 = vrot.lane.b32.xlu0 %v3551, 34
  %v3572 = vpop.permute.xlu0 %3571
  %3573 = vrot.lane.b32.xlu0 %v3541, 34
  %v3574 = vpop.permute.xlu0 %3573
  %3575 = vrot.lane.b32.xlu0 %v3547, 34
  %v3576 = vpop.permute.xlu0 %3575
  %3577 = vrot.lane.b32.xlu0 %v3553, 34
  %v3578 = vpop.permute.xlu0 %3577
  %v3579 = vsel %vm46, %v3568, %v3574
  %v3580 = vsel %vm46, %v3570, %v3576
  %v3581 = vsel %vm46, %v3572, %v3578
  %v3582 = vsel %vm46, %v3562, %v3568
  %v3583 = vsel %vm46, %v3564, %v3570
  %v3584 = vsel %vm46, %v3566, %v3572
  %v3585 = vsel %vm46, %v3556, %v3562
  %v3586 = vsel %vm46, %v3558, %v3564
  %v3587 = vsel %vm46, %v3560, %v3566
  %v3588 = vsel %vm46, %v3574, %v3556
  %v3589 = vsel %vm46, %v3576, %v3558
  %v3590 = vsel %vm46, %v3578, %v3560
  %3591 = vst [vmem:[#allocation2] sm:$0xff] %v3588
  %3592 = vst [vmem:[#allocation2 + $0x8] sm:$0xff] %v3585
  %3593 = vst [vmem:[#allocation2 + $0x10] sm:$0xff] %v3582
  %3594 = vst [vmem:[#allocation2 + $0x18] sm:$0xff] %v3579
  %3595 = vst [vmem:[#allocation2 + $0x20] sm:$0xff] %v3589
  %3596 = vst [vmem:[#allocation2 + $0x28] sm:$0xff] %v3586
  %3597 = vst [vmem:[#allocation2 + $0x30] sm:$0xff] %v3583
  %3598 = vst [vmem:[#allocation2 + $0x38] sm:$0xff] %v3580
  %3599 = vst [vmem:[#allocation2 + $0x40] sm:$0xff] %v3590
  %3600 = vst [vmem:[#allocation2 + $0x48] sm:$0xff] %v3587
  %3601 = vst [vmem:[#allocation2 + $0x50] sm:$0xff] %v3584
  %3602 = vst [vmem:[#allocation2 + $0x58] sm:$0xff] %v3581
  %3603 = vrot.lane.b32.xlu0 %v3290, 33
  %v3604 = vpop.permute.xlu0 %3603
  %3605 = vrot.lane.b32.xlu0 %v3296, 33
  %v3606 = vpop.permute.xlu0 %3605
  %3607 = vrot.lane.b32.xlu0 %v3302, 33
  %v3608 = vpop.permute.xlu0 %3607
  %3609 = vrot.lane.b32.xlu0 %v3292, 33
  %v3610 = vpop.permute.xlu0 %3609
  %3611 = vrot.lane.b32.xlu0 %v3298, 33
  %v3612 = vpop.permute.xlu0 %3611
  %3613 = vrot.lane.b32.xlu0 %v3304, 33
  %v3614 = vpop.permute.xlu0 %3613
  %3615 = vrot.lane.b32.xlu0 %v3539, 33
  %v3616 = vpop.permute.xlu0 %3615
  %3617 = vrot.lane.b32.xlu0 %v3545, 33
  %v3618 = vpop.permute.xlu0 %3617
  %3619 = vrot.lane.b32.xlu0 %v3551, 33
  %v3620 = vpop.permute.xlu0 %3619
  %3621 = vrot.lane.b32.xlu0 %v3541, 33
  %v3622 = vpop.permute.xlu0 %3621
  %3623 = vrot.lane.b32.xlu0 %v3547, 33
  %v3624 = vpop.permute.xlu0 %3623
  %3625 = vrot.lane.b32.xlu0 %v3553, 33
  %v3626 = vpop.permute.xlu0 %3625
  %v3627 = vsel %vm63, %v3616, %v3622
  %v3628 = vsel %vm63, %v3618, %v3624
  %v3629 = vsel %vm63, %v3620, %v3626
  %v3630 = vsel %vm63, %v3610, %v3616
  %v3631 = vsel %vm63, %v3612, %v3618
  %v3632 = vsel %vm63, %v3614, %v3620
  %v3633 = vsel %vm63, %v3604, %v3610
  %v3634 = vsel %vm63, %v3606, %v3612
  %v3635 = vsel %vm63, %v3608, %v3614
  %v3636 = vsel %vm63, %v3622, %v3604
  %v3637 = vsel %vm63, %v3624, %v3606
  %v3638 = vsel %vm63, %v3626, %v3608
  %3639 = vst [vmem:[#allocation2 + $0x60] sm:$0xff] %v3636
  %3640 = vst [vmem:[#allocation2 + $0x68] sm:$0xff] %v3633
  %3641 = vst [vmem:[#allocation2 + $0x70] sm:$0xff] %v3630
  %3642 = vst [vmem:[#allocation2 + $0x78] sm:$0xff] %v3627
  %3643 = vst [vmem:[#allocation2 + $0x80] sm:$0xff] %v3637
  %3644 = vst [vmem:[#allocation2 + $0x88] sm:$0xff] %v3634
  %3645 = vst [vmem:[#allocation2 + $0x90] sm:$0xff] %v3631
  %3646 = vst [vmem:[#allocation2 + $0x98] sm:$0xff] %v3628
  %3647 = vst [vmem:[#allocation2 + $0xa0] sm:$0xff] %v3638
  %3648 = vst [vmem:[#allocation2 + $0xa8] sm:$0xff] %v3635
  %3649 = vst [vmem:[#allocation2 + $0xb0] sm:$0xff] %v3632
  %3650 = vst [vmem:[#allocation2 + $0xb8] sm:$0xff] %v3629
  %3651 = vrot.lane.b32.xlu0 %v3290, 32
  %v3652 = vpop.permute.xlu0 %3651
  %3653 = vrot.lane.b32.xlu0 %v3296, 32
  %v3654 = vpop.permute.xlu0 %3653
  %3655 = vrot.lane.b32.xlu0 %v3302, 32
  %v3656 = vpop.permute.xlu0 %3655
  %3657 = vrot.lane.b32.xlu0 %v3292, 32
  %v3658 = vpop.permute.xlu0 %3657
  %3659 = vrot.lane.b32.xlu0 %v3298, 32
  %v3660 = vpop.permute.xlu0 %3659
  %3661 = vrot.lane.b32.xlu0 %v3304, 32
  %v3662 = vpop.permute.xlu0 %3661
  %3663 = vrot.lane.b32.xlu0 %v3539, 32
  %v3664 = vpop.permute.xlu0 %3663
  %3665 = vrot.lane.b32.xlu0 %v3545, 32
  %v3666 = vpop.permute.xlu0 %3665
  %3667 = vrot.lane.b32.xlu0 %v3551, 32
  %v3668 = vpop.permute.xlu0 %3667
  %3669 = vrot.lane.b32.xlu0 %v3541, 32
  %v3670 = vpop.permute.xlu0 %3669
  %3671 = vrot.lane.b32.xlu0 %v3547, 32
  %v3672 = vpop.permute.xlu0 %3671
  %3673 = vrot.lane.b32.xlu0 %v3553, 32
  %v3674 = vpop.permute.xlu0 %3673
  %v3675 = vsel %vm80, %v3664, %v3670
  %v3676 = vsel %vm80, %v3666, %v3672
  %v3677 = vsel %vm80, %v3668, %v3674
  %v3678 = vsel %vm80, %v3658, %v3664
  %v3679 = vsel %vm80, %v3660, %v3666
  %v3680 = vsel %vm80, %v3662, %v3668
  %v3681 = vsel %vm80, %v3652, %v3658
  %v3682 = vsel %vm80, %v3654, %v3660
  %v3683 = vsel %vm80, %v3656, %v3662
  %v3684 = vsel %vm80, %v3670, %v3652
  %v3685 = vsel %vm80, %v3672, %v3654
  %v3686 = vsel %vm80, %v3674, %v3656
  %3687 = vst [vmem:[#allocation2 + $0xc0] sm:$0xff] %v3684
  %3688 = vst [vmem:[#allocation2 + $0xc8] sm:$0xff] %v3681
  %3689 = vst [vmem:[#allocation2 + $0xd0] sm:$0xff] %v3678
  %3690 = vst [vmem:[#allocation2 + $0xd8] sm:$0xff] %v3675
  %3691 = vst [vmem:[#allocation2 + $0xe0] sm:$0xff] %v3685
  %3692 = vst [vmem:[#allocation2 + $0xe8] sm:$0xff] %v3682
  %3693 = vst [vmem:[#allocation2 + $0xf0] sm:$0xff] %v3679
  %3694 = vst [vmem:[#allocation2 + $0xf8] sm:$0xff] %v3676
  %3695 = vst [vmem:[#allocation2 + $0x100] sm:$0xff] %v3686
  %3696 = vst [vmem:[#allocation2 + $0x108] sm:$0xff] %v3683
  %3697 = vst [vmem:[#allocation2 + $0x110] sm:$0xff] %v3680
  %3698 = vst [vmem:[#allocation2 + $0x118] sm:$0xff] %v3677
  %3699 = vrot.lane.b32.xlu0 %v3290, 31
  %v3700 = vpop.permute.xlu0 %3699
  %3701 = vrot.lane.b32.xlu0 %v3296, 31
  %v3702 = vpop.permute.xlu0 %3701
  %3703 = vrot.lane.b32.xlu0 %v3302, 31
  %v3704 = vpop.permute.xlu0 %3703
  %3705 = vrot.lane.b32.xlu0 %v3292, 31
  %v3706 = vpop.permute.xlu0 %3705
  %3707 = vrot.lane.b32.xlu0 %v3298, 31
  %v3708 = vpop.permute.xlu0 %3707
  %3709 = vrot.lane.b32.xlu0 %v3304, 31
  %v3710 = vpop.permute.xlu0 %3709
  %3711 = vrot.lane.b32.xlu0 %v3539, 31
  %v3712 = vpop.permute.xlu0 %3711
  %3713 = vrot.lane.b32.xlu0 %v3545, 31
  %v3714 = vpop.permute.xlu0 %3713
  %3715 = vrot.lane.b32.xlu0 %v3551, 31
  %v3716 = vpop.permute.xlu0 %3715
  %3717 = vrot.lane.b32.xlu0 %v3541, 31
  %v3718 = vpop.permute.xlu0 %3717
  %3719 = vrot.lane.b32.xlu0 %v3547, 31
  %v3720 = vpop.permute.xlu0 %3719
  %3721 = vrot.lane.b32.xlu0 %v3553, 31
  %v3722 = vpop.permute.xlu0 %3721
  %v3723 = vsel %vm97, %v3712, %v3718
  %v3724 = vsel %vm97, %v3714, %v3720
  %v3725 = vsel %vm97, %v3716, %v3722
  %v3726 = vsel %vm97, %v3706, %v3712
  %v3727 = vsel %vm97, %v3708, %v3714
  %v3728 = vsel %vm97, %v3710, %v3716
  %v3729 = vsel %vm97, %v3700, %v3706
  %v3730 = vsel %vm97, %v3702, %v3708
  %v3731 = vsel %vm97, %v3704, %v3710
  %v3732 = vsel %vm97, %v3718, %v3700
  %v3733 = vsel %vm97, %v3720, %v3702
  %v3734 = vsel %vm97, %v3722, %v3704
  %3735 = vst [vmem:[#allocation2 + $0x120] sm:$0xff] %v3732
  %3736 = vst [vmem:[#allocation2 + $0x128] sm:$0xff] %v3729
  %3737 = vst [vmem:[#allocation2 + $0x130] sm:$0xff] %v3726
  %3738 = vst [vmem:[#allocation2 + $0x138] sm:$0xff] %v3723
  %3739 = vst [vmem:[#allocation2 + $0x140] sm:$0xff] %v3733
  %3740 = vst [vmem:[#allocation2 + $0x148] sm:$0xff] %v3730
  %3741 = vst [vmem:[#allocation2 + $0x150] sm:$0xff] %v3727
  %3742 = vst [vmem:[#allocation2 + $0x158] sm:$0xff] %v3724
  %3743 = vst [vmem:[#allocation2 + $0x160] sm:$0xff] %v3734
  %3744 = vst [vmem:[#allocation2 + $0x168] sm:$0xff] %v3731
  %3745 = vst [vmem:[#allocation2 + $0x170] sm:$0xff] %v3728
  %3746 = vst [vmem:[#allocation2 + $0x178] sm:$0xff] %v3725
  %3747 = vrot.lane.b32.xlu0 %v3290, 30
  %v3748 = vpop.permute.xlu0 %3747
  %3749 = vrot.lane.b32.xlu0 %v3296, 30
  %v3750 = vpop.permute.xlu0 %3749
  %3751 = vrot.lane.b32.xlu0 %v3302, 30
  %v3752 = vpop.permute.xlu0 %3751
  %3753 = vrot.lane.b32.xlu0 %v3292, 30
  %v3754 = vpop.permute.xlu0 %3753
  %3755 = vrot.lane.b32.xlu0 %v3298, 30
  %v3756 = vpop.permute.xlu0 %3755
  %3757 = vrot.lane.b32.xlu0 %v3304, 30
  %v3758 = vpop.permute.xlu0 %3757
  %3759 = vrot.lane.b32.xlu0 %v3539, 30
  %v3760 = vpop.permute.xlu0 %3759
  %3761 = vrot.lane.b32.xlu0 %v3545, 30
  %v3762 = vpop.permute.xlu0 %3761
  %3763 = vrot.lane.b32.xlu0 %v3551, 30
  %v3764 = vpop.permute.xlu0 %3763
  %3765 = vrot.lane.b32.xlu0 %v3541, 30
  %v3766 = vpop.permute.xlu0 %3765
  %3767 = vrot.lane.b32.xlu0 %v3547, 30
  %v3768 = vpop.permute.xlu0 %3767
  %3769 = vrot.lane.b32.xlu0 %v3553, 30
  %v3770 = vpop.permute.xlu0 %3769
  %v3771 = vsel %vm114, %v3760, %v3766
  %v3772 = vsel %vm114, %v3762, %v3768
  %v3773 = vsel %vm114, %v3764, %v3770
  %v3774 = vsel %vm114, %v3754, %v3760
  %v3775 = vsel %vm114, %v3756, %v3762
  %v3776 = vsel %vm114, %v3758, %v3764
  %v3777 = vsel %vm114, %v3748, %v3754
  %v3778 = vsel %vm114, %v3750, %v3756
  %v3779 = vsel %vm114, %v3752, %v3758
  %v3780 = vsel %vm114, %v3766, %v3748
  %v3781 = vsel %vm114, %v3768, %v3750
  %v3782 = vsel %vm114, %v3770, %v3752
  %3783 = vst [vmem:[#allocation2 + $0x180] sm:$0xff] %v3780
  %3784 = vst [vmem:[#allocation2 + $0x188] sm:$0xff] %v3777
  %3785 = vst [vmem:[#allocation2 + $0x190] sm:$0xff] %v3774
  %3786 = vst [vmem:[#allocation2 + $0x198] sm:$0xff] %v3771
  %3787 = vst [vmem:[#allocation2 + $0x1a0] sm:$0xff] %v3781
  %3788 = vst [vmem:[#allocation2 + $0x1a8] sm:$0xff] %v3778
  %3789 = vst [vmem:[#allocation2 + $0x1b0] sm:$0xff] %v3775
  %3790 = vst [vmem:[#allocation2 + $0x1b8] sm:$0xff] %v3772
  %3791 = vst [vmem:[#allocation2 + $0x1c0] sm:$0xff] %v3782
  %3792 = vst [vmem:[#allocation2 + $0x1c8] sm:$0xff] %v3779
  %3793 = vst [vmem:[#allocation2 + $0x1d0] sm:$0xff] %v3776
  %3794 = vst [vmem:[#allocation2 + $0x1d8] sm:$0xff] %v3773
  %3795 = vrot.lane.b32.xlu0 %v3290, 18
  %v3796 = vpop.permute.xlu0 %3795
  %3797 = vrot.lane.b32.xlu0 %v3296, 18
  %v3798 = vpop.permute.xlu0 %3797
  %3799 = vrot.lane.b32.xlu0 %v3302, 18
  %v3800 = vpop.permute.xlu0 %3799
  %3801 = vrot.lane.b32.xlu0 %v3292, 18
  %v3802 = vpop.permute.xlu0 %3801
  %3803 = vrot.lane.b32.xlu0 %v3298, 18
  %v3804 = vpop.permute.xlu0 %3803
  %3805 = vrot.lane.b32.xlu0 %v3304, 18
  %v3806 = vpop.permute.xlu0 %3805
  %3807 = vrot.lane.b32.xlu0 %v3539, 18
  %v3808 = vpop.permute.xlu0 %3807
  %3809 = vrot.lane.b32.xlu0 %v3545, 18
  %v3810 = vpop.permute.xlu0 %3809
  %3811 = vrot.lane.b32.xlu0 %v3551, 18
  %v3812 = vpop.permute.xlu0 %3811
  %3813 = vrot.lane.b32.xlu0 %v3541, 18
  %v3814 = vpop.permute.xlu0 %3813
  %3815 = vrot.lane.b32.xlu0 %v3547, 18
  %v3816 = vpop.permute.xlu0 %3815
  %3817 = vrot.lane.b32.xlu0 %v3553, 18
  %v3818 = vpop.permute.xlu0 %3817
  %v3819 = vsel %vm131, %v3808, %v3814
  %v3820 = vsel %vm131, %v3810, %v3816
  %v3821 = vsel %vm131, %v3812, %v3818
  %v3822 = vsel %vm131, %v3802, %v3808
  %v3823 = vsel %vm131, %v3804, %v3810
  %v3824 = vsel %vm131, %v3806, %v3812
  %v3825 = vsel %vm131, %v3796, %v3802
  %v3826 = vsel %vm131, %v3798, %v3804
  %v3827 = vsel %vm131, %v3800, %v3806
  %v3828 = vsel %vm131, %v3814, %v3796
  %v3829 = vsel %vm131, %v3816, %v3798
  %v3830 = vsel %vm131, %v3818, %v3800
  %3831 = vst [vmem:[#allocation2 + $0x1e0] sm:$0xff] %v3828
  %3832 = vst [vmem:[#allocation2 + $0x1e8] sm:$0xff] %v3825
  %3833 = vst [vmem:[#allocation2 + $0x1f0] sm:$0xff] %v3822
  %3834 = vst [vmem:[#allocation2 + $0x1f8] sm:$0xff] %v3819
  %3835 = vst [vmem:[#allocation2 + $0x200] sm:$0xff] %v3829
  %3836 = vst [vmem:[#allocation2 + $0x208] sm:$0xff] %v3826
  %3837 = vst [vmem:[#allocation2 + $0x210] sm:$0xff] %v3823
  %3838 = vst [vmem:[#allocation2 + $0x218] sm:$0xff] %v3820
  %3839 = vst [vmem:[#allocation2 + $0x220] sm:$0xff] %v3830
  %3840 = vst [vmem:[#allocation2 + $0x228] sm:$0xff] %v3827
  %3841 = vst [vmem:[#allocation2 + $0x230] sm:$0xff] %v3824
  %3842 = vst [vmem:[#allocation2 + $0x238] sm:$0xff] %v3821
  %3843 = vrot.lane.b32.xlu0 %v3290, 17
  %v3844 = vpop.permute.xlu0 %3843
  %3845 = vrot.lane.b32.xlu0 %v3296, 17
  %v3846 = vpop.permute.xlu0 %3845
  %3847 = vrot.lane.b32.xlu0 %v3302, 17
  %v3848 = vpop.permute.xlu0 %3847
  %3849 = vrot.lane.b32.xlu0 %v3292, 17
  %v3850 = vpop.permute.xlu0 %3849
  %3851 = vrot.lane.b32.xlu0 %v3298, 17
  %v3852 = vpop.permute.xlu0 %3851
  %3853 = vrot.lane.b32.xlu0 %v3304, 17
  %v3854 = vpop.permute.xlu0 %3853
  %3855 = vrot.lane.b32.xlu0 %v3539, 17
  %v3856 = vpop.permute.xlu0 %3855
  %3857 = vrot.lane.b32.xlu0 %v3545, 17
  %v3858 = vpop.permute.xlu0 %3857
  %3859 = vrot.lane.b32.xlu0 %v3551, 17
  %v3860 = vpop.permute.xlu0 %3859
  %3861 = vrot.lane.b32.xlu0 %v3541, 17
  %v3862 = vpop.permute.xlu0 %3861
  %3863 = vrot.lane.b32.xlu0 %v3547, 17
  %v3864 = vpop.permute.xlu0 %3863
  %3865 = vrot.lane.b32.xlu0 %v3553, 17
  %v3866 = vpop.permute.xlu0 %3865
  %v3867 = vsel %vm148, %v3856, %v3862
  %v3868 = vsel %vm148, %v3858, %v3864
  %v3869 = vsel %vm148, %v3860, %v3866
  %v3870 = vsel %vm148, %v3850, %v3856
  %v3871 = vsel %vm148, %v3852, %v3858
  %v3872 = vsel %vm148, %v3854, %v3860
  %v3873 = vsel %vm148, %v3844, %v3850
  %v3874 = vsel %vm148, %v3846, %v3852
  %v3875 = vsel %vm148, %v3848, %v3854
  %v3876 = vsel %vm148, %v3862, %v3844
  %v3877 = vsel %vm148, %v3864, %v3846
  %v3878 = vsel %vm148, %v3866, %v3848
  %3879 = vst [vmem:[#allocation2 + $0x240] sm:$0xff] %v3876
  %3880 = vst [vmem:[#allocation2 + $0x248] sm:$0xff] %v3873
  %3881 = vst [vmem:[#allocation2 + $0x250] sm:$0xff] %v3870
  %3882 = vst [vmem:[#allocation2 + $0x258] sm:$0xff] %v3867
  %3883 = vst [vmem:[#allocation2 + $0x260] sm:$0xff] %v3877
  %3884 = vst [vmem:[#allocation2 + $0x268] sm:$0xff] %v3874
  %3885 = vst [vmem:[#allocation2 + $0x270] sm:$0xff] %v3871
  %3886 = vst [vmem:[#allocation2 + $0x278] sm:$0xff] %v3868
  %3887 = vst [vmem:[#allocation2 + $0x280] sm:$0xff] %v3878
  %3888 = vst [vmem:[#allocation2 + $0x288] sm:$0xff] %v3875
  %3889 = vst [vmem:[#allocation2 + $0x290] sm:$0xff] %v3872
  %3890 = vst [vmem:[#allocation2 + $0x298] sm:$0xff] %v3869
  %3891 = vrot.lane.b32.xlu0 %v3290, 16
  %v3892 = vpop.permute.xlu0 %3891
  %3893 = vrot.lane.b32.xlu0 %v3296, 16
  %v3894 = vpop.permute.xlu0 %3893
  %3895 = vrot.lane.b32.xlu0 %v3302, 16
  %v3896 = vpop.permute.xlu0 %3895
  %3897 = vrot.lane.b32.xlu0 %v3292, 16
  %v3898 = vpop.permute.xlu0 %3897
  %3899 = vrot.lane.b32.xlu0 %v3298, 16
  %v3900 = vpop.permute.xlu0 %3899
  %3901 = vrot.lane.b32.xlu0 %v3304, 16
  %v3902 = vpop.permute.xlu0 %3901
  %3903 = vrot.lane.b32.xlu0 %v3539, 16
  %v3904 = vpop.permute.xlu0 %3903
  %3905 = vrot.lane.b32.xlu0 %v3545, 16
  %v3906 = vpop.permute.xlu0 %3905
  %3907 = vrot.lane.b32.xlu0 %v3551, 16
  %v3908 = vpop.permute.xlu0 %3907
  %3909 = vrot.lane.b32.xlu0 %v3541, 16
  %v3910 = vpop.permute.xlu0 %3909
  %3911 = vrot.lane.b32.xlu0 %v3547, 16
  %v3912 = vpop.permute.xlu0 %3911
  %3913 = vrot.lane.b32.xlu0 %v3553, 16
  %v3914 = vpop.permute.xlu0 %3913
  %v3915 = vsel %vm165, %v3904, %v3910
  %v3916 = vsel %vm165, %v3906, %v3912
  %v3917 = vsel %vm165, %v3908, %v3914
  %v3918 = vsel %vm165, %v3898, %v3904
  %v3919 = vsel %vm165, %v3900, %v3906
  %v3920 = vsel %vm165, %v3902, %v3908
  %v3921 = vsel %vm165, %v3892, %v3898
  %v3922 = vsel %vm165, %v3894, %v3900
  %v3923 = vsel %vm165, %v3896, %v3902
  %v3924 = vsel %vm165, %v3910, %v3892
  %v3925 = vsel %vm165, %v3912, %v3894
  %v3926 = vsel %vm165, %v3914, %v3896
  %3927 = vst [vmem:[#allocation2 + $0x2a0] sm:$0xff] %v3924
  %3928 = vst [vmem:[#allocation2 + $0x2a8] sm:$0xff] %v3921
  %3929 = vst [vmem:[#allocation2 + $0x2b0] sm:$0xff] %v3918
  %3930 = vst [vmem:[#allocation2 + $0x2b8] sm:$0xff] %v3915
  %3931 = vst [vmem:[#allocation2 + $0x2c0] sm:$0xff] %v3925
  %3932 = vst [vmem:[#allocation2 + $0x2c8] sm:$0xff] %v3922
  %3933 = vst [vmem:[#allocation2 + $0x2d0] sm:$0xff] %v3919
  %3934 = vst [vmem:[#allocation2 + $0x2d8] sm:$0xff] %v3916
  %3935 = vst [vmem:[#allocation2 + $0x2e0] sm:$0xff] %v3926
  %3936 = vst [vmem:[#allocation2 + $0x2e8] sm:$0xff] %v3923
  %3937 = vst [vmem:[#allocation2 + $0x2f0] sm:$0xff] %v3920
  %3938 = vst [vmem:[#allocation2 + $0x2f8] sm:$0xff] %v3917
  %3939 = vrot.lane.b32.xlu0 %v3290, 15
  %v3940 = vpop.permute.xlu0 %3939
  %3941 = vrot.lane.b32.xlu0 %v3296, 15
  %v3942 = vpop.permute.xlu0 %3941
  %3943 = vrot.lane.b32.xlu0 %v3302, 15
  %v3944 = vpop.permute.xlu0 %3943
  %3945 = vrot.lane.b32.xlu0 %v3292, 15
  %v3946 = vpop.permute.xlu0 %3945
  %3947 = vrot.lane.b32.xlu0 %v3298, 15
  %v3948 = vpop.permute.xlu0 %3947
  %3949 = vrot.lane.b32.xlu0 %v3304, 15
  %v3950 = vpop.permute.xlu0 %3949
  %3951 = vrot.lane.b32.xlu0 %v3539, 15
  %v3952 = vpop.permute.xlu0 %3951
  %3953 = vrot.lane.b32.xlu0 %v3545, 15
  %v3954 = vpop.permute.xlu0 %3953
  %3955 = vrot.lane.b32.xlu0 %v3551, 15
  %v3956 = vpop.permute.xlu0 %3955
  %3957 = vrot.lane.b32.xlu0 %v3541, 15
  %v3958 = vpop.permute.xlu0 %3957
  %3959 = vrot.lane.b32.xlu0 %v3547, 15
  %v3960 = vpop.permute.xlu0 %3959
  %3961 = vrot.lane.b32.xlu0 %v3553, 15
  %v3962 = vpop.permute.xlu0 %3961
  %v3963 = vsel %vm182, %v3952, %v3958
  %v3964 = vsel %vm182, %v3954, %v3960
  %v3965 = vsel %vm182, %v3956, %v3962
  %v3966 = vsel %vm182, %v3946, %v3952
  %v3967 = vsel %vm182, %v3948, %v3954
  %v3968 = vsel %vm182, %v3950, %v3956
  %v3969 = vsel %vm182, %v3940, %v3946
  %v3970 = vsel %vm182, %v3942, %v3948
  %v3971 = vsel %vm182, %v3944, %v3950
  %v3972 = vsel %vm182, %v3958, %v3940
  %v3973 = vsel %vm182, %v3960, %v3942
  %v3974 = vsel %vm182, %v3962, %v3944
  %3975 = vst [vmem:[#allocation2 + $0x300] sm:$0xff] %v3972
  %3976 = vst [vmem:[#allocation2 + $0x308] sm:$0xff] %v3969
  %3977 = vst [vmem:[#allocation2 + $0x310] sm:$0xff] %v3966
  %3978 = vst [vmem:[#allocation2 + $0x318] sm:$0xff] %v3963
  %3979 = vst [vmem:[#allocation2 + $0x320] sm:$0xff] %v3973
  %3980 = vst [vmem:[#allocation2 + $0x328] sm:$0xff] %v3970
  %3981 = vst [vmem:[#allocation2 + $0x330] sm:$0xff] %v3967
  %3982 = vst [vmem:[#allocation2 + $0x338] sm:$0xff] %v3964
  %3983 = vst [vmem:[#allocation2 + $0x340] sm:$0xff] %v3974
  %3984 = vst [vmem:[#allocation2 + $0x348] sm:$0xff] %v3971
  %3985 = vst [vmem:[#allocation2 + $0x350] sm:$0xff] %v3968
  %3986 = vst [vmem:[#allocation2 + $0x358] sm:$0xff] %v3965
  %3987 = vrot.lane.b32.xlu0 %v3290, 14
  %v3988 = vpop.permute.xlu0 %3987
  %3989 = vrot.lane.b32.xlu0 %v3296, 14
  %v3990 = vpop.permute.xlu0 %3989
  %3991 = vrot.lane.b32.xlu0 %v3302, 14
  %v3992 = vpop.permute.xlu0 %3991
  %3993 = vrot.lane.b32.xlu0 %v3292, 14
  %v3994 = vpop.permute.xlu0 %3993
  %3995 = vrot.lane.b32.xlu0 %v3298, 14
  %v3996 = vpop.permute.xlu0 %3995
  %3997 = vrot.lane.b32.xlu0 %v3304, 14
  %v3998 = vpop.permute.xlu0 %3997
  %3999 = vrot.lane.b32.xlu0 %v3539, 14
  %v4000 = vpop.permute.xlu0 %3999
  %4001 = vrot.lane.b32.xlu0 %v3545, 14
  %v4002 = vpop.permute.xlu0 %4001
  %4003 = vrot.lane.b32.xlu0 %v3551, 14
  %v4004 = vpop.permute.xlu0 %4003
  %4005 = vrot.lane.b32.xlu0 %v3541, 14
  %v4006 = vpop.permute.xlu0 %4005
  %4007 = vrot.lane.b32.xlu0 %v3547, 14
  %v4008 = vpop.permute.xlu0 %4007
  %4009 = vrot.lane.b32.xlu0 %v3553, 14
  %v4010 = vpop.permute.xlu0 %4009
  %v4011 = vsel %vm199, %v4000, %v4006
  %v4012 = vsel %vm199, %v4002, %v4008
  %v4013 = vsel %vm199, %v4004, %v4010
  %v4014 = vsel %vm199, %v3994, %v4000
  %v4015 = vsel %vm199, %v3996, %v4002
  %v4016 = vsel %vm199, %v3998, %v4004
  %v4017 = vsel %vm199, %v3988, %v3994
  %v4018 = vsel %vm199, %v3990, %v3996
  %v4019 = vsel %vm199, %v3992, %v3998
  %v4020 = vsel %vm199, %v4006, %v3988
  %v4021 = vsel %vm199, %v4008, %v3990
  %v4022 = vsel %vm199, %v4010, %v3992
  %4023 = vst [vmem:[#allocation2 + $0x360] sm:$0xff] %v4020
  %4024 = vst [vmem:[#allocation2 + $0x368] sm:$0xff] %v4017
  %4025 = vst [vmem:[#allocation2 + $0x370] sm:$0xff] %v4014
  %4026 = vst [vmem:[#allocation2 + $0x378] sm:$0xff] %v4011
  %4027 = vst [vmem:[#allocation2 + $0x380] sm:$0xff] %v4021
  %4028 = vst [vmem:[#allocation2 + $0x388] sm:$0xff] %v4018
  %4029 = vst [vmem:[#allocation2 + $0x390] sm:$0xff] %v4015
  %4030 = vst [vmem:[#allocation2 + $0x398] sm:$0xff] %v4012
  %4031 = vst [vmem:[#allocation2 + $0x3a0] sm:$0xff] %v4022
  %4032 = vst [vmem:[#allocation2 + $0x3a8] sm:$0xff] %v4019
  %4033 = vst [vmem:[#allocation2 + $0x3b0] sm:$0xff] %v4016
  %4034 = vst [vmem:[#allocation2 + $0x3b8] sm:$0xff] %v4013
  %4035 = vrot.lane.b32.xlu0 %v3290, 2
  %v4036 = vpop.permute.xlu0 %4035
  %4037 = vrot.lane.b32.xlu0 %v3296, 2
  %v4038 = vpop.permute.xlu0 %4037
  %4039 = vrot.lane.b32.xlu0 %v3302, 2
  %v4040 = vpop.permute.xlu0 %4039
  %4041 = vrot.lane.b32.xlu0 %v3292, 2
  %v4042 = vpop.permute.xlu0 %4041
  %4043 = vrot.lane.b32.xlu0 %v3298, 2
  %v4044 = vpop.permute.xlu0 %4043
  %4045 = vrot.lane.b32.xlu0 %v3304, 2
  %v4046 = vpop.permute.xlu0 %4045
  %4047 = vrot.lane.b32.xlu0 %v3539, 2
  %v4048 = vpop.permute.xlu0 %4047
  %4049 = vrot.lane.b32.xlu0 %v3545, 2
  %v4050 = vpop.permute.xlu0 %4049
  %4051 = vrot.lane.b32.xlu0 %v3551, 2
  %v4052 = vpop.permute.xlu0 %4051
  %4053 = vrot.lane.b32.xlu0 %v3541, 2
  %v4054 = vpop.permute.xlu0 %4053
  %4055 = vrot.lane.b32.xlu0 %v3547, 2
  %v4056 = vpop.permute.xlu0 %4055
  %4057 = vrot.lane.b32.xlu0 %v3553, 2
  %v4058 = vpop.permute.xlu0 %4057
  %v4059 = vsel %vm216, %v4048, %v4054
  %v4060 = vsel %vm216, %v4050, %v4056
  %v4061 = vsel %vm216, %v4052, %v4058
  %v4062 = vsel %vm216, %v4042, %v4048
  %v4063 = vsel %vm216, %v4044, %v4050
  %v4064 = vsel %vm216, %v4046, %v4052
  %v4065 = vsel %vm216, %v4036, %v4042
  %v4066 = vsel %vm216, %v4038, %v4044
  %v4067 = vsel %vm216, %v4040, %v4046
  %v4068 = vsel %vm216, %v4054, %v4036
  %v4069 = vsel %vm216, %v4056, %v4038
  %v4070 = vsel %vm216, %v4058, %v4040
  %4071 = vst [vmem:[#allocation2 + $0x3c0] sm:$0xff] %v4068
  %4072 = vst [vmem:[#allocation2 + $0x3c8] sm:$0xff] %v4065
  %4073 = vst [vmem:[#allocation2 + $0x3d0] sm:$0xff] %v4062
  %4074 = vst [vmem:[#allocation2 + $0x3d8] sm:$0xff] %v4059
  %4075 = vst [vmem:[#allocation2 + $0x3e0] sm:$0xff] %v4069
  %4076 = vst [vmem:[#allocation2 + $0x3e8] sm:$0xff] %v4066
  %4077 = vst [vmem:[#allocation2 + $0x3f0] sm:$0xff] %v4063
  %4078 = vst [vmem:[#allocation2 + $0x3f8] sm:$0xff] %v4060
  %4079 = vst [vmem:[#allocation2 + $0x400] sm:$0xff] %v4070
  %4080 = vst [vmem:[#allocation2 + $0x408] sm:$0xff] %v4067
  %4081 = vst [vmem:[#allocation2 + $0x410] sm:$0xff] %v4064
  %4082 = vst [vmem:[#allocation2 + $0x418] sm:$0xff] %v4061
  %4083 = vrot.lane.b32.xlu0 %v3290, 1
  %v4084 = vpop.permute.xlu0 %4083
  %4085 = vrot.lane.b32.xlu0 %v3296, 1
  %v4086 = vpop.permute.xlu0 %4085
  %4087 = vrot.lane.b32.xlu0 %v3302, 1
  %v4088 = vpop.permute.xlu0 %4087
  %4089 = vrot.lane.b32.xlu0 %v3292, 1
  %v4090 = vpop.permute.xlu0 %4089
  %4091 = vrot.lane.b32.xlu0 %v3298, 1
  %v4092 = vpop.permute.xlu0 %4091
  %4093 = vrot.lane.b32.xlu0 %v3304, 1
  %v4094 = vpop.permute.xlu0 %4093
  %4095 = vrot.lane.b32.xlu0 %v3539, 1
  %v4096 = vpop.permute.xlu0 %4095
  %4097 = vrot.lane.b32.xlu0 %v3545, 1
  %v4098 = vpop.permute.xlu0 %4097
  %4099 = vrot.lane.b32.xlu0 %v3551, 1
  %v4100 = vpop.permute.xlu0 %4099
  %4101 = vrot.lane.b32.xlu0 %v3541, 1
  %v4102 = vpop.permute.xlu0 %4101
  %4103 = vrot.lane.b32.xlu0 %v3547, 1
  %v4104 = vpop.permute.xlu0 %4103
  %4105 = vrot.lane.b32.xlu0 %v3553, 1
  %v4106 = vpop.permute.xlu0 %4105
  %v4107 = vsel %vm233, %v4096, %v4102
  %v4108 = vsel %vm233, %v4098, %v4104
  %v4109 = vsel %vm233, %v4100, %v4106
  %v4110 = vsel %vm233, %v4090, %v4096
  %v4111 = vsel %vm233, %v4092, %v4098
  %v4112 = vsel %vm233, %v4094, %v4100
  %v4113 = vsel %vm233, %v4084, %v4090
  %v4114 = vsel %vm233, %v4086, %v4092
  %v4115 = vsel %vm233, %v4088, %v4094
  %v4116 = vsel %vm233, %v4102, %v4084
  %v4117 = vsel %vm233, %v4104, %v4086
  %v4118 = vsel %vm233, %v4106, %v4088
  %4119 = vst [vmem:[#allocation2 + $0x420] sm:$0xff] %v4116
  %4120 = vst [vmem:[#allocation2 + $0x428] sm:$0xff] %v4113
  %4121 = vst [vmem:[#allocation2 + $0x430] sm:$0xff] %v4110
  %4122 = vst [vmem:[#allocation2 + $0x438] sm:$0xff] %v4107
  %4123 = vst [vmem:[#allocation2 + $0x440] sm:$0xff] %v4117
  %4124 = vst [vmem:[#allocation2 + $0x448] sm:$0xff] %v4114
  %4125 = vst [vmem:[#allocation2 + $0x450] sm:$0xff] %v4111
  %4126 = vst [vmem:[#allocation2 + $0x458] sm:$0xff] %v4108
  %4127 = vst [vmem:[#allocation2 + $0x460] sm:$0xff] %v4118
  %4128 = vst [vmem:[#allocation2 + $0x468] sm:$0xff] %v4115
  %4129 = vst [vmem:[#allocation2 + $0x470] sm:$0xff] %v4112
  %4130 = vst [vmem:[#allocation2 + $0x478] sm:$0xff] %v4109
  %4131 = vst [vmem:[#allocation2 + $0x480] sm:$0xff] %v3290
  %4132 = vst [vmem:[#allocation2 + $0x488] sm:$0xff] %v3292
  %4133 = vst [vmem:[#allocation2 + $0x490] sm:$0xff] %v3539
  %4134 = vst [vmem:[#allocation2 + $0x498] sm:$0xff] %v3541
  %4135 = vst [vmem:[#allocation2 + $0x4a0] sm:$0xff] %v3296
  %4136 = vst [vmem:[#allocation2 + $0x4a8] sm:$0xff] %v3298
  %4137 = vst [vmem:[#allocation2 + $0x4b0] sm:$0xff] %v3545
  %4138 = vst [vmem:[#allocation2 + $0x4b8] sm:$0xff] %v3547
  %4139 = vst [vmem:[#allocation2 + $0x4c0] sm:$0xff] %v3302
  %4140 = vst [vmem:[#allocation2 + $0x4c8] sm:$0xff] %v3304
  %4141 = vst [vmem:[#allocation2 + $0x4d0] sm:$0xff] %v3551
  %4142 = vst [vmem:[#allocation2 + $0x4d8] sm:$0xff] %v3553
  %4143 = vrot.lane.b32.xlu0 %v3290, 127
  %v4144 = vpop.permute.xlu0 %4143
  %4145 = vrot.lane.b32.xlu0 %v3296, 127
  %v4146 = vpop.permute.xlu0 %4145
  %4147 = vrot.lane.b32.xlu0 %v3302, 127
  %v4148 = vpop.permute.xlu0 %4147
  %4149 = vrot.lane.b32.xlu0 %v3292, 127
  %v4150 = vpop.permute.xlu0 %4149
  %4151 = vrot.lane.b32.xlu0 %v3298, 127
  %v4152 = vpop.permute.xlu0 %4151
  %4153 = vrot.lane.b32.xlu0 %v3304, 127
  %v4154 = vpop.permute.xlu0 %4153
  %4155 = vrot.lane.b32.xlu0 %v3539, 127
  %v4156 = vpop.permute.xlu0 %4155
  %4157 = vrot.lane.b32.xlu0 %v3545, 127
  %v4158 = vpop.permute.xlu0 %4157
  %4159 = vrot.lane.b32.xlu0 %v3551, 127
  %v4160 = vpop.permute.xlu0 %4159
  %4161 = vrot.lane.b32.xlu0 %v3541, 127
  %v4162 = vpop.permute.xlu0 %4161
  %4163 = vrot.lane.b32.xlu0 %v3547, 127
  %v4164 = vpop.permute.xlu0 %4163
  %4165 = vrot.lane.b32.xlu0 %v3553, 127
  %v4166 = vpop.permute.xlu0 %4165
  %v4167 = vsel %vm254, %v4156, %v4162
  %v4168 = vsel %vm254, %v4158, %v4164
  %v4169 = vsel %vm254, %v4160, %v4166
  %v4170 = vsel %vm254, %v4150, %v4156
  %v4171 = vsel %vm254, %v4152, %v4158
  %v4172 = vsel %vm254, %v4154, %v4160
  %v4173 = vsel %vm254, %v4144, %v4150
  %v4174 = vsel %vm254, %v4146, %v4152
  %v4175 = vsel %vm254, %v4148, %v4154
  %v4176 = vsel %vm254, %v4162, %v4144
  %v4177 = vsel %vm254, %v4164, %v4146
  %v4178 = vsel %vm254, %v4166, %v4148
  %4179 = vst [vmem:[#allocation2 + $0x4e0] sm:$0xff] %v4173
  %4180 = vst [vmem:[#allocation2 + $0x4e8] sm:$0xff] %v4170
  %4181 = vst [vmem:[#allocation2 + $0x4f0] sm:$0xff] %v4167
  %4182 = vst [vmem:[#allocation2 + $0x4f8] sm:$0xff] %v4176
  %4183 = vst [vmem:[#allocation2 + $0x500] sm:$0xff] %v4174
  %4184 = vst [vmem:[#allocation2 + $0x508] sm:$0xff] %v4171
  %4185 = vst [vmem:[#allocation2 + $0x510] sm:$0xff] %v4168
  %4186 = vst [vmem:[#allocation2 + $0x518] sm:$0xff] %v4177
  %4187 = vst [vmem:[#allocation2 + $0x520] sm:$0xff] %v4175
  %4188 = vst [vmem:[#allocation2 + $0x528] sm:$0xff] %v4172
  %4189 = vst [vmem:[#allocation2 + $0x530] sm:$0xff] %v4169
  %4190 = vst [vmem:[#allocation2 + $0x538] sm:$0xff] %v4178
  %4191 = vrot.lane.b32.xlu0 %v3290, 126
  %v4192 = vpop.permute.xlu0 %4191
  %4193 = vrot.lane.b32.xlu0 %v3296, 126
  %v4194 = vpop.permute.xlu0 %4193
  %4195 = vrot.lane.b32.xlu0 %v3302, 126
  %v4196 = vpop.permute.xlu0 %4195
  %4197 = vrot.lane.b32.xlu0 %v3292, 126
  %v4198 = vpop.permute.xlu0 %4197
  %4199 = vrot.lane.b32.xlu0 %v3298, 126
  %v4200 = vpop.permute.xlu0 %4199
  %4201 = vrot.lane.b32.xlu0 %v3304, 126
  %v4202 = vpop.permute.xlu0 %4201
  %4203 = vrot.lane.b32.xlu0 %v3539, 126
  %v4204 = vpop.permute.xlu0 %4203
  %4205 = vrot.lane.b32.xlu0 %v3545, 126
  %v4206 = vpop.permute.xlu0 %4205
  %4207 = vrot.lane.b32.xlu0 %v3551, 126
  %v4208 = vpop.permute.xlu0 %4207
  %4209 = vrot.lane.b32.xlu0 %v3541, 126
  %v4210 = vpop.permute.xlu0 %4209
  %4211 = vrot.lane.b32.xlu0 %v3547, 126
  %v4212 = vpop.permute.xlu0 %4211
  %4213 = vrot.lane.b32.xlu0 %v3553, 126
  %v4214 = vpop.permute.xlu0 %4213
  %v4215 = vsel %vm271, %v4204, %v4210
  %v4216 = vsel %vm271, %v4206, %v4212
  %v4217 = vsel %vm271, %v4208, %v4214
  %v4218 = vsel %vm271, %v4198, %v4204
  %v4219 = vsel %vm271, %v4200, %v4206
  %v4220 = vsel %vm271, %v4202, %v4208
  %v4221 = vsel %vm271, %v4192, %v4198
  %v4222 = vsel %vm271, %v4194, %v4200
  %v4223 = vsel %vm271, %v4196, %v4202
  %v4224 = vsel %vm271, %v4210, %v4192
  %v4225 = vsel %vm271, %v4212, %v4194
  %v4226 = vsel %vm271, %v4214, %v4196
  %4227 = vst [vmem:[#allocation2 + $0x540] sm:$0xff] %v4221
  %4228 = vst [vmem:[#allocation2 + $0x548] sm:$0xff] %v4218
  %4229 = vst [vmem:[#allocation2 + $0x550] sm:$0xff] %v4215
  %4230 = vst [vmem:[#allocation2 + $0x558] sm:$0xff] %v4224
  %4231 = vst [vmem:[#allocation2 + $0x560] sm:$0xff] %v4222
  %4232 = vst [vmem:[#allocation2 + $0x568] sm:$0xff] %v4219
  %4233 = vst [vmem:[#allocation2 + $0x570] sm:$0xff] %v4216
  %4234 = vst [vmem:[#allocation2 + $0x578] sm:$0xff] %v4225
  %4235 = vst [vmem:[#allocation2 + $0x580] sm:$0xff] %v4223
  %4236 = vst [vmem:[#allocation2 + $0x588] sm:$0xff] %v4220
  %4237 = vst [vmem:[#allocation2 + $0x590] sm:$0xff] %v4217
  %4238 = vst [vmem:[#allocation2 + $0x598] sm:$0xff] %v4226
  %4239 = vrot.lane.b32.xlu0 %v3290, 114
  %v4240 = vpop.permute.xlu0 %4239
  %4241 = vrot.lane.b32.xlu0 %v3296, 114
  %v4242 = vpop.permute.xlu0 %4241
  %4243 = vrot.lane.b32.xlu0 %v3302, 114
  %v4244 = vpop.permute.xlu0 %4243
  %4245 = vrot.lane.b32.xlu0 %v3292, 114
  %v4246 = vpop.permute.xlu0 %4245
  %4247 = vrot.lane.b32.xlu0 %v3298, 114
  %v4248 = vpop.permute.xlu0 %4247
  %4249 = vrot.lane.b32.xlu0 %v3304, 114
  %v4250 = vpop.permute.xlu0 %4249
  %4251 = vrot.lane.b32.xlu0 %v3539, 114
  %v4252 = vpop.permute.xlu0 %4251
  %4253 = vrot.lane.b32.xlu0 %v3545, 114
  %v4254 = vpop.permute.xlu0 %4253
  %4255 = vrot.lane.b32.xlu0 %v3551, 114
  %v4256 = vpop.permute.xlu0 %4255
  %4257 = vrot.lane.b32.xlu0 %v3541, 114
  %v4258 = vpop.permute.xlu0 %4257
  %4259 = vrot.lane.b32.xlu0 %v3547, 114
  %v4260 = vpop.permute.xlu0 %4259
  %4261 = vrot.lane.b32.xlu0 %v3553, 114
  %v4262 = vpop.permute.xlu0 %4261
  %v4263 = vsel %vm288, %v4252, %v4258
  %v4264 = vsel %vm288, %v4254, %v4260
  %v4265 = vsel %vm288, %v4256, %v4262
  %v4266 = vsel %vm288, %v4246, %v4252
  %v4267 = vsel %vm288, %v4248, %v4254
  %v4268 = vsel %vm288, %v4250, %v4256
  %v4269 = vsel %vm288, %v4240, %v4246
  %v4270 = vsel %vm288, %v4242, %v4248
  %v4271 = vsel %vm288, %v4244, %v4250
  %v4272 = vsel %vm288, %v4258, %v4240
  %v4273 = vsel %vm288, %v4260, %v4242
  %v4274 = vsel %vm288, %v4262, %v4244
  %4275 = vst [vmem:[#allocation2 + $0x5a0] sm:$0xff] %v4269
  %4276 = vst [vmem:[#allocation2 + $0x5a8] sm:$0xff] %v4266
  %4277 = vst [vmem:[#allocation2 + $0x5b0] sm:$0xff] %v4263
  %4278 = vst [vmem:[#allocation2 + $0x5b8] sm:$0xff] %v4272
  %4279 = vst [vmem:[#allocation2 + $0x5c0] sm:$0xff] %v4270
  %4280 = vst [vmem:[#allocation2 + $0x5c8] sm:$0xff] %v4267
  %4281 = vst [vmem:[#allocation2 + $0x5d0] sm:$0xff] %v4264
  %4282 = vst [vmem:[#allocation2 + $0x5d8] sm:$0xff] %v4273
  %4283 = vst [vmem:[#allocation2 + $0x5e0] sm:$0xff] %v4271
  %4284 = vst [vmem:[#allocation2 + $0x5e8] sm:$0xff] %v4268
  %4285 = vst [vmem:[#allocation2 + $0x5f0] sm:$0xff] %v4265
  %4286 = vst [vmem:[#allocation2 + $0x5f8] sm:$0xff] %v4274
  %4287 = vrot.lane.b32.xlu0 %v3290, 113
  %v4288 = vpop.permute.xlu0 %4287
  %4289 = vrot.lane.b32.xlu0 %v3296, 113
  %v4290 = vpop.permute.xlu0 %4289
  %4291 = vrot.lane.b32.xlu0 %v3302, 113
  %v4292 = vpop.permute.xlu0 %4291
  %4293 = vrot.lane.b32.xlu0 %v3292, 113
  %v4294 = vpop.permute.xlu0 %4293
  %4295 = vrot.lane.b32.xlu0 %v3298, 113
  %v4296 = vpop.permute.xlu0 %4295
  %4297 = vrot.lane.b32.xlu0 %v3304, 113
  %v4298 = vpop.permute.xlu0 %4297
  %4299 = vrot.lane.b32.xlu0 %v3539, 113
  %v4300 = vpop.permute.xlu0 %4299
  %4301 = vrot.lane.b32.xlu0 %v3545, 113
  %v4302 = vpop.permute.xlu0 %4301
  %4303 = vrot.lane.b32.xlu0 %v3551, 113
  %v4304 = vpop.permute.xlu0 %4303
  %4305 = vrot.lane.b32.xlu0 %v3541, 113
  %v4306 = vpop.permute.xlu0 %4305
  %4307 = vrot.lane.b32.xlu0 %v3547, 113
  %v4308 = vpop.permute.xlu0 %4307
  %4309 = vrot.lane.b32.xlu0 %v3553, 113
  %v4310 = vpop.permute.xlu0 %4309
  %v4311 = vsel %vm305, %v4300, %v4306
  %v4312 = vsel %vm305, %v4302, %v4308
  %v4313 = vsel %vm305, %v4304, %v4310
  %v4314 = vsel %vm305, %v4294, %v4300
  %v4315 = vsel %vm305, %v4296, %v4302
  %v4316 = vsel %vm305, %v4298, %v4304
  %v4317 = vsel %vm305, %v4288, %v4294
  %v4318 = vsel %vm305, %v4290, %v4296
  %v4319 = vsel %vm305, %v4292, %v4298
  %v4320 = vsel %vm305, %v4306, %v4288
  %v4321 = vsel %vm305, %v4308, %v4290
  %v4322 = vsel %vm305, %v4310, %v4292
  %4323 = vst [vmem:[#allocation2 + $0x600] sm:$0xff] %v4317
  %4324 = vst [vmem:[#allocation2 + $0x608] sm:$0xff] %v4314
  %4325 = vst [vmem:[#allocation2 + $0x610] sm:$0xff] %v4311
  %4326 = vst [vmem:[#allocation2 + $0x618] sm:$0xff] %v4320
  %4327 = vst [vmem:[#allocation2 + $0x620] sm:$0xff] %v4318
  %4328 = vst [vmem:[#allocation2 + $0x628] sm:$0xff] %v4315
  %4329 = vst [vmem:[#allocation2 + $0x630] sm:$0xff] %v4312
  %4330 = vst [vmem:[#allocation2 + $0x638] sm:$0xff] %v4321
  %4331 = vst [vmem:[#allocation2 + $0x640] sm:$0xff] %v4319
  %4332 = vst [vmem:[#allocation2 + $0x648] sm:$0xff] %v4316
  %4333 = vst [vmem:[#allocation2 + $0x650] sm:$0xff] %v4313
  %4334 = vst [vmem:[#allocation2 + $0x658] sm:$0xff] %v4322
  %4335 = vrot.lane.b32.xlu0 %v3290, 112
  %v4336 = vpop.permute.xlu0 %4335
  %4337 = vrot.lane.b32.xlu0 %v3296, 112
  %v4338 = vpop.permute.xlu0 %4337
  %4339 = vrot.lane.b32.xlu0 %v3302, 112
  %v4340 = vpop.permute.xlu0 %4339
  %4341 = vrot.lane.b32.xlu0 %v3292, 112
  %v4342 = vpop.permute.xlu0 %4341
  %4343 = vrot.lane.b32.xlu0 %v3298, 112
  %v4344 = vpop.permute.xlu0 %4343
  %4345 = vrot.lane.b32.xlu0 %v3304, 112
  %v4346 = vpop.permute.xlu0 %4345
  %4347 = vrot.lane.b32.xlu0 %v3539, 112
  %v4348 = vpop.permute.xlu0 %4347
  %4349 = vrot.lane.b32.xlu0 %v3545, 112
  %v4350 = vpop.permute.xlu0 %4349
  %4351 = vrot.lane.b32.xlu0 %v3551, 112
  %v4352 = vpop.permute.xlu0 %4351
  %4353 = vrot.lane.b32.xlu0 %v3541, 112
  %v4354 = vpop.permute.xlu0 %4353
  %4355 = vrot.lane.b32.xlu0 %v3547, 112
  %v4356 = vpop.permute.xlu0 %4355
  %4357 = vrot.lane.b32.xlu0 %v3553, 112
  %v4358 = vpop.permute.xlu0 %4357
  %v4359 = vsel %vm322, %v4348, %v4354
  %v4360 = vsel %vm322, %v4350, %v4356
  %v4361 = vsel %vm322, %v4352, %v4358
  %v4362 = vsel %vm322, %v4342, %v4348
  %v4363 = vsel %vm322, %v4344, %v4350
  %v4364 = vsel %vm322, %v4346, %v4352
  %v4365 = vsel %vm322, %v4336, %v4342
  %v4366 = vsel %vm322, %v4338, %v4344
  %v4367 = vsel %vm322, %v4340, %v4346
  %v4368 = vsel %vm322, %v4354, %v4336
  %v4369 = vsel %vm322, %v4356, %v4338
  %v4370 = vsel %vm322, %v4358, %v4340
  %4371 = vst [vmem:[#allocation2 + $0x660] sm:$0xff] %v4365
  %4372 = vst [vmem:[#allocation2 + $0x668] sm:$0xff] %v4362
  %4373 = vst [vmem:[#allocation2 + $0x670] sm:$0xff] %v4359
  %4374 = vst [vmem:[#allocation2 + $0x678] sm:$0xff] %v4368
  %4375 = vst [vmem:[#allocation2 + $0x680] sm:$0xff] %v4366
  %4376 = vst [vmem:[#allocation2 + $0x688] sm:$0xff] %v4363
  %4377 = vst [vmem:[#allocation2 + $0x690] sm:$0xff] %v4360
  %4378 = vst [vmem:[#allocation2 + $0x698] sm:$0xff] %v4369
  %4379 = vst [vmem:[#allocation2 + $0x6a0] sm:$0xff] %v4367
  %4380 = vst [vmem:[#allocation2 + $0x6a8] sm:$0xff] %v4364
  %4381 = vst [vmem:[#allocation2 + $0x6b0] sm:$0xff] %v4361
  %4382 = vst [vmem:[#allocation2 + $0x6b8] sm:$0xff] %v4370
  %4383 = vrot.lane.b32.xlu0 %v3290, 111
  %v4384 = vpop.permute.xlu0 %4383
  %4385 = vrot.lane.b32.xlu0 %v3296, 111
  %v4386 = vpop.permute.xlu0 %4385
  %4387 = vrot.lane.b32.xlu0 %v3302, 111
  %v4388 = vpop.permute.xlu0 %4387
  %4389 = vrot.lane.b32.xlu0 %v3292, 111
  %v4390 = vpop.permute.xlu0 %4389
  %4391 = vrot.lane.b32.xlu0 %v3298, 111
  %v4392 = vpop.permute.xlu0 %4391
  %4393 = vrot.lane.b32.xlu0 %v3304, 111
  %v4394 = vpop.permute.xlu0 %4393
  %4395 = vrot.lane.b32.xlu0 %v3539, 111
  %v4396 = vpop.permute.xlu0 %4395
  %4397 = vrot.lane.b32.xlu0 %v3545, 111
  %v4398 = vpop.permute.xlu0 %4397
  %4399 = vrot.lane.b32.xlu0 %v3551, 111
  %v4400 = vpop.permute.xlu0 %4399
  %4401 = vrot.lane.b32.xlu0 %v3541, 111
  %v4402 = vpop.permute.xlu0 %4401
  %4403 = vrot.lane.b32.xlu0 %v3547, 111
  %v4404 = vpop.permute.xlu0 %4403
  %4405 = vrot.lane.b32.xlu0 %v3553, 111
  %v4406 = vpop.permute.xlu0 %4405
  %v4407 = vsel %vm339, %v4396, %v4402
  %v4408 = vsel %vm339, %v4398, %v4404
  %v4409 = vsel %vm339, %v4400, %v4406
  %v4410 = vsel %vm339, %v4390, %v4396
  %v4411 = vsel %vm339, %v4392, %v4398
  %v4412 = vsel %vm339, %v4394, %v4400
  %v4413 = vsel %vm339, %v4384, %v4390
  %v4414 = vsel %vm339, %v4386, %v4392
  %v4415 = vsel %vm339, %v4388, %v4394
  %v4416 = vsel %vm339, %v4402, %v4384
  %v4417 = vsel %vm339, %v4404, %v4386
  %v4418 = vsel %vm339, %v4406, %v4388
  %4419 = vst [vmem:[#allocation2 + $0x6c0] sm:$0xff] %v4413
  %4420 = vst [vmem:[#allocation2 + $0x6c8] sm:$0xff] %v4410
  %4421 = vst [vmem:[#allocation2 + $0x6d0] sm:$0xff] %v4407
  %4422 = vst [vmem:[#allocation2 + $0x6d8] sm:$0xff] %v4416
  %4423 = vst [vmem:[#allocation2 + $0x6e0] sm:$0xff] %v4414
  %4424 = vst [vmem:[#allocation2 + $0x6e8] sm:$0xff] %v4411
  %4425 = vst [vmem:[#allocation2 + $0x6f0] sm:$0xff] %v4408
  %4426 = vst [vmem:[#allocation2 + $0x6f8] sm:$0xff] %v4417
  %4427 = vst [vmem:[#allocation2 + $0x700] sm:$0xff] %v4415
  %4428 = vst [vmem:[#allocation2 + $0x708] sm:$0xff] %v4412
  %4429 = vst [vmem:[#allocation2 + $0x710] sm:$0xff] %v4409
  %4430 = vst [vmem:[#allocation2 + $0x718] sm:$0xff] %v4418
  %4431 = vrot.lane.b32.xlu0 %v3290, 110
  %v4432 = vpop.permute.xlu0 %4431
  %4433 = vrot.lane.b32.xlu0 %v3296, 110
  %v4434 = vpop.permute.xlu0 %4433
  %4435 = vrot.lane.b32.xlu0 %v3302, 110
  %v4436 = vpop.permute.xlu0 %4435
  %4437 = vrot.lane.b32.xlu0 %v3292, 110
  %v4438 = vpop.permute.xlu0 %4437
  %4439 = vrot.lane.b32.xlu0 %v3298, 110
  %v4440 = vpop.permute.xlu0 %4439
  %4441 = vrot.lane.b32.xlu0 %v3304, 110
  %v4442 = vpop.permute.xlu0 %4441
  %4443 = vrot.lane.b32.xlu0 %v3539, 110
  %v4444 = vpop.permute.xlu0 %4443
  %4445 = vrot.lane.b32.xlu0 %v3545, 110
  %v4446 = vpop.permute.xlu0 %4445
  %4447 = vrot.lane.b32.xlu0 %v3551, 110
  %v4448 = vpop.permute.xlu0 %4447
  %4449 = vrot.lane.b32.xlu0 %v3541, 110
  %v4450 = vpop.permute.xlu0 %4449
  %4451 = vrot.lane.b32.xlu0 %v3547, 110
  %v4452 = vpop.permute.xlu0 %4451
  %4453 = vrot.lane.b32.xlu0 %v3553, 110
  %v4454 = vpop.permute.xlu0 %4453
  %v4455 = vsel %vm356, %v4444, %v4450
  %v4456 = vsel %vm356, %v4446, %v4452
  %v4457 = vsel %vm356, %v4448, %v4454
  %v4458 = vsel %vm356, %v4438, %v4444
  %v4459 = vsel %vm356, %v4440, %v4446
  %v4460 = vsel %vm356, %v4442, %v4448
  %v4461 = vsel %vm356, %v4432, %v4438
  %v4462 = vsel %vm356, %v4434, %v4440
  %v4463 = vsel %vm356, %v4436, %v4442
  %v4464 = vsel %vm356, %v4450, %v4432
  %v4465 = vsel %vm356, %v4452, %v4434
  %v4466 = vsel %vm356, %v4454, %v4436
  %4467 = vst [vmem:[#allocation2 + $0x720] sm:$0xff] %v4461
  %4468 = vst [vmem:[#allocation2 + $0x728] sm:$0xff] %v4458
  %4469 = vst [vmem:[#allocation2 + $0x730] sm:$0xff] %v4455
  %4470 = vst [vmem:[#allocation2 + $0x738] sm:$0xff] %v4464
  %4471 = vst [vmem:[#allocation2 + $0x740] sm:$0xff] %v4462
  %4472 = vst [vmem:[#allocation2 + $0x748] sm:$0xff] %v4459
  %4473 = vst [vmem:[#allocation2 + $0x750] sm:$0xff] %v4456
  %4474 = vst [vmem:[#allocation2 + $0x758] sm:$0xff] %v4465
  %4475 = vst [vmem:[#allocation2 + $0x760] sm:$0xff] %v4463
  %4476 = vst [vmem:[#allocation2 + $0x768] sm:$0xff] %v4460
  %4477 = vst [vmem:[#allocation2 + $0x770] sm:$0xff] %v4457
  %4478 = vst [vmem:[#allocation2 + $0x778] sm:$0xff] %v4466
  %4479 = vrot.lane.b32.xlu0 %v3290, 98
  %v4480 = vpop.permute.xlu0 %4479
  %4481 = vrot.lane.b32.xlu0 %v3296, 98
  %v4482 = vpop.permute.xlu0 %4481
  %4483 = vrot.lane.b32.xlu0 %v3302, 98
  %v4484 = vpop.permute.xlu0 %4483
  %4485 = vrot.lane.b32.xlu0 %v3292, 98
  %v4486 = vpop.permute.xlu0 %4485
  %4487 = vrot.lane.b32.xlu0 %v3298, 98
  %v4488 = vpop.permute.xlu0 %4487
  %4489 = vrot.lane.b32.xlu0 %v3304, 98
  %v4490 = vpop.permute.xlu0 %4489
  %4491 = vrot.lane.b32.xlu0 %v3539, 98
  %v4492 = vpop.permute.xlu0 %4491
  %4493 = vrot.lane.b32.xlu0 %v3545, 98
  %v4494 = vpop.permute.xlu0 %4493
  %4495 = vrot.lane.b32.xlu0 %v3551, 98
  %v4496 = vpop.permute.xlu0 %4495
  %4497 = vrot.lane.b32.xlu0 %v3541, 98
  %v4498 = vpop.permute.xlu0 %4497
  %4499 = vrot.lane.b32.xlu0 %v3547, 98
  %v4500 = vpop.permute.xlu0 %4499
  %4501 = vrot.lane.b32.xlu0 %v3553, 98
  %v4502 = vpop.permute.xlu0 %4501
  %v4503 = vsel %vm373, %v4492, %v4498
  %v4504 = vsel %vm373, %v4494, %v4500
  %v4505 = vsel %vm373, %v4496, %v4502
  %v4506 = vsel %vm373, %v4486, %v4492
  %v4507 = vsel %vm373, %v4488, %v4494
  %v4508 = vsel %vm373, %v4490, %v4496
  %v4509 = vsel %vm373, %v4480, %v4486
  %v4510 = vsel %vm373, %v4482, %v4488
  %v4511 = vsel %vm373, %v4484, %v4490
  %v4512 = vsel %vm373, %v4498, %v4480
  %v4513 = vsel %vm373, %v4500, %v4482
  %v4514 = vsel %vm373, %v4502, %v4484
  %4515 = vst [vmem:[#allocation2 + $0x780] sm:$0xff] %v4509
  %4516 = vst [vmem:[#allocation2 + $0x788] sm:$0xff] %v4506
  %4517 = vst [vmem:[#allocation2 + $0x790] sm:$0xff] %v4503
  %4518 = vst [vmem:[#allocation2 + $0x798] sm:$0xff] %v4512
  %4519 = vst [vmem:[#allocation2 + $0x7a0] sm:$0xff] %v4510
  %4520 = vst [vmem:[#allocation2 + $0x7a8] sm:$0xff] %v4507
  %4521 = vst [vmem:[#allocation2 + $0x7b0] sm:$0xff] %v4504
  %4522 = vst [vmem:[#allocation2 + $0x7b8] sm:$0xff] %v4513
  %4523 = vst [vmem:[#allocation2 + $0x7c0] sm:$0xff] %v4511
  %4524 = vst [vmem:[#allocation2 + $0x7c8] sm:$0xff] %v4508
  %4525 = vst [vmem:[#allocation2 + $0x7d0] sm:$0xff] %v4505
  %4526 = vst [vmem:[#allocation2 + $0x7d8] sm:$0xff] %v4514
  %4527 = vrot.lane.b32.xlu0 %v3290, 97
  %v4528 = vpop.permute.xlu0 %4527
  %4529 = vrot.lane.b32.xlu0 %v3296, 97
  %v4530 = vpop.permute.xlu0 %4529
  %4531 = vrot.lane.b32.xlu0 %v3302, 97
  %v4532 = vpop.permute.xlu0 %4531
  %4533 = vrot.lane.b32.xlu0 %v3292, 97
  %v4534 = vpop.permute.xlu0 %4533
  %4535 = vrot.lane.b32.xlu0 %v3298, 97
  %v4536 = vpop.permute.xlu0 %4535
  %4537 = vrot.lane.b32.xlu0 %v3304, 97
  %v4538 = vpop.permute.xlu0 %4537
  %4539 = vrot.lane.b32.xlu0 %v3539, 97
  %v4540 = vpop.permute.xlu0 %4539
  %4541 = vrot.lane.b32.xlu0 %v3545, 97
  %v4542 = vpop.permute.xlu0 %4541
  %4543 = vrot.lane.b32.xlu0 %v3551, 97
  %v4544 = vpop.permute.xlu0 %4543
  %4545 = vrot.lane.b32.xlu0 %v3541, 97
  %v4546 = vpop.permute.xlu0 %4545
  %4547 = vrot.lane.b32.xlu0 %v3547, 97
  %v4548 = vpop.permute.xlu0 %4547
  %4549 = vrot.lane.b32.xlu0 %v3553, 97
  %v4550 = vpop.permute.xlu0 %4549
  %v4551 = vsel %vm390, %v4540, %v4546
  %v4552 = vsel %vm390, %v4542, %v4548
  %v4553 = vsel %vm390, %v4544, %v4550
  %v4554 = vsel %vm390, %v4534, %v4540
  %v4555 = vsel %vm390, %v4536, %v4542
  %v4556 = vsel %vm390, %v4538, %v4544
  %v4557 = vsel %vm390, %v4528, %v4534
  %v4558 = vsel %vm390, %v4530, %v4536
  %v4559 = vsel %vm390, %v4532, %v4538
  %v4560 = vsel %vm390, %v4546, %v4528
  %v4561 = vsel %vm390, %v4548, %v4530
  %v4562 = vsel %vm390, %v4550, %v4532
  %4563 = vst [vmem:[#allocation2 + $0x7e0] sm:$0xff] %v4557
  %4564 = vst [vmem:[#allocation2 + $0x7e8] sm:$0xff] %v4554
  %4565 = vst [vmem:[#allocation2 + $0x7f0] sm:$0xff] %v4551
  %4566 = vst [vmem:[#allocation2 + $0x7f8] sm:$0xff] %v4560
  %4567 = vst [vmem:[#allocation2 + $0x800] sm:$0xff] %v4558
  %4568 = vst [vmem:[#allocation2 + $0x808] sm:$0xff] %v4555
  %4569 = vst [vmem:[#allocation2 + $0x810] sm:$0xff] %v4552
  %4570 = vst [vmem:[#allocation2 + $0x818] sm:$0xff] %v4561
  %4571 = vst [vmem:[#allocation2 + $0x820] sm:$0xff] %v4559
  %4572 = vst [vmem:[#allocation2 + $0x828] sm:$0xff] %v4556
  %4573 = vst [vmem:[#allocation2 + $0x830] sm:$0xff] %v4553
  %4574 = vst [vmem:[#allocation2 + $0x838] sm:$0xff] %v4562
  %4575 = vrot.lane.b32.xlu0 %v3290, 96
  %v4576 = vpop.permute.xlu0 %4575
  %4577 = vrot.lane.b32.xlu0 %v3296, 96
  %v4578 = vpop.permute.xlu0 %4577
  %4579 = vrot.lane.b32.xlu0 %v3302, 96
  %v4580 = vpop.permute.xlu0 %4579
  %4581 = vrot.lane.b32.xlu0 %v3292, 96
  %v4582 = vpop.permute.xlu0 %4581
  %4583 = vrot.lane.b32.xlu0 %v3298, 96
  %v4584 = vpop.permute.xlu0 %4583
  %4585 = vrot.lane.b32.xlu0 %v3304, 96
  %v4586 = vpop.permute.xlu0 %4585
  %4587 = vrot.lane.b32.xlu0 %v3539, 96
  %v4588 = vpop.permute.xlu0 %4587
  %4589 = vrot.lane.b32.xlu0 %v3545, 96
  %v4590 = vpop.permute.xlu0 %4589
  %4591 = vrot.lane.b32.xlu0 %v3551, 96
  %v4592 = vpop.permute.xlu0 %4591
  %4593 = vrot.lane.b32.xlu0 %v3541, 96
  %v4594 = vpop.permute.xlu0 %4593
  %4595 = vrot.lane.b32.xlu0 %v3547, 96
  %v4596 = vpop.permute.xlu0 %4595
  %4597 = vrot.lane.b32.xlu0 %v3553, 96
  %v4598 = vpop.permute.xlu0 %4597
  %v4599 = vsel %vm407, %v4588, %v4594
  %v4600 = vsel %vm407, %v4590, %v4596
  %v4601 = vsel %vm407, %v4592, %v4598
  %v4602 = vsel %vm407, %v4582, %v4588
  %v4603 = vsel %vm407, %v4584, %v4590
  %v4604 = vsel %vm407, %v4586, %v4592
  %v4605 = vsel %vm407, %v4576, %v4582
  %v4606 = vsel %vm407, %v4578, %v4584
  %v4607 = vsel %vm407, %v4580, %v4586
  %v4608 = vsel %vm407, %v4594, %v4576
  %v4609 = vsel %vm407, %v4596, %v4578
  %v4610 = vsel %vm407, %v4598, %v4580
  %4611 = vst [vmem:[#allocation2 + $0x840] sm:$0xff] %v4605
  %4612 = vst [vmem:[#allocation2 + $0x848] sm:$0xff] %v4602
  %4613 = vst [vmem:[#allocation2 + $0x850] sm:$0xff] %v4599
  %4614 = vst [vmem:[#allocation2 + $0x858] sm:$0xff] %v4608
  %4615 = vst [vmem:[#allocation2 + $0x860] sm:$0xff] %v4606
  %4616 = vst [vmem:[#allocation2 + $0x868] sm:$0xff] %v4603
  %4617 = vst [vmem:[#allocation2 + $0x870] sm:$0xff] %v4600
  %4618 = vst [vmem:[#allocation2 + $0x878] sm:$0xff] %v4609
  %4619 = vst [vmem:[#allocation2 + $0x880] sm:$0xff] %v4607
  %4620 = vst [vmem:[#allocation2 + $0x888] sm:$0xff] %v4604
  %4621 = vst [vmem:[#allocation2 + $0x890] sm:$0xff] %v4601
  %4622 = vst [vmem:[#allocation2 + $0x898] sm:$0xff] %v4610
  %4623 = vrot.lane.b32.xlu0 %v3290, 95
  %v4624 = vpop.permute.xlu0 %4623
  %4625 = vrot.lane.b32.xlu0 %v3296, 95
  %v4626 = vpop.permute.xlu0 %4625
  %4627 = vrot.lane.b32.xlu0 %v3302, 95
  %v4628 = vpop.permute.xlu0 %4627
  %4629 = vrot.lane.b32.xlu0 %v3292, 95
  %v4630 = vpop.permute.xlu0 %4629
  %4631 = vrot.lane.b32.xlu0 %v3298, 95
  %v4632 = vpop.permute.xlu0 %4631
  %4633 = vrot.lane.b32.xlu0 %v3304, 95
  %v4634 = vpop.permute.xlu0 %4633
  %4635 = vrot.lane.b32.xlu0 %v3539, 95
  %v4636 = vpop.permute.xlu0 %4635
  %4637 = vrot.lane.b32.xlu0 %v3545, 95
  %v4638 = vpop.permute.xlu0 %4637
  %4639 = vrot.lane.b32.xlu0 %v3551, 95
  %v4640 = vpop.permute.xlu0 %4639
  %4641 = vrot.lane.b32.xlu0 %v3541, 95
  %v4642 = vpop.permute.xlu0 %4641
  %4643 = vrot.lane.b32.xlu0 %v3547, 95
  %v4644 = vpop.permute.xlu0 %4643
  %4645 = vrot.lane.b32.xlu0 %v3553, 95
  %v4646 = vpop.permute.xlu0 %4645
  %v4647 = vsel %vm424, %v4636, %v4642
  %v4648 = vsel %vm424, %v4638, %v4644
  %v4649 = vsel %vm424, %v4640, %v4646
  %v4650 = vsel %vm424, %v4630, %v4636
  %v4651 = vsel %vm424, %v4632, %v4638
  %v4652 = vsel %vm424, %v4634, %v4640
  %v4653 = vsel %vm424, %v4624, %v4630
  %v4654 = vsel %vm424, %v4626, %v4632
  %v4655 = vsel %vm424, %v4628, %v4634
  %v4656 = vsel %vm424, %v4642, %v4624
  %v4657 = vsel %vm424, %v4644, %v4626
  %v4658 = vsel %vm424, %v4646, %v4628
  %4659 = vst [vmem:[#allocation2 + $0x8a0] sm:$0xff] %v4653
  %4660 = vst [vmem:[#allocation2 + $0x8a8] sm:$0xff] %v4650
  %4661 = vst [vmem:[#allocation2 + $0x8b0] sm:$0xff] %v4647
  %4662 = vst [vmem:[#allocation2 + $0x8b8] sm:$0xff] %v4656
  %4663 = vst [vmem:[#allocation2 + $0x8c0] sm:$0xff] %v4654
  %4664 = vst [vmem:[#allocation2 + $0x8c8] sm:$0xff] %v4651
  %4665 = vst [vmem:[#allocation2 + $0x8d0] sm:$0xff] %v4648
  %4666 = vst [vmem:[#allocation2 + $0x8d8] sm:$0xff] %v4657
  %4667 = vst [vmem:[#allocation2 + $0x8e0] sm:$0xff] %v4655
  %4668 = vst [vmem:[#allocation2 + $0x8e8] sm:$0xff] %v4652
  %4669 = vst [vmem:[#allocation2 + $0x8f0] sm:$0xff] %v4649
  %4670 = vst [vmem:[#allocation2 + $0x8f8] sm:$0xff] %v4658
  %4671 = vrot.lane.b32.xlu0 %v3290, 94
  %v4672 = vpop.permute.xlu0 %4671
  %4673 = vrot.lane.b32.xlu0 %v3296, 94
  %v4674 = vpop.permute.xlu0 %4673
  %4675 = vrot.lane.b32.xlu0 %v3302, 94
  %v4676 = vpop.permute.xlu0 %4675
  %4677 = vrot.lane.b32.xlu0 %v3292, 94
  %v4678 = vpop.permute.xlu0 %4677
  %4679 = vrot.lane.b32.xlu0 %v3298, 94
  %v4680 = vpop.permute.xlu0 %4679
  %4681 = vrot.lane.b32.xlu0 %v3304, 94
  %v4682 = vpop.permute.xlu0 %4681
  %4683 = vrot.lane.b32.xlu0 %v3539, 94
  %v4684 = vpop.permute.xlu0 %4683
  %4685 = vrot.lane.b32.xlu0 %v3545, 94
  %v4686 = vpop.permute.xlu0 %4685
  %4687 = vrot.lane.b32.xlu0 %v3551, 94
  %v4688 = vpop.permute.xlu0 %4687
  %4689 = vrot.lane.b32.xlu0 %v3541, 94
  %v4690 = vpop.permute.xlu0 %4689
  %4691 = vrot.lane.b32.xlu0 %v3547, 94
  %v4692 = vpop.permute.xlu0 %4691
  %4693 = vrot.lane.b32.xlu0 %v3553, 94
  %v4694 = vpop.permute.xlu0 %4693
  %v4695 = vsel %vm441, %v4684, %v4690
  %v4696 = vsel %vm441, %v4686, %v4692
  %v4697 = vsel %vm441, %v4688, %v4694
  %v4698 = vsel %vm441, %v4678, %v4684
  %v4699 = vsel %vm441, %v4680, %v4686
  %v4700 = vsel %vm441, %v4682, %v4688
  %v4701 = vsel %vm441, %v4672, %v4678
  %v4702 = vsel %vm441, %v4674, %v4680
  %v4703 = vsel %vm441, %v4676, %v4682
  %v4704 = vsel %vm441, %v4690, %v4672
  %v4705 = vsel %vm441, %v4692, %v4674
  %v4706 = vsel %vm441, %v4694, %v4676
  %4707 = vst [vmem:[#allocation2 + $0x900] sm:$0xff] %v4701
  %4708 = vst [vmem:[#allocation2 + $0x908] sm:$0xff] %v4698
  %4709 = vst [vmem:[#allocation2 + $0x910] sm:$0xff] %v4695
  %4710 = vst [vmem:[#allocation2 + $0x918] sm:$0xff] %v4704
  %4711 = vst [vmem:[#allocation2 + $0x920] sm:$0xff] %v4702
  %4712 = vst [vmem:[#allocation2 + $0x928] sm:$0xff] %v4699
  %4713 = vst [vmem:[#allocation2 + $0x930] sm:$0xff] %v4696
  %4714 = vst [vmem:[#allocation2 + $0x938] sm:$0xff] %v4705
  %4715 = vst [vmem:[#allocation2 + $0x940] sm:$0xff] %v4703
  %4716 = vst [vmem:[#allocation2 + $0x948] sm:$0xff] %v4700
  %4717 = vst [vmem:[#allocation2 + $0x950] sm:$0xff] %v4697
  %4718 = vst [vmem:[#allocation2 + $0x958] sm:$0xff] %v4706
  %v4719 = vld [vmem:[#allocation2] sm:$0xff]
  %v4720 = vld [vmem:[#allocation2 + $0x8] sm:$0xff]
  %v4721 = vld [vmem:[#allocation2 + $0x10] sm:$0xff]
  %v4722 = vld [vmem:[#allocation2 + $0x18] sm:$0xff]
  %v4723 = vld [vmem:[#allocation2 + $0x20] sm:$0xff]
  %v4724 = vld [vmem:[#allocation2 + $0x28] sm:$0xff]
  %v4725 = vld [vmem:[#allocation2 + $0x30] sm:$0xff]
  %v4726 = vld [vmem:[#allocation2 + $0x38] sm:$0xff]
  %v4727 = vld [vmem:[#allocation2 + $0x40] sm:$0xff]
  %v4728 = vld [vmem:[#allocation2 + $0x48] sm:$0xff]
  %v4729 = vld [vmem:[#allocation2 + $0x50] sm:$0xff]
  %v4730 = vld [vmem:[#allocation2 + $0x58] sm:$0xff]
  %v4731 = vld [vmem:[#allocation2 + $0x60] sm:$0xff]
  %v4732 = vld [vmem:[#allocation2 + $0x68] sm:$0xff]
  %v4733 = vld [vmem:[#allocation2 + $0x70] sm:$0xff]
  %v4734 = vld [vmem:[#allocation2 + $0x78] sm:$0xff]
  %v4735 = vld [vmem:[#allocation2 + $0x80] sm:$0xff]
  %v4736 = vld [vmem:[#allocation2 + $0x88] sm:$0xff]
  %v4737 = vld [vmem:[#allocation2 + $0x90] sm:$0xff]
  %v4738 = vld [vmem:[#allocation2 + $0x98] sm:$0xff]
  %v4739 = vld [vmem:[#allocation2 + $0xa0] sm:$0xff]
  %v4740 = vld [vmem:[#allocation2 + $0xa8] sm:$0xff]
  %v4741 = vld [vmem:[#allocation2 + $0xb0] sm:$0xff]
  %v4742 = vld [vmem:[#allocation2 + $0xb8] sm:$0xff]
  %v4743 = vld [vmem:[#allocation2 + $0xc0] sm:$0xff]
  %v4744 = vld [vmem:[#allocation2 + $0xc8] sm:$0xff]
  %v4745 = vld [vmem:[#allocation2 + $0xd0] sm:$0xff]
  %v4746 = vld [vmem:[#allocation2 + $0xd8] sm:$0xff]
  %v4747 = vld [vmem:[#allocation2 + $0xe0] sm:$0xff]
  %v4748 = vld [vmem:[#allocation2 + $0xe8] sm:$0xff]
  %v4749 = vld [vmem:[#allocation2 + $0xf0] sm:$0xff]
  %v4750 = vld [vmem:[#allocation2 + $0xf8] sm:$0xff]
  %v4751 = vld [vmem:[#allocation2 + $0x100] sm:$0xff]
  %v4752 = vld [vmem:[#allocation2 + $0x108] sm:$0xff]
  %v4753 = vld [vmem:[#allocation2 + $0x110] sm:$0xff]
  %v4754 = vld [vmem:[#allocation2 + $0x118] sm:$0xff]
  %v4755 = vld [vmem:[#allocation2 + $0x120] sm:$0xff]
  %v4756 = vld [vmem:[#allocation2 + $0x128] sm:$0xff]
  %v4757 = vld [vmem:[#allocation2 + $0x130] sm:$0xff]
  %v4758 = vld [vmem:[#allocation2 + $0x138] sm:$0xff]
  %v4759 = vld [vmem:[#allocation2 + $0x140] sm:$0xff]
  %v4760 = vld [vmem:[#allocation2 + $0x148] sm:$0xff]
  %v4761 = vld [vmem:[#allocation2 + $0x150] sm:$0xff]
  %v4762 = vld [vmem:[#allocation2 + $0x158] sm:$0xff]
  %v4763 = vld [vmem:[#allocation2 + $0x160] sm:$0xff]
  %v4764 = vld [vmem:[#allocation2 + $0x168] sm:$0xff]
  %v4765 = vld [vmem:[#allocation2 + $0x170] sm:$0xff]
  %v4766 = vld [vmem:[#allocation2 + $0x178] sm:$0xff]
  %v4767 = vld [vmem:[#allocation2 + $0x180] sm:$0xff]
  %v4768 = vld [vmem:[#allocation2 + $0x188] sm:$0xff]
  %v4769 = vld [vmem:[#allocation2 + $0x190] sm:$0xff]
  %v4770 = vld [vmem:[#allocation2 + $0x198] sm:$0xff]
  %v4771 = vld [vmem:[#allocation2 + $0x1a0] sm:$0xff]
  %v4772 = vld [vmem:[#allocation2 + $0x1a8] sm:$0xff]
  %v4773 = vld [vmem:[#allocation2 + $0x1b0] sm:$0xff]
  %v4774 = vld [vmem:[#allocation2 + $0x1b8] sm:$0xff]
  %v4775 = vld [vmem:[#allocation2 + $0x1c0] sm:$0xff]
  %v4776 = vld [vmem:[#allocation2 + $0x1c8] sm:$0xff]
  %v4777 = vld [vmem:[#allocation2 + $0x1d0] sm:$0xff]
  %v4778 = vld [vmem:[#allocation2 + $0x1d8] sm:$0xff]
  %v4779 = vld [vmem:[#allocation2 + $0x1e0] sm:$0xff]
  %v4780 = vld [vmem:[#allocation2 + $0x1e8] sm:$0xff]
  %v4781 = vld [vmem:[#allocation2 + $0x1f0] sm:$0xff]
  %v4782 = vld [vmem:[#allocation2 + $0x1f8] sm:$0xff]
  %v4783 = vld [vmem:[#allocation2 + $0x200] sm:$0xff]
  %v4784 = vld [vmem:[#allocation2 + $0x208] sm:$0xff]
  %v4785 = vld [vmem:[#allocation2 + $0x210] sm:$0xff]
  %v4786 = vld [vmem:[#allocation2 + $0x218] sm:$0xff]
  %v4787 = vld [vmem:[#allocation2 + $0x220] sm:$0xff]
  %v4788 = vld [vmem:[#allocation2 + $0x228] sm:$0xff]
  %v4789 = vld [vmem:[#allocation2 + $0x230] sm:$0xff]
  %v4790 = vld [vmem:[#allocation2 + $0x238] sm:$0xff]
  %v4791 = vld [vmem:[#allocation2 + $0x240] sm:$0xff]
  %v4792 = vld [vmem:[#allocation2 + $0x248] sm:$0xff]
  %v4793 = vld [vmem:[#allocation2 + $0x250] sm:$0xff]
  %v4794 = vld [vmem:[#allocation2 + $0x258] sm:$0xff]
  %v4795 = vld [vmem:[#allocation2 + $0x260] sm:$0xff]
  %v4796 = vld [vmem:[#allocation2 + $0x268] sm:$0xff]
  %v4797 = vld [vmem:[#allocation2 + $0x270] sm:$0xff]
  %v4798 = vld [vmem:[#allocation2 + $0x278] sm:$0xff]
  %v4799 = vld [vmem:[#allocation2 + $0x280] sm:$0xff]
  %v4800 = vld [vmem:[#allocation2 + $0x288] sm:$0xff]
  %v4801 = vld [vmem:[#allocation2 + $0x290] sm:$0xff]
  %v4802 = vld [vmem:[#allocation2 + $0x298] sm:$0xff]
  %v4803 = vld [vmem:[#allocation2 + $0x2a0] sm:$0xff]
  %v4804 = vld [vmem:[#allocation2 + $0x2a8] sm:$0xff]
  %v4805 = vld [vmem:[#allocation2 + $0x2b0] sm:$0xff]
  %v4806 = vld [vmem:[#allocation2 + $0x2b8] sm:$0xff]
  %v4807 = vld [vmem:[#allocation2 + $0x2c0] sm:$0xff]
  %v4808 = vld [vmem:[#allocation2 + $0x2c8] sm:$0xff]
  %v4809 = vld [vmem:[#allocation2 + $0x2d0] sm:$0xff]
  %v4810 = vld [vmem:[#allocation2 + $0x2d8] sm:$0xff]
  %v4811 = vld [vmem:[#allocation2 + $0x2e0] sm:$0xff]
  %v4812 = vld [vmem:[#allocation2 + $0x2e8] sm:$0xff]
  %v4813 = vld [vmem:[#allocation2 + $0x2f0] sm:$0xff]
  %v4814 = vld [vmem:[#allocation2 + $0x2f8] sm:$0xff]
  %v4815 = vld [vmem:[#allocation2 + $0x300] sm:$0xff]
  %v4816 = vld [vmem:[#allocation2 + $0x308] sm:$0xff]
  %v4817 = vld [vmem:[#allocation2 + $0x310] sm:$0xff]
  %v4818 = vld [vmem:[#allocation2 + $0x318] sm:$0xff]
  %v4819 = vld [vmem:[#allocation2 + $0x320] sm:$0xff]
  %v4820 = vld [vmem:[#allocation2 + $0x328] sm:$0xff]
  %v4821 = vld [vmem:[#allocation2 + $0x330] sm:$0xff]
  %v4822 = vld [vmem:[#allocation2 + $0x338] sm:$0xff]
  %v4823 = vld [vmem:[#allocation2 + $0x340] sm:$0xff]
  %v4824 = vld [vmem:[#allocation2 + $0x348] sm:$0xff]
  %v4825 = vld [vmem:[#allocation2 + $0x350] sm:$0xff]
  %v4826 = vld [vmem:[#allocation2 + $0x358] sm:$0xff]
  %v4827 = vld [vmem:[#allocation2 + $0x360] sm:$0xff]
  %v4828 = vld [vmem:[#allocation2 + $0x368] sm:$0xff]
  %v4829 = vld [vmem:[#allocation2 + $0x370] sm:$0xff]
  %v4830 = vld [vmem:[#allocation2 + $0x378] sm:$0xff]
  %v4831 = vld [vmem:[#allocation2 + $0x380] sm:$0xff]
  %v4832 = vld [vmem:[#allocation2 + $0x388] sm:$0xff]
  %v4833 = vld [vmem:[#allocation2 + $0x390] sm:$0xff]
  %v4834 = vld [vmem:[#allocation2 + $0x398] sm:$0xff]
  %v4835 = vld [vmem:[#allocation2 + $0x3a0] sm:$0xff]
  %v4836 = vld [vmem:[#allocation2 + $0x3a8] sm:$0xff]
  %v4837 = vld [vmem:[#allocation2 + $0x3b0] sm:$0xff]
  %v4838 = vld [vmem:[#allocation2 + $0x3b8] sm:$0xff]
  %v4839 = vld [vmem:[#allocation2 + $0x3c0] sm:$0xff]
  %v4840 = vld [vmem:[#allocation2 + $0x3c8] sm:$0xff]
  %v4841 = vld [vmem:[#allocation2 + $0x3d0] sm:$0xff]
  %v4842 = vld [vmem:[#allocation2 + $0x3d8] sm:$0xff]
  %v4843 = vld [vmem:[#allocation2 + $0x3e0] sm:$0xff]
  %v4844 = vld [vmem:[#allocation2 + $0x3e8] sm:$0xff]
  %v4845 = vld [vmem:[#allocation2 + $0x3f0] sm:$0xff]
  %v4846 = vld [vmem:[#allocation2 + $0x3f8] sm:$0xff]
  %v4847 = vld [vmem:[#allocation2 + $0x400] sm:$0xff]
  %v4848 = vld [vmem:[#allocation2 + $0x408] sm:$0xff]
  %v4849 = vld [vmem:[#allocation2 + $0x410] sm:$0xff]
  %v4850 = vld [vmem:[#allocation2 + $0x418] sm:$0xff]
  %v4851 = vld [vmem:[#allocation2 + $0x420] sm:$0xff]
  %v4852 = vld [vmem:[#allocation2 + $0x428] sm:$0xff]
  %v4853 = vld [vmem:[#allocation2 + $0x430] sm:$0xff]
  %v4854 = vld [vmem:[#allocation2 + $0x438] sm:$0xff]
  %v4855 = vld [vmem:[#allocation2 + $0x440] sm:$0xff]
  %v4856 = vld [vmem:[#allocation2 + $0x448] sm:$0xff]
  %v4857 = vld [vmem:[#allocation2 + $0x450] sm:$0xff]
  %v4858 = vld [vmem:[#allocation2 + $0x458] sm:$0xff]
  %v4859 = vld [vmem:[#allocation2 + $0x460] sm:$0xff]
  %v4860 = vld [vmem:[#allocation2 + $0x468] sm:$0xff]
  %v4861 = vld [vmem:[#allocation2 + $0x470] sm:$0xff]
  %v4862 = vld [vmem:[#allocation2 + $0x478] sm:$0xff]
  %v4863 = vld [vmem:[#allocation2 + $0x480] sm:$0xff]
  %v4864 = vld [vmem:[#allocation2 + $0x488] sm:$0xff]
  %v4865 = vld [vmem:[#allocation2 + $0x490] sm:$0xff]
  %v4866 = vld [vmem:[#allocation2 + $0x498] sm:$0xff]
  %v4867 = vld [vmem:[#allocation2 + $0x4a0] sm:$0xff]
  %v4868 = vld [vmem:[#allocation2 + $0x4a8] sm:$0xff]
  %v4869 = vld [vmem:[#allocation2 + $0x4b0] sm:$0xff]
  %v4870 = vld [vmem:[#allocation2 + $0x4b8] sm:$0xff]
  %v4871 = vld [vmem:[#allocation2 + $0x4c0] sm:$0xff]
  %v4872 = vld [vmem:[#allocation2 + $0x4c8] sm:$0xff]
  %v4873 = vld [vmem:[#allocation2 + $0x4d0] sm:$0xff]
  %v4874 = vld [vmem:[#allocation2 + $0x4d8] sm:$0xff]
  %v4875 = vld [vmem:[#allocation2 + $0x4e0] sm:$0xff]
  %v4876 = vld [vmem:[#allocation2 + $0x4e8] sm:$0xff]
  %v4877 = vld [vmem:[#allocation2 + $0x4f0] sm:$0xff]
  %v4878 = vld [vmem:[#allocation2 + $0x4f8] sm:$0xff]
  %v4879 = vld [vmem:[#allocation2 + $0x500] sm:$0xff]
  %v4880 = vld [vmem:[#allocation2 + $0x508] sm:$0xff]
  %v4881 = vld [vmem:[#allocation2 + $0x510] sm:$0xff]
  %v4882 = vld [vmem:[#allocation2 + $0x518] sm:$0xff]
  %v4883 = vld [vmem:[#allocation2 + $0x520] sm:$0xff]
  %v4884 = vld [vmem:[#allocation2 + $0x528] sm:$0xff]
  %v4885 = vld [vmem:[#allocation2 + $0x530] sm:$0xff]
  %v4886 = vld [vmem:[#allocation2 + $0x538] sm:$0xff]
  %v4887 = vld [vmem:[#allocation2 + $0x540] sm:$0xff]
  %v4888 = vld [vmem:[#allocation2 + $0x548] sm:$0xff]
  %v4889 = vld [vmem:[#allocation2 + $0x550] sm:$0xff]
  %v4890 = vld [vmem:[#allocation2 + $0x558] sm:$0xff]
  %v4891 = vld [vmem:[#allocation2 + $0x560] sm:$0xff]
  %v4892 = vld [vmem:[#allocation2 + $0x568] sm:$0xff]
  %v4893 = vld [vmem:[#allocation2 + $0x570] sm:$0xff]
  %v4894 = vld [vmem:[#allocation2 + $0x578] sm:$0xff]
  %v4895 = vld [vmem:[#allocation2 + $0x580] sm:$0xff]
  %v4896 = vld [vmem:[#allocation2 + $0x588] sm:$0xff]
  %v4897 = vld [vmem:[#allocation2 + $0x590] sm:$0xff]
  %v4898 = vld [vmem:[#allocation2 + $0x598] sm:$0xff]
  %v4899 = vld [vmem:[#allocation2 + $0x5a0] sm:$0xff]
  %v4900 = vld [vmem:[#allocation2 + $0x5a8] sm:$0xff]
  %v4901 = vld [vmem:[#allocation2 + $0x5b0] sm:$0xff]
  %v4902 = vld [vmem:[#allocation2 + $0x5b8] sm:$0xff]
  %v4903 = vld [vmem:[#allocation2 + $0x5c0] sm:$0xff]
  %v4904 = vld [vmem:[#allocation2 + $0x5c8] sm:$0xff]
  %v4905 = vld [vmem:[#allocation2 + $0x5d0] sm:$0xff]
  %v4906 = vld [vmem:[#allocation2 + $0x5d8] sm:$0xff]
  %v4907 = vld [vmem:[#allocation2 + $0x5e0] sm:$0xff]
  %v4908 = vld [vmem:[#allocation2 + $0x5e8] sm:$0xff]
  %v4909 = vld [vmem:[#allocation2 + $0x5f0] sm:$0xff]
  %v4910 = vld [vmem:[#allocation2 + $0x5f8] sm:$0xff]
  %v4911 = vld [vmem:[#allocation2 + $0x600] sm:$0xff]
  %v4912 = vld [vmem:[#allocation2 + $0x608] sm:$0xff]
  %v4913 = vld [vmem:[#allocation2 + $0x610] sm:$0xff]
  %v4914 = vld [vmem:[#allocation2 + $0x618] sm:$0xff]
  %v4915 = vld [vmem:[#allocation2 + $0x620] sm:$0xff]
  %v4916 = vld [vmem:[#allocation2 + $0x628] sm:$0xff]
  %v4917 = vld [vmem:[#allocation2 + $0x630] sm:$0xff]
  %v4918 = vld [vmem:[#allocation2 + $0x638] sm:$0xff]
  %v4919 = vld [vmem:[#allocation2 + $0x640] sm:$0xff]
  %v4920 = vld [vmem:[#allocation2 + $0x648] sm:$0xff]
  %v4921 = vld [vmem:[#allocation2 + $0x650] sm:$0xff]
  %v4922 = vld [vmem:[#allocation2 + $0x658] sm:$0xff]
  %v4923 = vld [vmem:[#allocation2 + $0x660] sm:$0xff]
  %v4924 = vld [vmem:[#allocation2 + $0x668] sm:$0xff]
  %v4925 = vld [vmem:[#allocation2 + $0x670] sm:$0xff]
  %v4926 = vld [vmem:[#allocation2 + $0x678] sm:$0xff]
  %v4927 = vld [vmem:[#allocation2 + $0x680] sm:$0xff]
  %v4928 = vld [vmem:[#allocation2 + $0x688] sm:$0xff]
  %v4929 = vld [vmem:[#allocation2 + $0x690] sm:$0xff]
  %v4930 = vld [vmem:[#allocation2 + $0x698] sm:$0xff]
  %v4931 = vld [vmem:[#allocation2 + $0x6a0] sm:$0xff]
  %v4932 = vld [vmem:[#allocation2 + $0x6a8] sm:$0xff]
  %v4933 = vld [vmem:[#allocation2 + $0x6b0] sm:$0xff]
  %v4934 = vld [vmem:[#allocation2 + $0x6b8] sm:$0xff]
  %v4935 = vld [vmem:[#allocation2 + $0x6c0] sm:$0xff]
  %v4936 = vld [vmem:[#allocation2 + $0x6c8] sm:$0xff]
  %v4937 = vld [vmem:[#allocation2 + $0x6d0] sm:$0xff]
  %v4938 = vld [vmem:[#allocation2 + $0x6d8] sm:$0xff]
  %v4939 = vld [vmem:[#allocation2 + $0x6e0] sm:$0xff]
  %v4940 = vld [vmem:[#allocation2 + $0x6e8] sm:$0xff]
  %v4941 = vld [vmem:[#allocation2 + $0x6f0] sm:$0xff]
  %v4942 = vld [vmem:[#allocation2 + $0x6f8] sm:$0xff]
  %v4943 = vld [vmem:[#allocation2 + $0x700] sm:$0xff]
  %v4944 = vld [vmem:[#allocation2 + $0x708] sm:$0xff]
  %v4945 = vld [vmem:[#allocation2 + $0x710] sm:$0xff]
  %v4946 = vld [vmem:[#allocation2 + $0x718] sm:$0xff]
  %v4947 = vld [vmem:[#allocation2 + $0x720] sm:$0xff]
  %v4948 = vld [vmem:[#allocation2 + $0x728] sm:$0xff]
  %v4949 = vld [vmem:[#allocation2 + $0x730] sm:$0xff]
  %v4950 = vld [vmem:[#allocation2 + $0x738] sm:$0xff]
  %v4951 = vld [vmem:[#allocation2 + $0x740] sm:$0xff]
  %v4952 = vld [vmem:[#allocation2 + $0x748] sm:$0xff]
  %v4953 = vld [vmem:[#allocation2 + $0x750] sm:$0xff]
  %v4954 = vld [vmem:[#allocation2 + $0x758] sm:$0xff]
  %v4955 = vld [vmem:[#allocation2 + $0x760] sm:$0xff]
  %v4956 = vld [vmem:[#allocation2 + $0x768] sm:$0xff]
  %v4957 = vld [vmem:[#allocation2 + $0x770] sm:$0xff]
  %v4958 = vld [vmem:[#allocation2 + $0x778] sm:$0xff]
  %v4959 = vld [vmem:[#allocation2 + $0x780] sm:$0xff]
  %v4960 = vld [vmem:[#allocation2 + $0x788] sm:$0xff]
  %v4961 = vld [vmem:[#allocation2 + $0x790] sm:$0xff]
  %v4962 = vld [vmem:[#allocation2 + $0x798] sm:$0xff]
  %v4963 = vld [vmem:[#allocation2 + $0x7a0] sm:$0xff]
  %v4964 = vld [vmem:[#allocation2 + $0x7a8] sm:$0xff]
  %v4965 = vld [vmem:[#allocation2 + $0x7b0] sm:$0xff]
  %v4966 = vld [vmem:[#allocation2 + $0x7b8] sm:$0xff]
  %v4967 = vld [vmem:[#allocation2 + $0x7c0] sm:$0xff]
  %v4968 = vld [vmem:[#allocation2 + $0x7c8] sm:$0xff]
  %v4969 = vld [vmem:[#allocation2 + $0x7d0] sm:$0xff]
  %v4970 = vld [vmem:[#allocation2 + $0x7d8] sm:$0xff]
  %v4971 = vld [vmem:[#allocation2 + $0x7e0] sm:$0xff]
  %v4972 = vld [vmem:[#allocation2 + $0x7e8] sm:$0xff]
  %v4973 = vld [vmem:[#allocation2 + $0x7f0] sm:$0xff]
  %v4974 = vld [vmem:[#allocation2 + $0x7f8] sm:$0xff]
  %v4975 = vld [vmem:[#allocation2 + $0x800] sm:$0xff]
  %v4976 = vld [vmem:[#allocation2 + $0x808] sm:$0xff]
  %v4977 = vld [vmem:[#allocation2 + $0x810] sm:$0xff]
  %v4978 = vld [vmem:[#allocation2 + $0x818] sm:$0xff]
  %v4979 = vld [vmem:[#allocation2 + $0x820] sm:$0xff]
  %v4980 = vld [vmem:[#allocation2 + $0x828] sm:$0xff]
  %v4981 = vld [vmem:[#allocation2 + $0x830] sm:$0xff]
  %v4982 = vld [vmem:[#allocation2 + $0x838] sm:$0xff]
  %v4983 = vld [vmem:[#allocation2 + $0x840] sm:$0xff]
  %v4984 = vld [vmem:[#allocation2 + $0x848] sm:$0xff]
  %v4985 = vld [vmem:[#allocation2 + $0x850] sm:$0xff]
  %v4986 = vld [vmem:[#allocation2 + $0x858] sm:$0xff]
  %v4987 = vld [vmem:[#allocation2 + $0x860] sm:$0xff]
  %v4988 = vld [vmem:[#allocation2 + $0x868] sm:$0xff]
  %v4989 = vld [vmem:[#allocation2 + $0x870] sm:$0xff]
  %v4990 = vld [vmem:[#allocation2 + $0x878] sm:$0xff]
  %v4991 = vld [vmem:[#allocation2 + $0x880] sm:$0xff]
  %v4992 = vld [vmem:[#allocation2 + $0x888] sm:$0xff]
  %v4993 = vld [vmem:[#allocation2 + $0x890] sm:$0xff]
  %v4994 = vld [vmem:[#allocation2 + $0x898] sm:$0xff]
  %v4995 = vld [vmem:[#allocation2 + $0x8a0] sm:$0xff]
  %v4996 = vld [vmem:[#allocation2 + $0x8a8] sm:$0xff]
  %v4997 = vld [vmem:[#allocation2 + $0x8b0] sm:$0xff]
  %v4998 = vld [vmem:[#allocation2 + $0x8b8] sm:$0xff]
  %v4999 = vld [vmem:[#allocation2 + $0x8c0] sm:$0xff]
  %v5000 = vld [vmem:[#allocation2 + $0x8c8] sm:$0xff]
  %v5001 = vld [vmem:[#allocation2 + $0x8d0] sm:$0xff]
  %v5002 = vld [vmem:[#allocation2 + $0x8d8] sm:$0xff]
  %v5003 = vld [vmem:[#allocation2 + $0x8e0] sm:$0xff]
  %v5004 = vld [vmem:[#allocation2 + $0x8e8] sm:$0xff]
  %v5005 = vld [vmem:[#allocation2 + $0x8f0] sm:$0xff]
  %v5006 = vld [vmem:[#allocation2 + $0x8f8] sm:$0xff]
  %v5007 = vld [vmem:[#allocation2 + $0x900] sm:$0xff]
  %v5008 = vld [vmem:[#allocation2 + $0x908] sm:$0xff]
  %v5009 = vld [vmem:[#allocation2 + $0x910] sm:$0xff]
  %v5010 = vld [vmem:[#allocation2 + $0x918] sm:$0xff]
  %v5011 = vld [vmem:[#allocation2 + $0x920] sm:$0xff]
  %v5012 = vld [vmem:[#allocation2 + $0x928] sm:$0xff]
  %v5013 = vld [vmem:[#allocation2 + $0x930] sm:$0xff]
  %v5014 = vld [vmem:[#allocation2 + $0x938] sm:$0xff]
  %v5015 = vld [vmem:[#allocation2 + $0x940] sm:$0xff]
  %v5016 = vld [vmem:[#allocation2 + $0x948] sm:$0xff]
  %v5017 = vld [vmem:[#allocation2 + $0x950] sm:$0xff]
  %v5018 = vld [vmem:[#allocation2 + $0x958] sm:$0xff]
  %v5019 = vld [vmem:[%s2] sm:$0xff]
  %v5020 = vld [vmem:[%s2 + $0x8] sm:$0xff]
  %v5021 = vld [vmem:[%s2 + $0x10] sm:$0xff]
  %v5022 = vld [vmem:[%s2 + $0x18] sm:$0xff]
  %v5023 = vld [vmem:[%s2 + $0x20] sm:$0xff]
  %v5024 = vld [vmem:[%s2 + $0x28] sm:$0xff]
  %v5025 = vld [vmem:[%s2 + $0x30] sm:$0xff]
  %v5026 = vld [vmem:[%s2 + $0x38] sm:$0xff]
  %v5027 = vld [vmem:[%s2 + $0x40] sm:$0xff]
  %v5028 = vld [vmem:[%s2 + $0x48] sm:$0xff]
  %v5029 = vld [vmem:[%s2 + $0x50] sm:$0xff]
  %v5030 = vld [vmem:[%s2 + $0x58] sm:$0xff]
  %v5031 = vld [vmem:[%s2 + $0x60] sm:$0xff]
  %v5032 = vld [vmem:[%s2 + $0x68] sm:$0xff]
  %v5033 = vld [vmem:[%s2 + $0x70] sm:$0xff]
  %v5034 = vld [vmem:[%s2 + $0x78] sm:$0xff]
  %v5035 = vld [vmem:[%s2 + $0x80] sm:$0xff]
  %v5036 = vld [vmem:[%s2 + $0x88] sm:$0xff]
  %v5037 = vld [vmem:[%s2 + $0x90] sm:$0xff]
  %v5038 = vld [vmem:[%s2 + $0x98] sm:$0xff]
  %v5039 = vld [vmem:[%s2 + $0xa0] sm:$0xff]
  %v5040 = vld [vmem:[%s2 + $0xa8] sm:$0xff]
  %v5041 = vld [vmem:[%s2 + $0xb0] sm:$0xff]
  %v5042 = vld [vmem:[%s2 + $0xb8] sm:$0xff]
  %v5043 = vld [vmem:[%s2 + $0xc0] sm:$0xff]
  %v5044 = vld [vmem:[%s2 + $0xc8] sm:$0xff]
  %v5045 = vld [vmem:[%s2 + $0xd0] sm:$0xff]
  %v5046 = vld [vmem:[%s2 + $0xd8] sm:$0xff]
  %v5047 = vld [vmem:[%s2 + $0xe0] sm:$0xff]
  %v5048 = vld [vmem:[%s2 + $0xe8] sm:$0xff]
  %v5049 = vld [vmem:[%s2 + $0xf0] sm:$0xff]
  %v5050 = vld [vmem:[%s2 + $0xf8] sm:$0xff]
  %v5051 = vld [vmem:[%s2 + $0x100] sm:$0xff]
  %v5052 = vld [vmem:[%s2 + $0x108] sm:$0xff]
  %v5053 = vld [vmem:[%s2 + $0x110] sm:$0xff]
  %v5054 = vld [vmem:[%s2 + $0x118] sm:$0xff]
  %v5055 = vld [vmem:[%s2 + $0x120] sm:$0xff]
  %v5056 = vld [vmem:[%s2 + $0x128] sm:$0xff]
  %v5057 = vld [vmem:[%s2 + $0x130] sm:$0xff]
  %v5058 = vld [vmem:[%s2 + $0x138] sm:$0xff]
  %v5059 = vld [vmem:[%s2 + $0x140] sm:$0xff]
  %v5060 = vld [vmem:[%s2 + $0x148] sm:$0xff]
  %v5061 = vld [vmem:[%s2 + $0x150] sm:$0xff]
  %v5062 = vld [vmem:[%s2 + $0x158] sm:$0xff]
  %v5063 = vld [vmem:[%s2 + $0x160] sm:$0xff]
  %v5064 = vld [vmem:[%s2 + $0x168] sm:$0xff]
  %v5065 = vld [vmem:[%s2 + $0x170] sm:$0xff]
  %v5066 = vld [vmem:[%s2 + $0x178] sm:$0xff]
  %v5067 = vld [vmem:[%s2 + $0x180] sm:$0xff]
  %v5068 = vld [vmem:[%s2 + $0x188] sm:$0xff]
  %v5069 = vld [vmem:[%s2 + $0x190] sm:$0xff]
  %v5070 = vld [vmem:[%s2 + $0x198] sm:$0xff]
  %v5071 = vld [vmem:[%s2 + $0x1a0] sm:$0xff]
  %v5072 = vld [vmem:[%s2 + $0x1a8] sm:$0xff]
  %v5073 = vld [vmem:[%s2 + $0x1b0] sm:$0xff]
  %v5074 = vld [vmem:[%s2 + $0x1b8] sm:$0xff]
  %v5075 = vld [vmem:[%s2 + $0x1c0] sm:$0xff]
  %v5076 = vld [vmem:[%s2 + $0x1c8] sm:$0xff]
  %v5077 = vld [vmem:[%s2 + $0x1d0] sm:$0xff]
  %v5078 = vld [vmem:[%s2 + $0x1d8] sm:$0xff]
  %v5079 = vld [vmem:[%s2 + $0x1e0] sm:$0xff]
  %v5080 = vld [vmem:[%s2 + $0x1e8] sm:$0xff]
  %v5081 = vld [vmem:[%s2 + $0x1f0] sm:$0xff]
  %v5082 = vld [vmem:[%s2 + $0x1f8] sm:$0xff]
  %v5083 = vld [vmem:[%s2 + $0x200] sm:$0xff]
  %v5084 = vld [vmem:[%s2 + $0x208] sm:$0xff]
  %v5085 = vld [vmem:[%s2 + $0x210] sm:$0xff]
  %v5086 = vld [vmem:[%s2 + $0x218] sm:$0xff]
  %v5087 = vld [vmem:[%s2 + $0x220] sm:$0xff]
  %v5088 = vld [vmem:[%s2 + $0x228] sm:$0xff]
  %v5089 = vld [vmem:[%s2 + $0x230] sm:$0xff]
  %v5090 = vld [vmem:[%s2 + $0x238] sm:$0xff]
  %v5091 = vld [vmem:[%s2 + $0x240] sm:$0xff]
  %v5092 = vld [vmem:[%s2 + $0x248] sm:$0xff]
  %v5093 = vld [vmem:[%s2 + $0x250] sm:$0xff]
  %v5094 = vld [vmem:[%s2 + $0x258] sm:$0xff]
  %v5095 = vld [vmem:[%s2 + $0x260] sm:$0xff]
  %v5096 = vld [vmem:[%s2 + $0x268] sm:$0xff]
  %v5097 = vld [vmem:[%s2 + $0x270] sm:$0xff]
  %v5098 = vld [vmem:[%s2 + $0x278] sm:$0xff]
  %v5099 = vld [vmem:[%s2 + $0x280] sm:$0xff]
  %v5100 = vld [vmem:[%s2 + $0x288] sm:$0xff]
  %v5101 = vld [vmem:[%s2 + $0x290] sm:$0xff]
  %v5102 = vld [vmem:[%s2 + $0x298] sm:$0xff]
  %v5103 = vld [vmem:[%s2 + $0x2a0] sm:$0xff]
  %v5104 = vld [vmem:[%s2 + $0x2a8] sm:$0xff]
  %v5105 = vld [vmem:[%s2 + $0x2b0] sm:$0xff]
  %v5106 = vld [vmem:[%s2 + $0x2b8] sm:$0xff]
  %v5107 = vld [vmem:[%s2 + $0x2c0] sm:$0xff]
  %v5108 = vld [vmem:[%s2 + $0x2c8] sm:$0xff]
  %v5109 = vld [vmem:[%s2 + $0x2d0] sm:$0xff]
  %v5110 = vld [vmem:[%s2 + $0x2d8] sm:$0xff]
  %v5111 = vld [vmem:[%s2 + $0x2e0] sm:$0xff]
  %v5112 = vld [vmem:[%s2 + $0x2e8] sm:$0xff]
  %v5113 = vld [vmem:[%s2 + $0x2f0] sm:$0xff]
  %v5114 = vld [vmem:[%s2 + $0x2f8] sm:$0xff]
  %v5115 = vld [vmem:[%s2 + $0x300] sm:$0xff]
  %v5116 = vld [vmem:[%s2 + $0x308] sm:$0xff]
  %v5117 = vld [vmem:[%s2 + $0x310] sm:$0xff]
  %v5118 = vld [vmem:[%s2 + $0x318] sm:$0xff]
  %v5119 = vld [vmem:[%s2 + $0x320] sm:$0xff]
  %v5120 = vld [vmem:[%s2 + $0x328] sm:$0xff]
  %v5121 = vld [vmem:[%s2 + $0x330] sm:$0xff]
  %v5122 = vld [vmem:[%s2 + $0x338] sm:$0xff]
  %v5123 = vld [vmem:[%s2 + $0x340] sm:$0xff]
  %v5124 = vld [vmem:[%s2 + $0x348] sm:$0xff]
  %v5125 = vld [vmem:[%s2 + $0x350] sm:$0xff]
  %v5126 = vld [vmem:[%s2 + $0x358] sm:$0xff]
  %v5127 = vld [vmem:[%s2 + $0x360] sm:$0xff]
  %v5128 = vld [vmem:[%s2 + $0x368] sm:$0xff]
  %v5129 = vld [vmem:[%s2 + $0x370] sm:$0xff]
  %v5130 = vld [vmem:[%s2 + $0x378] sm:$0xff]
  %v5131 = vld [vmem:[%s2 + $0x380] sm:$0xff]
  %v5132 = vld [vmem:[%s2 + $0x388] sm:$0xff]
  %v5133 = vld [vmem:[%s2 + $0x390] sm:$0xff]
  %v5134 = vld [vmem:[%s2 + $0x398] sm:$0xff]
  %v5135 = vld [vmem:[%s2 + $0x3a0] sm:$0xff]
  %v5136 = vld [vmem:[%s2 + $0x3a8] sm:$0xff]
  %v5137 = vld [vmem:[%s2 + $0x3b0] sm:$0xff]
  %v5138 = vld [vmem:[%s2 + $0x3b8] sm:$0xff]
  %v5139 = vld [vmem:[%s2 + $0x3c0] sm:$0xff]
  %v5140 = vld [vmem:[%s2 + $0x3c8] sm:$0xff]
  %v5141 = vld [vmem:[%s2 + $0x3d0] sm:$0xff]
  %v5142 = vld [vmem:[%s2 + $0x3d8] sm:$0xff]
  %v5143 = vld [vmem:[%s2 + $0x3e0] sm:$0xff]
  %v5144 = vld [vmem:[%s2 + $0x3e8] sm:$0xff]
  %v5145 = vld [vmem:[%s2 + $0x3f0] sm:$0xff]
  %v5146 = vld [vmem:[%s2 + $0x3f8] sm:$0xff]
  %v5147 = vld [vmem:[%s2 + $0x400] sm:$0xff]
  %v5148 = vld [vmem:[%s2 + $0x408] sm:$0xff]
  %v5149 = vld [vmem:[%s2 + $0x410] sm:$0xff]
  %v5150 = vld [vmem:[%s2 + $0x418] sm:$0xff]
  %v5151 = vld [vmem:[%s2 + $0x420] sm:$0xff]
  %v5152 = vld [vmem:[%s2 + $0x428] sm:$0xff]
  %v5153 = vld [vmem:[%s2 + $0x430] sm:$0xff]
  %v5154 = vld [vmem:[%s2 + $0x438] sm:$0xff]
  %v5155 = vld [vmem:[%s2 + $0x440] sm:$0xff]
  %v5156 = vld [vmem:[%s2 + $0x448] sm:$0xff]
  %v5157 = vld [vmem:[%s2 + $0x450] sm:$0xff]
  %v5158 = vld [vmem:[%s2 + $0x458] sm:$0xff]
  %v5159 = vld [vmem:[%s2 + $0x460] sm:$0xff]
  %v5160 = vld [vmem:[%s2 + $0x468] sm:$0xff]
  %v5161 = vld [vmem:[%s2 + $0x470] sm:$0xff]
  %v5162 = vld [vmem:[%s2 + $0x478] sm:$0xff]
  %v5163 = vld [vmem:[%s2 + $0x480] sm:$0xff]
  %v5164 = vld [vmem:[%s2 + $0x488] sm:$0xff]
  %v5165 = vld [vmem:[%s2 + $0x490] sm:$0xff]
  %v5166 = vld [vmem:[%s2 + $0x498] sm:$0xff]
  %v5167 = vld [vmem:[%s2 + $0x4a0] sm:$0xff]
  %v5168 = vld [vmem:[%s2 + $0x4a8] sm:$0xff]
  %v5169 = vld [vmem:[%s2 + $0x4b0] sm:$0xff]
  %v5170 = vld [vmem:[%s2 + $0x4b8] sm:$0xff]
  %v5171 = vld [vmem:[%s2 + $0x4c0] sm:$0xff]
  %v5172 = vld [vmem:[%s2 + $0x4c8] sm:$0xff]
  %v5173 = vld [vmem:[%s2 + $0x4d0] sm:$0xff]
  %v5174 = vld [vmem:[%s2 + $0x4d8] sm:$0xff]
  %v5175 = vld [vmem:[%s2 + $0x4e0] sm:$0xff]
  %v5176 = vld [vmem:[%s2 + $0x4e8] sm:$0xff]
  %v5177 = vld [vmem:[%s2 + $0x4f0] sm:$0xff]
  %v5178 = vld [vmem:[%s2 + $0x4f8] sm:$0xff]
  %v5179 = vld [vmem:[%s2 + $0x500] sm:$0xff]
  %v5180 = vld [vmem:[%s2 + $0x508] sm:$0xff]
  %v5181 = vld [vmem:[%s2 + $0x510] sm:$0xff]
  %v5182 = vld [vmem:[%s2 + $0x518] sm:$0xff]
  %v5183 = vld [vmem:[%s2 + $0x520] sm:$0xff]
  %v5184 = vld [vmem:[%s2 + $0x528] sm:$0xff]
  %v5185 = vld [vmem:[%s2 + $0x530] sm:$0xff]
  %v5186 = vld [vmem:[%s2 + $0x538] sm:$0xff]
  %v5187 = vld [vmem:[%s2 + $0x540] sm:$0xff]
  %v5188 = vld [vmem:[%s2 + $0x548] sm:$0xff]
  %v5189 = vld [vmem:[%s2 + $0x550] sm:$0xff]
  %v5190 = vld [vmem:[%s2 + $0x558] sm:$0xff]
  %v5191 = vld [vmem:[%s2 + $0x560] sm:$0xff]
  %v5192 = vld [vmem:[%s2 + $0x568] sm:$0xff]
  %v5193 = vld [vmem:[%s2 + $0x570] sm:$0xff]
  %v5194 = vld [vmem:[%s2 + $0x578] sm:$0xff]
  %v5195 = vld [vmem:[%s2 + $0x580] sm:$0xff]
  %v5196 = vld [vmem:[%s2 + $0x588] sm:$0xff]
  %v5197 = vld [vmem:[%s2 + $0x590] sm:$0xff]
  %v5198 = vld [vmem:[%s2 + $0x598] sm:$0xff]
  %v5199 = vld [vmem:[%s2 + $0x5a0] sm:$0xff]
  %v5200 = vld [vmem:[%s2 + $0x5a8] sm:$0xff]
  %v5201 = vld [vmem:[%s2 + $0x5b0] sm:$0xff]
  %v5202 = vld [vmem:[%s2 + $0x5b8] sm:$0xff]
  %v5203 = vld [vmem:[%s2 + $0x5c0] sm:$0xff]
  %v5204 = vld [vmem:[%s2 + $0x5c8] sm:$0xff]
  %v5205 = vld [vmem:[%s2 + $0x5d0] sm:$0xff]
  %v5206 = vld [vmem:[%s2 + $0x5d8] sm:$0xff]
  %v5207 = vld [vmem:[%s2 + $0x5e0] sm:$0xff]
  %v5208 = vld [vmem:[%s2 + $0x5e8] sm:$0xff]
  %v5209 = vld [vmem:[%s2 + $0x5f0] sm:$0xff]
  %v5210 = vld [vmem:[%s2 + $0x5f8] sm:$0xff]
  %v5211 = vld [vmem:[%s2 + $0x600] sm:$0xff]
  %v5212 = vld [vmem:[%s2 + $0x608] sm:$0xff]
  %v5213 = vld [vmem:[%s2 + $0x610] sm:$0xff]
  %v5214 = vld [vmem:[%s2 + $0x618] sm:$0xff]
  %v5215 = vld [vmem:[%s2 + $0x620] sm:$0xff]
  %v5216 = vld [vmem:[%s2 + $0x628] sm:$0xff]
  %v5217 = vld [vmem:[%s2 + $0x630] sm:$0xff]
  %v5218 = vld [vmem:[%s2 + $0x638] sm:$0xff]
  %v5219 = vld [vmem:[%s2 + $0x640] sm:$0xff]
  %v5220 = vld [vmem:[%s2 + $0x648] sm:$0xff]
  %v5221 = vld [vmem:[%s2 + $0x650] sm:$0xff]
  %v5222 = vld [vmem:[%s2 + $0x658] sm:$0xff]
  %v5223 = vld [vmem:[%s2 + $0x660] sm:$0xff]
  %v5224 = vld [vmem:[%s2 + $0x668] sm:$0xff]
  %v5225 = vld [vmem:[%s2 + $0x670] sm:$0xff]
  %v5226 = vld [vmem:[%s2 + $0x678] sm:$0xff]
  %v5227 = vld [vmem:[%s2 + $0x680] sm:$0xff]
  %v5228 = vld [vmem:[%s2 + $0x688] sm:$0xff]
  %v5229 = vld [vmem:[%s2 + $0x690] sm:$0xff]
  %v5230 = vld [vmem:[%s2 + $0x698] sm:$0xff]
  %v5231 = vld [vmem:[%s2 + $0x6a0] sm:$0xff]
  %v5232 = vld [vmem:[%s2 + $0x6a8] sm:$0xff]
  %v5233 = vld [vmem:[%s2 + $0x6b0] sm:$0xff]
  %v5234 = vld [vmem:[%s2 + $0x6b8] sm:$0xff]
  %v5235 = vld [vmem:[%s2 + $0x6c0] sm:$0xff]
  %v5236 = vld [vmem:[%s2 + $0x6c8] sm:$0xff]
  %v5237 = vld [vmem:[%s2 + $0x6d0] sm:$0xff]
  %v5238 = vld [vmem:[%s2 + $0x6d8] sm:$0xff]
  %v5239 = vld [vmem:[%s2 + $0x6e0] sm:$0xff]
  %v5240 = vld [vmem:[%s2 + $0x6e8] sm:$0xff]
  %v5241 = vld [vmem:[%s2 + $0x6f0] sm:$0xff]
  %v5242 = vld [vmem:[%s2 + $0x6f8] sm:$0xff]
  %v5243 = vld [vmem:[%s2 + $0x700] sm:$0xff]
  %v5244 = vld [vmem:[%s2 + $0x708] sm:$0xff]
  %v5245 = vld [vmem:[%s2 + $0x710] sm:$0xff]
  %v5246 = vld [vmem:[%s2 + $0x718] sm:$0xff]
  %v5247 = vld [vmem:[%s2 + $0x720] sm:$0xff]
  %v5248 = vld [vmem:[%s2 + $0x728] sm:$0xff]
  %v5249 = vld [vmem:[%s2 + $0x730] sm:$0xff]
  %v5250 = vld [vmem:[%s2 + $0x738] sm:$0xff]
  %v5251 = vld [vmem:[%s2 + $0x740] sm:$0xff]
  %v5252 = vld [vmem:[%s2 + $0x748] sm:$0xff]
  %v5253 = vld [vmem:[%s2 + $0x750] sm:$0xff]
  %v5254 = vld [vmem:[%s2 + $0x758] sm:$0xff]
  %v5255 = vld [vmem:[%s2 + $0x760] sm:$0xff]
  %v5256 = vld [vmem:[%s2 + $0x768] sm:$0xff]
  %v5257 = vld [vmem:[%s2 + $0x770] sm:$0xff]
  %v5258 = vld [vmem:[%s2 + $0x778] sm:$0xff]
  %v5259 = vld [vmem:[%s2 + $0x780] sm:$0xff]
  %v5260 = vld [vmem:[%s2 + $0x788] sm:$0xff]
  %v5261 = vld [vmem:[%s2 + $0x790] sm:$0xff]
  %v5262 = vld [vmem:[%s2 + $0x798] sm:$0xff]
  %v5263 = vld [vmem:[%s2 + $0x7a0] sm:$0xff]
  %v5264 = vld [vmem:[%s2 + $0x7a8] sm:$0xff]
  %v5265 = vld [vmem:[%s2 + $0x7b0] sm:$0xff]
  %v5266 = vld [vmem:[%s2 + $0x7b8] sm:$0xff]
  %v5267 = vld [vmem:[%s2 + $0x7c0] sm:$0xff]
  %v5268 = vld [vmem:[%s2 + $0x7c8] sm:$0xff]
  %v5269 = vld [vmem:[%s2 + $0x7d0] sm:$0xff]
  %v5270 = vld [vmem:[%s2 + $0x7d8] sm:$0xff]
  %v5271 = vld [vmem:[%s2 + $0x7e0] sm:$0xff]
  %v5272 = vld [vmem:[%s2 + $0x7e8] sm:$0xff]
  %v5273 = vld [vmem:[%s2 + $0x7f0] sm:$0xff]
  %v5274 = vld [vmem:[%s2 + $0x7f8] sm:$0xff]
  %v5275 = vld [vmem:[%s2 + $0x800] sm:$0xff]
  %v5276 = vld [vmem:[%s2 + $0x808] sm:$0xff]
  %v5277 = vld [vmem:[%s2 + $0x810] sm:$0xff]
  %v5278 = vld [vmem:[%s2 + $0x818] sm:$0xff]
  %v5279 = vld [vmem:[%s2 + $0x820] sm:$0xff]
  %v5280 = vld [vmem:[%s2 + $0x828] sm:$0xff]
  %v5281 = vld [vmem:[%s2 + $0x830] sm:$0xff]
  %v5282 = vld [vmem:[%s2 + $0x838] sm:$0xff]
  %v5283 = vld [vmem:[%s2 + $0x840] sm:$0xff]
  %v5284 = vld [vmem:[%s2 + $0x848] sm:$0xff]
  %v5285 = vld [vmem:[%s2 + $0x850] sm:$0xff]
  %v5286 = vld [vmem:[%s2 + $0x858] sm:$0xff]
  %v5287 = vld [vmem:[%s2 + $0x860] sm:$0xff]
  %v5288 = vld [vmem:[%s2 + $0x868] sm:$0xff]
  %v5289 = vld [vmem:[%s2 + $0x870] sm:$0xff]
  %v5290 = vld [vmem:[%s2 + $0x878] sm:$0xff]
  %v5291 = vld [vmem:[%s2 + $0x880] sm:$0xff]
  %v5292 = vld [vmem:[%s2 + $0x888] sm:$0xff]
  %v5293 = vld [vmem:[%s2 + $0x890] sm:$0xff]
  %v5294 = vld [vmem:[%s2 + $0x898] sm:$0xff]
  %v5295 = vld [vmem:[%s2 + $0x8a0] sm:$0xff]
  %v5296 = vld [vmem:[%s2 + $0x8a8] sm:$0xff]
  %v5297 = vld [vmem:[%s2 + $0x8b0] sm:$0xff]
  %v5298 = vld [vmem:[%s2 + $0x8b8] sm:$0xff]
  %v5299 = vld [vmem:[%s2 + $0x8c0] sm:$0xff]
  %v5300 = vld [vmem:[%s2 + $0x8c8] sm:$0xff]
  %v5301 = vld [vmem:[%s2 + $0x8d0] sm:$0xff]
  %v5302 = vld [vmem:[%s2 + $0x8d8] sm:$0xff]
  %v5303 = vld [vmem:[%s2 + $0x8e0] sm:$0xff]
  %v5304 = vld [vmem:[%s2 + $0x8e8] sm:$0xff]
  %v5305 = vld [vmem:[%s2 + $0x8f0] sm:$0xff]
  %v5306 = vld [vmem:[%s2 + $0x8f8] sm:$0xff]
  %v5307 = vld [vmem:[%s2 + $0x900] sm:$0xff]
  %v5308 = vld [vmem:[%s2 + $0x908] sm:$0xff]
  %v5309 = vld [vmem:[%s2 + $0x910] sm:$0xff]
  %v5310 = vld [vmem:[%s2 + $0x918] sm:$0xff]
  %v5311 = vld [vmem:[%s2 + $0x920] sm:$0xff]
  %v5312 = vld [vmem:[%s2 + $0x928] sm:$0xff]
  %v5313 = vld [vmem:[%s2 + $0x930] sm:$0xff]
  %v5314 = vld [vmem:[%s2 + $0x938] sm:$0xff]
  %v5315 = vld [vmem:[%s2 + $0x940] sm:$0xff]
  %v5316 = vld [vmem:[%s2 + $0x948] sm:$0xff]
  %v5317 = vld [vmem:[%s2 + $0x950] sm:$0xff]
  %v5318 = vld [vmem:[%s2 + $0x958] sm:$0xff]
  %v5319 = vmul.f32 %v4719, %v5019
  %v5320 = vmul.f32 %v4720, %v5020
  %v5321 = vmul.f32 %v4721, %v5021
  %v5322 = vmul.f32 %v4722, %v5022
  %v5323 = vmul.f32 %v4723, %v5023
  %v5324 = vmul.f32 %v4724, %v5024
  %v5325 = vmul.f32 %v4725, %v5025
  %v5326 = vmul.f32 %v4726, %v5026
  %v5327 = vmul.f32 %v4727, %v5027
  %v5328 = vmul.f32 %v4728, %v5028
  %v5329 = vmul.f32 %v4729, %v5029
  %v5330 = vmul.f32 %v4730, %v5030
  %v5331 = vmul.f32 %v4731, %v5031
  %v5332 = vmul.f32 %v4732, %v5032
  %v5333 = vmul.f32 %v4733, %v5033
  %v5334 = vmul.f32 %v4734, %v5034
  %v5335 = vmul.f32 %v4735, %v5035
  %v5336 = vmul.f32 %v4736, %v5036
  %v5337 = vmul.f32 %v4737, %v5037
  %v5338 = vmul.f32 %v4738, %v5038
  %v5339 = vmul.f32 %v4739, %v5039
  %v5340 = vmul.f32 %v4740, %v5040
  %v5341 = vmul.f32 %v4741, %v5041
  %v5342 = vmul.f32 %v4742, %v5042
  %v5343 = vmul.f32 %v4743, %v5043
  %v5344 = vmul.f32 %v4744, %v5044
  %v5345 = vmul.f32 %v4745, %v5045
  %v5346 = vmul.f32 %v4746, %v5046
  %v5347 = vmul.f32 %v4747, %v5047
  %v5348 = vmul.f32 %v4748, %v5048
  %v5349 = vmul.f32 %v4749, %v5049
  %v5350 = vmul.f32 %v4750, %v5050
  %v5351 = vmul.f32 %v4751, %v5051
  %v5352 = vmul.f32 %v4752, %v5052
  %v5353 = vmul.f32 %v4753, %v5053
  %v5354 = vmul.f32 %v4754, %v5054
  %v5355 = vmul.f32 %v4755, %v5055
  %v5356 = vmul.f32 %v4756, %v5056
  %v5357 = vmul.f32 %v4757, %v5057
  %v5358 = vmul.f32 %v4758, %v5058
  %v5359 = vmul.f32 %v4759, %v5059
  %v5360 = vmul.f32 %v4760, %v5060
  %v5361 = vmul.f32 %v4761, %v5061
  %v5362 = vmul.f32 %v4762, %v5062
  %v5363 = vmul.f32 %v4763, %v5063
  %v5364 = vmul.f32 %v4764, %v5064
  %v5365 = vmul.f32 %v4765, %v5065
  %v5366 = vmul.f32 %v4766, %v5066
  %v5367 = vmul.f32 %v4767, %v5067
  %v5368 = vmul.f32 %v4768, %v5068
  %v5369 = vmul.f32 %v4769, %v5069
  %v5370 = vmul.f32 %v4770, %v5070
  %v5371 = vmul.f32 %v4771, %v5071
  %v5372 = vmul.f32 %v4772, %v5072
  %v5373 = vmul.f32 %v4773, %v5073
  %v5374 = vmul.f32 %v4774, %v5074
  %v5375 = vmul.f32 %v4775, %v5075
  %v5376 = vmul.f32 %v4776, %v5076
  %v5377 = vmul.f32 %v4777, %v5077
  %v5378 = vmul.f32 %v4778, %v5078
  %v5379 = vmul.f32 %v4779, %v5079
  %v5380 = vmul.f32 %v4780, %v5080
  %v5381 = vmul.f32 %v4781, %v5081
  %v5382 = vmul.f32 %v4782, %v5082
  %v5383 = vmul.f32 %v4783, %v5083
  %v5384 = vmul.f32 %v4784, %v5084
  %v5385 = vmul.f32 %v4785, %v5085
  %v5386 = vmul.f32 %v4786, %v5086
  %v5387 = vmul.f32 %v4787, %v5087
  %v5388 = vmul.f32 %v4788, %v5088
  %v5389 = vmul.f32 %v4789, %v5089
  %v5390 = vmul.f32 %v4790, %v5090
  %v5391 = vmul.f32 %v4791, %v5091
  %v5392 = vmul.f32 %v4792, %v5092
  %v5393 = vmul.f32 %v4793, %v5093
  %v5394 = vmul.f32 %v4794, %v5094
  %v5395 = vmul.f32 %v4795, %v5095
  %v5396 = vmul.f32 %v4796, %v5096
  %v5397 = vmul.f32 %v4797, %v5097
  %v5398 = vmul.f32 %v4798, %v5098
  %v5399 = vmul.f32 %v4799, %v5099
  %v5400 = vmul.f32 %v4800, %v5100
  %v5401 = vmul.f32 %v4801, %v5101
  %v5402 = vmul.f32 %v4802, %v5102
  %v5403 = vmul.f32 %v4803, %v5103
  %v5404 = vmul.f32 %v4804, %v5104
  %v5405 = vmul.f32 %v4805, %v5105
  %v5406 = vmul.f32 %v4806, %v5106
  %v5407 = vmul.f32 %v4807, %v5107
  %v5408 = vmul.f32 %v4808, %v5108
  %v5409 = vmul.f32 %v4809, %v5109
  %v5410 = vmul.f32 %v4810, %v5110
  %v5411 = vmul.f32 %v4811, %v5111
  %v5412 = vmul.f32 %v4812, %v5112
  %v5413 = vmul.f32 %v4813, %v5113
  %v5414 = vmul.f32 %v4814, %v5114
  %v5415 = vmul.f32 %v4815, %v5115
  %v5416 = vmul.f32 %v4816, %v5116
  %v5417 = vmul.f32 %v4817, %v5117
  %v5418 = vmul.f32 %v4818, %v5118
  %v5419 = vmul.f32 %v4819, %v5119
  %v5420 = vmul.f32 %v4820, %v5120
  %v5421 = vmul.f32 %v4821, %v5121
  %v5422 = vmul.f32 %v4822, %v5122
  %v5423 = vmul.f32 %v4823, %v5123
  %v5424 = vmul.f32 %v4824, %v5124
  %v5425 = vmul.f32 %v4825, %v5125
  %v5426 = vmul.f32 %v4826, %v5126
  %v5427 = vmul.f32 %v4827, %v5127
  %v5428 = vmul.f32 %v4828, %v5128
  %v5429 = vmul.f32 %v4829, %v5129
  %v5430 = vmul.f32 %v4830, %v5130
  %v5431 = vmul.f32 %v4831, %v5131
  %v5432 = vmul.f32 %v4832, %v5132
  %v5433 = vmul.f32 %v4833, %v5133
  %v5434 = vmul.f32 %v4834, %v5134
  %v5435 = vmul.f32 %v4835, %v5135
  %v5436 = vmul.f32 %v4836, %v5136
  %v5437 = vmul.f32 %v4837, %v5137
  %v5438 = vmul.f32 %v4838, %v5138
  %v5439 = vmul.f32 %v4839, %v5139
  %v5440 = vmul.f32 %v4840, %v5140
  %v5441 = vmul.f32 %v4841, %v5141
  %v5442 = vmul.f32 %v4842, %v5142
  %v5443 = vmul.f32 %v4843, %v5143
  %v5444 = vmul.f32 %v4844, %v5144
  %v5445 = vmul.f32 %v4845, %v5145
  %v5446 = vmul.f32 %v4846, %v5146
  %v5447 = vmul.f32 %v4847, %v5147
  %v5448 = vmul.f32 %v4848, %v5148
  %v5449 = vmul.f32 %v4849, %v5149
  %v5450 = vmul.f32 %v4850, %v5150
  %v5451 = vmul.f32 %v4851, %v5151
  %v5452 = vmul.f32 %v4852, %v5152
  %v5453 = vmul.f32 %v4853, %v5153
  %v5454 = vmul.f32 %v4854, %v5154
  %v5455 = vmul.f32 %v4855, %v5155
  %v5456 = vmul.f32 %v4856, %v5156
  %v5457 = vmul.f32 %v4857, %v5157
  %v5458 = vmul.f32 %v4858, %v5158
  %v5459 = vmul.f32 %v4859, %v5159
  %v5460 = vmul.f32 %v4860, %v5160
  %v5461 = vmul.f32 %v4861, %v5161
  %v5462 = vmul.f32 %v4862, %v5162
  %v5463 = vmul.f32 %v4863, %v5163
  %v5464 = vmul.f32 %v4864, %v5164
  %v5465 = vmul.f32 %v4865, %v5165
  %v5466 = vmul.f32 %v4866, %v5166
  %v5467 = vmul.f32 %v4867, %v5167
  %v5468 = vmul.f32 %v4868, %v5168
  %v5469 = vmul.f32 %v4869, %v5169
  %v5470 = vmul.f32 %v4870, %v5170
  %v5471 = vmul.f32 %v4871, %v5171
  %v5472 = vmul.f32 %v4872, %v5172
  %v5473 = vmul.f32 %v4873, %v5173
  %v5474 = vmul.f32 %v4874, %v5174
  %v5475 = vmul.f32 %v4875, %v5175
  %v5476 = vmul.f32 %v4876, %v5176
  %v5477 = vmul.f32 %v4877, %v5177
  %v5478 = vmul.f32 %v4878, %v5178
  %v5479 = vmul.f32 %v4879, %v5179
  %v5480 = vmul.f32 %v4880, %v5180
  %v5481 = vmul.f32 %v4881, %v5181
  %v5482 = vmul.f32 %v4882, %v5182
  %v5483 = vmul.f32 %v4883, %v5183
  %v5484 = vmul.f32 %v4884, %v5184
  %v5485 = vmul.f32 %v4885, %v5185
  %v5486 = vmul.f32 %v4886, %v5186
  %v5487 = vmul.f32 %v4887, %v5187
  %v5488 = vmul.f32 %v4888, %v5188
  %v5489 = vmul.f32 %v4889, %v5189
  %v5490 = vmul.f32 %v4890, %v5190
  %v5491 = vmul.f32 %v4891, %v5191
  %v5492 = vmul.f32 %v4892, %v5192
  %v5493 = vmul.f32 %v4893, %v5193
  %v5494 = vmul.f32 %v4894, %v5194
  %v5495 = vmul.f32 %v4895, %v5195
  %v5496 = vmul.f32 %v4896, %v5196
  %v5497 = vmul.f32 %v4897, %v5197
  %v5498 = vmul.f32 %v4898, %v5198
  %v5499 = vmul.f32 %v4899, %v5199
  %v5500 = vmul.f32 %v4900, %v5200
  %v5501 = vmul.f32 %v4901, %v5201
  %v5502 = vmul.f32 %v4902, %v5202
  %v5503 = vmul.f32 %v4903, %v5203
  %v5504 = vmul.f32 %v4904, %v5204
  %v5505 = vmul.f32 %v4905, %v5205
  %v5506 = vmul.f32 %v4906, %v5206
  %v5507 = vmul.f32 %v4907, %v5207
  %v5508 = vmul.f32 %v4908, %v5208
  %v5509 = vmul.f32 %v4909, %v5209
  %v5510 = vmul.f32 %v4910, %v5210
  %v5511 = vmul.f32 %v4911, %v5211
  %v5512 = vmul.f32 %v4912, %v5212
  %v5513 = vmul.f32 %v4913, %v5213
  %v5514 = vmul.f32 %v4914, %v5214
  %v5515 = vmul.f32 %v4915, %v5215
  %v5516 = vmul.f32 %v4916, %v5216
  %v5517 = vmul.f32 %v4917, %v5217
  %v5518 = vmul.f32 %v4918, %v5218
  %v5519 = vmul.f32 %v4919, %v5219
  %v5520 = vmul.f32 %v4920, %v5220
  %v5521 = vmul.f32 %v4921, %v5221
  %v5522 = vmul.f32 %v4922, %v5222
  %v5523 = vmul.f32 %v4923, %v5223
  %v5524 = vmul.f32 %v4924, %v5224
  %v5525 = vmul.f32 %v4925, %v5225
  %v5526 = vmul.f32 %v4926, %v5226
  %v5527 = vmul.f32 %v4927, %v5227
  %v5528 = vmul.f32 %v4928, %v5228
  %v5529 = vmul.f32 %v4929, %v5229
  %v5530 = vmul.f32 %v4930, %v5230
  %v5531 = vmul.f32 %v4931, %v5231
  %v5532 = vmul.f32 %v4932, %v5232
  %v5533 = vmul.f32 %v4933, %v5233
  %v5534 = vmul.f32 %v4934, %v5234
  %v5535 = vmul.f32 %v4935, %v5235
  %v5536 = vmul.f32 %v4936, %v5236
  %v5537 = vmul.f32 %v4937, %v5237
  %v5538 = vmul.f32 %v4938, %v5238
  %v5539 = vmul.f32 %v4939, %v5239
  %v5540 = vmul.f32 %v4940, %v5240
  %v5541 = vmul.f32 %v4941, %v5241
  %v5542 = vmul.f32 %v4942, %v5242
  %v5543 = vmul.f32 %v4943, %v5243
  %v5544 = vmul.f32 %v4944, %v5244
  %v5545 = vmul.f32 %v4945, %v5245
  %v5546 = vmul.f32 %v4946, %v5246
  %v5547 = vmul.f32 %v4947, %v5247
  %v5548 = vmul.f32 %v4948, %v5248
  %v5549 = vmul.f32 %v4949, %v5249
  %v5550 = vmul.f32 %v4950, %v5250
  %v5551 = vmul.f32 %v4951, %v5251
  %v5552 = vmul.f32 %v4952, %v5252
  %v5553 = vmul.f32 %v4953, %v5253
  %v5554 = vmul.f32 %v4954, %v5254
  %v5555 = vmul.f32 %v4955, %v5255
  %v5556 = vmul.f32 %v4956, %v5256
  %v5557 = vmul.f32 %v4957, %v5257
  %v5558 = vmul.f32 %v4958, %v5258
  %v5559 = vmul.f32 %v4959, %v5259
  %v5560 = vmul.f32 %v4960, %v5260
  %v5561 = vmul.f32 %v4961, %v5261
  %v5562 = vmul.f32 %v4962, %v5262
  %v5563 = vmul.f32 %v4963, %v5263
  %v5564 = vmul.f32 %v4964, %v5264
  %v5565 = vmul.f32 %v4965, %v5265
  %v5566 = vmul.f32 %v4966, %v5266
  %v5567 = vmul.f32 %v4967, %v5267
  %v5568 = vmul.f32 %v4968, %v5268
  %v5569 = vmul.f32 %v4969, %v5269
  %v5570 = vmul.f32 %v4970, %v5270
  %v5571 = vmul.f32 %v4971, %v5271
  %v5572 = vmul.f32 %v4972, %v5272
  %v5573 = vmul.f32 %v4973, %v5273
  %v5574 = vmul.f32 %v4974, %v5274
  %v5575 = vmul.f32 %v4975, %v5275
  %v5576 = vmul.f32 %v4976, %v5276
  %v5577 = vmul.f32 %v4977, %v5277
  %v5578 = vmul.f32 %v4978, %v5278
  %v5579 = vmul.f32 %v4979, %v5279
  %v5580 = vmul.f32 %v4980, %v5280
  %v5581 = vmul.f32 %v4981, %v5281
  %v5582 = vmul.f32 %v4982, %v5282
  %v5583 = vmul.f32 %v4983, %v5283
  %v5584 = vmul.f32 %v4984, %v5284
  %v5585 = vmul.f32 %v4985, %v5285
  %v5586 = vmul.f32 %v4986, %v5286
  %v5587 = vmul.f32 %v4987, %v5287
  %v5588 = vmul.f32 %v4988, %v5288
  %v5589 = vmul.f32 %v4989, %v5289
  %v5590 = vmul.f32 %v4990, %v5290
  %v5591 = vmul.f32 %v4991, %v5291
  %v5592 = vmul.f32 %v4992, %v5292
  %v5593 = vmul.f32 %v4993, %v5293
  %v5594 = vmul.f32 %v4994, %v5294
  %v5595 = vmul.f32 %v4995, %v5295
  %v5596 = vmul.f32 %v4996, %v5296
  %v5597 = vmul.f32 %v4997, %v5297
  %v5598 = vmul.f32 %v4998, %v5298
  %v5599 = vmul.f32 %v4999, %v5299
  %v5600 = vmul.f32 %v5000, %v5300
  %v5601 = vmul.f32 %v5001, %v5301
  %v5602 = vmul.f32 %v5002, %v5302
  %v5603 = vmul.f32 %v5003, %v5303
  %v5604 = vmul.f32 %v5004, %v5304
  %v5605 = vmul.f32 %v5005, %v5305
  %v5606 = vmul.f32 %v5006, %v5306
  %v5607 = vmul.f32 %v5007, %v5307
  %v5608 = vmul.f32 %v5008, %v5308
  %v5609 = vmul.f32 %v5009, %v5309
  %v5610 = vmul.f32 %v5010, %v5310
  %v5611 = vmul.f32 %v5011, %v5311
  %v5612 = vmul.f32 %v5012, %v5312
  %v5613 = vmul.f32 %v5013, %v5313
  %v5614 = vmul.f32 %v5014, %v5314
  %v5615 = vmul.f32 %v5015, %v5315
  %v5616 = vmul.f32 %v5016, %v5316
  %v5617 = vmul.f32 %v5017, %v5317
  %v5618 = vmul.f32 %v5018, %v5318
  %v5619 = vld [vmem:[%s7] sm:$0xff]
  %v5620 = vld [vmem:[%s7 + $0x8] sm:$0xff]
  %v5621 = vld [vmem:[%s7 + $0x10] sm:$0xff]
  %v5622 = vld [vmem:[%s7 + $0x18] sm:$0xff]
  %v5623 = vld [vmem:[%s7 + $0x20] sm:$0xff]
  %v5624 = vld [vmem:[%s8] sm:$0xff]
  %5626 = vset.pattern.permute.xlu0 0
  %5627 = vperm.xlu0 %5626, %v5624
  %v5628 = vpop.permute.xlu0 %5627
  %v5631 = vsel %vm3047, %v5623, 0
  %5633 = vmatprep.subr.mxu0 %v5380
  %5634 = vmatpush1.msra.mxu0 %v5379
  %5635 = vmatprep.subr.mxu0 %v5376
  %5636 = vmatpush1.msra.mxu0 %v5375
  %5637 = vmatprep.subr.mxu0 %v5372
  %5638 = vmatpush1.msra.mxu0 %v5371
  %5639 = vmatprep.subr.mxu0 %v5368
  %5640 = vmatpush1.msra.mxu0 %v5367
  %5641 = vmatprep.subr.mxu0 %v5364
  %5642 = vmatpush1.msra.mxu0 %v5363
  %5643 = vmatprep.subr.mxu0 %v5360
  %5644 = vmatpush1.msra.mxu0 %v5359
  %5645 = vmatprep.subr.mxu0 %v5356
  %5646 = vmatpush1.msra.mxu0 %v5355
  %5647 = vmatprep.subr.mxu0 %v5352
  %5648 = vmatpush1.msra.mxu0 %v5351
  %5649 = vmatprep.subr.mxu0 %v5348
  %5650 = vmatpush1.msra.mxu0 %v5347
  %5651 = vmatprep.subr.mxu0 %v5344
  %5652 = vmatpush1.msra.mxu0 %v5343
  %5653 = vmatprep.subr.mxu0 %v5340
  %5654 = vmatpush1.msra.mxu0 %v5339
  %5655 = vmatprep.subr.mxu0 %v5336
  %5656 = vmatpush1.msra.mxu0 %v5335
  %5657 = vmatprep.subr.mxu0 %v5332
  %5658 = vmatpush1.msra.mxu0 %v5331
  %5659 = vmatprep.subr.mxu0 %v5328
  %5660 = vmatpush1.msra.mxu0 %v5327
  %5661 = vmatprep.subr.mxu0 %v5324
  %5662 = vmatpush1.msra.mxu0 %v5323
  %5663 = vmatprep.subr.mxu0 %v5320
  %5664 = vmatpush1.msra.mxu0 %v5319
  %5665 = vmatprep.subr.mxu0 %v5444
  %5666 = vmatpush2.msra.mxu0 %v5443
  %5667 = vmatprep.subr.mxu0 %v5440
  %5668 = vmatpush2.msra.mxu0 %v5439
  %5669 = vmatprep.subr.mxu0 %v5436
  %5670 = vmatpush2.msra.mxu0 %v5435
  %5671 = vmatprep.subr.mxu0 %v5432
  %5672 = vmatpush2.msra.mxu0 %v5431
  %5673 = vmatprep.subr.mxu0 %v5428
  %5674 = vmatpush2.msra.mxu0 %v5427
  %5675 = vmatprep.subr.mxu0 %v5424
  %5676 = vmatpush2.msra.mxu0 %v5423
  %5677 = vmatprep.subr.mxu0 %v5420
  %5678 = vmatpush2.msra.mxu0 %v5419
  %5679 = vmatprep.subr.mxu0 %v5416
  %5680 = vmatpush2.msra.mxu0 %v5415
  %5681 = vmatprep.subr.mxu0 %v5412
  %5682 = vmatpush2.msra.mxu0 %v5411
  %5683 = vmatprep.subr.mxu0 %v5408
  %5684 = vmatpush2.msra.mxu0 %v5407
  %5685 = vmatprep.subr.mxu0 %v5404
  %5686 = vmatpush2.msra.mxu0 %v5403
  %5687 = vmatprep.subr.mxu0 %v5400
  %5688 = vmatpush2.msra.mxu0 %v5399
  %5689 = vmatprep.subr.mxu0 %v5396
  %5690 = vmatpush2.msra.mxu0 %v5395
  %5691 = vmatprep.subr.mxu0 %v5392
  %5692 = vmatpush2.msra.mxu0 %v5391
  %5693 = vmatprep.subr.mxu0 %v5388
  %5694 = vmatpush2.msra.mxu0 %v5387
  %5695 = vmatprep.subr.mxu0 %v5384
  %5696 = vmatpush2.msra.mxu0 %v5383
  %5697 = vmatprep.mubr.f32.mxu0 %v5620
  %5698 = vmatmul.mubr.f32.gmra.mxu0 %v5619
  %v5699 = vpop.f32.mrf.mxu0
  %v5700 = vadd.f32 %v5628, %v5699
  %v5701 = vpop.f32.mrf.mxu0
  %v5702 = vadd.f32 %v5628, %v5701
  %5703 = vdwg.mxu0
  %5704 = vmatprep.subr.mxu0 %v5508
  %5705 = vmatpush1.msra.mxu0 %v5507
  %5706 = vmatprep.subr.mxu0 %v5504
  %5707 = vmatpush1.msra.mxu0 %v5503
  %5708 = vmatprep.subr.mxu0 %v5500
  %5709 = vmatpush1.msra.mxu0 %v5499
  %5710 = vmatprep.subr.mxu0 %v5496
  %5711 = vmatpush1.msra.mxu0 %v5495
  %5712 = vmatprep.subr.mxu0 %v5492
  %5713 = vmatpush1.msra.mxu0 %v5491
  %5714 = vmatprep.subr.mxu0 %v5488
  %5715 = vmatpush1.msra.mxu0 %v5487
  %5716 = vmatprep.subr.mxu0 %v5484
  %5717 = vmatpush1.msra.mxu0 %v5483
  %5718 = vmatprep.subr.mxu0 %v5480
  %5719 = vmatpush1.msra.mxu0 %v5479
  %5720 = vmatprep.subr.mxu0 %v5476
  %5721 = vmatpush1.msra.mxu0 %v5475
  %5722 = vmatprep.subr.mxu0 %v5472
  %5723 = vmatpush1.msra.mxu0 %v5471
  %5724 = vmatprep.subr.mxu0 %v5468
  %5725 = vmatpush1.msra.mxu0 %v5467
  %5726 = vmatprep.subr.mxu0 %v5464
  %5727 = vmatpush1.msra.mxu0 %v5463
  %5728 = vmatprep.subr.mxu0 %v5460
  %5729 = vmatpush1.msra.mxu0 %v5459
  %5730 = vmatprep.subr.mxu0 %v5456
  %5731 = vmatpush1.msra.mxu0 %v5455
  %5732 = vmatprep.subr.mxu0 %v5452
  %5733 = vmatpush1.msra.mxu0 %v5451
  %5734 = vmatprep.subr.mxu0 %v5448
  %5735 = vmatpush1.msra.mxu0 %v5447
  %5736 = vmatprep.subr.mxu0 %v5572
  %5737 = vmatpush2.msra.mxu0 %v5571
  %5738 = vmatprep.subr.mxu0 %v5568
  %5739 = vmatpush2.msra.mxu0 %v5567
  %5740 = vmatprep.subr.mxu0 %v5564
  %5741 = vmatpush2.msra.mxu0 %v5563
  %5742 = vmatprep.subr.mxu0 %v5560
  %5743 = vmatpush2.msra.mxu0 %v5559
  %5744 = vmatprep.subr.mxu0 %v5556
  %5745 = vmatpush2.msra.mxu0 %v5555
  %5746 = vmatprep.subr.mxu0 %v5552
  %5747 = vmatpush2.msra.mxu0 %v5551
  %5748 = vmatprep.subr.mxu0 %v5548
  %5749 = vmatpush2.msra.mxu0 %v5547
  %5750 = vmatprep.subr.mxu0 %v5544
  %5751 = vmatpush2.msra.mxu0 %v5543
  %5752 = vmatprep.subr.mxu0 %v5540
  %5753 = vmatpush2.msra.mxu0 %v5539
  %5754 = vmatprep.subr.mxu0 %v5536
  %5755 = vmatpush2.msra.mxu0 %v5535
  %5756 = vmatprep.subr.mxu0 %v5532
  %5757 = vmatpush2.msra.mxu0 %v5531
  %5758 = vmatprep.subr.mxu0 %v5528
  %5759 = vmatpush2.msra.mxu0 %v5527
  %5760 = vmatprep.subr.mxu0 %v5524
  %5761 = vmatpush2.msra.mxu0 %v5523
  %5762 = vmatprep.subr.mxu0 %v5520
  %5763 = vmatpush2.msra.mxu0 %v5519
  %5764 = vmatprep.subr.mxu0 %v5516
  %5765 = vmatpush2.msra.mxu0 %v5515
  %5766 = vmatprep.subr.mxu0 %v5512
  %5767 = vmatpush2.msra.mxu0 %v5511
  %5768 = vmatprep.mubr.f32.mxu0 %v5622
  %5769 = vmatmul.mubr.f32.gmra.mxu0 %v5621
  %v5770 = vpop.f32.mrf.mxu0
  %v5771 = vadd.f32 %v5700, %v5770
  %v5772 = vpop.f32.mrf.mxu0
  %v5773 = vadd.f32 %v5702, %v5772
  %5774 = vdwg.mxu0
  %5775 = vmatprep.subr.mxu0 0.0
  %5776 = vmatpush1.msra.mxu0 0.0
  %5777 = vmatprep.subr.mxu0 0.0
  %5778 = vmatpush1.msra.mxu0 0.0
  %5779 = vmatprep.subr.mxu0 0.0
  %5780 = vmatpush1.msra.mxu0 0.0
  %5781 = vmatprep.subr.mxu0 0.0
  %5782 = vmatpush1.msra.mxu0 0.0
  %5783 = vmatprep.subr.mxu0 0.0
  %5784 = vmatpush1.msra.mxu0 0.0
  %5785 = vmatprep.subr.mxu0 %v5616
  %5786 = vmatpush1.msra.mxu0 %v5615
  %5787 = vmatprep.subr.mxu0 %v5612
  %5788 = vmatpush1.msra.mxu0 %v5611
  %5789 = vmatprep.subr.mxu0 %v5608
  %5790 = vmatpush1.msra.mxu0 %v5607
  %5791 = vmatprep.subr.mxu0 %v5604
  %5792 = vmatpush1.msra.mxu0 %v5603
  %5793 = vmatprep.subr.mxu0 %v5600
  %5794 = vmatpush1.msra.mxu0 %v5599
  %5795 = vmatprep.subr.mxu0 %v5596
  %5796 = vmatpush1.msra.mxu0 %v5595
  %5797 = vmatprep.subr.mxu0 %v5592
  %5798 = vmatpush1.msra.mxu0 %v5591
  %5799 = vmatprep.subr.mxu0 %v5588
  %5800 = vmatpush1.msra.mxu0 %v5587
  %5801 = vmatprep.subr.mxu0 %v5584
  %5802 = vmatpush1.msra.mxu0 %v5583
  %5803 = vmatprep.subr.mxu0 %v5580
  %5804 = vmatpush1.msra.mxu0 %v5579
  %5805 = vmatprep.subr.mxu0 %v5576
  %5806 = vmatpush1.msra.mxu0 %v5575
  %5807 = vmatprep.subr.mxu0 0.0
  %5808 = vmatpush2.msra.mxu0 0.0
  %5809 = vmatprep.subr.mxu0 0.0
  %5810 = vmatpush2.msra.mxu0 0.0
  %5811 = vmatprep.subr.mxu0 0.0
  %5812 = vmatpush2.msra.mxu0 0.0
  %5813 = vmatprep.subr.mxu0 0.0
  %5814 = vmatpush2.msra.mxu0 0.0
  %5815 = vmatprep.subr.mxu0 0.0
  %5816 = vmatpush2.msra.mxu0 0.0
  %5817 = vmatprep.subr.mxu0 0.0
  %5818 = vmatpush2.msra.mxu0 0.0
  %5819 = vmatprep.subr.mxu0 0.0
  %5820 = vmatpush2.msra.mxu0 0.0
  %5821 = vmatprep.subr.mxu0 0.0
  %5822 = vmatpush2.msra.mxu0 0.0
  %5823 = vmatprep.subr.mxu0 0.0
  %5824 = vmatpush2.msra.mxu0 0.0
  %5825 = vmatprep.subr.mxu0 0.0
  %5826 = vmatpush2.msra.mxu0 0.0
  %5827 = vmatprep.subr.mxu0 0.0
  %5828 = vmatpush2.msra.mxu0 0.0
  %5829 = vmatprep.subr.mxu0 0.0
  %5830 = vmatpush2.msra.mxu0 0.0
  %5831 = vmatprep.subr.mxu0 0.0
  %5832 = vmatpush2.msra.mxu0 0.0
  %5833 = vmatprep.subr.mxu0 0.0
  %5834 = vmatpush2.msra.mxu0 0.0
  %5835 = vmatprep.subr.mxu0 0.0
  %5836 = vmatpush2.msra.mxu0 0.0
  %5837 = vmatprep.subr.mxu0 0.0
  %5838 = vmatpush2.msra.mxu0 0.0
  %5839 = vmatprep.mubr.f32.mxu0 0.0
  %5840 = vmatmul.mubr.f32.gmra.mxu0 %v5631
  %v5841 = vpop.f32.mrf.mxu0
  %v5842 = vadd.f32 %v5771, %v5841
  %v5843 = vpop.f32.mrf.mxu0
  %v5844 = vadd.f32 %v5773, %v5843
  %5845 = vdwg.mxu0
  %5846 = vmatprep.subr.mxu0 %v5382
  %5847 = vmatpush1.msra.mxu0 %v5381
  %5848 = vmatprep.subr.mxu0 %v5378
  %5849 = vmatpush1.msra.mxu0 %v5377
  %5850 = vmatprep.subr.mxu0 %v5374
  %5851 = vmatpush1.msra.mxu0 %v5373
  %5852 = vmatprep.subr.mxu0 %v5370
  %5853 = vmatpush1.msra.mxu0 %v5369
  %5854 = vmatprep.subr.mxu0 %v5366
  %5855 = vmatpush1.msra.mxu0 %v5365
  %5856 = vmatprep.subr.mxu0 %v5362
  %5857 = vmatpush1.msra.mxu0 %v5361
  %5858 = vmatprep.subr.mxu0 %v5358
  %5859 = vmatpush1.msra.mxu0 %v5357
  %5860 = vmatprep.subr.mxu0 %v5354
  %5861 = vmatpush1.msra.mxu0 %v5353
  %5862 = vmatprep.subr.mxu0 %v5350
  %5863 = vmatpush1.msra.mxu0 %v5349
  %5864 = vmatprep.subr.mxu0 %v5346
  %5865 = vmatpush1.msra.mxu0 %v5345
  %5866 = vmatprep.subr.mxu0 %v5342
  %5867 = vmatpush1.msra.mxu0 %v5341
  %5868 = vmatprep.subr.mxu0 %v5338
  %5869 = vmatpush1.msra.mxu0 %v5337
  %5870 = vmatprep.subr.mxu0 %v5334
  %5871 = vmatpush1.msra.mxu0 %v5333
  %5872 = vmatprep.subr.mxu0 %v5330
  %5873 = vmatpush1.msra.mxu0 %v5329
  %5874 = vmatprep.subr.mxu0 %v5326
  %5875 = vmatpush1.msra.mxu0 %v5325
  %5876 = vmatprep.subr.mxu0 %v5322
  %5877 = vmatpush1.msra.mxu0 %v5321
  %5878 = vmatprep.subr.mxu0 %v5446
  %5879 = vmatpush2.msra.mxu0 %v5445
  %5880 = vmatprep.subr.mxu0 %v5442
  %5881 = vmatpush2.msra.mxu0 %v5441
  %5882 = vmatprep.subr.mxu0 %v5438
  %5883 = vmatpush2.msra.mxu0 %v5437
  %5884 = vmatprep.subr.mxu0 %v5434
  %5885 = vmatpush2.msra.mxu0 %v5433
  %5886 = vmatprep.subr.mxu0 %v5430
  %5887 = vmatpush2.msra.mxu0 %v5429
  %5888 = vmatprep.subr.mxu0 %v5426
  %5889 = vmatpush2.msra.mxu0 %v5425
  %5890 = vmatprep.subr.mxu0 %v5422
  %5891 = vmatpush2.msra.mxu0 %v5421
  %5892 = vmatprep.subr.mxu0 %v5418
  %5893 = vmatpush2.msra.mxu0 %v5417
  %5894 = vmatprep.subr.mxu0 %v5414
  %5895 = vmatpush2.msra.mxu0 %v5413
  %5896 = vmatprep.subr.mxu0 %v5410
  %5897 = vmatpush2.msra.mxu0 %v5409
  %5898 = vmatprep.subr.mxu0 %v5406
  %5899 = vmatpush2.msra.mxu0 %v5405
  %5900 = vmatprep.subr.mxu0 %v5402
  %5901 = vmatpush2.msra.mxu0 %v5401
  %5902 = vmatprep.subr.mxu0 %v5398
  %5903 = vmatpush2.msra.mxu0 %v5397
  %5904 = vmatprep.subr.mxu0 %v5394
  %5905 = vmatpush2.msra.mxu0 %v5393
  %5906 = vmatprep.subr.mxu0 %v5390
  %5907 = vmatpush2.msra.mxu0 %v5389
  %5908 = vmatprep.subr.mxu0 %v5386
  %5909 = vmatpush2.msra.mxu0 %v5385
  %5910 = vmatprep.mubr.f32.mxu0 %v5620
  %5911 = vmatmul.mubr.f32.gmra.mxu0 %v5619
  %v5912 = vpop.f32.mrf.mxu0
  %v5913 = vadd.f32 %v5628, %v5912
  %v5914 = vpop.f32.mrf.mxu0
  %v5915 = vadd.f32 %v5628, %v5914
  %5916 = vdwg.mxu0
  %5917 = vmatprep.subr.mxu0 %v5510
  %5918 = vmatpush1.msra.mxu0 %v5509
  %5919 = vmatprep.subr.mxu0 %v5506
  %5920 = vmatpush1.msra.mxu0 %v5505
  %5921 = vmatprep.subr.mxu0 %v5502
  %5922 = vmatpush1.msra.mxu0 %v5501
  %5923 = vmatprep.subr.mxu0 %v5498
  %5924 = vmatpush1.msra.mxu0 %v5497
  %5925 = vmatprep.subr.mxu0 %v5494
  %5926 = vmatpush1.msra.mxu0 %v5493
  %5927 = vmatprep.subr.mxu0 %v5490
  %5928 = vmatpush1.msra.mxu0 %v5489
  %5929 = vmatprep.subr.mxu0 %v5486
  %5930 = vmatpush1.msra.mxu0 %v5485
  %5931 = vmatprep.subr.mxu0 %v5482
  %5932 = vmatpush1.msra.mxu0 %v5481
  %5933 = vmatprep.subr.mxu0 %v5478
  %5934 = vmatpush1.msra.mxu0 %v5477
  %5935 = vmatprep.subr.mxu0 %v5474
  %5936 = vmatpush1.msra.mxu0 %v5473
  %5937 = vmatprep.subr.mxu0 %v5470
  %5938 = vmatpush1.msra.mxu0 %v5469
  %5939 = vmatprep.subr.mxu0 %v5466
  %5940 = vmatpush1.msra.mxu0 %v5465
  %5941 = vmatprep.subr.mxu0 %v5462
  %5942 = vmatpush1.msra.mxu0 %v5461
  %5943 = vmatprep.subr.mxu0 %v5458
  %5944 = vmatpush1.msra.mxu0 %v5457
  %5945 = vmatprep.subr.mxu0 %v5454
  %5946 = vmatpush1.msra.mxu0 %v5453
  %5947 = vmatprep.subr.mxu0 %v5450
  %5948 = vmatpush1.msra.mxu0 %v5449
  %5949 = vmatprep.subr.mxu0 %v5574
  %5950 = vmatpush2.msra.mxu0 %v5573
  %5951 = vmatprep.subr.mxu0 %v5570
  %5952 = vmatpush2.msra.mxu0 %v5569
  %5953 = vmatprep.subr.mxu0 %v5566
  %5954 = vmatpush2.msra.mxu0 %v5565
  %5955 = vmatprep.subr.mxu0 %v5562
  %5956 = vmatpush2.msra.mxu0 %v5561
  %5957 = vmatprep.subr.mxu0 %v5558
  %5958 = vmatpush2.msra.mxu0 %v5557
  %5959 = vmatprep.subr.mxu0 %v5554
  %5960 = vmatpush2.msra.mxu0 %v5553
  %5961 = vmatprep.subr.mxu0 %v5550
  %5962 = vmatpush2.msra.mxu0 %v5549
  %5963 = vmatprep.subr.mxu0 %v5546
  %5964 = vmatpush2.msra.mxu0 %v5545
  %5965 = vmatprep.subr.mxu0 %v5542
  %5966 = vmatpush2.msra.mxu0 %v5541
  %5967 = vmatprep.subr.mxu0 %v5538
  %5968 = vmatpush2.msra.mxu0 %v5537
  %5969 = vmatprep.subr.mxu0 %v5534
  %5970 = vmatpush2.msra.mxu0 %v5533
  %5971 = vmatprep.subr.mxu0 %v5530
  %5972 = vmatpush2.msra.mxu0 %v5529
  %5973 = vmatprep.subr.mxu0 %v5526
  %5974 = vmatpush2.msra.mxu0 %v5525
  %5975 = vmatprep.subr.mxu0 %v5522
  %5976 = vmatpush2.msra.mxu0 %v5521
  %5977 = vmatprep.subr.mxu0 %v5518
  %5978 = vmatpush2.msra.mxu0 %v5517
  %5979 = vmatprep.subr.mxu0 %v5514
  %5980 = vmatpush2.msra.mxu0 %v5513
  %5981 = vmatprep.mubr.f32.mxu0 %v5622
  %5982 = vmatmul.mubr.f32.gmra.mxu0 %v5621
  %v5983 = vpop.f32.mrf.mxu0
  %v5984 = vadd.f32 %v5913, %v5983
  %v5985 = vpop.f32.mrf.mxu0
  %v5986 = vadd.f32 %v5915, %v5985
  %5987 = vdwg.mxu0
  %5988 = vmatprep.subr.mxu0 0.0
  %5989 = vmatpush1.msra.mxu0 0.0
  %5990 = vmatprep.subr.mxu0 0.0
  %5991 = vmatpush1.msra.mxu0 0.0
  %5992 = vmatprep.subr.mxu0 0.0
  %5993 = vmatpush1.msra.mxu0 0.0
  %5994 = vmatprep.subr.mxu0 0.0
  %5995 = vmatpush1.msra.mxu0 0.0
  %5996 = vmatprep.subr.mxu0 0.0
  %5997 = vmatpush1.msra.mxu0 0.0
  %5998 = vmatprep.subr.mxu0 %v5618
  %5999 = vmatpush1.msra.mxu0 %v5617
  %6000 = vmatprep.subr.mxu0 %v5614
  %6001 = vmatpush1.msra.mxu0 %v5613
  %6002 = vmatprep.subr.mxu0 %v5610
  %6003 = vmatpush1.msra.mxu0 %v5609
  %6004 = vmatprep.subr.mxu0 %v5606
  %6005 = vmatpush1.msra.mxu0 %v5605
  %6006 = vmatprep.subr.mxu0 %v5602
  %6007 = vmatpush1.msra.mxu0 %v5601
  %6008 = vmatprep.subr.mxu0 %v5598
  %6009 = vmatpush1.msra.mxu0 %v5597
  %6010 = vmatprep.subr.mxu0 %v5594
  %6011 = vmatpush1.msra.mxu0 %v5593
  %6012 = vmatprep.subr.mxu0 %v5590
  %6013 = vmatpush1.msra.mxu0 %v5589
  %6014 = vmatprep.subr.mxu0 %v5586
  %6015 = vmatpush1.msra.mxu0 %v5585
  %6016 = vmatprep.subr.mxu0 %v5582
  %6017 = vmatpush1.msra.mxu0 %v5581
  %6018 = vmatprep.subr.mxu0 %v5578
  %6019 = vmatpush1.msra.mxu0 %v5577
  %6020 = vmatprep.subr.mxu0 0.0
  %6021 = vmatpush2.msra.mxu0 0.0
  %6022 = vmatprep.subr.mxu0 0.0
  %6023 = vmatpush2.msra.mxu0 0.0
  %6024 = vmatprep.subr.mxu0 0.0
  %6025 = vmatpush2.msra.mxu0 0.0
  %6026 = vmatprep.subr.mxu0 0.0
  %6027 = vmatpush2.msra.mxu0 0.0
  %6028 = vmatprep.subr.mxu0 0.0
  %6029 = vmatpush2.msra.mxu0 0.0
  %6030 = vmatprep.subr.mxu0 0.0
  %6031 = vmatpush2.msra.mxu0 0.0
  %6032 = vmatprep.subr.mxu0 0.0
  %6033 = vmatpush2.msra.mxu0 0.0
  %6034 = vmatprep.subr.mxu0 0.0
  %6035 = vmatpush2.msra.mxu0 0.0
  %6036 = vmatprep.subr.mxu0 0.0
  %6037 = vmatpush2.msra.mxu0 0.0
  %6038 = vmatprep.subr.mxu0 0.0
  %6039 = vmatpush2.msra.mxu0 0.0
  %6040 = vmatprep.subr.mxu0 0.0
  %6041 = vmatpush2.msra.mxu0 0.0
  %6042 = vmatprep.subr.mxu0 0.0
  %6043 = vmatpush2.msra.mxu0 0.0
  %6044 = vmatprep.subr.mxu0 0.0
  %6045 = vmatpush2.msra.mxu0 0.0
  %6046 = vmatprep.subr.mxu0 0.0
  %6047 = vmatpush2.msra.mxu0 0.0
  %6048 = vmatprep.subr.mxu0 0.0
  %6049 = vmatpush2.msra.mxu0 0.0
  %6050 = vmatprep.subr.mxu0 0.0
  %6051 = vmatpush2.msra.mxu0 0.0
  %6052 = vmatprep.mubr.f32.mxu0 0.0
  %6053 = vmatmul.mubr.f32.gmra.mxu0 %v5631
  %v6054 = vpop.f32.mrf.mxu0
  %v6055 = vadd.f32 %v5984, %v6054
  %v6056 = vpop.f32.mrf.mxu0
  %v6057 = vadd.f32 %v5986, %v6056
  %6058 = vdwg.mxu0
  %6059 = vst [vmem:[%s9] sm:$0xff] %v5842
  %6060 = vst [vmem:[%s9 + $0x8] sm:$0xff] %v5844
  %6061 = vst [vmem:[%s9 + $0x10] sm:$0xff] %v6055
  %6062 = vst [vmem:[%s9 + $0x18] sm:$0xff] %v6057
  // Predicated region
  $region38: #{cnn_forward.1} parent=0 // pred_check
    _
  $region39: #{cnn_forward.1} parent=0 // pred_check_branch
    %6064 = sbr.rel (0) target = $region41
  $region40: #{cnn_forward.1} parent=0 // pred_region
    _
  $region41: #{cnn_forward.1} parent=0 // pred_fallthru
    _
  // Predicated region
  $region42: #{cnn_forward.1} parent=0 // pred_check
    _
  $region43: #{cnn_forward.1} parent=0 // pred_check_branch
    %6066 = sbr.rel (0) target = $region45
  $region44: #{cnn_forward.1} parent=0 // pred_region
    _
  $region45: #{cnn_forward.1} parent=0 // pred_fallthru
    _

</llo_original>
